<compile_context>
chip_gen: v7x
topology: tpu7x:2x2x1
jax: 0.10.0
libtpu: 0.0.40
codegen_flags: <defaults>
</compile_context>

<pallas_src>
import functools

import jax
import jax.numpy as jnp
from jax import lax
from jax.experimental import pallas as pl
from jax.experimental.pallas import tpu as pltpu


_VMEM_LIMIT = 48 * 1024 * 1024   # explicit budget; fits v5e/v6e (128 MiB) and v7x (64 MiB)


def _compiler_params(*semantics):
    return pltpu.CompilerParams(dimension_semantics=tuple(semantics),
                                vmem_limit_bytes=_VMEM_LIMIT)


def _pick_tile(dim, target):
    """Largest tile <= target that evenly divides dim (falls back to full dim)."""
    t = min(dim, target)
    return t if dim % t == 0 else dim


# ---------------------------------------------------------------------------
# Fused residual-add + RMSNorm (vLLM's fused_add_rms_norm), gridded over seq.
# ---------------------------------------------------------------------------
def add_rmsnorm_kernel(hid_ref, res_ref, w_ref, normed_ref, resout_ref, *, eps):
    x = hid_ref[...].astype(jnp.float32) + res_ref[...].astype(jnp.float32)
    var = jnp.mean(x * x, axis=-1, keepdims=True)
    normed = x * lax.rsqrt(var + eps) * w_ref[...].astype(jnp.float32)
    normed_ref[...] = normed.astype(normed_ref.dtype)
    resout_ref[...] = x.astype(resout_ref.dtype)


def add_rmsnorm(hidden, residual, weight, *, eps, seq_tile=128):
    S, H = hidden.shape
    ts = _pick_tile(S, seq_tile)
    return pl.pallas_call(
        functools.partial(add_rmsnorm_kernel, eps=eps),
        out_shape=(jax.ShapeDtypeStruct((S, H), hidden.dtype),
                   jax.ShapeDtypeStruct((S, H), hidden.dtype)),
        grid_spec=pltpu.PrefetchScalarGridSpec(
            num_scalar_prefetch=0, grid=(S // ts,),
            in_specs=[pl.BlockSpec((ts, H), lambda i: (i, 0)),
                      pl.BlockSpec((ts, H), lambda i: (i, 0)),
                      pl.BlockSpec((1, H), lambda i: (0, 0))],
            out_specs=(pl.BlockSpec((ts, H), lambda i: (i, 0)),
                       pl.BlockSpec((ts, H), lambda i: (i, 0)))),
        compiler_params=_compiler_params("parallel"),
    )(hidden, residual, weight)


# ---------------------------------------------------------------------------
# Generic tiled matmul: bf16 operands streamed per tile, f32 VMEM accumulator.
# ---------------------------------------------------------------------------
def matmul_kernel(x_ref, w_ref, o_ref, acc_ref):
    @pl.when(pl.program_id(2) == 0)
    def _():
        acc_ref[...] = jnp.zeros_like(acc_ref)

    acc_ref[...] += jnp.dot(x_ref[...], w_ref[...],
                            preferred_element_type=jnp.float32)

    @pl.when(pl.program_id(2) == pl.num_programs(2) - 1)
    def _():
        o_ref[...] = acc_ref[...].astype(o_ref.dtype)


def matmul(x, w, *, out_dtype=None, tm=128, tn=256, tk=512):
    M, K = x.shape
    _, N = w.shape
    out_dtype = out_dtype or x.dtype
    tm, tn, tk = _pick_tile(M, tm), _pick_tile(N, tn), _pick_tile(K, tk)
    grid = (M // tm, N // tn, K // tk)
    itemsize = x.dtype.itemsize
    return pl.pallas_call(
        matmul_kernel,
        out_shape=jax.ShapeDtypeStruct((M, N), out_dtype),
        grid_spec=pltpu.PrefetchScalarGridSpec(
            num_scalar_prefetch=0, grid=grid,
            in_specs=[pl.BlockSpec((tm, tk), lambda i, j, k: (i, k)),
                      pl.BlockSpec((tk, tn), lambda i, j, k: (k, j))],
            out_specs=pl.BlockSpec((tm, tn), lambda i, j, k: (i, j)),
            scratch_shapes=[pltpu.VMEM((tm, tn), jnp.float32)]),
        compiler_params=_compiler_params("parallel", "parallel", "arbitrary"),
        cost_estimate=pl.CostEstimate(
            flops=2 * M * N * K, transcendentals=0,
            bytes_accessed=int((M * K + K * N + M * N) * itemsize)),
    )(x, w)


# ---------------------------------------------------------------------------
# Fused gate_up_proj + SiluAndMul (tiled over M/I/K, two f32 accumulators).
# ---------------------------------------------------------------------------
def gate_up_silu_kernel(x_ref, wg_ref, wu_ref, o_ref, accg_ref, accu_ref):
    @pl.when(pl.program_id(2) == 0)
    def _():
        accg_ref[...] = jnp.zeros_like(accg_ref)
        accu_ref[...] = jnp.zeros_like(accu_ref)

    x = x_ref[...]
    accg_ref[...] += jnp.dot(x, wg_ref[...], preferred_element_type=jnp.float32)
    accu_ref[...] += jnp.dot(x, wu_ref[...], preferred_element_type=jnp.float32)

    @pl.when(pl.program_id(2) == pl.num_programs(2) - 1)
    def _():
        g = accg_ref[...]
        silu = g / (1.0 + jnp.exp(-g))          # g * sigmoid(g), f32
        o_ref[...] = (silu * accu_ref[...]).astype(o_ref.dtype)


def gate_up_silu(x, wg, wu, *, tm=128, tn=256, tk=512):
    M, K = x.shape
    _, N = wg.shape
    tm, tn, tk = _pick_tile(M, tm), _pick_tile(N, tn), _pick_tile(K, tk)
    grid = (M // tm, N // tn, K // tk)
    itemsize = x.dtype.itemsize
    return pl.pallas_call(
        gate_up_silu_kernel,
        out_shape=jax.ShapeDtypeStruct((M, N), x.dtype),
        grid_spec=pltpu.PrefetchScalarGridSpec(
            num_scalar_prefetch=0, grid=grid,
            in_specs=[pl.BlockSpec((tm, tk), lambda i, j, k: (i, k)),
                      pl.BlockSpec((tk, tn), lambda i, j, k: (k, j)),
                      pl.BlockSpec((tk, tn), lambda i, j, k: (k, j))],
            out_specs=pl.BlockSpec((tm, tn), lambda i, j, k: (i, j)),
            scratch_shapes=[pltpu.VMEM((tm, tn), jnp.float32),
                            pltpu.VMEM((tm, tn), jnp.float32)]),
        compiler_params=_compiler_params("parallel", "parallel", "arbitrary"),
        cost_estimate=pl.CostEstimate(
            flops=4 * M * N * K, transcendentals=M * N,
            bytes_accessed=int((M * K + 2 * K * N + M * N) * itemsize)),
    )(x, wg, wu)


# ---------------------------------------------------------------------------
# RoPE (neox): rotate_half via static slices + concat; scale folded into Q.
# Operates on a (num_heads * seq, head_dim) slab, grid = (head, seq_tile).
# ---------------------------------------------------------------------------
def rope_kernel(x_ref, cos_ref, sin_ref, o_ref, *, half, scale):
    x = x_ref[...].astype(jnp.float32)                     # (ts, hd)
    cos = cos_ref[...]
    sin = sin_ref[...]
    x1 = x[:, :half]
    x2 = x[:, half:]
    rot = jnp.concatenate([-x2, x1], axis=-1)              # rotate_half
    o_ref[...] = ((x * cos + rot * sin) * scale).astype(o_ref.dtype)


def apply_rope(x, cos, sin, num_heads, seq_len, head_dim, *, scale, seq_tile=128):
    ts = _pick_tile(seq_len, seq_tile)
    nblk = seq_len // ts
    return pl.pallas_call(
        functools.partial(rope_kernel, half=head_dim // 2, scale=scale),
        out_shape=jax.ShapeDtypeStruct(x.shape, x.dtype),
        grid_spec=pltpu.PrefetchScalarGridSpec(
            num_scalar_prefetch=0, grid=(num_heads, nblk),
            in_specs=[pl.BlockSpec((ts, head_dim),
                                   lambda h, i, n=nblk: (h * n + i, 0)),
                      pl.BlockSpec((ts, head_dim), lambda h, i: (i, 0)),
                      pl.BlockSpec((ts, head_dim), lambda h, i: (i, 0))],
            out_specs=pl.BlockSpec((ts, head_dim),
                                   lambda h, i, n=nblk: (h * n + i, 0))),
        compiler_params=_compiler_params("parallel", "parallel"),
    )(x, cos, sin)


# ---------------------------------------------------------------------------
# Causal flash attention, heads batched, online softmax, causal block skip.
# q/k/v: (num_heads, S, head_dim) bf16.  q is pre-scaled by head_dim**-0.5.
# ---------------------------------------------------------------------------
def flash_attn_kernel(q_ref, k_ref, v_ref, o_ref, m_ref, l_ref, acc_ref,
                      *, q_tile, kv_tile):
    qi = pl.program_id(0)
    ki = pl.program_id(1)

    @pl.when(ki == 0)
    def _():
        m_ref[...] = jnp.full(m_ref.shape, -1e30, m_ref.dtype)
        l_ref[...] = jnp.zeros_like(l_ref)
        acc_ref[...] = jnp.zeros_like(acc_ref)

    # Skip kv blocks strictly above the causal diagonal (they contribute 0).
    @pl.when(ki * kv_tile <= qi * q_tile + (q_tile - 1))
    def _():
        s = jnp.einsum("hqd,hkd->hqk", q_ref[...], k_ref[...],
                       preferred_element_type=jnp.float32)       # (nH, tq, tk)
        row = lax.broadcasted_iota(jnp.int32, s.shape, 1)
        col = lax.broadcasted_iota(jnp.int32, s.shape, 2)
        mask = (ki * kv_tile + col) <= (qi * q_tile + row)
        s = jnp.where(mask, s, -1e30)

        m_prev = m_ref[...]
        m_new = jnp.maximum(m_prev, jnp.max(s, axis=-1, keepdims=True))
        alpha = jnp.exp(m_prev - m_new)
        p = jnp.exp(s - m_new)
        l_ref[...] = alpha * l_ref[...] + jnp.sum(p, axis=-1, keepdims=True)
        acc_ref[...] = alpha * acc_ref[...] + jnp.einsum(
            "hqk,hkd->hqd", p.astype(v_ref.dtype), v_ref[...],
            preferred_element_type=jnp.float32)
        m_ref[...] = m_new

    @pl.when(ki == pl.num_programs(1) - 1)
    def _():
        o_ref[...] = (acc_ref[...] / l_ref[...]).astype(o_ref.dtype)


def flash_attention(q, k, v, *, q_tile=128, kv_tile=128):
    nH, S, hd = q.shape
    tq = _pick_tile(S, q_tile)
    tk = _pick_tile(S, kv_tile)
    grid = (S // tq, S // tk)
    itemsize = q.dtype.itemsize
    return pl.pallas_call(
        functools.partial(flash_attn_kernel, q_tile=tq, kv_tile=tk),
        out_shape=jax.ShapeDtypeStruct((nH, S, hd), q.dtype),
        grid_spec=pltpu.PrefetchScalarGridSpec(
            num_scalar_prefetch=0, grid=grid,
            in_specs=[pl.BlockSpec((nH, tq, hd), lambda qi, ki: (0, qi, 0)),
                      pl.BlockSpec((nH, tk, hd), lambda qi, ki: (0, ki, 0)),
                      pl.BlockSpec((nH, tk, hd), lambda qi, ki: (0, ki, 0))],
            out_specs=pl.BlockSpec((nH, tq, hd), lambda qi, ki: (0, qi, 0)),
            scratch_shapes=[pltpu.VMEM((nH, tq, 1), jnp.float32),
                            pltpu.VMEM((nH, tq, 1), jnp.float32),
                            pltpu.VMEM((nH, tq, hd), jnp.float32)]),
        compiler_params=_compiler_params("parallel", "arbitrary"),
        cost_estimate=pl.CostEstimate(
            flops=4 * nH * S * S * hd, transcendentals=nH * S * S,
            bytes_accessed=int(4 * nH * S * hd * itemsize)),
    )(q, k, v)


# ---------------------------------------------------------------------------
# Parameters & model forward.
# ---------------------------------------------------------------------------
def init_params(key, cfg):
    H, I = cfg["hidden_size"], cfg["intermediate_size"]
    nH, nKV, hd = cfg["num_heads"], cfg["num_kv_heads"], cfg["head_dim"]
    V, L = cfg["vocab_size"], cfg["num_layers"]
    keys = jax.random.split(key, 1 + 5 * L)

    def w(k, shape, scale=0.05):
        return (jax.random.normal(k, shape, jnp.float32) * scale).astype(jnp.bfloat16)

    params = {"embed": w(keys[0], (V, H), 0.02),
              "norm": jnp.ones((1, H), jnp.float32),
              "layers": []}
    ki = 1
    for _ in range(L):
        params["layers"].append({
            "ln1": jnp.ones((1, H), jnp.float32),
            "ln2": jnp.ones((1, H), jnp.float32),
            "wqkv": w(keys[ki + 0], (H, (nH + 2 * nKV) * hd)),
            "wo": w(keys[ki + 1], (nH * hd, H)),
            "wg": w(keys[ki + 2], (H, I)),
            "wu": w(keys[ki + 3], (H, I)),
            "wdown": w(keys[ki + 4], (I, H)),
        })
        ki += 5
    return params


def llama_forward(params, input_ids, positions, cfg):
    S = input_ids.shape[0]
    H, hd = cfg["hidden_size"], cfg["head_dim"]
    nH, nKV = cfg["num_heads"], cfg["num_kv_heads"]
    group = nH // nKV
    q_size, kv_size = nH * hd, nKV * hd
    eps = cfg["eps"]
    scaling = hd ** -0.5

    # Embedding lookup (glue).
    hidden = jnp.take(params["embed"], input_ids, axis=0)            # (S, H) bf16
    residual = jnp.zeros_like(hidden)                                # layer 0: residual=None

    # RoPE tables (neox: halves duplicated), f32.
    inv_freq = 1.0 / (cfg["rope_theta"] **
                      (jnp.arange(0, hd, 2, dtype=jnp.float32) / hd))
    freqs = positions.astype(jnp.float32)[:, None] * inv_freq[None, :]
    cos = jnp.concatenate([jnp.cos(freqs), jnp.cos(freqs)], axis=-1)  # (S, hd)
    sin = jnp.concatenate([jnp.sin(freqs), jnp.sin(freqs)], axis=-1)

    for lp in params["layers"]:
        # input_layernorm (fused residual add + RMSNorm).
        h_norm, res1 = add_rmsnorm(hidden, residual, lp["ln1"], eps=eps)

        # QKV projection (tiled, weight tiles streamed).
        qkv = matmul(h_norm, lp["wqkv"])
        q = qkv[:, :q_size]
        k = qkv[:, q_size:q_size + kv_size]
        v = qkv[:, q_size + kv_size:]

        # Per-head layout (layout plumbing in XLA glue).
        q = q.reshape(S, nH, hd).transpose(1, 0, 2)                   # (nH, S, hd)
        k = k.reshape(S, nKV, hd).transpose(1, 0, 2)                  # (nKV, S, hd)
        v = v.reshape(S, nKV, hd).transpose(1, 0, 2)

        # RoPE once per head; attention scale folded into Q.
        q = apply_rope(q.reshape(nH * S, hd), cos, sin, nH, S, hd,
                       scale=scaling).reshape(nH, S, hd)
        k = apply_rope(k.reshape(nKV * S, hd), cos, sin, nKV, S, hd,
                       scale=1.0).reshape(nKV, S, hd)

        # GQA expansion in glue (head h uses kv head h // group).
        k = jnp.repeat(k, group, axis=0)
        v = jnp.repeat(v, group, axis=0)

        # Causal flash attention (blocked, online softmax).
        o = flash_attention(q, k, v)                                  # (nH, S, hd)
        attn = o.transpose(1, 0, 2).reshape(S, q_size)

        # o_proj as a single big matmul.
        attn = matmul(attn, lp["wo"])

        # post_attention_layernorm.
        h2, res2 = add_rmsnorm(attn, res1, lp["ln2"], eps=eps)

        # MLP: fused gate/up + SiluAndMul, then tiled down_proj.
        act = gate_up_silu(h2, lp["wg"], lp["wu"])
        hidden = matmul(act, lp["wdown"])
        residual = res2

    out, _ = add_rmsnorm(hidden, residual, params["norm"], eps=eps)
    return out


if __name__ == "__main__":
    cfg = dict(
        hidden_size=256,
        intermediate_size=1024,
        num_heads=2,
        num_kv_heads=1,        # GQA, group size 2
        head_dim=128,          # hidden_size // num_heads
        num_layers=2,
        vocab_size=128,
        rope_theta=10000.0,
        eps=1e-6,
    )
    seq_len = 8

    key = jax.random.PRNGKey(0)
    k_param, k_ids = jax.random.split(key)
    params = init_params(k_param, cfg)

    input_ids = jax.random.randint(k_ids, (seq_len,), 0, cfg["vocab_size"],
                                   dtype=jnp.int32)
    positions = jnp.arange(seq_len, dtype=jnp.int32)

    fwd = jax.jit(functools.partial(llama_forward, cfg=cfg))
    out = fwd(params, input_ids, positions)
    out = jax.block_until_ready(out)

    assert out.shape == (seq_len, cfg["hidden_size"]), out.shape
    assert bool(jnp.all(jnp.isfinite(out.astype(jnp.float32))))
    print("KERNEL_OK")
</pallas_src>

<mosaic_0001>
module attributes {stable_mosaic.version = 11 : i64} {
  func.func @add_rmsnorm_kernel(%arg0: i32, %arg1: memref<8x256xbf16, #tpu.memory_space<vmem>>, %arg2: memref<8x256xbf16, #tpu.memory_space<vmem>>, %arg3: memref<1x256xf32, #tpu.memory_space<vmem>>, %arg4: memref<8x256xbf16, #tpu.memory_space<vmem>>, %arg5: memref<8x256xbf16, #tpu.memory_space<vmem>>) attributes {dimension_semantics = [#tpu.dimension_semantics<parallel>], iteration_bounds = array<i64: 1>, scalar_prefetch = 0 : i64, scratch_operands = 0 : i64, tpu.core_type = #tpu.core_type<tc>, window_params = [{transform_indices = @transform_0, window_bounds = array<i64: 8, 256>}, {transform_indices = @transform_1, window_bounds = array<i64: 8, 256>}, {pipeline_mode = #tpu.pipeline_mode<synchronous>, transform_indices = @transform_2, window_bounds = array<i64: 1, 256>}, {transform_indices = @transform_3, window_bounds = array<i64: 8, 256>}, {transform_indices = @transform_4, window_bounds = array<i64: 8, 256>}]} {
    %c0 = arith.constant 0 : index
    %c0_0 = arith.constant 0 : index
    %0 = vector.load %arg1[%c0, %c0_0] : memref<8x256xbf16, #tpu.memory_space<vmem>>, vector<8x256xbf16>
    %1 = arith.extf %0 : vector<8x256xbf16> to vector<8x256xf32>
    %c0_1 = arith.constant 0 : index
    %c0_2 = arith.constant 0 : index
    %2 = vector.load %arg2[%c0_1, %c0_2] : memref<8x256xbf16, #tpu.memory_space<vmem>>, vector<8x256xbf16>
    %3 = arith.extf %2 : vector<8x256xbf16> to vector<8x256xf32>
    %4 = arith.addf %1, %3 : vector<8x256xf32>
    %5 = arith.mulf %4, %4 : vector<8x256xf32>
    %cst = arith.constant dense<0.000000e+00> : vector<8xf32>
    %6 = vector.multi_reduction <add>, %5, %cst [1] : vector<8x256xf32> to vector<8xf32>
    %7 = vector.shape_cast %6 : vector<8xf32> to vector<8x1xf32>
    %cst_3 = arith.constant 2.560000e+02 : f32
    %8 = vector.broadcast %cst_3 : f32 to vector<8x1xf32>
    %9 = arith.divf %7, %8 : vector<8x1xf32>
    %cst_4 = arith.constant 9.99999997E-7 : f32
    %10 = vector.broadcast %cst_4 : f32 to vector<8x1xf32>
    %11 = arith.addf %9, %10 : vector<8x1xf32>
    %12 = math.rsqrt %11 : vector<8x1xf32>
    %13 = vector.broadcast %12 : vector<8x1xf32> to vector<8x256xf32>
    %14 = arith.mulf %4, %13 : vector<8x256xf32>
    %c0_5 = arith.constant 0 : index
    %c0_6 = arith.constant 0 : index
    %15 = vector.load %arg3[%c0_5, %c0_6] : memref<1x256xf32, #tpu.memory_space<vmem>>, vector<1x256xf32>
    %16 = vector.broadcast %15 : vector<1x256xf32> to vector<8x256xf32>
    %17 = arith.mulf %14, %16 : vector<8x256xf32>
    %18 = arith.truncf %17 : vector<8x256xf32> to vector<8x256xbf16>
    %c0_7 = arith.constant 0 : index
    %c0_8 = arith.constant 0 : index
    %19 = vector.load %arg4[%c0_7, %c0_8] : memref<8x256xbf16, #tpu.memory_space<vmem>>, vector<8x256xbf16>
    tpu.vector_store %arg4[%c0_7, %c0_8], %18 {strides = array<i32>} : memref<8x256xbf16, #tpu.memory_space<vmem>>, vector<8x256xbf16>,
    %20 = arith.truncf %4 : vector<8x256xf32> to vector<8x256xbf16>
    %c0_9 = arith.constant 0 : index
    %c0_10 = arith.constant 0 : index
    %21 = vector.load %arg5[%c0_9, %c0_10] : memref<8x256xbf16, #tpu.memory_space<vmem>>, vector<8x256xbf16>
    tpu.vector_store %arg5[%c0_9, %c0_10], %20 {strides = array<i32>} : memref<8x256xbf16, #tpu.memory_space<vmem>>, vector<8x256xbf16>,
    return
  }
  func.func @transform_0(%arg0: i32) -> (i32, i32) {
    %c0_i32 = arith.constant 0 : i32
    %c0_i32_0 = arith.constant 0 : i32
    return %arg0, %c0_i32 : i32, i32
  }
  func.func @transform_1(%arg0: i32) -> (i32, i32) {
    %c0_i32 = arith.constant 0 : i32
    %c0_i32_0 = arith.constant 0 : i32
    return %arg0, %c0_i32 : i32, i32
  }
  func.func @transform_2(%arg0: i32) -> (i32, i32) {
    %c0_i32 = arith.constant 0 : i32
    %c0_i32_0 = arith.constant 0 : i32
    %c0_i32_1 = arith.constant 0 : i32
    return %c0_i32, %c0_i32_0 : i32, i32
  }
  func.func @transform_3(%arg0: i32) -> (i32, i32) {
    %c0_i32 = arith.constant 0 : i32
    %c0_i32_0 = arith.constant 0 : i32
    return %arg0, %c0_i32 : i32, i32
  }
  func.func @transform_4(%arg0: i32) -> (i32, i32) {
    %c0_i32 = arith.constant 0 : i32
    %c0_i32_0 = arith.constant 0 : i32
    return %arg0, %c0_i32 : i32, i32
  }
}

module attributes {stable_mosaic.version = 11 : i64} {
  func.func @matmul_kernel(%arg0: i32, %arg1: i32, %arg2: i32, %arg3: memref<8x256xbf16, #tpu.memory_space<vmem>>, %arg4: memref<256x256xbf16, #tpu.memory_space<vmem>>, %arg5: memref<8x256xbf16, #tpu.memory_space<vmem>>, %arg6: memref<8x256xf32, #tpu.memory_space<vmem>>) attributes {dimension_semantics = [#tpu.dimension_semantics<parallel>, #tpu.dimension_semantics<parallel>, #tpu.dimension_semantics<arbitrary>], iteration_bounds = array<i64: 1, 2, 1>, scalar_prefetch = 0 : i64, scratch_operands = 1 : i64, tpu.core_type = #tpu.core_type<tc>, window_params = [{transform_indices = @transform_0, window_bounds = array<i64: 8, 256>}, {transform_indices = @transform_1, window_bounds = array<i64: 256, 256>}, {transform_indices = @transform_2, window_bounds = array<i64: 8, 256>}]} {
    %c0_i32 = arith.constant 0 : i32
    %0 = arith.cmpi eq, %arg2, %c0_i32 : i32
    %1 = arith.extui %0 : i1 to i32
    %c0_i32_0 = arith.constant 0 : i32
    %2 = arith.cmpi ne, %1, %c0_i32_0 : i32
    scf.if %2 {
      %cst_10 = arith.constant 0.000000e+00 : f32
      %12 = vector.broadcast %cst_10 : f32 to vector<8x256xf32>
      %c0_11 = arith.constant 0 : index
      %c0_12 = arith.constant 0 : index
      %13 = vector.load %arg6[%c0_11, %c0_12] : memref<8x256xf32, #tpu.memory_space<vmem>>, vector<8x256xf32>
      tpu.vector_store %arg6[%c0_11, %c0_12], %12 {strides = array<i32>} : memref<8x256xf32, #tpu.memory_space<vmem>>, vector<8x256xf32>,
    } else {
    }
    %c0 = arith.constant 0 : index
    %c0_1 = arith.constant 0 : index
    %3 = vector.load %arg6[%c0, %c0_1] : memref<8x256xf32, #tpu.memory_space<vmem>>, vector<8x256xf32>
    %c0_2 = arith.constant 0 : index
    %c0_3 = arith.constant 0 : index
    %4 = vector.load %arg3[%c0_2, %c0_3] : memref<8x256xbf16, #tpu.memory_space<vmem>>, vector<8x256xbf16>
    %c0_4 = arith.constant 0 : index
    %c0_5 = arith.constant 0 : index
    %5 = vector.load %arg4[%c0_4, %c0_5] : memref<256x256xbf16, #tpu.memory_space<vmem>>, vector<256x256xbf16>
    %cst = arith.constant dense<0.000000e+00> : vector<8x256xf32>
    %6 = tpu.matmul %4, %5, %cst {dimension_numbers = #tpu.dot_dimension_numbers<[1], [0], [0], [1], [0, 0, 1, 1], [], []>} : vector<8x256xbf16>, vector<256x256xbf16>, vector<8x256xf32> -> vector<8x256xf32>
    %7 = arith.addf %3, %6 : vector<8x256xf32>
    %c0_6 = arith.constant 0 : index
    %c0_7 = arith.constant 0 : index
    %8 = vector.load %arg6[%c0_6, %c0_7] : memref<8x256xf32, #tpu.memory_space<vmem>>, vector<8x256xf32>
    tpu.vector_store %arg6[%c0_6, %c0_7], %7 {strides = array<i32>} : memref<8x256xf32, #tpu.memory_space<vmem>>, vector<8x256xf32>,
    %c0_i32_8 = arith.constant 0 : i32
    %9 = arith.cmpi eq, %arg2, %c0_i32_8 : i32
    %10 = arith.extui %9 : i1 to i32
    %c0_i32_9 = arith.constant 0 : i32
    %11 = arith.cmpi ne, %10, %c0_i32_9 : i32
    scf.if %11 {
      %c0_10 = arith.constant 0 : index
      %c0_11 = arith.constant 0 : index
      %12 = vector.load %arg6[%c0_10, %c0_11] : memref<8x256xf32, #tpu.memory_space<vmem>>, vector<8x256xf32>
      %13 = arith.truncf %12 : vector<8x256xf32> to vector<8x256xbf16>
      %c0_12 = arith.constant 0 : index
      %c0_13 = arith.constant 0 : index
      %14 = vector.load %arg5[%c0_12, %c0_13] : memref<8x256xbf16, #tpu.memory_space<vmem>>, vector<8x256xbf16>
      tpu.vector_store %arg5[%c0_12, %c0_13], %13 {strides = array<i32>} : memref<8x256xbf16, #tpu.memory_space<vmem>>, vector<8x256xbf16>,
    } else {
    }
    return
  }
  func.func @transform_0(%arg0: i32, %arg1: i32, %arg2: i32) -> (i32, i32) {
    %c0_i32 = arith.constant 0 : i32
    return %arg0, %arg2 : i32, i32
  }
  func.func @transform_1(%arg0: i32, %arg1: i32, %arg2: i32) -> (i32, i32) {
    %c0_i32 = arith.constant 0 : i32
    return %arg2, %arg1 : i32, i32
  }
  func.func @transform_2(%arg0: i32, %arg1: i32, %arg2: i32) -> (i32, i32) {
    %c0_i32 = arith.constant 0 : i32
    return %arg0, %arg1 : i32, i32
  }
}

module attributes {stable_mosaic.version = 11 : i64} {
  func.func @rope_kernel(%arg0: i32, %arg1: i32, %arg2: memref<8x128xbf16, #tpu.memory_space<vmem>>, %arg3: memref<8x128xf32, #tpu.memory_space<vmem>>, %arg4: memref<8x128xf32, #tpu.memory_space<vmem>>, %arg5: memref<8x128xbf16, #tpu.memory_space<vmem>>) attributes {dimension_semantics = [#tpu.dimension_semantics<parallel>, #tpu.dimension_semantics<parallel>], iteration_bounds = array<i64: 2, 1>, scalar_prefetch = 0 : i64, scratch_operands = 0 : i64, tpu.core_type = #tpu.core_type<tc>, window_params = [{transform_indices = @transform_0, window_bounds = array<i64: 8, 128>}, {transform_indices = @transform_1, window_bounds = array<i64: 8, 128>}, {transform_indices = @transform_2, window_bounds = array<i64: 8, 128>}, {transform_indices = @transform_3, window_bounds = array<i64: 8, 128>}]} {
    %c0 = arith.constant 0 : index
    %c0_0 = arith.constant 0 : index
    %0 = vector.load %arg2[%c0, %c0_0] : memref<8x128xbf16, #tpu.memory_space<vmem>>, vector<8x128xbf16>
    %1 = arith.extf %0 : vector<8x128xbf16> to vector<8x128xf32>
    %c0_1 = arith.constant 0 : index
    %c0_2 = arith.constant 0 : index
    %2 = vector.load %arg3[%c0_1, %c0_2] : memref<8x128xf32, #tpu.memory_space<vmem>>, vector<8x128xf32>
    %c0_3 = arith.constant 0 : index
    %c0_4 = arith.constant 0 : index
    %3 = vector.load %arg4[%c0_3, %c0_4] : memref<8x128xf32, #tpu.memory_space<vmem>>, vector<8x128xf32>
    %4 = vector.extract_strided_slice %1 {offsets = [0, 0], sizes = [8, 64], strides = [1, 1]} : vector<8x128xf32> to vector<8x64xf32>
    %5 = vector.extract_strided_slice %1 {offsets = [0, 64], sizes = [8, 64], strides = [1, 1]} : vector<8x128xf32> to vector<8x64xf32>
    %cst = arith.constant 0.000000e+00 : f32
    %6 = vector.broadcast %cst : f32 to vector<8x64xf32>
    %7 = arith.subf %6, %5 : vector<8x64xf32>
    %8 = tpu.concatenate %7, %4 in 1 : vector<8x64xf32>, vector<8x64xf32> -> vector<8x128xf32>
    %9 = arith.mulf %1, %2 : vector<8x128xf32>
    %10 = arith.mulf %8, %3 : vector<8x128xf32>
    %11 = arith.addf %9, %10 : vector<8x128xf32>
    %cst_5 = arith.constant 0.0883883461 : f32
    %12 = vector.broadcast %cst_5 : f32 to vector<8x128xf32>
    %13 = arith.mulf %11, %12 : vector<8x128xf32>
    %14 = arith.truncf %13 : vector<8x128xf32> to vector<8x128xbf16>
    %c0_6 = arith.constant 0 : index
    %c0_7 = arith.constant 0 : index
    %15 = vector.load %arg5[%c0_6, %c0_7] : memref<8x128xbf16, #tpu.memory_space<vmem>>, vector<8x128xbf16>
    tpu.vector_store %arg5[%c0_6, %c0_7], %14 {strides = array<i32>} : memref<8x128xbf16, #tpu.memory_space<vmem>>, vector<8x128xbf16>,
    return
  }
  func.func @transform_0(%arg0: i32, %arg1: i32) -> (i32, i32) {
    %c1_i32 = arith.constant 1 : i32
    %0 = arith.muli %arg0, %c1_i32 : i32
    %1 = arith.addi %0, %arg1 : i32
    %c0_i32 = arith.constant 0 : i32
    %c0_i32_0 = arith.constant 0 : i32
    return %1, %c0_i32 : i32, i32
  }
  func.func @transform_1(%arg0: i32, %arg1: i32) -> (i32, i32) {
    %c0_i32 = arith.constant 0 : i32
    %c0_i32_0 = arith.constant 0 : i32
    return %arg1, %c0_i32 : i32, i32
  }
  func.func @transform_2(%arg0: i32, %arg1: i32) -> (i32, i32) {
    %c0_i32 = arith.constant 0 : i32
    %c0_i32_0 = arith.constant 0 : i32
    return %arg1, %c0_i32 : i32, i32
  }
  func.func @transform_3(%arg0: i32, %arg1: i32) -> (i32, i32) {
    %c1_i32 = arith.constant 1 : i32
    %0 = arith.muli %arg0, %c1_i32 : i32
    %1 = arith.addi %0, %arg1 : i32
    %c0_i32 = arith.constant 0 : i32
    %c0_i32_0 = arith.constant 0 : i32
    return %1, %c0_i32 : i32, i32
  }
}

module attributes {stable_mosaic.version = 11 : i64} {
  func.func @rope_kernel(%arg0: i32, %arg1: i32, %arg2: memref<8x128xbf16, #tpu.memory_space<vmem>>, %arg3: memref<8x128xf32, #tpu.memory_space<vmem>>, %arg4: memref<8x128xf32, #tpu.memory_space<vmem>>, %arg5: memref<8x128xbf16, #tpu.memory_space<vmem>>) attributes {dimension_semantics = [#tpu.dimension_semantics<parallel>, #tpu.dimension_semantics<parallel>], iteration_bounds = array<i64: 1, 1>, scalar_prefetch = 0 : i64, scratch_operands = 0 : i64, tpu.core_type = #tpu.core_type<tc>, window_params = [{transform_indices = @transform_0, window_bounds = array<i64: 8, 128>}, {transform_indices = @transform_1, window_bounds = array<i64: 8, 128>}, {transform_indices = @transform_2, window_bounds = array<i64: 8, 128>}, {transform_indices = @transform_3, window_bounds = array<i64: 8, 128>}]} {
    %c0 = arith.constant 0 : index
    %c0_0 = arith.constant 0 : index
    %0 = vector.load %arg2[%c0, %c0_0] : memref<8x128xbf16, #tpu.memory_space<vmem>>, vector<8x128xbf16>
    %1 = arith.extf %0 : vector<8x128xbf16> to vector<8x128xf32>
    %c0_1 = arith.constant 0 : index
    %c0_2 = arith.constant 0 : index
    %2 = vector.load %arg3[%c0_1, %c0_2] : memref<8x128xf32, #tpu.memory_space<vmem>>, vector<8x128xf32>
    %c0_3 = arith.constant 0 : index
    %c0_4 = arith.constant 0 : index
    %3 = vector.load %arg4[%c0_3, %c0_4] : memref<8x128xf32, #tpu.memory_space<vmem>>, vector<8x128xf32>
    %4 = vector.extract_strided_slice %1 {offsets = [0, 0], sizes = [8, 64], strides = [1, 1]} : vector<8x128xf32> to vector<8x64xf32>
    %5 = vector.extract_strided_slice %1 {offsets = [0, 64], sizes = [8, 64], strides = [1, 1]} : vector<8x128xf32> to vector<8x64xf32>
    %cst = arith.constant 0.000000e+00 : f32
    %6 = vector.broadcast %cst : f32 to vector<8x64xf32>
    %7 = arith.subf %6, %5 : vector<8x64xf32>
    %8 = tpu.concatenate %7, %4 in 1 : vector<8x64xf32>, vector<8x64xf32> -> vector<8x128xf32>
    %9 = arith.mulf %1, %2 : vector<8x128xf32>
    %10 = arith.mulf %8, %3 : vector<8x128xf32>
    %11 = arith.addf %9, %10 : vector<8x128xf32>
    %cst_5 = arith.constant 1.000000e+00 : f32
    %12 = vector.broadcast %cst_5 : f32 to vector<8x128xf32>
    %13 = arith.mulf %11, %12 : vector<8x128xf32>
    %14 = arith.truncf %13 : vector<8x128xf32> to vector<8x128xbf16>
    %c0_6 = arith.constant 0 : index
    %c0_7 = arith.constant 0 : index
    %15 = vector.load %arg5[%c0_6, %c0_7] : memref<8x128xbf16, #tpu.memory_space<vmem>>, vector<8x128xbf16>
    tpu.vector_store %arg5[%c0_6, %c0_7], %14 {strides = array<i32>} : memref<8x128xbf16, #tpu.memory_space<vmem>>, vector<8x128xbf16>,
    return
  }
  func.func @transform_0(%arg0: i32, %arg1: i32) -> (i32, i32) {
    %c1_i32 = arith.constant 1 : i32
    %0 = arith.muli %arg0, %c1_i32 : i32
    %1 = arith.addi %0, %arg1 : i32
    %c0_i32 = arith.constant 0 : i32
    %c0_i32_0 = arith.constant 0 : i32
    return %1, %c0_i32 : i32, i32
  }
  func.func @transform_1(%arg0: i32, %arg1: i32) -> (i32, i32) {
    %c0_i32 = arith.constant 0 : i32
    %c0_i32_0 = arith.constant 0 : i32
    return %arg1, %c0_i32 : i32, i32
  }
  func.func @transform_2(%arg0: i32, %arg1: i32) -> (i32, i32) {
    %c0_i32 = arith.constant 0 : i32
    %c0_i32_0 = arith.constant 0 : i32
    return %arg1, %c0_i32 : i32, i32
  }
  func.func @transform_3(%arg0: i32, %arg1: i32) -> (i32, i32) {
    %c1_i32 = arith.constant 1 : i32
    %0 = arith.muli %arg0, %c1_i32 : i32
    %1 = arith.addi %0, %arg1 : i32
    %c0_i32 = arith.constant 0 : i32
    %c0_i32_0 = arith.constant 0 : i32
    return %1, %c0_i32 : i32, i32
  }
}

module attributes {stable_mosaic.version = 11 : i64} {
  func.func @matmul_kernel(%arg0: i32, %arg1: i32, %arg2: i32, %arg3: memref<8x256xbf16, #tpu.memory_space<vmem>>, %arg4: memref<256x256xbf16, #tpu.memory_space<vmem>>, %arg5: memref<8x256xbf16, #tpu.memory_space<vmem>>, %arg6: memref<8x256xf32, #tpu.memory_space<vmem>>) attributes {dimension_semantics = [#tpu.dimension_semantics<parallel>, #tpu.dimension_semantics<parallel>, #tpu.dimension_semantics<arbitrary>], iteration_bounds = array<i64: 1, 1, 1>, scalar_prefetch = 0 : i64, scratch_operands = 1 : i64, tpu.core_type = #tpu.core_type<tc>, window_params = [{transform_indices = @transform_0, window_bounds = array<i64: 8, 256>}, {transform_indices = @transform_1, window_bounds = array<i64: 256, 256>}, {transform_indices = @transform_2, window_bounds = array<i64: 8, 256>}]} {
    %c0_i32 = arith.constant 0 : i32
    %0 = arith.cmpi eq, %arg2, %c0_i32 : i32
    %1 = arith.extui %0 : i1 to i32
    %c0_i32_0 = arith.constant 0 : i32
    %2 = arith.cmpi ne, %1, %c0_i32_0 : i32
    scf.if %2 {
      %cst_10 = arith.constant 0.000000e+00 : f32
      %12 = vector.broadcast %cst_10 : f32 to vector<8x256xf32>
      %c0_11 = arith.constant 0 : index
      %c0_12 = arith.constant 0 : index
      %13 = vector.load %arg6[%c0_11, %c0_12] : memref<8x256xf32, #tpu.memory_space<vmem>>, vector<8x256xf32>
      tpu.vector_store %arg6[%c0_11, %c0_12], %12 {strides = array<i32>} : memref<8x256xf32, #tpu.memory_space<vmem>>, vector<8x256xf32>,
    } else {
    }
    %c0 = arith.constant 0 : index
    %c0_1 = arith.constant 0 : index
    %3 = vector.load %arg6[%c0, %c0_1] : memref<8x256xf32, #tpu.memory_space<vmem>>, vector<8x256xf32>
    %c0_2 = arith.constant 0 : index
    %c0_3 = arith.constant 0 : index
    %4 = vector.load %arg3[%c0_2, %c0_3] : memref<8x256xbf16, #tpu.memory_space<vmem>>, vector<8x256xbf16>
    %c0_4 = arith.constant 0 : index
    %c0_5 = arith.constant 0 : index
    %5 = vector.load %arg4[%c0_4, %c0_5] : memref<256x256xbf16, #tpu.memory_space<vmem>>, vector<256x256xbf16>
    %cst = arith.constant dense<0.000000e+00> : vector<8x256xf32>
    %6 = tpu.matmul %4, %5, %cst {dimension_numbers = #tpu.dot_dimension_numbers<[1], [0], [0], [1], [0, 0, 1, 1], [], []>} : vector<8x256xbf16>, vector<256x256xbf16>, vector<8x256xf32> -> vector<8x256xf32>
    %7 = arith.addf %3, %6 : vector<8x256xf32>
    %c0_6 = arith.constant 0 : index
    %c0_7 = arith.constant 0 : index
    %8 = vector.load %arg6[%c0_6, %c0_7] : memref<8x256xf32, #tpu.memory_space<vmem>>, vector<8x256xf32>
    tpu.vector_store %arg6[%c0_6, %c0_7], %7 {strides = array<i32>} : memref<8x256xf32, #tpu.memory_space<vmem>>, vector<8x256xf32>,
    %c0_i32_8 = arith.constant 0 : i32
    %9 = arith.cmpi eq, %arg2, %c0_i32_8 : i32
    %10 = arith.extui %9 : i1 to i32
    %c0_i32_9 = arith.constant 0 : i32
    %11 = arith.cmpi ne, %10, %c0_i32_9 : i32
    scf.if %11 {
      %c0_10 = arith.constant 0 : index
      %c0_11 = arith.constant 0 : index
      %12 = vector.load %arg6[%c0_10, %c0_11] : memref<8x256xf32, #tpu.memory_space<vmem>>, vector<8x256xf32>
      %13 = arith.truncf %12 : vector<8x256xf32> to vector<8x256xbf16>
      %c0_12 = arith.constant 0 : index
      %c0_13 = arith.constant 0 : index
      %14 = vector.load %arg5[%c0_12, %c0_13] : memref<8x256xbf16, #tpu.memory_space<vmem>>, vector<8x256xbf16>
      tpu.vector_store %arg5[%c0_12, %c0_13], %13 {strides = array<i32>} : memref<8x256xbf16, #tpu.memory_space<vmem>>, vector<8x256xbf16>,
    } else {
    }
    return
  }
  func.func @transform_0(%arg0: i32, %arg1: i32, %arg2: i32) -> (i32, i32) {
    %c0_i32 = arith.constant 0 : i32
    return %arg0, %arg2 : i32, i32
  }
  func.func @transform_1(%arg0: i32, %arg1: i32, %arg2: i32) -> (i32, i32) {
    %c0_i32 = arith.constant 0 : i32
    return %arg2, %arg1 : i32, i32
  }
  func.func @transform_2(%arg0: i32, %arg1: i32, %arg2: i32) -> (i32, i32) {
    %c0_i32 = arith.constant 0 : i32
    return %arg0, %arg1 : i32, i32
  }
}

module attributes {stable_mosaic.version = 11 : i64} {
  func.func @flash_attn_kernel(%arg0: i32, %arg1: i32, %arg2: memref<2x8x128xbf16, #tpu.memory_space<vmem>>, %arg3: memref<2x8x128xbf16, #tpu.memory_space<vmem>>, %arg4: memref<2x8x128xbf16, #tpu.memory_space<vmem>>, %arg5: memref<2x8x128xbf16, #tpu.memory_space<vmem>>, %arg6: memref<2x8x1xf32, #tpu.memory_space<vmem>>, %arg7: memref<2x8x1xf32, #tpu.memory_space<vmem>>, %arg8: memref<2x8x128xf32, #tpu.memory_space<vmem>>) attributes {dimension_semantics = [#tpu.dimension_semantics<parallel>, #tpu.dimension_semantics<arbitrary>], iteration_bounds = array<i64: 1, 1>, scalar_prefetch = 0 : i64, scratch_operands = 3 : i64, tpu.core_type = #tpu.core_type<tc>, window_params = [{transform_indices = @transform_0, window_bounds = array<i64: 2, 8, 128>}, {transform_indices = @transform_1, window_bounds = array<i64: 2, 8, 128>}, {transform_indices = @transform_2, window_bounds = array<i64: 2, 8, 128>}, {transform_indices = @transform_3, window_bounds = array<i64: 2, 8, 128>}]} {
    %c0_i32 = arith.constant 0 : i32
    %0 = arith.cmpi eq, %arg1, %c0_i32 : i32
    %1 = arith.extui %0 : i1 to i32
    %c0_i32_0 = arith.constant 0 : i32
    %2 = arith.cmpi ne, %1, %c0_i32_0 : i32
    scf.if %2 {
      %cst = arith.constant -1.000000e+30 : f32
      %12 = vector.broadcast %cst : f32 to vector<2x8x1xf32>
      %c0 = arith.constant 0 : index
      %c0_5 = arith.constant 0 : index
      %c0_6 = arith.constant 0 : index
      %13 = vector.load %arg6[%c0, %c0_5, %c0_6] : memref<2x8x1xf32, #tpu.memory_space<vmem>>, vector<2x8x1xf32>
      tpu.vector_store %arg6[%c0, %c0_5, %c0_6], %12 {strides = array<i32>} : memref<2x8x1xf32, #tpu.memory_space<vmem>>, vector<2x8x1xf32>,
      %cst_7 = arith.constant 0.000000e+00 : f32
      %14 = vector.broadcast %cst_7 : f32 to vector<2x8x1xf32>
      %c0_8 = arith.constant 0 : index
      %c0_9 = arith.constant 0 : index
      %c0_10 = arith.constant 0 : index
      %15 = vector.load %arg7[%c0_8, %c0_9, %c0_10] : memref<2x8x1xf32, #tpu.memory_space<vmem>>, vector<2x8x1xf32>
      tpu.vector_store %arg7[%c0_8, %c0_9, %c0_10], %14 {strides = array<i32>} : memref<2x8x1xf32, #tpu.memory_space<vmem>>, vector<2x8x1xf32>,
      %cst_11 = arith.constant 0.000000e+00 : f32
      %16 = vector.broadcast %cst_11 : f32 to vector<2x8x128xf32>
      %c0_12 = arith.constant 0 : index
      %c0_13 = arith.constant 0 : index
      %c0_14 = arith.constant 0 : index
      %17 = vector.load %arg8[%c0_12, %c0_13, %c0_14] : memref<2x8x128xf32, #tpu.memory_space<vmem>>, vector<2x8x128xf32>
      tpu.vector_store %arg8[%c0_12, %c0_13, %c0_14], %16 {strides = array<i32>} : memref<2x8x128xf32, #tpu.memory_space<vmem>>, vector<2x8x128xf32>,
    } else {
    }
    %c8_i32 = arith.constant 8 : i32
    %3 = arith.muli %arg1, %c8_i32 : i32
    %c8_i32_1 = arith.constant 8 : i32
    %4 = arith.muli %arg0, %c8_i32_1 : i32
    %c7_i32 = arith.constant 7 : i32
    %5 = arith.addi %4, %c7_i32 : i32
    %6 = arith.cmpi sle, %3, %5 : i32
    %7 = arith.extui %6 : i1 to i32
    %c0_i32_2 = arith.constant 0 : i32
    %8 = arith.cmpi ne, %7, %c0_i32_2 : i32
    scf.if %8 {
      %c0 = arith.constant 0 : index
      %c0_5 = arith.constant 0 : index
      %c0_6 = arith.constant 0 : index
      %12 = vector.load %arg2[%c0, %c0_5, %c0_6] : memref<2x8x128xbf16, #tpu.memory_space<vmem>>, vector<2x8x128xbf16>
      %c0_7 = arith.constant 0 : index
      %c0_8 = arith.constant 0 : index
      %c0_9 = arith.constant 0 : index
      %13 = vector.load %arg3[%c0_7, %c0_8, %c0_9] : memref<2x8x128xbf16, #tpu.memory_space<vmem>>, vector<2x8x128xbf16>
      "tpu.trace_start"() <{level = 10 : i32, message = "hqd,hkd->hqk"}> : () -> ()
      %cst = arith.constant dense<0.000000e+00> : vector<2x8x8xf32>
      %14 = tpu.matmul %12, %13, %cst {dimension_numbers = #tpu.dot_dimension_numbers<[2], [2], [1], [1], [0, 0, 0, 1, 1, 1], [0], [0]>} : vector<2x8x128xbf16>, vector<2x8x128xbf16>, vector<2x8x8xf32> -> vector<2x8x8xf32>
      "tpu.trace_stop"() : () -> ()
      %15 = tpu.iota {dimensions = array<i32: 1>} : vector<2x8x8xi32>
      %16 = tpu.iota {dimensions = array<i32: 2>} : vector<2x8x8xi32>
      %c8_i32_10 = arith.constant 8 : i32
      %17 = arith.muli %arg1, %c8_i32_10 : i32
      %18 = vector.broadcast %17 : i32 to vector<2x8x8xi32>
      %19 = arith.addi %18, %16 : vector<2x8x8xi32>
      %c8_i32_11 = arith.constant 8 : i32
      %20 = arith.muli %arg0, %c8_i32_11 : i32
      %21 = vector.broadcast %20 : i32 to vector<2x8x8xi32>
      %22 = arith.addi %21, %15 : vector<2x8x8xi32>
      %23 = arith.cmpi sle, %19, %22 : vector<2x8x8xi32>
      %cst_12 = arith.constant -1.000000e+30 : f32
      %24 = vector.broadcast %cst_12 : f32 to vector<2x8x8xf32>
      %25 = arith.select %23, %14, %24 : vector<2x8x8xi1>, vector<2x8x8xf32>
      %c0_13 = arith.constant 0 : index
      %c0_14 = arith.constant 0 : index
      %c0_15 = arith.constant 0 : index
      %26 = vector.load %arg6[%c0_13, %c0_14, %c0_15] : memref<2x8x1xf32, #tpu.memory_space<vmem>>, vector<2x8x1xf32>
      %cst_16 = arith.constant dense<0xFF800000> : vector<2x8xf32>
      %27 = vector.multi_reduction <maximumf>, %25, %cst_16 [2] : vector<2x8x8xf32> to vector<2x8xf32>
      %28 = vector.shape_cast %27 : vector<2x8xf32> to vector<2x8x1xf32>
      %29 = arith.maximumf %26, %28 : vector<2x8x1xf32>
      %30 = arith.subf %26, %29 : vector<2x8x1xf32>
      %31 = math.exp %30 : vector<2x8x1xf32>
      %32 = vector.broadcast %29 : vector<2x8x1xf32> to vector<2x8x8xf32>
      %33 = arith.subf %25, %32 : vector<2x8x8xf32>
      %34 = math.exp %33 : vector<2x8x8xf32>
      %c0_17 = arith.constant 0 : index
      %c0_18 = arith.constant 0 : index
      %c0_19 = arith.constant 0 : index
      %35 = vector.load %arg7[%c0_17, %c0_18, %c0_19] : memref<2x8x1xf32, #tpu.memory_space<vmem>>, vector<2x8x1xf32>
      %36 = arith.mulf %31, %35 : vector<2x8x1xf32>
      %cst_20 = arith.constant dense<0.000000e+00> : vector<2x8xf32>
      %37 = vector.multi_reduction <add>, %34, %cst_20 [2] : vector<2x8x8xf32> to vector<2x8xf32>
      %38 = vector.shape_cast %37 : vector<2x8xf32> to vector<2x8x1xf32>
      %39 = arith.addf %36, %38 : vector<2x8x1xf32>
      %c0_21 = arith.constant 0 : index
      %c0_22 = arith.constant 0 : index
      %c0_23 = arith.constant 0 : index
      %40 = vector.load %arg7[%c0_21, %c0_22, %c0_23] : memref<2x8x1xf32, #tpu.memory_space<vmem>>, vector<2x8x1xf32>
      tpu.vector_store %arg7[%c0_21, %c0_22, %c0_23], %39 {strides = array<i32>} : memref<2x8x1xf32, #tpu.memory_space<vmem>>, vector<2x8x1xf32>,
      %c0_24 = arith.constant 0 : index
      %c0_25 = arith.constant 0 : index
      %c0_26 = arith.constant 0 : index
      %41 = vector.load %arg8[%c0_24, %c0_25, %c0_26] : memref<2x8x128xf32, #tpu.memory_space<vmem>>, vector<2x8x128xf32>
      %42 = vector.broadcast %31 : vector<2x8x1xf32> to vector<2x8x128xf32>
      %43 = arith.mulf %42, %41 : vector<2x8x128xf32>
      %44 = arith.truncf %34 : vector<2x8x8xf32> to vector<2x8x8xbf16>
      %c0_27 = arith.constant 0 : index
      %c0_28 = arith.constant 0 : index
      %c0_29 = arith.constant 0 : index
      %45 = vector.load %arg4[%c0_27, %c0_28, %c0_29] : memref<2x8x128xbf16, #tpu.memory_space<vmem>>, vector<2x8x128xbf16>
      "tpu.trace_start"() <{level = 10 : i32, message = "hqk,hkd->hqd"}> : () -> ()
      %cst_30 = arith.constant dense<0.000000e+00> : vector<2x8x128xf32>
      %46 = tpu.matmul %44, %45, %cst_30 {dimension_numbers = #tpu.dot_dimension_numbers<[2], [1], [1], [2], [0, 0, 0, 1, 1, 2], [0], [0]>} : vector<2x8x8xbf16>, vector<2x8x128xbf16>, vector<2x8x128xf32> -> vector<2x8x128xf32>
      "tpu.trace_stop"() : () -> ()
      %47 = arith.addf %43, %46 : vector<2x8x128xf32>
      %c0_31 = arith.constant 0 : index
      %c0_32 = arith.constant 0 : index
      %c0_33 = arith.constant 0 : index
      %48 = vector.load %arg8[%c0_31, %c0_32, %c0_33] : memref<2x8x128xf32, #tpu.memory_space<vmem>>, vector<2x8x128xf32>
      tpu.vector_store %arg8[%c0_31, %c0_32, %c0_33], %47 {strides = array<i32>} : memref<2x8x128xf32, #tpu.memory_space<vmem>>, vector<2x8x128xf32>,
      %c0_34 = arith.constant 0 : index
      %c0_35 = arith.constant 0 : index
      %c0_36 = arith.constant 0 : index
      %49 = vector.load %arg6[%c0_34, %c0_35, %c0_36] : memref<2x8x1xf32, #tpu.memory_space<vmem>>, vector<2x8x1xf32>
      tpu.vector_store %arg6[%c0_34, %c0_35, %c0_36], %29 {strides = array<i32>} : memref<2x8x1xf32, #tpu.memory_space<vmem>>, vector<2x8x1xf32>,
    } else {
    }
    %c0_i32_3 = arith.constant 0 : i32
    %9 = arith.cmpi eq, %arg1, %c0_i32_3 : i32
    %10 = arith.extui %9 : i1 to i32
    %c0_i32_4 = arith.constant 0 : i32
    %11 = arith.cmpi ne, %10, %c0_i32_4 : i32
    scf.if %11 {
      %c0 = arith.constant 0 : index
      %c0_5 = arith.constant 0 : index
      %c0_6 = arith.constant 0 : index
      %12 = vector.load %arg8[%c0, %c0_5, %c0_6] : memref<2x8x128xf32, #tpu.memory_space<vmem>>, vector<2x8x128xf32>
      %c0_7 = arith.constant 0 : index
      %c0_8 = arith.constant 0 : index
      %c0_9 = arith.constant 0 : index
      %13 = vector.load %arg7[%c0_7, %c0_8, %c0_9] : memref<2x8x1xf32, #tpu.memory_space<vmem>>, vector<2x8x1xf32>
      %14 = vector.broadcast %13 : vector<2x8x1xf32> to vector<2x8x128xf32>
      %15 = arith.divf %12, %14 : vector<2x8x128xf32>
      %16 = arith.truncf %15 : vector<2x8x128xf32> to vector<2x8x128xbf16>
      %c0_10 = arith.constant 0 : index
      %c0_11 = arith.constant 0 : index
      %c0_12 = arith.constant 0 : index
      %17 = vector.load %arg5[%c0_10, %c0_11, %c0_12] : memref<2x8x128xbf16, #tpu.memory_space<vmem>>, vector<2x8x128xbf16>
      tpu.vector_store %arg5[%c0_10, %c0_11, %c0_12], %16 {strides = array<i32>} : memref<2x8x128xbf16, #tpu.memory_space<vmem>>, vector<2x8x128xbf16>,
    } else {
    }
    return
  }
  func.func @transform_0(%arg0: i32, %arg1: i32) -> (i32, i32, i32) {
    %c0_i32 = arith.constant 0 : i32
    %c0_i32_0 = arith.constant 0 : i32
    %c0_i32_1 = arith.constant 0 : i32
    return %c0_i32, %arg0, %c0_i32_0 : i32, i32, i32
  }
  func.func @transform_1(%arg0: i32, %arg1: i32) -> (i32, i32, i32) {
    %c0_i32 = arith.constant 0 : i32
    %c0_i32_0 = arith.constant 0 : i32
    %c0_i32_1 = arith.constant 0 : i32
    return %c0_i32, %arg1, %c0_i32_0 : i32, i32, i32
  }
  func.func @transform_2(%arg0: i32, %arg1: i32) -> (i32, i32, i32) {
    %c0_i32 = arith.constant 0 : i32
    %c0_i32_0 = arith.constant 0 : i32
    %c0_i32_1 = arith.constant 0 : i32
    return %c0_i32, %arg1, %c0_i32_0 : i32, i32, i32
  }
  func.func @transform_3(%arg0: i32, %arg1: i32) -> (i32, i32, i32) {
    %c0_i32 = arith.constant 0 : i32
    %c0_i32_0 = arith.constant 0 : i32
    %c0_i32_1 = arith.constant 0 : i32
    return %c0_i32, %arg0, %c0_i32_0 : i32, i32, i32
  }
}

module attributes {stable_mosaic.version = 11 : i64} {
  func.func @add_rmsnorm_kernel(%arg0: i32, %arg1: memref<8x256xbf16, #tpu.memory_space<vmem>>, %arg2: memref<8x256xbf16, #tpu.memory_space<vmem>>, %arg3: memref<1x256xf32, #tpu.memory_space<vmem>>, %arg4: memref<8x256xbf16, #tpu.memory_space<vmem>>, %arg5: memref<8x256xbf16, #tpu.memory_space<vmem>>) attributes {dimension_semantics = [#tpu.dimension_semantics<parallel>], iteration_bounds = array<i64: 1>, scalar_prefetch = 0 : i64, scratch_operands = 0 : i64, tpu.core_type = #tpu.core_type<tc>, window_params = [{transform_indices = @transform_0, window_bounds = array<i64: 8, 256>}, {transform_indices = @transform_1, window_bounds = array<i64: 8, 256>}, {pipeline_mode = #tpu.pipeline_mode<synchronous>, transform_indices = @transform_2, window_bounds = array<i64: 1, 256>}, {transform_indices = @transform_3, window_bounds = array<i64: 8, 256>}, {transform_indices = @transform_4, window_bounds = array<i64: 8, 256>}]} {
    %c0 = arith.constant 0 : index
    %c0_0 = arith.constant 0 : index
    %0 = vector.load %arg1[%c0, %c0_0] : memref<8x256xbf16, #tpu.memory_space<vmem>>, vector<8x256xbf16>
    %1 = arith.extf %0 : vector<8x256xbf16> to vector<8x256xf32>
    %c0_1 = arith.constant 0 : index
    %c0_2 = arith.constant 0 : index
    %2 = vector.load %arg2[%c0_1, %c0_2] : memref<8x256xbf16, #tpu.memory_space<vmem>>, vector<8x256xbf16>
    %3 = arith.extf %2 : vector<8x256xbf16> to vector<8x256xf32>
    %4 = arith.addf %1, %3 : vector<8x256xf32>
    %5 = arith.mulf %4, %4 : vector<8x256xf32>
    %cst = arith.constant dense<0.000000e+00> : vector<8xf32>
    %6 = vector.multi_reduction <add>, %5, %cst [1] : vector<8x256xf32> to vector<8xf32>
    %7 = vector.shape_cast %6 : vector<8xf32> to vector<8x1xf32>
    %cst_3 = arith.constant 2.560000e+02 : f32
    %8 = vector.broadcast %cst_3 : f32 to vector<8x1xf32>
    %9 = arith.divf %7, %8 : vector<8x1xf32>
    %cst_4 = arith.constant 9.99999997E-7 : f32
    %10 = vector.broadcast %cst_4 : f32 to vector<8x1xf32>
    %11 = arith.addf %9, %10 : vector<8x1xf32>
    %12 = math.rsqrt %11 : vector<8x1xf32>
    %13 = vector.broadcast %12 : vector<8x1xf32> to vector<8x256xf32>
    %14 = arith.mulf %4, %13 : vector<8x256xf32>
    %c0_5 = arith.constant 0 : index
    %c0_6 = arith.constant 0 : index
    %15 = vector.load %arg3[%c0_5, %c0_6] : memref<1x256xf32, #tpu.memory_space<vmem>>, vector<1x256xf32>
    %16 = vector.broadcast %15 : vector<1x256xf32> to vector<8x256xf32>
    %17 = arith.mulf %14, %16 : vector<8x256xf32>
    %18 = arith.truncf %17 : vector<8x256xf32> to vector<8x256xbf16>
    %c0_7 = arith.constant 0 : index
    %c0_8 = arith.constant 0 : index
    %19 = vector.load %arg4[%c0_7, %c0_8] : memref<8x256xbf16, #tpu.memory_space<vmem>>, vector<8x256xbf16>
    tpu.vector_store %arg4[%c0_7, %c0_8], %18 {strides = array<i32>} : memref<8x256xbf16, #tpu.memory_space<vmem>>, vector<8x256xbf16>,
    %20 = arith.truncf %4 : vector<8x256xf32> to vector<8x256xbf16>
    %c0_9 = arith.constant 0 : index
    %c0_10 = arith.constant 0 : index
    %21 = vector.load %arg5[%c0_9, %c0_10] : memref<8x256xbf16, #tpu.memory_space<vmem>>, vector<8x256xbf16>
    tpu.vector_store %arg5[%c0_9, %c0_10], %20 {strides = array<i32>} : memref<8x256xbf16, #tpu.memory_space<vmem>>, vector<8x256xbf16>,
    return
  }
  func.func @transform_0(%arg0: i32) -> (i32, i32) {
    %c0_i32 = arith.constant 0 : i32
    %c0_i32_0 = arith.constant 0 : i32
    return %arg0, %c0_i32 : i32, i32
  }
  func.func @transform_1(%arg0: i32) -> (i32, i32) {
    %c0_i32 = arith.constant 0 : i32
    %c0_i32_0 = arith.constant 0 : i32
    return %arg0, %c0_i32 : i32, i32
  }
  func.func @transform_2(%arg0: i32) -> (i32, i32) {
    %c0_i32 = arith.constant 0 : i32
    %c0_i32_0 = arith.constant 0 : i32
    %c0_i32_1 = arith.constant 0 : i32
    return %c0_i32, %c0_i32_0 : i32, i32
  }
  func.func @transform_3(%arg0: i32) -> (i32, i32) {
    %c0_i32 = arith.constant 0 : i32
    %c0_i32_0 = arith.constant 0 : i32
    return %arg0, %c0_i32 : i32, i32
  }
  func.func @transform_4(%arg0: i32) -> (i32, i32) {
    %c0_i32 = arith.constant 0 : i32
    %c0_i32_0 = arith.constant 0 : i32
    return %arg0, %c0_i32 : i32, i32
  }
}

module attributes {stable_mosaic.version = 11 : i64} {
  func.func @gate_up_silu_kernel(%arg0: i32, %arg1: i32, %arg2: i32, %arg3: memref<8x256xbf16, #tpu.memory_space<vmem>>, %arg4: memref<256x256xbf16, #tpu.memory_space<vmem>>, %arg5: memref<256x256xbf16, #tpu.memory_space<vmem>>, %arg6: memref<8x256xbf16, #tpu.memory_space<vmem>>, %arg7: memref<8x256xf32, #tpu.memory_space<vmem>>, %arg8: memref<8x256xf32, #tpu.memory_space<vmem>>) attributes {dimension_semantics = [#tpu.dimension_semantics<parallel>, #tpu.dimension_semantics<parallel>, #tpu.dimension_semantics<arbitrary>], iteration_bounds = array<i64: 1, 4, 1>, scalar_prefetch = 0 : i64, scratch_operands = 2 : i64, tpu.core_type = #tpu.core_type<tc>, window_params = [{transform_indices = @transform_0, window_bounds = array<i64: 8, 256>}, {transform_indices = @transform_1, window_bounds = array<i64: 256, 256>}, {transform_indices = @transform_2, window_bounds = array<i64: 256, 256>}, {transform_indices = @transform_3, window_bounds = array<i64: 8, 256>}]} {
    %c0_i32 = arith.constant 0 : i32
    %0 = arith.cmpi eq, %arg2, %c0_i32 : i32
    %1 = arith.extui %0 : i1 to i32
    %c0_i32_0 = arith.constant 0 : i32
    %2 = arith.cmpi ne, %1, %c0_i32_0 : i32
    scf.if %2 {
      %cst_17 = arith.constant 0.000000e+00 : f32
      %17 = vector.broadcast %cst_17 : f32 to vector<8x256xf32>
      %c0_18 = arith.constant 0 : index
      %c0_19 = arith.constant 0 : index
      %18 = vector.load %arg7[%c0_18, %c0_19] : memref<8x256xf32, #tpu.memory_space<vmem>>, vector<8x256xf32>
      tpu.vector_store %arg7[%c0_18, %c0_19], %17 {strides = array<i32>} : memref<8x256xf32, #tpu.memory_space<vmem>>, vector<8x256xf32>,
      %cst_20 = arith.constant 0.000000e+00 : f32
      %19 = vector.broadcast %cst_20 : f32 to vector<8x256xf32>
      %c0_21 = arith.constant 0 : index
      %c0_22 = arith.constant 0 : index
      %20 = vector.load %arg8[%c0_21, %c0_22] : memref<8x256xf32, #tpu.memory_space<vmem>>, vector<8x256xf32>
      tpu.vector_store %arg8[%c0_21, %c0_22], %19 {strides = array<i32>} : memref<8x256xf32, #tpu.memory_space<vmem>>, vector<8x256xf32>,
    } else {
    }
    %c0 = arith.constant 0 : index
    %c0_1 = arith.constant 0 : index
    %3 = vector.load %arg3[%c0, %c0_1] : memref<8x256xbf16, #tpu.memory_space<vmem>>, vector<8x256xbf16>
    %c0_2 = arith.constant 0 : index
    %c0_3 = arith.constant 0 : index
    %4 = vector.load %arg7[%c0_2, %c0_3] : memref<8x256xf32, #tpu.memory_space<vmem>>, vector<8x256xf32>
    %c0_4 = arith.constant 0 : index
    %c0_5 = arith.constant 0 : index
    %5 = vector.load %arg4[%c0_4, %c0_5] : memref<256x256xbf16, #tpu.memory_space<vmem>>, vector<256x256xbf16>
    %cst = arith.constant dense<0.000000e+00> : vector<8x256xf32>
    %6 = tpu.matmul %3, %5, %cst {dimension_numbers = #tpu.dot_dimension_numbers<[1], [0], [0], [1], [0, 0, 1, 1], [], []>} : vector<8x256xbf16>, vector<256x256xbf16>, vector<8x256xf32> -> vector<8x256xf32>
    %7 = arith.addf %4, %6 : vector<8x256xf32>
    %c0_6 = arith.constant 0 : index
    %c0_7 = arith.constant 0 : index
    %8 = vector.load %arg7[%c0_6, %c0_7] : memref<8x256xf32, #tpu.memory_space<vmem>>, vector<8x256xf32>
    tpu.vector_store %arg7[%c0_6, %c0_7], %7 {strides = array<i32>} : memref<8x256xf32, #tpu.memory_space<vmem>>, vector<8x256xf32>,
    %c0_8 = arith.constant 0 : index
    %c0_9 = arith.constant 0 : index
    %9 = vector.load %arg8[%c0_8, %c0_9] : memref<8x256xf32, #tpu.memory_space<vmem>>, vector<8x256xf32>
    %c0_10 = arith.constant 0 : index
    %c0_11 = arith.constant 0 : index
    %10 = vector.load %arg5[%c0_10, %c0_11] : memref<256x256xbf16, #tpu.memory_space<vmem>>, vector<256x256xbf16>
    %cst_12 = arith.constant dense<0.000000e+00> : vector<8x256xf32>
    %11 = tpu.matmul %3, %10, %cst_12 {dimension_numbers = #tpu.dot_dimension_numbers<[1], [0], [0], [1], [0, 0, 1, 1], [], []>} : vector<8x256xbf16>, vector<256x256xbf16>, vector<8x256xf32> -> vector<8x256xf32>
    %12 = arith.addf %9, %11 : vector<8x256xf32>
    %c0_13 = arith.constant 0 : index
    %c0_14 = arith.constant 0 : index
    %13 = vector.load %arg8[%c0_13, %c0_14] : memref<8x256xf32, #tpu.memory_space<vmem>>, vector<8x256xf32>
    tpu.vector_store %arg8[%c0_13, %c0_14], %12 {strides = array<i32>} : memref<8x256xf32, #tpu.memory_space<vmem>>, vector<8x256xf32>,
    %c0_i32_15 = arith.constant 0 : i32
    %14 = arith.cmpi eq, %arg2, %c0_i32_15 : i32
    %15 = arith.extui %14 : i1 to i32
    %c0_i32_16 = arith.constant 0 : i32
    %16 = arith.cmpi ne, %15, %c0_i32_16 : i32
    scf.if %16 {
      %c0_17 = arith.constant 0 : index
      %c0_18 = arith.constant 0 : index
      %17 = vector.load %arg7[%c0_17, %c0_18] : memref<8x256xf32, #tpu.memory_space<vmem>>, vector<8x256xf32>
      %cst_19 = arith.constant 0.000000e+00 : f32
      %18 = vector.broadcast %cst_19 : f32 to vector<8x256xf32>
      %19 = arith.subf %18, %17 : vector<8x256xf32>
      %20 = math.exp %19 : vector<8x256xf32>
      %cst_20 = arith.constant 1.000000e+00 : f32
      %21 = vector.broadcast %cst_20 : f32 to vector<8x256xf32>
      %22 = arith.addf %21, %20 : vector<8x256xf32>
      %23 = arith.divf %17, %22 : vector<8x256xf32>
      %c0_21 = arith.constant 0 : index
      %c0_22 = arith.constant 0 : index
      %24 = vector.load %arg8[%c0_21, %c0_22] : memref<8x256xf32, #tpu.memory_space<vmem>>, vector<8x256xf32>
      %25 = arith.mulf %23, %24 : vector<8x256xf32>
      %26 = arith.truncf %25 : vector<8x256xf32> to vector<8x256xbf16>
      %c0_23 = arith.constant 0 : index
      %c0_24 = arith.constant 0 : index
      %27 = vector.load %arg6[%c0_23, %c0_24] : memref<8x256xbf16, #tpu.memory_space<vmem>>, vector<8x256xbf16>
      tpu.vector_store %arg6[%c0_23, %c0_24], %26 {strides = array<i32>} : memref<8x256xbf16, #tpu.memory_space<vmem>>, vector<8x256xbf16>,
    } else {
    }
    return
  }
  func.func @transform_0(%arg0: i32, %arg1: i32, %arg2: i32) -> (i32, i32) {
    %c0_i32 = arith.constant 0 : i32
    return %arg0, %arg2 : i32, i32
  }
  func.func @transform_1(%arg0: i32, %arg1: i32, %arg2: i32) -> (i32, i32) {
    %c0_i32 = arith.constant 0 : i32
    return %arg2, %arg1 : i32, i32
  }
  func.func @transform_2(%arg0: i32, %arg1: i32, %arg2: i32) -> (i32, i32) {
    %c0_i32 = arith.constant 0 : i32
    return %arg2, %arg1 : i32, i32
  }
  func.func @transform_3(%arg0: i32, %arg1: i32, %arg2: i32) -> (i32, i32) {
    %c0_i32 = arith.constant 0 : i32
    return %arg0, %arg1 : i32, i32
  }
}

module attributes {stable_mosaic.version = 11 : i64} {
  func.func @matmul_kernel(%arg0: i32, %arg1: i32, %arg2: i32, %arg3: memref<8x256xbf16, #tpu.memory_space<vmem>>, %arg4: memref<256x256xbf16, #tpu.memory_space<vmem>>, %arg5: memref<8x256xbf16, #tpu.memory_space<vmem>>, %arg6: memref<8x256xf32, #tpu.memory_space<vmem>>) attributes {dimension_semantics = [#tpu.dimension_semantics<parallel>, #tpu.dimension_semantics<parallel>, #tpu.dimension_semantics<arbitrary>], iteration_bounds = array<i64: 1, 2, 1>, scalar_prefetch = 0 : i64, scratch_operands = 1 : i64, tpu.core_type = #tpu.core_type<tc>, window_params = [{transform_indices = @transform_0, window_bounds = array<i64: 8, 256>}, {transform_indices = @transform_1, window_bounds = array<i64: 256, 256>}, {transform_indices = @transform_2, window_bounds = array<i64: 8, 256>}]} {
    %c0_i32 = arith.constant 0 : i32
    %0 = arith.cmpi eq, %arg2, %c0_i32 : i32
    %1 = arith.extui %0 : i1 to i32
    %c0_i32_0 = arith.constant 0 : i32
    %2 = arith.cmpi ne, %1, %c0_i32_0 : i32
    scf.if %2 {
      %cst_10 = arith.constant 0.000000e+00 : f32
      %12 = vector.broadcast %cst_10 : f32 to vector<8x256xf32>
      %c0_11 = arith.constant 0 : index
      %c0_12 = arith.constant 0 : index
      %13 = vector.load %arg6[%c0_11, %c0_12] : memref<8x256xf32, #tpu.memory_space<vmem>>, vector<8x256xf32>
      tpu.vector_store %arg6[%c0_11, %c0_12], %12 {strides = array<i32>} : memref<8x256xf32, #tpu.memory_space<vmem>>, vector<8x256xf32>,
    } else {
    }
    %c0 = arith.constant 0 : index
    %c0_1 = arith.constant 0 : index
    %3 = vector.load %arg6[%c0, %c0_1] : memref<8x256xf32, #tpu.memory_space<vmem>>, vector<8x256xf32>
    %c0_2 = arith.constant 0 : index
    %c0_3 = arith.constant 0 : index
    %4 = vector.load %arg3[%c0_2, %c0_3] : memref<8x256xbf16, #tpu.memory_space<vmem>>, vector<8x256xbf16>
    %c0_4 = arith.constant 0 : index
    %c0_5 = arith.constant 0 : index
    %5 = vector.load %arg4[%c0_4, %c0_5] : memref<256x256xbf16, #tpu.memory_space<vmem>>, vector<256x256xbf16>
    %cst = arith.constant dense<0.000000e+00> : vector<8x256xf32>
    %6 = tpu.matmul %4, %5, %cst {dimension_numbers = #tpu.dot_dimension_numbers<[1], [0], [0], [1], [0, 0, 1, 1], [], []>} : vector<8x256xbf16>, vector<256x256xbf16>, vector<8x256xf32> -> vector<8x256xf32>
    %7 = arith.addf %3, %6 : vector<8x256xf32>
    %c0_6 = arith.constant 0 : index
    %c0_7 = arith.constant 0 : index
    %8 = vector.load %arg6[%c0_6, %c0_7] : memref<8x256xf32, #tpu.memory_space<vmem>>, vector<8x256xf32>
    tpu.vector_store %arg6[%c0_6, %c0_7], %7 {strides = array<i32>} : memref<8x256xf32, #tpu.memory_space<vmem>>, vector<8x256xf32>,
    %c0_i32_8 = arith.constant 0 : i32
    %9 = arith.cmpi eq, %arg2, %c0_i32_8 : i32
    %10 = arith.extui %9 : i1 to i32
    %c0_i32_9 = arith.constant 0 : i32
    %11 = arith.cmpi ne, %10, %c0_i32_9 : i32
    scf.if %11 {
      %c0_10 = arith.constant 0 : index
      %c0_11 = arith.constant 0 : index
      %12 = vector.load %arg6[%c0_10, %c0_11] : memref<8x256xf32, #tpu.memory_space<vmem>>, vector<8x256xf32>
      %13 = arith.truncf %12 : vector<8x256xf32> to vector<8x256xbf16>
      %c0_12 = arith.constant 0 : index
      %c0_13 = arith.constant 0 : index
      %14 = vector.load %arg5[%c0_12, %c0_13] : memref<8x256xbf16, #tpu.memory_space<vmem>>, vector<8x256xbf16>
      tpu.vector_store %arg5[%c0_12, %c0_13], %13 {strides = array<i32>} : memref<8x256xbf16, #tpu.memory_space<vmem>>, vector<8x256xbf16>,
    } else {
    }
    return
  }
  func.func @transform_0(%arg0: i32, %arg1: i32, %arg2: i32) -> (i32, i32) {
    %c0_i32 = arith.constant 0 : i32
    return %arg0, %arg2 : i32, i32
  }
  func.func @transform_1(%arg0: i32, %arg1: i32, %arg2: i32) -> (i32, i32) {
    %c0_i32 = arith.constant 0 : i32
    return %arg2, %arg1 : i32, i32
  }
  func.func @transform_2(%arg0: i32, %arg1: i32, %arg2: i32) -> (i32, i32) {
    %c0_i32 = arith.constant 0 : i32
    return %arg0, %arg1 : i32, i32
  }
}

module attributes {stable_mosaic.version = 11 : i64} {
  func.func @matmul_kernel(%arg0: i32, %arg1: i32, %arg2: i32, %arg3: memref<8x256xbf16, #tpu.memory_space<vmem>>, %arg4: memref<256x256xbf16, #tpu.memory_space<vmem>>, %arg5: memref<8x256xbf16, #tpu.memory_space<vmem>>, %arg6: memref<8x256xf32, #tpu.memory_space<vmem>>) attributes {dimension_semantics = [#tpu.dimension_semantics<parallel>, #tpu.dimension_semantics<parallel>, #tpu.dimension_semantics<arbitrary>], iteration_bounds = array<i64: 1, 1, 1>, scalar_prefetch = 0 : i64, scratch_operands = 1 : i64, tpu.core_type = #tpu.core_type<tc>, window_params = [{transform_indices = @transform_0, window_bounds = array<i64: 8, 256>}, {transform_indices = @transform_1, window_bounds = array<i64: 256, 256>}, {transform_indices = @transform_2, window_bounds = array<i64: 8, 256>}]} {
    %c0_i32 = arith.constant 0 : i32
    %0 = arith.cmpi eq, %arg2, %c0_i32 : i32
    %1 = arith.extui %0 : i1 to i32
    %c0_i32_0 = arith.constant 0 : i32
    %2 = arith.cmpi ne, %1, %c0_i32_0 : i32
    scf.if %2 {
      %cst_10 = arith.constant 0.000000e+00 : f32
      %12 = vector.broadcast %cst_10 : f32 to vector<8x256xf32>
      %c0_11 = arith.constant 0 : index
      %c0_12 = arith.constant 0 : index
      %13 = vector.load %arg6[%c0_11, %c0_12] : memref<8x256xf32, #tpu.memory_space<vmem>>, vector<8x256xf32>
      tpu.vector_store %arg6[%c0_11, %c0_12], %12 {strides = array<i32>} : memref<8x256xf32, #tpu.memory_space<vmem>>, vector<8x256xf32>,
    } else {
    }
    %c0 = arith.constant 0 : index
    %c0_1 = arith.constant 0 : index
    %3 = vector.load %arg6[%c0, %c0_1] : memref<8x256xf32, #tpu.memory_space<vmem>>, vector<8x256xf32>
    %c0_2 = arith.constant 0 : index
    %c0_3 = arith.constant 0 : index
    %4 = vector.load %arg3[%c0_2, %c0_3] : memref<8x256xbf16, #tpu.memory_space<vmem>>, vector<8x256xbf16>
    %c0_4 = arith.constant 0 : index
    %c0_5 = arith.constant 0 : index
    %5 = vector.load %arg4[%c0_4, %c0_5] : memref<256x256xbf16, #tpu.memory_space<vmem>>, vector<256x256xbf16>
    %cst = arith.constant dense<0.000000e+00> : vector<8x256xf32>
    %6 = tpu.matmul %4, %5, %cst {dimension_numbers = #tpu.dot_dimension_numbers<[1], [0], [0], [1], [0, 0, 1, 1], [], []>} : vector<8x256xbf16>, vector<256x256xbf16>, vector<8x256xf32> -> vector<8x256xf32>
    %7 = arith.addf %3, %6 : vector<8x256xf32>
    %c0_6 = arith.constant 0 : index
    %c0_7 = arith.constant 0 : index
    %8 = vector.load %arg6[%c0_6, %c0_7] : memref<8x256xf32, #tpu.memory_space<vmem>>, vector<8x256xf32>
    tpu.vector_store %arg6[%c0_6, %c0_7], %7 {strides = array<i32>} : memref<8x256xf32, #tpu.memory_space<vmem>>, vector<8x256xf32>,
    %c0_i32_8 = arith.constant 0 : i32
    %9 = arith.cmpi eq, %arg2, %c0_i32_8 : i32
    %10 = arith.extui %9 : i1 to i32
    %c0_i32_9 = arith.constant 0 : i32
    %11 = arith.cmpi ne, %10, %c0_i32_9 : i32
    scf.if %11 {
      %c0_10 = arith.constant 0 : index
      %c0_11 = arith.constant 0 : index
      %12 = vector.load %arg6[%c0_10, %c0_11] : memref<8x256xf32, #tpu.memory_space<vmem>>, vector<8x256xf32>
      %13 = arith.truncf %12 : vector<8x256xf32> to vector<8x256xbf16>
      %c0_12 = arith.constant 0 : index
      %c0_13 = arith.constant 0 : index
      %14 = vector.load %arg5[%c0_12, %c0_13] : memref<8x256xbf16, #tpu.memory_space<vmem>>, vector<8x256xbf16>
      tpu.vector_store %arg5[%c0_12, %c0_13], %13 {strides = array<i32>} : memref<8x256xbf16, #tpu.memory_space<vmem>>, vector<8x256xbf16>,
    } else {
    }
    return
  }
  func.func @transform_0(%arg0: i32, %arg1: i32, %arg2: i32) -> (i32, i32) {
    %c0_i32 = arith.constant 0 : i32
    return %arg0, %arg2 : i32, i32
  }
  func.func @transform_1(%arg0: i32, %arg1: i32, %arg2: i32) -> (i32, i32) {
    %c0_i32 = arith.constant 0 : i32
    return %arg2, %arg1 : i32, i32
  }
  func.func @transform_2(%arg0: i32, %arg1: i32, %arg2: i32) -> (i32, i32) {
    %c0_i32 = arith.constant 0 : i32
    return %arg0, %arg1 : i32, i32
  }
}

module attributes {stable_mosaic.version = 11 : i64} {
  func.func @matmul_kernel(%arg0: i32, %arg1: i32, %arg2: i32, %arg3: memref<8x512xbf16, #tpu.memory_space<vmem>>, %arg4: memref<512x256xbf16, #tpu.memory_space<vmem>>, %arg5: memref<8x256xbf16, #tpu.memory_space<vmem>>, %arg6: memref<8x256xf32, #tpu.memory_space<vmem>>) attributes {dimension_semantics = [#tpu.dimension_semantics<parallel>, #tpu.dimension_semantics<parallel>, #tpu.dimension_semantics<arbitrary>], iteration_bounds = array<i64: 1, 1, 2>, scalar_prefetch = 0 : i64, scratch_operands = 1 : i64, tpu.core_type = #tpu.core_type<tc>, window_params = [{transform_indices = @transform_0, window_bounds = array<i64: 8, 512>}, {transform_indices = @transform_1, window_bounds = array<i64: 512, 256>}, {transform_indices = @transform_2, window_bounds = array<i64: 8, 256>}]} {
    %c0_i32 = arith.constant 0 : i32
    %0 = arith.cmpi eq, %arg2, %c0_i32 : i32
    %1 = arith.extui %0 : i1 to i32
    %c0_i32_0 = arith.constant 0 : i32
    %2 = arith.cmpi ne, %1, %c0_i32_0 : i32
    scf.if %2 {
      %cst_9 = arith.constant 0.000000e+00 : f32
      %12 = vector.broadcast %cst_9 : f32 to vector<8x256xf32>
      %c0_10 = arith.constant 0 : index
      %c0_11 = arith.constant 0 : index
      %13 = vector.load %arg6[%c0_10, %c0_11] : memref<8x256xf32, #tpu.memory_space<vmem>>, vector<8x256xf32>
      tpu.vector_store %arg6[%c0_10, %c0_11], %12 {strides = array<i32>} : memref<8x256xf32, #tpu.memory_space<vmem>>, vector<8x256xf32>,
    } else {
    }
    %c0 = arith.constant 0 : index
    %c0_1 = arith.constant 0 : index
    %3 = vector.load %arg6[%c0, %c0_1] : memref<8x256xf32, #tpu.memory_space<vmem>>, vector<8x256xf32>
    %c0_2 = arith.constant 0 : index
    %c0_3 = arith.constant 0 : index
    %4 = vector.load %arg3[%c0_2, %c0_3] : memref<8x512xbf16, #tpu.memory_space<vmem>>, vector<8x512xbf16>
    %c0_4 = arith.constant 0 : index
    %c0_5 = arith.constant 0 : index
    %5 = vector.load %arg4[%c0_4, %c0_5] : memref<512x256xbf16, #tpu.memory_space<vmem>>, vector<512x256xbf16>
    %cst = arith.constant dense<0.000000e+00> : vector<8x256xf32>
    %6 = tpu.matmul %4, %5, %cst {dimension_numbers = #tpu.dot_dimension_numbers<[1], [0], [0], [1], [0, 0, 1, 1], [], []>} : vector<8x512xbf16>, vector<512x256xbf16>, vector<8x256xf32> -> vector<8x256xf32>
    %7 = arith.addf %3, %6 : vector<8x256xf32>
    %c0_6 = arith.constant 0 : index
    %c0_7 = arith.constant 0 : index
    %8 = vector.load %arg6[%c0_6, %c0_7] : memref<8x256xf32, #tpu.memory_space<vmem>>, vector<8x256xf32>
    tpu.vector_store %arg6[%c0_6, %c0_7], %7 {strides = array<i32>} : memref<8x256xf32, #tpu.memory_space<vmem>>, vector<8x256xf32>,
    %c1_i32 = arith.constant 1 : i32
    %9 = arith.cmpi eq, %arg2, %c1_i32 : i32
    %10 = arith.extui %9 : i1 to i32
    %c0_i32_8 = arith.constant 0 : i32
    %11 = arith.cmpi ne, %10, %c0_i32_8 : i32
    scf.if %11 {
      %c0_9 = arith.constant 0 : index
      %c0_10 = arith.constant 0 : index
      %12 = vector.load %arg6[%c0_9, %c0_10] : memref<8x256xf32, #tpu.memory_space<vmem>>, vector<8x256xf32>
      %13 = arith.truncf %12 : vector<8x256xf32> to vector<8x256xbf16>
      %c0_11 = arith.constant 0 : index
      %c0_12 = arith.constant 0 : index
      %14 = vector.load %arg5[%c0_11, %c0_12] : memref<8x256xbf16, #tpu.memory_space<vmem>>, vector<8x256xbf16>
      tpu.vector_store %arg5[%c0_11, %c0_12], %13 {strides = array<i32>} : memref<8x256xbf16, #tpu.memory_space<vmem>>, vector<8x256xbf16>,
    } else {
    }
    return
  }
  func.func @transform_0(%arg0: i32, %arg1: i32, %arg2: i32) -> (i32, i32) {
    %c0_i32 = arith.constant 0 : i32
    return %arg0, %arg2 : i32, i32
  }
  func.func @transform_1(%arg0: i32, %arg1: i32, %arg2: i32) -> (i32, i32) {
    %c0_i32 = arith.constant 0 : i32
    return %arg2, %arg1 : i32, i32
  }
  func.func @transform_2(%arg0: i32, %arg1: i32, %arg2: i32) -> (i32, i32) {
    %c0_i32 = arith.constant 0 : i32
    return %arg0, %arg1 : i32, i32
  }
}

module attributes {stable_mosaic.version = 11 : i64} {
  func.func @gate_up_silu_kernel(%arg0: i32, %arg1: i32, %arg2: i32, %arg3: memref<8x256xbf16, #tpu.memory_space<vmem>>, %arg4: memref<256x256xbf16, #tpu.memory_space<vmem>>, %arg5: memref<256x256xbf16, #tpu.memory_space<vmem>>, %arg6: memref<8x256xbf16, #tpu.memory_space<vmem>>, %arg7: memref<8x256xf32, #tpu.memory_space<vmem>>, %arg8: memref<8x256xf32, #tpu.memory_space<vmem>>) attributes {dimension_semantics = [#tpu.dimension_semantics<parallel>, #tpu.dimension_semantics<parallel>, #tpu.dimension_semantics<arbitrary>], iteration_bounds = array<i64: 1, 4, 1>, scalar_prefetch = 0 : i64, scratch_operands = 2 : i64, tpu.core_type = #tpu.core_type<tc>, window_params = [{transform_indices = @transform_0, window_bounds = array<i64: 8, 256>}, {transform_indices = @transform_1, window_bounds = array<i64: 256, 256>}, {transform_indices = @transform_2, window_bounds = array<i64: 256, 256>}, {transform_indices = @transform_3, window_bounds = array<i64: 8, 256>}]} {
    %c0_i32 = arith.constant 0 : i32
    %0 = arith.cmpi eq, %arg2, %c0_i32 : i32
    %1 = arith.extui %0 : i1 to i32
    %c0_i32_0 = arith.constant 0 : i32
    %2 = arith.cmpi ne, %1, %c0_i32_0 : i32
    scf.if %2 {
      %cst_17 = arith.constant 0.000000e+00 : f32
      %17 = vector.broadcast %cst_17 : f32 to vector<8x256xf32>
      %c0_18 = arith.constant 0 : index
      %c0_19 = arith.constant 0 : index
      %18 = vector.load %arg7[%c0_18, %c0_19] : memref<8x256xf32, #tpu.memory_space<vmem>>, vector<8x256xf32>
      tpu.vector_store %arg7[%c0_18, %c0_19], %17 {strides = array<i32>} : memref<8x256xf32, #tpu.memory_space<vmem>>, vector<8x256xf32>,
      %cst_20 = arith.constant 0.000000e+00 : f32
      %19 = vector.broadcast %cst_20 : f32 to vector<8x256xf32>
      %c0_21 = arith.constant 0 : index
      %c0_22 = arith.constant 0 : index
      %20 = vector.load %arg8[%c0_21, %c0_22] : memref<8x256xf32, #tpu.memory_space<vmem>>, vector<8x256xf32>
      tpu.vector_store %arg8[%c0_21, %c0_22], %19 {strides = array<i32>} : memref<8x256xf32, #tpu.memory_space<vmem>>, vector<8x256xf32>,
    } else {
    }
    %c0 = arith.constant 0 : index
    %c0_1 = arith.constant 0 : index
    %3 = vector.load %arg3[%c0, %c0_1] : memref<8x256xbf16, #tpu.memory_space<vmem>>, vector<8x256xbf16>
    %c0_2 = arith.constant 0 : index
    %c0_3 = arith.constant 0 : index
    %4 = vector.load %arg7[%c0_2, %c0_3] : memref<8x256xf32, #tpu.memory_space<vmem>>, vector<8x256xf32>
    %c0_4 = arith.constant 0 : index
    %c0_5 = arith.constant 0 : index
    %5 = vector.load %arg4[%c0_4, %c0_5] : memref<256x256xbf16, #tpu.memory_space<vmem>>, vector<256x256xbf16>
    %cst = arith.constant dense<0.000000e+00> : vector<8x256xf32>
    %6 = tpu.matmul %3, %5, %cst {dimension_numbers = #tpu.dot_dimension_numbers<[1], [0], [0], [1], [0, 0, 1, 1], [], []>} : vector<8x256xbf16>, vector<256x256xbf16>, vector<8x256xf32> -> vector<8x256xf32>
    %7 = arith.addf %4, %6 : vector<8x256xf32>
    %c0_6 = arith.constant 0 : index
    %c0_7 = arith.constant 0 : index
    %8 = vector.load %arg7[%c0_6, %c0_7] : memref<8x256xf32, #tpu.memory_space<vmem>>, vector<8x256xf32>
    tpu.vector_store %arg7[%c0_6, %c0_7], %7 {strides = array<i32>} : memref<8x256xf32, #tpu.memory_space<vmem>>, vector<8x256xf32>,
    %c0_8 = arith.constant 0 : index
    %c0_9 = arith.constant 0 : index
    %9 = vector.load %arg8[%c0_8, %c0_9] : memref<8x256xf32, #tpu.memory_space<vmem>>, vector<8x256xf32>
    %c0_10 = arith.constant 0 : index
    %c0_11 = arith.constant 0 : index
    %10 = vector.load %arg5[%c0_10, %c0_11] : memref<256x256xbf16, #tpu.memory_space<vmem>>, vector<256x256xbf16>
    %cst_12 = arith.constant dense<0.000000e+00> : vector<8x256xf32>
    %11 = tpu.matmul %3, %10, %cst_12 {dimension_numbers = #tpu.dot_dimension_numbers<[1], [0], [0], [1], [0, 0, 1, 1], [], []>} : vector<8x256xbf16>, vector<256x256xbf16>, vector<8x256xf32> -> vector<8x256xf32>
    %12 = arith.addf %9, %11 : vector<8x256xf32>
    %c0_13 = arith.constant 0 : index
    %c0_14 = arith.constant 0 : index
    %13 = vector.load %arg8[%c0_13, %c0_14] : memref<8x256xf32, #tpu.memory_space<vmem>>, vector<8x256xf32>
    tpu.vector_store %arg8[%c0_13, %c0_14], %12 {strides = array<i32>} : memref<8x256xf32, #tpu.memory_space<vmem>>, vector<8x256xf32>,
    %c0_i32_15 = arith.constant 0 : i32
    %14 = arith.cmpi eq, %arg2, %c0_i32_15 : i32
    %15 = arith.extui %14 : i1 to i32
    %c0_i32_16 = arith.constant 0 : i32
    %16 = arith.cmpi ne, %15, %c0_i32_16 : i32
    scf.if %16 {
      %c0_17 = arith.constant 0 : index
      %c0_18 = arith.constant 0 : index
      %17 = vector.load %arg7[%c0_17, %c0_18] : memref<8x256xf32, #tpu.memory_space<vmem>>, vector<8x256xf32>
      %cst_19 = arith.constant 0.000000e+00 : f32
      %18 = vector.broadcast %cst_19 : f32 to vector<8x256xf32>
      %19 = arith.subf %18, %17 : vector<8x256xf32>
      %20 = math.exp %19 : vector<8x256xf32>
      %cst_20 = arith.constant 1.000000e+00 : f32
      %21 = vector.broadcast %cst_20 : f32 to vector<8x256xf32>
      %22 = arith.addf %21, %20 : vector<8x256xf32>
      %23 = arith.divf %17, %22 : vector<8x256xf32>
      %c0_21 = arith.constant 0 : index
      %c0_22 = arith.constant 0 : index
      %24 = vector.load %arg8[%c0_21, %c0_22] : memref<8x256xf32, #tpu.memory_space<vmem>>, vector<8x256xf32>
      %25 = arith.mulf %23, %24 : vector<8x256xf32>
      %26 = arith.truncf %25 : vector<8x256xf32> to vector<8x256xbf16>
      %c0_23 = arith.constant 0 : index
      %c0_24 = arith.constant 0 : index
      %27 = vector.load %arg6[%c0_23, %c0_24] : memref<8x256xbf16, #tpu.memory_space<vmem>>, vector<8x256xbf16>
      tpu.vector_store %arg6[%c0_23, %c0_24], %26 {strides = array<i32>} : memref<8x256xbf16, #tpu.memory_space<vmem>>, vector<8x256xbf16>,
    } else {
    }
    return
  }
  func.func @transform_0(%arg0: i32, %arg1: i32, %arg2: i32) -> (i32, i32) {
    %c0_i32 = arith.constant 0 : i32
    return %arg0, %arg2 : i32, i32
  }
  func.func @transform_1(%arg0: i32, %arg1: i32, %arg2: i32) -> (i32, i32) {
    %c0_i32 = arith.constant 0 : i32
    return %arg2, %arg1 : i32, i32
  }
  func.func @transform_2(%arg0: i32, %arg1: i32, %arg2: i32) -> (i32, i32) {
    %c0_i32 = arith.constant 0 : i32
    return %arg2, %arg1 : i32, i32
  }
  func.func @transform_3(%arg0: i32, %arg1: i32, %arg2: i32) -> (i32, i32) {
    %c0_i32 = arith.constant 0 : i32
    return %arg0, %arg1 : i32, i32
  }
}

module attributes {stable_mosaic.version = 11 : i64} {
  func.func @add_rmsnorm_kernel(%arg0: i32, %arg1: memref<8x256xbf16, #tpu.memory_space<vmem>>, %arg2: memref<8x256xbf16, #tpu.memory_space<vmem>>, %arg3: memref<1x256xf32, #tpu.memory_space<vmem>>, %arg4: memref<8x256xbf16, #tpu.memory_space<vmem>>, %arg5: memref<8x256xbf16, #tpu.memory_space<vmem>>) attributes {dimension_semantics = [#tpu.dimension_semantics<parallel>], iteration_bounds = array<i64: 1>, scalar_prefetch = 0 : i64, scratch_operands = 0 : i64, tpu.core_type = #tpu.core_type<tc>, window_params = [{transform_indices = @transform_0, window_bounds = array<i64: 8, 256>}, {transform_indices = @transform_1, window_bounds = array<i64: 8, 256>}, {pipeline_mode = #tpu.pipeline_mode<synchronous>, transform_indices = @transform_2, window_bounds = array<i64: 1, 256>}, {transform_indices = @transform_3, window_bounds = array<i64: 8, 256>}, {transform_indices = @transform_4, window_bounds = array<i64: 8, 256>}]} {
    %c0 = arith.constant 0 : index
    %c0_0 = arith.constant 0 : index
    %0 = vector.load %arg1[%c0, %c0_0] : memref<8x256xbf16, #tpu.memory_space<vmem>>, vector<8x256xbf16>
    %1 = arith.extf %0 : vector<8x256xbf16> to vector<8x256xf32>
    %c0_1 = arith.constant 0 : index
    %c0_2 = arith.constant 0 : index
    %2 = vector.load %arg2[%c0_1, %c0_2] : memref<8x256xbf16, #tpu.memory_space<vmem>>, vector<8x256xbf16>
    %3 = arith.extf %2 : vector<8x256xbf16> to vector<8x256xf32>
    %4 = arith.addf %1, %3 : vector<8x256xf32>
    %5 = arith.mulf %4, %4 : vector<8x256xf32>
    %cst = arith.constant dense<0.000000e+00> : vector<8xf32>
    %6 = vector.multi_reduction <add>, %5, %cst [1] : vector<8x256xf32> to vector<8xf32>
    %7 = vector.shape_cast %6 : vector<8xf32> to vector<8x1xf32>
    %cst_3 = arith.constant 2.560000e+02 : f32
    %8 = vector.broadcast %cst_3 : f32 to vector<8x1xf32>
    %9 = arith.divf %7, %8 : vector<8x1xf32>
    %cst_4 = arith.constant 9.99999997E-7 : f32
    %10 = vector.broadcast %cst_4 : f32 to vector<8x1xf32>
    %11 = arith.addf %9, %10 : vector<8x1xf32>
    %12 = math.rsqrt %11 : vector<8x1xf32>
    %13 = vector.broadcast %12 : vector<8x1xf32> to vector<8x256xf32>
    %14 = arith.mulf %4, %13 : vector<8x256xf32>
    %c0_5 = arith.constant 0 : index
    %c0_6 = arith.constant 0 : index
    %15 = vector.load %arg3[%c0_5, %c0_6] : memref<1x256xf32, #tpu.memory_space<vmem>>, vector<1x256xf32>
    %16 = vector.broadcast %15 : vector<1x256xf32> to vector<8x256xf32>
    %17 = arith.mulf %14, %16 : vector<8x256xf32>
    %18 = arith.truncf %17 : vector<8x256xf32> to vector<8x256xbf16>
    %c0_7 = arith.constant 0 : index
    %c0_8 = arith.constant 0 : index
    %19 = vector.load %arg4[%c0_7, %c0_8] : memref<8x256xbf16, #tpu.memory_space<vmem>>, vector<8x256xbf16>
    tpu.vector_store %arg4[%c0_7, %c0_8], %18 {strides = array<i32>} : memref<8x256xbf16, #tpu.memory_space<vmem>>, vector<8x256xbf16>,
    %20 = arith.truncf %4 : vector<8x256xf32> to vector<8x256xbf16>
    %c0_9 = arith.constant 0 : index
    %c0_10 = arith.constant 0 : index
    %21 = vector.load %arg5[%c0_9, %c0_10] : memref<8x256xbf16, #tpu.memory_space<vmem>>, vector<8x256xbf16>
    tpu.vector_store %arg5[%c0_9, %c0_10], %20 {strides = array<i32>} : memref<8x256xbf16, #tpu.memory_space<vmem>>, vector<8x256xbf16>,
    return
  }
  func.func @transform_0(%arg0: i32) -> (i32, i32) {
    %c0_i32 = arith.constant 0 : i32
    %c0_i32_0 = arith.constant 0 : i32
    return %arg0, %c0_i32 : i32, i32
  }
  func.func @transform_1(%arg0: i32) -> (i32, i32) {
    %c0_i32 = arith.constant 0 : i32
    %c0_i32_0 = arith.constant 0 : i32
    return %arg0, %c0_i32 : i32, i32
  }
  func.func @transform_2(%arg0: i32) -> (i32, i32) {
    %c0_i32 = arith.constant 0 : i32
    %c0_i32_0 = arith.constant 0 : i32
    %c0_i32_1 = arith.constant 0 : i32
    return %c0_i32, %c0_i32_0 : i32, i32
  }
  func.func @transform_3(%arg0: i32) -> (i32, i32) {
    %c0_i32 = arith.constant 0 : i32
    %c0_i32_0 = arith.constant 0 : i32
    return %arg0, %c0_i32 : i32, i32
  }
  func.func @transform_4(%arg0: i32) -> (i32, i32) {
    %c0_i32 = arith.constant 0 : i32
    %c0_i32_0 = arith.constant 0 : i32
    return %arg0, %c0_i32 : i32, i32
  }
}

</mosaic_0001>

<llo_original>
// kernel: llama_forward.19
$region0: #{llama_forward.19}
  #allocation0 [shape = 'u32[]', space=smem, size = 0x4, offset = 0x4, fixed_abs, tag = 'smem constant byte address 0x4 - core index']
  #allocation1 [shape = 'u32[144,128]{1,0:T(1,128)}', space=vmem, size = 0x12000, scoped, tag = 'internal scratch']
  %s0 = inlined_call_operand.vmem [shape: bf16[8,256], index: 0, kind: input, shape index: {}]
  %s1 = inlined_call_operand.vmem [shape: bf16[8,256], index: 1, kind: input, shape index: {}]
  %s2 = inlined_call_operand.hbm [shape: f32[1,256], index: 2, kind: input, shape index: {}]
  %s3 = inlined_call_operand.vmem [shape: bf16[8,256], index: 3, kind: output, shape index: {0}]
  %s4 = inlined_call_operand.vmem [shape: bf16[8,256], index: 4, kind: output, shape index: {1}]
  %5 = xla_tuple %s3, %s4
  %s6 = sld [smem:[#allocation0]]
  $region34: #{llama_forward.19} parent=0
    _
  %s8 = ssub.s32 1, %s6
  %s9 = scalar_select 0, %s8, %s6
  $region1: #{llama_forward.19} parent=0
    #allocation2 [shape = 'u8[1024]{0}', space=vmem, size = 0x400, scoped, tag = 'input window, operand 2, single buffered']
    #allocation3 [shape = 's32[1]{0}', space=sflag, size = 0x4, scoped, tag = 'scoped memory for llama_forward.19']
    %10 = vsyncpa [#allocation3], 0
    // Predicated region
    $region2: #{llama_forward.19} parent=1 // pred_check
      _
    $region3: #{llama_forward.19} parent=1 // pred_check_branch
      %12 = sbr.rel (0) target = $region5
    $region4: #{llama_forward.19} parent=1 // pred_region
      _
    $region5: #{llama_forward.19} parent=1 // pred_fallthru
      _
    // Predicated region
    $region6: #{llama_forward.19} parent=1 // pred_check
      _
    $region7: #{llama_forward.19} parent=1 // pred_check_branch
      %14 = sbr.rel (0) target = $region9
    $region8: #{llama_forward.19} parent=1 // pred_region
      _
    $region9: #{llama_forward.19} parent=1 // pred_fallthru
      _
    // Predicated region
    $region10: #{llama_forward.19} parent=1 // pred_check
      _
    $region11: #{llama_forward.19} parent=1 // pred_check_branch
      %16 = sbr.rel (0) target = $region13
    $region12: #{llama_forward.19} parent=1 // pred_region
      %s18 = ssub.s32 32, 32
      %19 = vsyncadd [#allocation3], %s18
      %s21 = sshll.u32 [#allocation2], 4
      %s22 = int_to_ptr.vmem [resolvable:$true] %s21
      %24 = dma.hbm_to_vmem [thread:$0]  %s2, 32, %s22, [#allocation3]
    $region13: #{llama_forward.19} parent=1 // pred_fallthru
      _
    // Predicated region
    $region14: #{llama_forward.19} parent=1 // pred_check
      _
    $region15: #{llama_forward.19} parent=1 // pred_check_branch
      %26 = sbr.rel (0) target = $region17
    $region16: #{llama_forward.19} parent=1 // pred_region
      %27 = dma.done [#allocation3], 32
    $region17: #{llama_forward.19} parent=1 // pred_fallthru
      _
    %v28 = vld [vmem:[%s0] sm:$0xff]
    %v29 = vunpack.c.l.bf16 %v28
    %v30 = vunpack.c.h.bf16 %v28
    %v31 = vld [vmem:[%s1] sm:$0xff]
    %v32 = vunpack.c.l.bf16 %v31
    %v33 = vunpack.c.h.bf16 %v31
    %v34 = vadd.f32 %v29, %v32
    %v35 = vadd.f32 %v30, %v33
    %v36 = vmul.f32 %v34, %v34
    %v37 = vmul.f32 %v35, %v35
    %v38 = vadd.f32 %v36, %v37
    %39 = vadd.xlane.f32.xlu0 %v38
    %v40 = vpop.xlane.xlu0 %39
    %v41 = vrcp.pop 256.0
    %v42 = vmul.f32 %v40, %v41
    %v43 = vadd.f32 %v42, 1e-06
    %v44 = vrsqrt.pop %v43
    %v45 = vmul.f32 %v34, %v44
    %v46 = vmul.f32 %v35, %v44
    %v47 = vld [vmem:[#allocation2] sm:$0x3]
    %v49 = vlaneseq
    %v50 = vshrl.u32 %v49, 7
    %v51 = vsub.s32 0, %v50
    %v52 = vrot.slane %v47, %v51
    %v53 = vlaneseq
    %v54 = vshrl.u32 %v53, 7
    %v55 = vsub.s32 1, %v54
    %v56 = vrot.slane %v47, %v55
    %v59 = vmul.f32 %v45, %v52
    %v60 = vmul.f32 %v46, %v56
    %v61 = vpack.c.bf16 %v59, %v59
    %v62 = vpack.c.bf16 %v60, %v60
    %v65 = vunpack.c.l.b16 %v61
    %v66 = vunpack.c.l.b16 %v62
    %v67 = vpack.c.b16 %v66, %v65
    %69 = vst [vmem:[%s3] sm:$0xff] %v67
    %v70 = vpack.c.bf16 %v34, %v34
    %v71 = vpack.c.bf16 %v35, %v35
    %v74 = vunpack.c.l.b16 %v70
    %v75 = vunpack.c.l.b16 %v71
    %v76 = vpack.c.b16 %v75, %v74
    %78 = vst [vmem:[%s4] sm:$0xff] %v76
    // Predicated region
    $region18: #{llama_forward.19} parent=1 // pred_check
      _
    $region19: #{llama_forward.19} parent=1 // pred_check_branch
      %80 = sbr.rel (0) target = $region21
    $region20: #{llama_forward.19} parent=1 // pred_region
      _
    $region21: #{llama_forward.19} parent=1 // pred_fallthru
      _
    // Predicated region
    $region22: #{llama_forward.19} parent=1 // pred_check
      _
    $region23: #{llama_forward.19} parent=1 // pred_check_branch
      %82 = sbr.rel (0) target = $region25
    $region24: #{llama_forward.19} parent=1 // pred_region
      _
    $region25: #{llama_forward.19} parent=1 // pred_fallthru
      _
    // Predicated region
    $region26: #{llama_forward.19} parent=1 // pred_check
      _
    $region27: #{llama_forward.19} parent=1 // pred_check_branch
      %84 = sbr.rel (0) target = $region29
    $region28: #{llama_forward.19} parent=1 // pred_region
      _
    $region29: #{llama_forward.19} parent=1 // pred_fallthru
      _
    // Predicated region
    $region30: #{llama_forward.19} parent=1 // pred_check
      _
    $region31: #{llama_forward.19} parent=1 // pred_check_branch
      %86 = sbr.rel (0) target = $region33
    $region32: #{llama_forward.19} parent=1 // pred_region
      _
    $region33: #{llama_forward.19} parent=1 // pred_fallthru
      _
    %87 = vsyncpa [#allocation3], 1

// kernel: llama_forward.21
$region0: #{llama_forward.21}
  #allocation0 [shape = 'u32[]', space=smem, size = 0x4, offset = 0x4, fixed_abs, tag = 'smem constant byte address 0x4 - core index']
  #allocation1 [shape = 'u32[144,128]{1,0:T(1,128)}', space=vmem, size = 0x12000, scoped, tag = 'internal scratch']
  %s0 = inlined_call_operand.vmem [shape: bf16[16,128], index: 0, kind: input, shape index: {}]
  %s1 = inlined_call_operand.vmem [shape: f32[8,128], index: 1, kind: input, shape index: {}]
  %s2 = inlined_call_operand.vmem [shape: f32[8,128], index: 2, kind: input, shape index: {}]
  %s3 = inlined_call_operand.vmem [shape: bf16[16,128], index: 3, kind: output, shape index: {}]
  %s4 = sld [smem:[#allocation0]]
  $region45: #{llama_forward.21} parent=0
    _
  %s6 = ssub.s32 1, %s4
  %s7 = scalar_select 0, %s6, %s4
  loop: start=0, step=1, limit=4
  $region2: #{llama_forward.21} parent=0 // loop_pre_header
    _
  $region3: #{llama_forward.21} parent=0 // loop_header
    %s9 = sphi 0, %s13
    %p10 = scmp.ge.s32.totalorder %s9, 4
    %s16 = sphi 0, %s28
    %s17 = sphi 0, %s24
    %s18 = sphi 0, %s16
    %s19 = sphi 0, %s17
    %s20 = sphi 0, %s18
    %s21 = sphi 0, %s19
    %s33 = sphi 0, %s35
    %s36 = sphi 0, %s33
    %s37 = sphi 0, %s36
    %s53 = sphi 0, %s37
    %s59 = sphi 0, %s61
    %s62 = sphi 0, %s59
    %s63 = sphi 0, %s62
    %s79 = sphi 0, %s63
    %s85 = sphi 0, %s87
    %s88 = sphi 0, %s85
    %s89 = sphi 0, %s88
    %s105 = sphi 0, %s89
    %s113 = sphi 0, %s115
    %s116 = sphi 0, %s113
    %s117 = sphi 0, %s116
    %s133 = sphi 0, %s117
  $region4: #{llama_forward.21} parent=0 // loop_header_branch
    %12 = sbr.rel (%p10) target = $region8
  $region5: #{llama_forward.21} parent=0 // loop_body
    %s14 = ssub.s32 %s9, 1
    %s15 = ssub.s32 %s9, 2
    %s22 = sadd.s32 1, %s17
    %p23 = scmp.ge.s32.totalorder %s22, 1
    %s24 = scalar_select %p23, 0, %s22
    %s25 = sadd.s32 1, %s16
    %s26 = scalar_select %p23, %s25, %s16
    %p27 = scmp.ge.s32.totalorder %s26, 2
    %s28 = scalar_select %p27, 0, %s26
    %s29 = sadd.s32 %s16, %s17
    %s30 = sadd.s32 %s28, %s24
    %s31 = ssub.s32 %s29, %s30
    %p32 = scmp.eq.s32.totalorder %s31, 0
    %s34 = sadd.s32 %s33, 1
    %s35 = scalar_select %p32, %s33, %s34
    %p38 = pneg %p32
    %p39 = scmp.eq.s32.totalorder %s9, 1
    %p40 = por %p38, %p39
    %p41 = scmp.ne.s32.totalorder %s33, %s36
    %p42 = scmp.eq.s32.totalorder %s9, 0
    %p43 = por %p41, %p42
    %p44 = scmp.ne.s32.totalorder %s33, %s36
    %p45 = scmp.eq.s32.totalorder %s14, 1
    %p46 = por %p44, %p45
    %p47 = scmp.ne.s32.totalorder %s36, %s37
    %p48 = scmp.eq.s32.totalorder %s14, 0
    %p49 = por %p47, %p48
    %p50 = scmp.ne.s32.totalorder %s36, %s37
    %p51 = scmp.eq.s32.totalorder %s15, 1
    %p52 = por %p50, %p51
    %p54 = scmp.ne.s32.totalorder %s37, %s53
    %p55 = scmp.eq.s32.totalorder %s15, 0
    %p56 = por %p54, %p55
    %s57 = ssub.s32 %s17, %s24
    %p58 = scmp.eq.s32.totalorder %s57, 0
    %s60 = sadd.s32 %s59, 1
    %s61 = scalar_select %p58, %s59, %s60
    %p64 = pneg %p58
    %p65 = scmp.eq.s32.totalorder %s9, 1
    %p66 = por %p64, %p65
    %p67 = scmp.ne.s32.totalorder %s59, %s62
    %p68 = scmp.eq.s32.totalorder %s9, 0
    %p69 = por %p67, %p68
    %p70 = scmp.ne.s32.totalorder %s59, %s62
    %p71 = scmp.eq.s32.totalorder %s14, 1
    %p72 = por %p70, %p71
    %p73 = scmp.ne.s32.totalorder %s62, %s63
    %p74 = scmp.eq.s32.totalorder %s14, 0
    %p75 = por %p73, %p74
    %p76 = scmp.ne.s32.totalorder %s62, %s63
    %p77 = scmp.eq.s32.totalorder %s15, 1
    %p78 = por %p76, %p77
    %p80 = scmp.ne.s32.totalorder %s63, %s79
    %p81 = scmp.eq.s32.totalorder %s15, 0
    %p82 = por %p80, %p81
    %s83 = ssub.s32 %s17, %s24
    %p84 = scmp.eq.s32.totalorder %s83, 0
    %s86 = sadd.s32 %s85, 1
    %s87 = scalar_select %p84, %s85, %s86
    %p90 = pneg %p84
    %p91 = scmp.eq.s32.totalorder %s9, 1
    %p92 = por %p90, %p91
    %p93 = scmp.ne.s32.totalorder %s85, %s88
    %p94 = scmp.eq.s32.totalorder %s9, 0
    %p95 = por %p93, %p94
    %p96 = scmp.ne.s32.totalorder %s85, %s88
    %p97 = scmp.eq.s32.totalorder %s14, 1
    %p98 = por %p96, %p97
    %p99 = scmp.ne.s32.totalorder %s88, %s89
    %p100 = scmp.eq.s32.totalorder %s14, 0
    %p101 = por %p99, %p100
    %p102 = scmp.ne.s32.totalorder %s88, %s89
    %p103 = scmp.eq.s32.totalorder %s15, 1
    %p104 = por %p102, %p103
    %p106 = scmp.ne.s32.totalorder %s89, %s105
    %p107 = scmp.eq.s32.totalorder %s15, 0
    %p108 = por %p106, %p107
    %s109 = sadd.s32 %s16, %s17
    %s110 = sadd.s32 %s28, %s24
    %s111 = ssub.s32 %s109, %s110
    %p112 = scmp.eq.s32.totalorder %s111, 0
    %s114 = sadd.s32 %s113, 1
    %s115 = scalar_select %p112, %s113, %s114
    %p118 = pneg %p112
    %p119 = scmp.eq.s32.totalorder %s9, 1
    %p120 = por %p118, %p119
    %p121 = scmp.ne.s32.totalorder %s113, %s116
    %p122 = scmp.eq.s32.totalorder %s9, 0
    %p123 = por %p121, %p122
    %p124 = scmp.ne.s32.totalorder %s113, %s116
    %p125 = scmp.eq.s32.totalorder %s14, 1
    %p126 = por %p124, %p125
    %p127 = scmp.ne.s32.totalorder %s116, %s117
    %p128 = scmp.eq.s32.totalorder %s14, 0
    %p129 = por %p127, %p128
    %p130 = scmp.ne.s32.totalorder %s116, %s117
    %p131 = scmp.eq.s32.totalorder %s15, 1
    %p132 = por %p130, %p131
    %p134 = scmp.ne.s32.totalorder %s117, %s133
    %p135 = scmp.eq.s32.totalorder %s15, 0
    %p136 = por %p134, %p135
    %p137 = scmp.le.s32.totalorder 1, %s9
    %p138 = scmp.lt.s32.totalorder %s9, 3
    %p139 = pnand %p137, %p138
    %p140 = pneg %p139
    // Predicated region
    $region9: #{llama_forward.21} parent=5 // pred_check
      _
    $region10: #{llama_forward.21} parent=5 // pred_check_branch
      %142 = sbr.rel (%p139) target = $region12
    $region11: #{llama_forward.21} parent=5 // pred_region
      %s143 = ssub.s32 %s9, 1
      // Predicated region
      $region13: #{llama_forward.21} parent=11 // pred_check
        %p144 = pneg %p75
      $region14: #{llama_forward.21} parent=11 // pred_check_branch
        %146 = sbr.rel (%p144) target = $region16
      $region15: #{llama_forward.21} parent=11 // pred_region
        %p147 = scmp.lt.s32.totalorder %s19, 0
        %s148 = scalar_select %p147, %s19, 0
        %s149 = smul.addr %s148, 8
        %s150 = scalar_lea.vmem %s1, %s149
      $region16: #{llama_forward.21} parent=11 // pred_fallthru
        _
      // Predicated region
      $region17: #{llama_forward.21} parent=11 // pred_check
        %p151 = pneg %p101
      $region18: #{llama_forward.21} parent=11 // pred_check_branch
        %153 = sbr.rel (%p151) target = $region20
      $region19: #{llama_forward.21} parent=11 // pred_region
        %p154 = scmp.lt.s32.totalorder %s19, 0
        %s155 = scalar_select %p154, %s19, 0
        %s156 = smul.addr %s155, 8
        %s157 = scalar_lea.vmem %s2, %s156
      $region20: #{llama_forward.21} parent=11 // pred_fallthru
        _
    $region12: #{llama_forward.21} parent=5 // pred_fallthru
      _
    %p158 = scmp.lt.s32.totalorder %s9, 2
    // Predicated region
    $region21: #{llama_forward.21} parent=5 // pred_check
      %p159 = pneg %p158
    $region22: #{llama_forward.21} parent=5 // pred_check_branch
      %161 = sbr.rel (%p159) target = $region24
    $region23: #{llama_forward.21} parent=5 // pred_region
      // Predicated region
      $region25: #{llama_forward.21} parent=23 // pred_check
        %p162 = pneg %p43
      $region26: #{llama_forward.21} parent=23 // pred_check_branch
        %164 = sbr.rel (%p162) target = $region28
      $region27: #{llama_forward.21} parent=23 // pred_region
        %s165 = sadd.s32 %s16, %s17
        %p166 = scmp.lt.s32.totalorder %s165, 1
        %s167 = scalar_select %p166, %s165, 1
        %s168 = smul.addr %s167, 4
        %s169 = scalar_lea.vmem %s0, %s168
        %s170 = sadd.s32 %s16, %s17
      $region28: #{llama_forward.21} parent=23 // pred_fallthru
        _
    $region24: #{llama_forward.21} parent=5 // pred_fallthru
      _
    %p171 = scmp.le.s32.totalorder 1, %s9
    %p172 = scmp.lt.s32.totalorder %s9, 3
    %p173 = pnand %p171, %p172
    %p174 = pneg %p173
    // Predicated region
    $region29: #{llama_forward.21} parent=5 // pred_check
      _
    $region30: #{llama_forward.21} parent=5 // pred_check_branch
      %176 = sbr.rel (%p173) target = $region32
    $region31: #{llama_forward.21} parent=5 // pred_region
      %s177 = ssub.s32 %s9, 1
      %s178 = sadd.s32 %s18, %s19
      %p179 = scmp.lt.s32.totalorder %s178, 1
      %s180 = scalar_select %p179, %s178, 1
      %s181 = smul.addr %s180, 4
      %s182 = scalar_lea.vmem %s0, %s181
      %p183 = pneg %p49
      %p184 = pneg %p46
      %p185 = scmp.lt.s32.totalorder %s19, 0
      %s186 = scalar_select %p185, %s19, 0
      %s187 = smul.addr %s186, 8
      %s188 = scalar_lea.vmem %s1, %s187
      %p189 = pneg %p75
      %p190 = pneg %p72
      %p191 = scmp.lt.s32.totalorder %s19, 0
      %s192 = scalar_select %p191, %s19, 0
      %s193 = smul.addr %s192, 8
      %s194 = scalar_lea.vmem %s2, %s193
      %p195 = pneg %p101
      %p196 = pneg %p98
      %p197 = pneg %p129
      %p198 = pneg %p126
      %s199 = sadd.s32 %s18, %s19
      %p200 = scmp.lt.s32.totalorder %s199, 1
      %s201 = scalar_select %p200, %s199, 1
      %s202 = smul.addr %s201, 4
      %s203 = scalar_lea.vmem %s3, %s202
      %s204 = sadd.s32 %s18, %s19
      %p205 = scmp.lt.s32.totalorder %s204, 1
      %s206 = scalar_select %p205, %s204, 1
      %s207 = smul.addr %s206, 4
      %s208 = scalar_lea.vmem %s0, %s207
      %s209 = sadd.s32 %s18, %s19
      %p210 = scmp.lt.s32.totalorder %s19, 0
      %s211 = scalar_select %p210, %s19, 0
      %s212 = smul.addr %s211, 8
      %s213 = scalar_lea.vmem %s1, %s212
      %p214 = scmp.lt.s32.totalorder %s19, 0
      %s215 = scalar_select %p214, %s19, 0
      %s216 = smul.addr %s215, 8
      %s217 = scalar_lea.vmem %s2, %s216
      %s218 = sadd.s32 %s18, %s19
      %p219 = scmp.lt.s32.totalorder %s218, 1
      %s220 = scalar_select %p219, %s218, 1
      %s221 = smul.addr %s220, 4
      %s222 = scalar_lea.vmem %s3, %s221
      %s223 = sadd.s32 %s18, %s19
      %v224 = vld [vmem:[%s208] sm:$0xf]
      %v225 = vunpack.c.l.bf16 %v224
      %v226 = vld [vmem:[%s213] sm:$0xff]
      %v227 = vld [vmem:[%s217] sm:$0xff]
      %v228 = vsub.f32 0.0, %v225
      %230 = vrot.lane.b32.xlu0 %v228, 64
      %v231 = vpop.permute.xlu0 %230
      %234 = vrot.lane.b32.xlu0 %v225, 64
      %v235 = vpop.permute.xlu0 %234
      %vm237 = vcmask 523264
      %v238 = vsel %vm237, %v231, %v235
      %v239 = vmul.f32 %v225, %v226
      %v240 = vmul.f32 %v238, %v227
      %v241 = vadd.f32 %v239, %v240
      %v242 = vmul.f32 %v241, 0.088388346
      %v243 = vpack.c.bf16 %v242, %v242
      %244 = vst [vmem:[%s222] sm:$0xf] %v243
      %s245 = sadd.s32 %s18, %s19
      %p246 = scmp.lt.s32.totalorder %s245, 1
      %s247 = scalar_select %p246, %s245, 1
      %s248 = smul.addr %s247, 4
      %s249 = scalar_lea.vmem %s3, %s248
      // Predicated region
      $region33: #{llama_forward.21} parent=31 // pred_check
        %p250 = pneg %p126
      $region34: #{llama_forward.21} parent=31 // pred_check_branch
        %252 = sbr.rel (%p250) target = $region36
      $region35: #{llama_forward.21} parent=31 // pred_region
        %s253 = sadd.s32 %s18, %s19
      $region36: #{llama_forward.21} parent=31 // pred_fallthru
        _
    $region32: #{llama_forward.21} parent=5 // pred_fallthru
      _
    %p254 = scmp.le.s32.totalorder 2, %s9
    // Predicated region
    $region37: #{llama_forward.21} parent=5 // pred_check
      %p255 = pneg %p254
    $region38: #{llama_forward.21} parent=5 // pred_check_branch
      %257 = sbr.rel (%p255) target = $region40
    $region39: #{llama_forward.21} parent=5 // pred_region
      %s258 = ssub.s32 %s9, 2
      // Predicated region
      $region41: #{llama_forward.21} parent=39 // pred_check
        %p259 = pneg %p132
      $region42: #{llama_forward.21} parent=39 // pred_check_branch
        %261 = sbr.rel (%p259) target = $region44
      $region43: #{llama_forward.21} parent=39 // pred_region
        %s262 = sadd.s32 %s20, %s21
        %p263 = scmp.lt.s32.totalorder %s262, 1
        %s264 = scalar_select %p263, %s262, 1
        %s265 = smul.addr %s264, 4
        %s266 = scalar_lea.vmem %s3, %s265
      $region44: #{llama_forward.21} parent=39 // pred_fallthru
        _
    $region40: #{llama_forward.21} parent=5 // pred_fallthru
      _
  $region6: #{llama_forward.21} parent=0 // loop_footer
    %s13 = sadd.s32 1, %s9
  $region7: #{llama_forward.21} parent=0 // loop_footer_branch
    %8 = sbr.rel target = $region3
  $region8: #{llama_forward.21} parent=0 // loop_exit
    _

// kernel: llama_forward.20
$region0: #{llama_forward.20}
  #allocation0 [shape = 'u32[]', space=smem, size = 0x4, offset = 0x4, fixed_abs, tag = 'smem constant byte address 0x4 - core index']
  #allocation1 [shape = 'u32[144,128]{1,0:T(1,128)}', space=vmem, size = 0x12000, scoped, tag = 'internal scratch']
  #allocation2 [shape = 'f32[8,256]{1,0:T(8,128)}', space=vmem, size = 0x2000, scoped, tag = 'scratch operand']
  %s0 = inlined_call_operand.vmem [shape: bf16[8,256], index: 0, kind: input, shape index: {}]
  %s1 = inlined_call_operand.hbm [shape: bf16[256,512], index: 1, kind: input, shape index: {}]
  %s2 = inlined_call_operand.vmem [shape: bf16[8,512], index: 2, kind: output, shape index: {}]
  %s3 = sld [smem:[#allocation0]]
  $region53: #{llama_forward.20} parent=0
    _
  %s5 = ssub.s32 1, %s3
  %s6 = scalar_select 0, %s5, %s3
  $region1: #{llama_forward.20} parent=0
    #allocation3 [shape = 'u8[262144]{0}', space=vmem, size = 0x40000, scoped, tag = 'input window, operand 1']
    #allocation4 [shape = 's32[2]{0}', space=sflag, size = 0x8, scoped, tag = 'scoped memory for llama_forward.20']
    %7 = vsyncpa [#allocation4], 0
    %s8 = scalar_lea.sflag [#allocation4], 1
    %9 = vsyncpa %s8, 0
    loop: start=0, step=1, limit=4
    $region2: #{llama_forward.20} parent=1 // loop_pre_header
      _
    $region3: #{llama_forward.20} parent=1 // loop_header
      %s11 = sphi 0, %s15
      %p12 = scmp.ge.s32.totalorder %s11, 4
      %s18 = sphi 0, %s37
      %s19 = sphi 0, %s33
      %s20 = sphi 0, %s29
      %s21 = sphi 0, %s18
      %s22 = sphi 0, %s19
      %s23 = sphi 0, %s20
      %s24 = sphi 0, %s21
      %s25 = sphi 0, %s22
      %s26 = sphi 0, %s23
      %s42 = sphi 0, %s44
      %s45 = sphi 0, %s42
      %s46 = sphi 0, %s45
      %s62 = sphi 0, %s46
      %s70 = sphi 0, %s72
      %s73 = sphi 0, %s70
      %s74 = sphi 0, %s73
      %s90 = sphi 0, %s74
      %s98 = sphi 0, %s100
      %s101 = sphi 0, %s98
      %s102 = sphi 0, %s101
      %s118 = sphi 0, %s102
    $region4: #{llama_forward.20} parent=1 // loop_header_branch
      %14 = sbr.rel (%p12) target = $region8
    $region5: #{llama_forward.20} parent=1 // loop_body
      %s16 = ssub.s32 %s11, 1
      %s17 = ssub.s32 %s11, 2
      %s27 = sadd.s32 1, %s20
      %p28 = scmp.ge.s32.totalorder %s27, 1
      %s29 = scalar_select %p28, 0, %s27
      %s30 = sadd.s32 1, %s19
      %s31 = scalar_select %p28, %s30, %s19
      %p32 = scmp.ge.s32.totalorder %s31, 2
      %s33 = scalar_select %p32, 0, %s31
      %s34 = sadd.s32 1, %s18
      %s35 = scalar_select %p32, %s34, %s18
      %p36 = scmp.ge.s32.totalorder %s35, 1
      %s37 = scalar_select %p36, 0, %s35
      %s38 = ssub.s32 %s18, %s37
      %s39 = ssub.s32 %s20, %s29
      %s40 = sor.u32 %s38, %s39
      %p41 = scmp.eq.s32.totalorder %s40, 0
      %s43 = sadd.s32 %s42, 1
      %s44 = scalar_select %p41, %s42, %s43
      %p47 = pneg %p41
      %p48 = scmp.eq.s32.totalorder %s11, 1
      %p49 = por %p47, %p48
      %p50 = scmp.ne.s32.totalorder %s42, %s45
      %p51 = scmp.eq.s32.totalorder %s11, 0
      %p52 = por %p50, %p51
      %p53 = scmp.ne.s32.totalorder %s42, %s45
      %p54 = scmp.eq.s32.totalorder %s16, 1
      %p55 = por %p53, %p54
      %p56 = scmp.ne.s32.totalorder %s45, %s46
      %p57 = scmp.eq.s32.totalorder %s16, 0
      %p58 = por %p56, %p57
      %p59 = scmp.ne.s32.totalorder %s45, %s46
      %p60 = scmp.eq.s32.totalorder %s17, 1
      %p61 = por %p59, %p60
      %p63 = scmp.ne.s32.totalorder %s46, %s62
      %p64 = scmp.eq.s32.totalorder %s17, 0
      %p65 = por %p63, %p64
      %s66 = ssub.s32 %s20, %s29
      %s67 = ssub.s32 %s19, %s33
      %s68 = sor.u32 %s66, %s67
      %p69 = scmp.eq.s32.totalorder %s68, 0
      %s71 = sadd.s32 %s70, 1
      %s72 = scalar_select %p69, %s70, %s71
      %p75 = pneg %p69
      %p76 = scmp.eq.s32.totalorder %s11, 1
      %p77 = por %p75, %p76
      %p78 = scmp.ne.s32.totalorder %s70, %s73
      %p79 = scmp.eq.s32.totalorder %s11, 0
      %p80 = por %p78, %p79
      %p81 = scmp.ne.s32.totalorder %s70, %s73
      %p82 = scmp.eq.s32.totalorder %s16, 1
      %p83 = por %p81, %p82
      %p84 = scmp.ne.s32.totalorder %s73, %s74
      %p85 = scmp.eq.s32.totalorder %s16, 0
      %p86 = por %p84, %p85
      %p87 = scmp.ne.s32.totalorder %s73, %s74
      %p88 = scmp.eq.s32.totalorder %s17, 1
      %p89 = por %p87, %p88
      %p91 = scmp.ne.s32.totalorder %s74, %s90
      %p92 = scmp.eq.s32.totalorder %s17, 0
      %p93 = por %p91, %p92
      %s94 = ssub.s32 %s18, %s37
      %s95 = ssub.s32 %s19, %s33
      %s96 = sor.u32 %s94, %s95
      %p97 = scmp.eq.s32.totalorder %s96, 0
      %s99 = sadd.s32 %s98, 1
      %s100 = scalar_select %p97, %s98, %s99
      %p103 = pneg %p97
      %p104 = scmp.eq.s32.totalorder %s11, 1
      %p105 = por %p103, %p104
      %p106 = scmp.ne.s32.totalorder %s98, %s101
      %p107 = scmp.eq.s32.totalorder %s11, 0
      %p108 = por %p106, %p107
      %p109 = scmp.ne.s32.totalorder %s98, %s101
      %p110 = scmp.eq.s32.totalorder %s16, 1
      %p111 = por %p109, %p110
      %p112 = scmp.ne.s32.totalorder %s101, %s102
      %p113 = scmp.eq.s32.totalorder %s16, 0
      %p114 = por %p112, %p113
      %p115 = scmp.ne.s32.totalorder %s101, %s102
      %p116 = scmp.eq.s32.totalorder %s17, 1
      %p117 = por %p115, %p116
      %p119 = scmp.ne.s32.totalorder %s102, %s118
      %p120 = scmp.eq.s32.totalorder %s17, 0
      %p121 = por %p119, %p120
      %p122 = scmp.le.s32.totalorder 1, %s11
      %p123 = scmp.lt.s32.totalorder %s11, 3
      %p124 = pnand %p122, %p123
      %p125 = pneg %p124
      // Predicated region
      $region9: #{llama_forward.20} parent=5 // pred_check
        _
      $region10: #{llama_forward.20} parent=5 // pred_check_branch
        %127 = sbr.rel (%p124) target = $region12
      $region11: #{llama_forward.20} parent=5 // pred_region
        %s128 = ssub.s32 %s11, 1
        // Predicated region
        $region13: #{llama_forward.20} parent=11 // pred_check
          %p129 = pneg %p58
        $region14: #{llama_forward.20} parent=11 // pred_check_branch
          %131 = sbr.rel (%p129) target = $region16
        $region15: #{llama_forward.20} parent=11 // pred_region
          %s132 = smul.u32 2, %s23
          %p133 = scmp.lt.s32.totalorder %s21, 0
          %s134 = scalar_select %p133, %s21, 0
          %p135 = scmp.lt.s32.totalorder %s132, 1
          %s136 = scalar_select %p135, %s132, 1
          %s137 = smul.addr %s134, 2
          %s138 = sadd.s32 %s136, %s137
          %s139 = smul.addr %s138, 4
          %s140 = scalar_lea.vmem %s0, %s139
          %s141 = smul.u32 2, %s23
        $region16: #{llama_forward.20} parent=11 // pred_fallthru
          _
      $region12: #{llama_forward.20} parent=5 // pred_fallthru
        _
      %p142 = scmp.lt.s32.totalorder %s11, 2
      // Predicated region
      $region17: #{llama_forward.20} parent=5 // pred_check
        %p143 = pneg %p142
      $region18: #{llama_forward.20} parent=5 // pred_check_branch
        %145 = sbr.rel (%p143) target = $region20
      $region19: #{llama_forward.20} parent=5 // pred_region
        // Predicated region
        $region21: #{llama_forward.20} parent=19 // pred_check
          %p146 = pneg %p80
        $region22: #{llama_forward.20} parent=19 // pred_check_branch
          %148 = sbr.rel (%p146) target = $region24
        $region23: #{llama_forward.20} parent=19 // pred_region
          %s149 = sand.u32 %s70, 1
          %s150 = scalar_lea.sflag [#allocation4], %s149
          %s151 = sand.u32 %s70, 1
          %s152 = smul.addr %s151, 256
          %s153 = scalar_lea.vmem [#allocation3], %s152
          %s154 = smul.u32 32, %s20
          %s155 = smul.u32 2, %s19
          %s157 = ssub.s32 4096, 4096
          %158 = vsyncadd %s150, %s157
          %s159 = smul.addr %s154, 4
          %s160 = sadd.s32 %s155, %s159
          %s161 = smul.addr %s160, 64
          %s162 = scalar_lea.hbm %s1, %s161
          %s163 = sshll.u32 %s153, 4
          %s164 = int_to_ptr.vmem [resolvable:$true] %s163
          %169 = dma.hbm_to_vmem [thread:$0]  %s162, 4096, %s164, %s150, 256, 128, 8
        $region24: #{llama_forward.20} parent=19 // pred_fallthru
          _
      $region20: #{llama_forward.20} parent=5 // pred_fallthru
        _
      %p170 = scmp.le.s32.totalorder 1, %s11
      %p171 = scmp.lt.s32.totalorder %s11, 3
      %p172 = pnand %p170, %p171
      %p173 = pneg %p172
      // Predicated region
      $region25: #{llama_forward.20} parent=5 // pred_check
        _
      $region26: #{llama_forward.20} parent=5 // pred_check_branch
        %175 = sbr.rel (%p172) target = $region28
      $region27: #{llama_forward.20} parent=5 // pred_region
        %s176 = ssub.s32 %s11, 1
        %s177 = sand.u32 %s73, 1
        %s178 = scalar_lea.sflag [#allocation4], %s177
        %s179 = sand.u32 %s73, 1
        %s180 = smul.addr %s179, 256
        %s181 = scalar_lea.vmem [#allocation3], %s180
        // Predicated region
        $region29: #{llama_forward.20} parent=27 // pred_check
          %p182 = pneg %p86
        $region30: #{llama_forward.20} parent=27 // pred_check_branch
          %184 = sbr.rel (%p182) target = $region32
        $region31: #{llama_forward.20} parent=27 // pred_region
          %185 = dma.done %s178, 4096
        $region32: #{llama_forward.20} parent=27 // pred_fallthru
          _
        %s186 = smul.u32 2, %s23
        %p187 = scmp.lt.s32.totalorder %s21, 0
        %s188 = scalar_select %p187, %s21, 0
        %p189 = scmp.lt.s32.totalorder %s186, 1
        %s190 = scalar_select %p189, %s186, 1
        %s191 = smul.addr %s188, 2
        %s192 = sadd.s32 %s190, %s191
        %s193 = smul.addr %s192, 4
        %s194 = scalar_lea.vmem %s0, %s193
        %p195 = pneg %p58
        %p196 = pneg %p55
        %s197 = sand.u32 %s73, 1
        %s198 = scalar_lea.sflag [#allocation4], %s197
        %s199 = sand.u32 %s73, 1
        %s200 = smul.addr %s199, 256
        %s201 = scalar_lea.vmem [#allocation3], %s200
        %p202 = pneg %p86
        %p203 = pneg %p83
        %p204 = pneg %p114
        %p205 = pneg %p111
        %s206 = smul.u32 2, %s22
        %p207 = scmp.lt.s32.totalorder %s21, 0
        %s208 = scalar_select %p207, %s21, 0
        %p209 = scmp.lt.s32.totalorder %s206, 3
        %s210 = scalar_select %p209, %s206, 3
        %s211 = smul.addr %s208, 4
        %s212 = sadd.s32 %s210, %s211
        %s213 = smul.addr %s212, 4
        %s214 = scalar_lea.vmem %s2, %s213
        %s215 = smul.u32 2, %s23
        %p216 = scmp.lt.s32.totalorder %s21, 0
        %s217 = scalar_select %p216, %s21, 0
        %p218 = scmp.lt.s32.totalorder %s215, 1
        %s219 = scalar_select %p218, %s215, 1
        %s220 = smul.addr %s217, 2
        %s221 = sadd.s32 %s219, %s220
        %s222 = smul.addr %s221, 4
        %s223 = scalar_lea.vmem %s0, %s222
        %s224 = smul.u32 2, %s23
        %s225 = smul.u32 32, %s23
        %s226 = smul.u32 2, %s22
        %s227 = smul.u32 2, %s22
        %p228 = scmp.lt.s32.totalorder %s21, 0
        %s229 = scalar_select %p228, %s21, 0
        %p230 = scmp.lt.s32.totalorder %s227, 3
        %s231 = scalar_select %p230, %s227, 3
        %s232 = smul.addr %s229, 4
        %s233 = sadd.s32 %s231, %s232
        %s234 = smul.addr %s233, 4
        %s235 = scalar_lea.vmem %s2, %s234
        %s236 = smul.u32 2, %s22
        %p237 = scmp.eq.s32.totalorder %s23, 0
        // Predicated region
        $region33: #{llama_forward.20} parent=27 // pred_check
          %p238 = pneg %p237
        $region34: #{llama_forward.20} parent=27 // pred_check_branch
          %240 = sbr.rel (%p238) target = $region36
        $region35: #{llama_forward.20} parent=27 // pred_region
          %241 = vst [vmem:[#allocation2] sm:$0xff] 0.0
          %242 = vst [vmem:[#allocation2 + $0x8] sm:$0xff] 0.0
        $region36: #{llama_forward.20} parent=27 // pred_fallthru
          _
        %v243 = vld [vmem:[#allocation2] sm:$0xff]
        %v244 = vld [vmem:[#allocation2 + $0x8] sm:$0xff]
        %v245 = vld [vmem:[%s223] sm:$0xff]
        %v246 = vld [vmem:[%s181] sm:$0xff]
        %v247 = vld [vmem:[%s181 + $0x8] sm:$0xff]
        %v248 = vld [vmem:[%s181 + $0x10] sm:$0xff]
        %v249 = vld [vmem:[%s181 + $0x18] sm:$0xff]
        %v250 = vld [vmem:[%s181 + $0x20] sm:$0xff]
        %v251 = vld [vmem:[%s181 + $0x28] sm:$0xff]
        %v252 = vld [vmem:[%s181 + $0x30] sm:$0xff]
        %v253 = vld [vmem:[%s181 + $0x38] sm:$0xff]
        %v254 = vld [vmem:[%s181 + $0x40] sm:$0xff]
        %v255 = vld [vmem:[%s181 + $0x48] sm:$0xff]
        %v256 = vld [vmem:[%s181 + $0x50] sm:$0xff]
        %v257 = vld [vmem:[%s181 + $0x58] sm:$0xff]
        %v258 = vld [vmem:[%s181 + $0x60] sm:$0xff]
        %v259 = vld [vmem:[%s181 + $0x68] sm:$0xff]
        %v260 = vld [vmem:[%s181 + $0x70] sm:$0xff]
        %v261 = vld [vmem:[%s181 + $0x78] sm:$0xff]
        %v262 = vld [vmem:[%s181 + $0x80] sm:$0xff]
        %v263 = vld [vmem:[%s181 + $0x88] sm:$0xff]
        %v264 = vld [vmem:[%s181 + $0x90] sm:$0xff]
        %v265 = vld [vmem:[%s181 + $0x98] sm:$0xff]
        %v266 = vld [vmem:[%s181 + $0xa0] sm:$0xff]
        %v267 = vld [vmem:[%s181 + $0xa8] sm:$0xff]
        %v268 = vld [vmem:[%s181 + $0xb0] sm:$0xff]
        %v269 = vld [vmem:[%s181 + $0xb8] sm:$0xff]
        %v270 = vld [vmem:[%s181 + $0xc0] sm:$0xff]
        %v271 = vld [vmem:[%s181 + $0xc8] sm:$0xff]
        %v272 = vld [vmem:[%s181 + $0xd0] sm:$0xff]
        %v273 = vld [vmem:[%s181 + $0xd8] sm:$0xff]
        %v274 = vld [vmem:[%s181 + $0xe0] sm:$0xff]
        %v275 = vld [vmem:[%s181 + $0xe8] sm:$0xff]
        %v276 = vld [vmem:[%s181 + $0xf0] sm:$0xff]
        %v277 = vld [vmem:[%s181 + $0xf8] sm:$0xff]
        %v279 = vunpack.c.l.b16 %v245
        %v280 = vunpack.c.h.b16 %v245
        %v281 = vpack.c.b16 %v279, %v279
        %v282 = vpack.c.b16 %v280, %v280
        %v317 = vunpack.c.l.b16 %v246
        %v318 = vunpack.c.h.b16 %v246
        %v319 = vunpack.c.l.b16 %v247
        %v320 = vunpack.c.h.b16 %v247
        %v321 = vunpack.c.l.b16 %v248
        %v322 = vunpack.c.h.b16 %v248
        %v323 = vunpack.c.l.b16 %v249
        %v324 = vunpack.c.h.b16 %v249
        %v325 = vunpack.c.l.b16 %v250
        %v326 = vunpack.c.h.b16 %v250
        %v327 = vunpack.c.l.b16 %v251
        %v328 = vunpack.c.h.b16 %v251
        %v329 = vunpack.c.l.b16 %v252
        %v330 = vunpack.c.h.b16 %v252
        %v331 = vunpack.c.l.b16 %v253
        %v332 = vunpack.c.h.b16 %v253
        %v333 = vunpack.c.l.b16 %v254
        %v334 = vunpack.c.h.b16 %v254
        %v335 = vunpack.c.l.b16 %v255
        %v336 = vunpack.c.h.b16 %v255
        %v337 = vunpack.c.l.b16 %v256
        %v338 = vunpack.c.h.b16 %v256
        %v339 = vunpack.c.l.b16 %v257
        %v340 = vunpack.c.h.b16 %v257
        %v341 = vunpack.c.l.b16 %v258
        %v342 = vunpack.c.h.b16 %v258
        %v343 = vunpack.c.l.b16 %v259
        %v344 = vunpack.c.h.b16 %v259
        %v345 = vunpack.c.l.b16 %v260
        %v346 = vunpack.c.h.b16 %v260
        %v347 = vunpack.c.l.b16 %v261
        %v348 = vunpack.c.h.b16 %v261
        %v349 = vunpack.c.l.b16 %v262
        %v350 = vunpack.c.h.b16 %v262
        %v351 = vunpack.c.l.b16 %v263
        %v352 = vunpack.c.h.b16 %v263
        %v353 = vunpack.c.l.b16 %v264
        %v354 = vunpack.c.h.b16 %v264
        %v355 = vunpack.c.l.b16 %v265
        %v356 = vunpack.c.h.b16 %v265
        %v357 = vunpack.c.l.b16 %v266
        %v358 = vunpack.c.h.b16 %v266
        %v359 = vunpack.c.l.b16 %v267
        %v360 = vunpack.c.h.b16 %v267
        %v361 = vunpack.c.l.b16 %v268
        %v362 = vunpack.c.h.b16 %v268
        %v363 = vunpack.c.l.b16 %v269
        %v364 = vunpack.c.h.b16 %v269
        %v365 = vunpack.c.l.b16 %v270
        %v366 = vunpack.c.h.b16 %v270
        %v367 = vunpack.c.l.b16 %v271
        %v368 = vunpack.c.h.b16 %v271
        %v369 = vunpack.c.l.b16 %v272
        %v370 = vunpack.c.h.b16 %v272
        %v371 = vunpack.c.l.b16 %v273
        %v372 = vunpack.c.h.b16 %v273
        %v373 = vunpack.c.l.b16 %v274
        %v374 = vunpack.c.h.b16 %v274
        %v375 = vunpack.c.l.b16 %v275
        %v376 = vunpack.c.h.b16 %v275
        %v377 = vunpack.c.l.b16 %v276
        %v378 = vunpack.c.h.b16 %v276
        %v379 = vunpack.c.l.b16 %v277
        %v380 = vunpack.c.h.b16 %v277
        %v381 = vpack.c.b16 %v319, %v317
        %v382 = vpack.c.b16 %v320, %v318
        %v383 = vpack.c.b16 %v323, %v321
        %v384 = vpack.c.b16 %v324, %v322
        %v385 = vpack.c.b16 %v327, %v325
        %v386 = vpack.c.b16 %v328, %v326
        %v387 = vpack.c.b16 %v331, %v329
        %v388 = vpack.c.b16 %v332, %v330
        %v389 = vpack.c.b16 %v335, %v333
        %v390 = vpack.c.b16 %v336, %v334
        %v391 = vpack.c.b16 %v339, %v337
        %v392 = vpack.c.b16 %v340, %v338
        %v393 = vpack.c.b16 %v343, %v341
        %v394 = vpack.c.b16 %v344, %v342
        %v395 = vpack.c.b16 %v347, %v345
        %v396 = vpack.c.b16 %v348, %v346
        %v397 = vpack.c.b16 %v351, %v349
        %v398 = vpack.c.b16 %v352, %v350
        %v399 = vpack.c.b16 %v355, %v353
        %v400 = vpack.c.b16 %v356, %v354
        %v401 = vpack.c.b16 %v359, %v357
        %v402 = vpack.c.b16 %v360, %v358
        %v403 = vpack.c.b16 %v363, %v361
        %v404 = vpack.c.b16 %v364, %v362
        %v405 = vpack.c.b16 %v367, %v365
        %v406 = vpack.c.b16 %v368, %v366
        %v407 = vpack.c.b16 %v371, %v369
        %v408 = vpack.c.b16 %v372, %v370
        %v409 = vpack.c.b16 %v375, %v373
        %v410 = vpack.c.b16 %v376, %v374
        %v411 = vpack.c.b16 %v379, %v377
        %v412 = vpack.c.b16 %v380, %v378
        %445 = vmatprep.subr.bf16.mxu0 %v382
        %446 = vmatpush1.bf16.msra.mxu0 %v381
        %447 = vmatprep.subr.bf16.mxu0 %v384
        %448 = vmatpush1.bf16.msra.mxu0 %v383
        %449 = vmatprep.subr.bf16.mxu0 %v386
        %450 = vmatpush1.bf16.msra.mxu0 %v385
        %451 = vmatprep.subr.bf16.mxu0 %v388
        %452 = vmatpush1.bf16.msra.mxu0 %v387
        %453 = vmatprep.subr.bf16.mxu0 %v390
        %454 = vmatpush1.bf16.msra.mxu0 %v389
        %455 = vmatprep.subr.bf16.mxu0 %v392
        %456 = vmatpush1.bf16.msra.mxu0 %v391
        %457 = vmatprep.subr.bf16.mxu0 %v394
        %458 = vmatpush1.bf16.msra.mxu0 %v393
        %459 = vmatprep.subr.bf16.mxu0 %v396
        %460 = vmatpush1.bf16.msra.mxu0 %v395
        %461 = vmatprep.subr.bf16.mxu0 %v398
        %462 = vmatpush1.bf16.msra.mxu0 %v397
        %463 = vmatprep.subr.bf16.mxu0 %v400
        %464 = vmatpush1.bf16.msra.mxu0 %v399
        %465 = vmatprep.subr.bf16.mxu0 %v402
        %466 = vmatpush1.bf16.msra.mxu0 %v401
        %467 = vmatprep.subr.bf16.mxu0 %v404
        %468 = vmatpush1.bf16.msra.mxu0 %v403
        %469 = vmatprep.subr.bf16.mxu0 %v406
        %470 = vmatpush1.bf16.msra.mxu0 %v405
        %471 = vmatprep.subr.bf16.mxu0 %v408
        %472 = vmatpush1.bf16.msra.mxu0 %v407
        %473 = vmatprep.subr.bf16.mxu0 %v410
        %474 = vmatpush1.bf16.msra.mxu0 %v409
        %475 = vmatprep.subr.bf16.mxu0 %v412
        %476 = vmatpush1.bf16.msra.mxu0 %v411
        %477 = vmatprep.mubr.bf16.mxu0 %v282
        %478 = vmatmul.mubr.bf16.gmra.mrb[0].mxu0 %v281
        %v479 = vpop.f32.mrb[0].mxu0
        %v480 = vadd.f32 0.0, %v479
        %v481 = vpop.f32.mrb[0].mxu0
        %v482 = vadd.f32 0.0, %v481
        %v483 = vpop.f32.mrb[0].mxu0
        %v484 = vpop.f32.mrb[0].mxu0
        %485 = vdwg.mxu0
        %v486 = vadd.f32 %v243, %v480
        %v487 = vadd.f32 %v244, %v482
        %488 = vst [vmem:[#allocation2] sm:$0xff] %v486
        %489 = vst [vmem:[#allocation2 + $0x8] sm:$0xff] %v487
        // Predicated region
        $region37: #{llama_forward.20} parent=27 // pred_check
          %p490 = pneg %p237
        $region38: #{llama_forward.20} parent=27 // pred_check_branch
          %492 = sbr.rel (%p490) target = $region40
        $region39: #{llama_forward.20} parent=27 // pred_region
          %v493 = vld [vmem:[#allocation2] sm:$0xff]
          %v494 = vld [vmem:[#allocation2 + $0x8] sm:$0xff]
          %v495 = vpack.c.bf16 %v493, %v493
          %v496 = vpack.c.bf16 %v494, %v494
          %v499 = vunpack.c.l.b16 %v495
          %v500 = vunpack.c.l.b16 %v496
          %v501 = vpack.c.b16 %v500, %v499
          %503 = vst [vmem:[%s235] sm:$0xff] %v501
        $region40: #{llama_forward.20} parent=27 // pred_fallthru
          _
        %s504 = smul.u32 2, %s22
        %p505 = scmp.lt.s32.totalorder %s21, 0
        %s506 = scalar_select %p505, %s21, 0
        %p507 = scmp.lt.s32.totalorder %s504, 3
        %s508 = scalar_select %p507, %s504, 3
        %s509 = smul.addr %s506, 4
        %s510 = sadd.s32 %s508, %s509
        %s511 = smul.addr %s510, 4
        %s512 = scalar_lea.vmem %s2, %s511
        // Predicated region
        $region41: #{llama_forward.20} parent=27 // pred_check
          %p513 = pneg %p111
        $region42: #{llama_forward.20} parent=27 // pred_check_branch
          %515 = sbr.rel (%p513) target = $region44
        $region43: #{llama_forward.20} parent=27 // pred_region
          %s516 = smul.u32 2, %s22
        $region44: #{llama_forward.20} parent=27 // pred_fallthru
          _
      $region28: #{llama_forward.20} parent=5 // pred_fallthru
        _
      %p517 = scmp.le.s32.totalorder 2, %s11
      // Predicated region
      $region45: #{llama_forward.20} parent=5 // pred_check
        %p518 = pneg %p517
      $region46: #{llama_forward.20} parent=5 // pred_check_branch
        %520 = sbr.rel (%p518) target = $region48
      $region47: #{llama_forward.20} parent=5 // pred_region
        %s521 = ssub.s32 %s11, 2
        // Predicated region
        $region49: #{llama_forward.20} parent=47 // pred_check
          %p522 = pneg %p117
        $region50: #{llama_forward.20} parent=47 // pred_check_branch
          %524 = sbr.rel (%p522) target = $region52
        $region51: #{llama_forward.20} parent=47 // pred_region
          %s525 = smul.u32 2, %s25
          %p526 = scmp.lt.s32.totalorder %s24, 0
          %s527 = scalar_select %p526, %s24, 0
          %p528 = scmp.lt.s32.totalorder %s525, 3
          %s529 = scalar_select %p528, %s525, 3
          %s530 = smul.addr %s527, 4
          %s531 = sadd.s32 %s529, %s530
          %s532 = smul.addr %s531, 4
          %s533 = scalar_lea.vmem %s2, %s532
        $region52: #{llama_forward.20} parent=47 // pred_fallthru
          _
      $region48: #{llama_forward.20} parent=5 // pred_fallthru
        _
    $region6: #{llama_forward.20} parent=1 // loop_footer
      %s15 = sadd.s32 1, %s11
    $region7: #{llama_forward.20} parent=1 // loop_footer_branch
      %10 = sbr.rel target = $region3
    $region8: #{llama_forward.20} parent=1 // loop_exit
      _
    %534 = vsyncpa [#allocation4], 1
    %s535 = scalar_lea.sflag [#allocation4], 1
    %536 = vsyncpa %s535, 1

// kernel: llama_forward.22
$region0: #{llama_forward.22}
  #allocation0 [shape = 'u32[]', space=smem, size = 0x4, offset = 0x4, fixed_abs, tag = 'smem constant byte address 0x4 - core index']
  #allocation1 [shape = 'u32[144,128]{1,0:T(1,128)}', space=vmem, size = 0x12000, scoped, tag = 'internal scratch']
  %s0 = inlined_call_operand.vmem [shape: bf16[8,128], index: 0, kind: input, shape index: {}]
  %s1 = inlined_call_operand.vmem [shape: f32[8,128], index: 1, kind: input, shape index: {}]
  %s2 = inlined_call_operand.vmem [shape: f32[8,128], index: 2, kind: input, shape index: {}]
  %s3 = inlined_call_operand.vmem [shape: bf16[8,128], index: 3, kind: output, shape index: {}]
  %s4 = sld [smem:[#allocation0]]
  $region22: #{llama_forward.22} parent=0
    _
  %s6 = ssub.s32 1, %s4
  %s7 = scalar_select 0, %s6, %s4
  // Predicated region
  $region2: #{llama_forward.22} parent=0 // pred_check
    _
  $region3: #{llama_forward.22} parent=0 // pred_check_branch
    %9 = sbr.rel (0) target = $region5
  $region4: #{llama_forward.22} parent=0 // pred_region
    %s10 = sadd.s32 0, 0
    %p11 = scmp.lt.s32.totalorder %s10, 0
    %s12 = scalar_select %p11, %s10, 0
    %s13 = smul.addr %s12, 4
    %s14 = scalar_lea.vmem %s0, %s13
    %s15 = sadd.s32 0, 0
  $region5: #{llama_forward.22} parent=0 // pred_fallthru
    _
  // Predicated region
  $region6: #{llama_forward.22} parent=0 // pred_check
    _
  $region7: #{llama_forward.22} parent=0 // pred_check_branch
    %17 = sbr.rel (0) target = $region9
  $region8: #{llama_forward.22} parent=0 // pred_region
    _
  $region9: #{llama_forward.22} parent=0 // pred_fallthru
    _
  // Predicated region
  $region10: #{llama_forward.22} parent=0 // pred_check
    _
  $region11: #{llama_forward.22} parent=0 // pred_check_branch
    %19 = sbr.rel (0) target = $region13
  $region12: #{llama_forward.22} parent=0 // pred_region
    _
  $region13: #{llama_forward.22} parent=0 // pred_fallthru
    _
  %s20 = sadd.s32 0, 0
  %p21 = scmp.lt.s32.totalorder %s20, 0
  %s22 = scalar_select %p21, %s20, 0
  %s23 = smul.addr %s22, 4
  %s24 = scalar_lea.vmem %s0, %s23
  %s25 = sadd.s32 0, 0
  %p26 = scmp.lt.s32.totalorder %s25, 0
  %s27 = scalar_select %p26, %s25, 0
  %s28 = smul.addr %s27, 4
  %s29 = scalar_lea.vmem %s3, %s28
  %s30 = sadd.s32 0, 0
  %p31 = scmp.lt.s32.totalorder %s30, 0
  %s32 = scalar_select %p31, %s30, 0
  %s33 = smul.addr %s32, 4
  %s34 = scalar_lea.vmem %s0, %s33
  %s35 = sadd.s32 0, 0
  %s36 = sadd.s32 0, 0
  %p37 = scmp.lt.s32.totalorder %s36, 0
  %s38 = scalar_select %p37, %s36, 0
  %s39 = smul.addr %s38, 4
  %s40 = scalar_lea.vmem %s3, %s39
  %s41 = sadd.s32 0, 0
  %v42 = vld [vmem:[%s34] sm:$0xf]
  %v43 = vunpack.c.l.bf16 %v42
  %v44 = vld [vmem:[%s1] sm:$0xff]
  %v45 = vld [vmem:[%s2] sm:$0xff]
  %v46 = vsub.f32 0.0, %v43
  %48 = vrot.lane.b32.xlu0 %v46, 64
  %v49 = vpop.permute.xlu0 %48
  %52 = vrot.lane.b32.xlu0 %v43, 64
  %v53 = vpop.permute.xlu0 %52
  %vm55 = vcmask 523264
  %v56 = vsel %vm55, %v49, %v53
  %v57 = vmul.f32 %v43, %v44
  %v58 = vmul.f32 %v56, %v45
  %v59 = vadd.f32 %v57, %v58
  %v60 = vpack.c.bf16 %v59, %v59
  %61 = vst [vmem:[%s40] sm:$0xf] %v60
  %s62 = sadd.s32 0, 0
  %p63 = scmp.lt.s32.totalorder %s62, 0
  %s64 = scalar_select %p63, %s62, 0
  %s65 = smul.addr %s64, 4
  %s66 = scalar_lea.vmem %s3, %s65
  // Predicated region
  $region14: #{llama_forward.22} parent=0 // pred_check
    _
  $region15: #{llama_forward.22} parent=0 // pred_check_branch
    %68 = sbr.rel (0) target = $region17
  $region16: #{llama_forward.22} parent=0 // pred_region
    %s69 = sadd.s32 0, 0
  $region17: #{llama_forward.22} parent=0 // pred_fallthru
    _
  // Predicated region
  $region18: #{llama_forward.22} parent=0 // pred_check
    _
  $region19: #{llama_forward.22} parent=0 // pred_check_branch
    %71 = sbr.rel (0) target = $region21
  $region20: #{llama_forward.22} parent=0 // pred_region
    %s72 = sadd.s32 0, 0
    %p73 = scmp.lt.s32.totalorder %s72, 0
    %s74 = scalar_select %p73, %s72, 0
    %s75 = smul.addr %s74, 4
    %s76 = scalar_lea.vmem %s3, %s75
  $region21: #{llama_forward.22} parent=0 // pred_fallthru
    _

// kernel: llama_forward.25
$region0: #{llama_forward.25}
  #allocation0 [shape = 'u32[]', space=smem, size = 0x4, offset = 0x4, fixed_abs, tag = 'smem constant byte address 0x4 - core index']
  #allocation1 [shape = 'u32[144,128]{1,0:T(1,128)}', space=vmem, size = 0x12000, scoped, tag = 'internal scratch']
  %s0 = inlined_call_operand.vmem [shape: bf16[8,256], index: 0, kind: input, shape index: {}]
  %s1 = inlined_call_operand.vmem [shape: bf16[8,256], index: 1, kind: input, shape index: {}]
  %s2 = inlined_call_operand.vmem [shape: f32[1,256], index: 2, kind: input, shape index: {}]
  %s3 = inlined_call_operand.vmem [shape: bf16[8,256], index: 3, kind: output, shape index: {0}]
  %s4 = inlined_call_operand.vmem [shape: bf16[8,256], index: 4, kind: output, shape index: {1}]
  %5 = xla_tuple %s3, %s4
  %s6 = sld [smem:[#allocation0]]
  $region30: #{llama_forward.25} parent=0
    _
  %s8 = ssub.s32 1, %s6
  %s9 = scalar_select 0, %s8, %s6
  // Predicated region
  $region2: #{llama_forward.25} parent=0 // pred_check
    _
  $region3: #{llama_forward.25} parent=0 // pred_check_branch
    %11 = sbr.rel (0) target = $region5
  $region4: #{llama_forward.25} parent=0 // pred_region
    _
  $region5: #{llama_forward.25} parent=0 // pred_fallthru
    _
  // Predicated region
  $region6: #{llama_forward.25} parent=0 // pred_check
    _
  $region7: #{llama_forward.25} parent=0 // pred_check_branch
    %13 = sbr.rel (0) target = $region9
  $region8: #{llama_forward.25} parent=0 // pred_region
    _
  $region9: #{llama_forward.25} parent=0 // pred_fallthru
    _
  // Predicated region
  $region10: #{llama_forward.25} parent=0 // pred_check
    _
  $region11: #{llama_forward.25} parent=0 // pred_check_branch
    %15 = sbr.rel (0) target = $region13
  $region12: #{llama_forward.25} parent=0 // pred_region
    _
  $region13: #{llama_forward.25} parent=0 // pred_fallthru
    _
  %v16 = vld [vmem:[%s0] sm:$0xff]
  %v17 = vunpack.c.l.bf16 %v16
  %v18 = vunpack.c.h.bf16 %v16
  %v19 = vld [vmem:[%s1] sm:$0xff]
  %v20 = vunpack.c.l.bf16 %v19
  %v21 = vunpack.c.h.bf16 %v19
  %v22 = vadd.f32 %v17, %v20
  %v23 = vadd.f32 %v18, %v21
  %v24 = vmul.f32 %v22, %v22
  %v25 = vmul.f32 %v23, %v23
  %v26 = vadd.f32 %v24, %v25
  %27 = vadd.xlane.f32.xlu0 %v26
  %v28 = vpop.xlane.xlu0 %27
  %v29 = vrcp.pop 256.0
  %v30 = vmul.f32 %v28, %v29
  %v31 = vadd.f32 %v30, 1e-06
  %v32 = vrsqrt.pop %v31
  %v33 = vmul.f32 %v22, %v32
  %v34 = vmul.f32 %v23, %v32
  %v35 = vld [vmem:[%s2] sm:$0x3]
  %v37 = vlaneseq
  %v38 = vshrl.u32 %v37, 7
  %v39 = vsub.s32 0, %v38
  %v40 = vrot.slane %v35, %v39
  %v41 = vlaneseq
  %v42 = vshrl.u32 %v41, 7
  %v43 = vsub.s32 1, %v42
  %v44 = vrot.slane %v35, %v43
  %v47 = vmul.f32 %v33, %v40
  %v48 = vmul.f32 %v34, %v44
  %v49 = vpack.c.bf16 %v47, %v47
  %v50 = vpack.c.bf16 %v48, %v48
  %v53 = vunpack.c.l.b16 %v49
  %v54 = vunpack.c.l.b16 %v50
  %v55 = vpack.c.b16 %v54, %v53
  %57 = vst [vmem:[%s3] sm:$0xff] %v55
  %v58 = vpack.c.bf16 %v22, %v22
  %v59 = vpack.c.bf16 %v23, %v23
  %v62 = vunpack.c.l.b16 %v58
  %v63 = vunpack.c.l.b16 %v59
  %v64 = vpack.c.b16 %v63, %v62
  %66 = vst [vmem:[%s4] sm:$0xff] %v64
  // Predicated region
  $region14: #{llama_forward.25} parent=0 // pred_check
    _
  $region15: #{llama_forward.25} parent=0 // pred_check_branch
    %68 = sbr.rel (0) target = $region17
  $region16: #{llama_forward.25} parent=0 // pred_region
    _
  $region17: #{llama_forward.25} parent=0 // pred_fallthru
    _
  // Predicated region
  $region18: #{llama_forward.25} parent=0 // pred_check
    _
  $region19: #{llama_forward.25} parent=0 // pred_check_branch
    %70 = sbr.rel (0) target = $region21
  $region20: #{llama_forward.25} parent=0 // pred_region
    _
  $region21: #{llama_forward.25} parent=0 // pred_fallthru
    _
  // Predicated region
  $region22: #{llama_forward.25} parent=0 // pred_check
    _
  $region23: #{llama_forward.25} parent=0 // pred_check_branch
    %72 = sbr.rel (0) target = $region25
  $region24: #{llama_forward.25} parent=0 // pred_region
    _
  $region25: #{llama_forward.25} parent=0 // pred_fallthru
    _
  // Predicated region
  $region26: #{llama_forward.25} parent=0 // pred_check
    _
  $region27: #{llama_forward.25} parent=0 // pred_check_branch
    %74 = sbr.rel (0) target = $region29
  $region28: #{llama_forward.25} parent=0 // pred_region
    _
  $region29: #{llama_forward.25} parent=0 // pred_fallthru
    _

// kernel: llama_forward.24
$region0: #{llama_forward.24}
  #allocation0 [shape = 'u32[]', space=smem, size = 0x4, offset = 0x4, fixed_abs, tag = 'smem constant byte address 0x4 - core index']
  #allocation1 [shape = 'u32[144,128]{1,0:T(1,128)}', space=vmem, size = 0x12000, scoped, tag = 'internal scratch']
  #allocation2 [shape = 'f32[8,256]{1,0:T(8,128)}', space=vmem, size = 0x2000, scoped, tag = 'scratch operand']
  %s0 = inlined_call_operand.vmem [shape: bf16[8,256], index: 0, kind: input, shape index: {}]
  %s1 = inlined_call_operand.hbm [shape: bf16[256,256], index: 1, kind: input, shape index: {}]
  %s2 = inlined_call_operand.vmem [shape: bf16[8,256], index: 2, kind: output, shape index: {}]
  %s3 = sld [smem:[#allocation0]]
  $region30: #{llama_forward.24} parent=0
    _
  %s5 = ssub.s32 1, %s3
  %s6 = scalar_select 0, %s5, %s3
  $region1: #{llama_forward.24} parent=0
    #allocation3 [shape = 'u8[131072]{0}', space=vmem, size = 0x20000, scoped, tag = 'input window, operand 1, single buffered']
    #allocation4 [shape = 's32[1]{0}', space=sflag, size = 0x4, scoped, tag = 'scoped memory for llama_forward.24']
    %7 = vsyncpa [#allocation4], 0
    // Predicated region
    $region2: #{llama_forward.24} parent=1 // pred_check
      _
    $region3: #{llama_forward.24} parent=1 // pred_check_branch
      %9 = sbr.rel (0) target = $region5
    $region4: #{llama_forward.24} parent=1 // pred_region
      _
    $region5: #{llama_forward.24} parent=1 // pred_fallthru
      _
    // Predicated region
    $region6: #{llama_forward.24} parent=1 // pred_check
      _
    $region7: #{llama_forward.24} parent=1 // pred_check_branch
      %11 = sbr.rel (0) target = $region9
    $region8: #{llama_forward.24} parent=1 // pred_region
      %s13 = ssub.s32 4096, 4096
      %14 = vsyncadd [#allocation4], %s13
      %s15 = sshll.u32 [#allocation3], 4
      %s16 = int_to_ptr.vmem [resolvable:$true] %s15
      %21 = dma.hbm_to_vmem [thread:$0]  %s1, 4096, %s16, [#allocation4], 128, 128, 8
    $region9: #{llama_forward.24} parent=1 // pred_fallthru
      _
    // Predicated region
    $region10: #{llama_forward.24} parent=1 // pred_check
      _
    $region11: #{llama_forward.24} parent=1 // pred_check_branch
      %23 = sbr.rel (0) target = $region13
    $region12: #{llama_forward.24} parent=1 // pred_region
      %24 = dma.done [#allocation4], 4096
    $region13: #{llama_forward.24} parent=1 // pred_fallthru
      _
    %p25 = scmp.eq.s32.totalorder 0, 0
    // Predicated region
    $region14: #{llama_forward.24} parent=1 // pred_check
      %p26 = pneg %p25
    $region15: #{llama_forward.24} parent=1 // pred_check_branch
      %28 = sbr.rel (%p26) target = $region17
    $region16: #{llama_forward.24} parent=1 // pred_region
      %29 = vst [vmem:[#allocation2] sm:$0xff] 0.0
      %30 = vst [vmem:[#allocation2 + $0x8] sm:$0xff] 0.0
    $region17: #{llama_forward.24} parent=1 // pred_fallthru
      _
    %v31 = vld [vmem:[#allocation2] sm:$0xff]
    %v32 = vld [vmem:[#allocation2 + $0x8] sm:$0xff]
    %v33 = vld [vmem:[%s0] sm:$0xff]
    %v34 = vld [vmem:[#allocation3] sm:$0xff]
    %v35 = vld [vmem:[#allocation3 + $0x8] sm:$0xff]
    %v36 = vld [vmem:[#allocation3 + $0x10] sm:$0xff]
    %v37 = vld [vmem:[#allocation3 + $0x18] sm:$0xff]
    %v38 = vld [vmem:[#allocation3 + $0x20] sm:$0xff]
    %v39 = vld [vmem:[#allocation3 + $0x28] sm:$0xff]
    %v40 = vld [vmem:[#allocation3 + $0x30] sm:$0xff]
    %v41 = vld [vmem:[#allocation3 + $0x38] sm:$0xff]
    %v42 = vld [vmem:[#allocation3 + $0x40] sm:$0xff]
    %v43 = vld [vmem:[#allocation3 + $0x48] sm:$0xff]
    %v44 = vld [vmem:[#allocation3 + $0x50] sm:$0xff]
    %v45 = vld [vmem:[#allocation3 + $0x58] sm:$0xff]
    %v46 = vld [vmem:[#allocation3 + $0x60] sm:$0xff]
    %v47 = vld [vmem:[#allocation3 + $0x68] sm:$0xff]
    %v48 = vld [vmem:[#allocation3 + $0x70] sm:$0xff]
    %v49 = vld [vmem:[#allocation3 + $0x78] sm:$0xff]
    %v50 = vld [vmem:[#allocation3 + $0x80] sm:$0xff]
    %v51 = vld [vmem:[#allocation3 + $0x88] sm:$0xff]
    %v52 = vld [vmem:[#allocation3 + $0x90] sm:$0xff]
    %v53 = vld [vmem:[#allocation3 + $0x98] sm:$0xff]
    %v54 = vld [vmem:[#allocation3 + $0xa0] sm:$0xff]
    %v55 = vld [vmem:[#allocation3 + $0xa8] sm:$0xff]
    %v56 = vld [vmem:[#allocation3 + $0xb0] sm:$0xff]
    %v57 = vld [vmem:[#allocation3 + $0xb8] sm:$0xff]
    %v58 = vld [vmem:[#allocation3 + $0xc0] sm:$0xff]
    %v59 = vld [vmem:[#allocation3 + $0xc8] sm:$0xff]
    %v60 = vld [vmem:[#allocation3 + $0xd0] sm:$0xff]
    %v61 = vld [vmem:[#allocation3 + $0xd8] sm:$0xff]
    %v62 = vld [vmem:[#allocation3 + $0xe0] sm:$0xff]
    %v63 = vld [vmem:[#allocation3 + $0xe8] sm:$0xff]
    %v64 = vld [vmem:[#allocation3 + $0xf0] sm:$0xff]
    %v65 = vld [vmem:[#allocation3 + $0xf8] sm:$0xff]
    %v67 = vunpack.c.l.b16 %v33
    %v68 = vunpack.c.h.b16 %v33
    %v69 = vpack.c.b16 %v67, %v67
    %v70 = vpack.c.b16 %v68, %v68
    %v105 = vunpack.c.l.b16 %v34
    %v106 = vunpack.c.h.b16 %v34
    %v107 = vunpack.c.l.b16 %v35
    %v108 = vunpack.c.h.b16 %v35
    %v109 = vunpack.c.l.b16 %v36
    %v110 = vunpack.c.h.b16 %v36
    %v111 = vunpack.c.l.b16 %v37
    %v112 = vunpack.c.h.b16 %v37
    %v113 = vunpack.c.l.b16 %v38
    %v114 = vunpack.c.h.b16 %v38
    %v115 = vunpack.c.l.b16 %v39
    %v116 = vunpack.c.h.b16 %v39
    %v117 = vunpack.c.l.b16 %v40
    %v118 = vunpack.c.h.b16 %v40
    %v119 = vunpack.c.l.b16 %v41
    %v120 = vunpack.c.h.b16 %v41
    %v121 = vunpack.c.l.b16 %v42
    %v122 = vunpack.c.h.b16 %v42
    %v123 = vunpack.c.l.b16 %v43
    %v124 = vunpack.c.h.b16 %v43
    %v125 = vunpack.c.l.b16 %v44
    %v126 = vunpack.c.h.b16 %v44
    %v127 = vunpack.c.l.b16 %v45
    %v128 = vunpack.c.h.b16 %v45
    %v129 = vunpack.c.l.b16 %v46
    %v130 = vunpack.c.h.b16 %v46
    %v131 = vunpack.c.l.b16 %v47
    %v132 = vunpack.c.h.b16 %v47
    %v133 = vunpack.c.l.b16 %v48
    %v134 = vunpack.c.h.b16 %v48
    %v135 = vunpack.c.l.b16 %v49
    %v136 = vunpack.c.h.b16 %v49
    %v137 = vunpack.c.l.b16 %v50
    %v138 = vunpack.c.h.b16 %v50
    %v139 = vunpack.c.l.b16 %v51
    %v140 = vunpack.c.h.b16 %v51
    %v141 = vunpack.c.l.b16 %v52
    %v142 = vunpack.c.h.b16 %v52
    %v143 = vunpack.c.l.b16 %v53
    %v144 = vunpack.c.h.b16 %v53
    %v145 = vunpack.c.l.b16 %v54
    %v146 = vunpack.c.h.b16 %v54
    %v147 = vunpack.c.l.b16 %v55
    %v148 = vunpack.c.h.b16 %v55
    %v149 = vunpack.c.l.b16 %v56
    %v150 = vunpack.c.h.b16 %v56
    %v151 = vunpack.c.l.b16 %v57
    %v152 = vunpack.c.h.b16 %v57
    %v153 = vunpack.c.l.b16 %v58
    %v154 = vunpack.c.h.b16 %v58
    %v155 = vunpack.c.l.b16 %v59
    %v156 = vunpack.c.h.b16 %v59
    %v157 = vunpack.c.l.b16 %v60
    %v158 = vunpack.c.h.b16 %v60
    %v159 = vunpack.c.l.b16 %v61
    %v160 = vunpack.c.h.b16 %v61
    %v161 = vunpack.c.l.b16 %v62
    %v162 = vunpack.c.h.b16 %v62
    %v163 = vunpack.c.l.b16 %v63
    %v164 = vunpack.c.h.b16 %v63
    %v165 = vunpack.c.l.b16 %v64
    %v166 = vunpack.c.h.b16 %v64
    %v167 = vunpack.c.l.b16 %v65
    %v168 = vunpack.c.h.b16 %v65
    %v169 = vpack.c.b16 %v107, %v105
    %v170 = vpack.c.b16 %v108, %v106
    %v171 = vpack.c.b16 %v111, %v109
    %v172 = vpack.c.b16 %v112, %v110
    %v173 = vpack.c.b16 %v115, %v113
    %v174 = vpack.c.b16 %v116, %v114
    %v175 = vpack.c.b16 %v119, %v117
    %v176 = vpack.c.b16 %v120, %v118
    %v177 = vpack.c.b16 %v123, %v121
    %v178 = vpack.c.b16 %v124, %v122
    %v179 = vpack.c.b16 %v127, %v125
    %v180 = vpack.c.b16 %v128, %v126
    %v181 = vpack.c.b16 %v131, %v129
    %v182 = vpack.c.b16 %v132, %v130
    %v183 = vpack.c.b16 %v135, %v133
    %v184 = vpack.c.b16 %v136, %v134
    %v185 = vpack.c.b16 %v139, %v137
    %v186 = vpack.c.b16 %v140, %v138
    %v187 = vpack.c.b16 %v143, %v141
    %v188 = vpack.c.b16 %v144, %v142
    %v189 = vpack.c.b16 %v147, %v145
    %v190 = vpack.c.b16 %v148, %v146
    %v191 = vpack.c.b16 %v151, %v149
    %v192 = vpack.c.b16 %v152, %v150
    %v193 = vpack.c.b16 %v155, %v153
    %v194 = vpack.c.b16 %v156, %v154
    %v195 = vpack.c.b16 %v159, %v157
    %v196 = vpack.c.b16 %v160, %v158
    %v197 = vpack.c.b16 %v163, %v161
    %v198 = vpack.c.b16 %v164, %v162
    %v199 = vpack.c.b16 %v167, %v165
    %v200 = vpack.c.b16 %v168, %v166
    %233 = vmatprep.subr.bf16.mxu0 %v170
    %234 = vmatpush1.bf16.msra.mxu0 %v169
    %235 = vmatprep.subr.bf16.mxu0 %v172
    %236 = vmatpush1.bf16.msra.mxu0 %v171
    %237 = vmatprep.subr.bf16.mxu0 %v174
    %238 = vmatpush1.bf16.msra.mxu0 %v173
    %239 = vmatprep.subr.bf16.mxu0 %v176
    %240 = vmatpush1.bf16.msra.mxu0 %v175
    %241 = vmatprep.subr.bf16.mxu0 %v178
    %242 = vmatpush1.bf16.msra.mxu0 %v177
    %243 = vmatprep.subr.bf16.mxu0 %v180
    %244 = vmatpush1.bf16.msra.mxu0 %v179
    %245 = vmatprep.subr.bf16.mxu0 %v182
    %246 = vmatpush1.bf16.msra.mxu0 %v181
    %247 = vmatprep.subr.bf16.mxu0 %v184
    %248 = vmatpush1.bf16.msra.mxu0 %v183
    %249 = vmatprep.subr.bf16.mxu0 %v186
    %250 = vmatpush1.bf16.msra.mxu0 %v185
    %251 = vmatprep.subr.bf16.mxu0 %v188
    %252 = vmatpush1.bf16.msra.mxu0 %v187
    %253 = vmatprep.subr.bf16.mxu0 %v190
    %254 = vmatpush1.bf16.msra.mxu0 %v189
    %255 = vmatprep.subr.bf16.mxu0 %v192
    %256 = vmatpush1.bf16.msra.mxu0 %v191
    %257 = vmatprep.subr.bf16.mxu0 %v194
    %258 = vmatpush1.bf16.msra.mxu0 %v193
    %259 = vmatprep.subr.bf16.mxu0 %v196
    %260 = vmatpush1.bf16.msra.mxu0 %v195
    %261 = vmatprep.subr.bf16.mxu0 %v198
    %262 = vmatpush1.bf16.msra.mxu0 %v197
    %263 = vmatprep.subr.bf16.mxu0 %v200
    %264 = vmatpush1.bf16.msra.mxu0 %v199
    %265 = vmatprep.mubr.bf16.mxu0 %v70
    %266 = vmatmul.mubr.bf16.gmra.mrb[0].mxu0 %v69
    %v267 = vpop.f32.mrb[0].mxu0
    %v268 = vadd.f32 0.0, %v267
    %v269 = vpop.f32.mrb[0].mxu0
    %v270 = vadd.f32 0.0, %v269
    %v271 = vpop.f32.mrb[0].mxu0
    %v272 = vpop.f32.mrb[0].mxu0
    %273 = vdwg.mxu0
    %v274 = vadd.f32 %v31, %v268
    %v275 = vadd.f32 %v32, %v270
    %276 = vst [vmem:[#allocation2] sm:$0xff] %v274
    %277 = vst [vmem:[#allocation2 + $0x8] sm:$0xff] %v275
    // Predicated region
    $region18: #{llama_forward.24} parent=1 // pred_check
      %p278 = pneg %p25
    $region19: #{llama_forward.24} parent=1 // pred_check_branch
      %280 = sbr.rel (%p278) target = $region21
    $region20: #{llama_forward.24} parent=1 // pred_region
      %v281 = vld [vmem:[#allocation2] sm:$0xff]
      %v282 = vld [vmem:[#allocation2 + $0x8] sm:$0xff]
      %v283 = vpack.c.bf16 %v281, %v281
      %v284 = vpack.c.bf16 %v282, %v282
      %v287 = vunpack.c.l.b16 %v283
      %v288 = vunpack.c.l.b16 %v284
      %v289 = vpack.c.b16 %v288, %v287
      %291 = vst [vmem:[%s2] sm:$0xff] %v289
    $region21: #{llama_forward.24} parent=1 // pred_fallthru
      _
    // Predicated region
    $region22: #{llama_forward.24} parent=1 // pred_check
      _
    $region23: #{llama_forward.24} parent=1 // pred_check_branch
      %293 = sbr.rel (0) target = $region25
    $region24: #{llama_forward.24} parent=1 // pred_region
      _
    $region25: #{llama_forward.24} parent=1 // pred_fallthru
      _
    // Predicated region
    $region26: #{llama_forward.24} parent=1 // pred_check
      _
    $region27: #{llama_forward.24} parent=1 // pred_check_branch
      %295 = sbr.rel (0) target = $region29
    $region28: #{llama_forward.24} parent=1 // pred_region
      _
    $region29: #{llama_forward.24} parent=1 // pred_fallthru
      _
    %296 = vsyncpa [#allocation4], 1

// kernel: llama_forward.23
$region0: #{llama_forward.23}
  #allocation0 [shape = 'u32[]', space=smem, size = 0x4, offset = 0x4, fixed_abs, tag = 'smem constant byte address 0x4 - core index']
  #allocation1 [shape = 'u32[144,128]{1,0:T(1,128)}', space=vmem, size = 0x12000, scoped, tag = 'internal scratch']
  #allocation2 [shape = 'f32[2,8,1]{2,1,0:T(8,128)}', space=vmem, size = 0x2000, scoped, tag = 'scratch operand']
  #allocation3 [shape = 'f32[2,8,1]{2,1,0:T(8,128)}', space=vmem, size = 0x2000, scoped, tag = 'scratch operand']
  #allocation4 [shape = 'f32[2,8,128]{2,1,0:T(8,128)}', space=vmem, size = 0x2000, scoped, tag = 'scratch operand']
  %s0 = inlined_call_operand.vmem [shape: bf16[2,8,128], index: 0, kind: input, shape index: {}]
  %s1 = inlined_call_operand.vmem [shape: bf16[2,8,128], index: 1, kind: input, shape index: {}]
  %s2 = inlined_call_operand.vmem [shape: bf16[2,8,128], index: 2, kind: input, shape index: {}]
  %s3 = inlined_call_operand.vmem [shape: bf16[2,8,128], index: 3, kind: output, shape index: {}]
  %s4 = sld [smem:[#allocation0]]
  $region34: #{llama_forward.23} parent=0
    _
  %s6 = ssub.s32 1, %s4
  %s7 = scalar_select 0, %s6, %s4
  // Predicated region
  $region2: #{llama_forward.23} parent=0 // pred_check
    _
  $region3: #{llama_forward.23} parent=0 // pred_check_branch
    %9 = sbr.rel (0) target = $region5
  $region4: #{llama_forward.23} parent=0 // pred_region
    _
  $region5: #{llama_forward.23} parent=0 // pred_fallthru
    _
  // Predicated region
  $region6: #{llama_forward.23} parent=0 // pred_check
    _
  $region7: #{llama_forward.23} parent=0 // pred_check_branch
    %11 = sbr.rel (0) target = $region9
  $region8: #{llama_forward.23} parent=0 // pred_region
    _
  $region9: #{llama_forward.23} parent=0 // pred_fallthru
    _
  // Predicated region
  $region10: #{llama_forward.23} parent=0 // pred_check
    _
  $region11: #{llama_forward.23} parent=0 // pred_check_branch
    %13 = sbr.rel (0) target = $region13
  $region12: #{llama_forward.23} parent=0 // pred_region
    _
  $region13: #{llama_forward.23} parent=0 // pred_fallthru
    _
  %p15 = scmp.eq.s32.totalorder 0, 0
  // Predicated region
  $region14: #{llama_forward.23} parent=0 // pred_check
    %p16 = pneg %p15
  $region15: #{llama_forward.23} parent=0 // pred_check_branch
    %18 = sbr.rel (%p16) target = $region17
  $region16: #{llama_forward.23} parent=0 // pred_region
    %vm19 = vcmask 7168
    %20 = vst.msk [vmem:[#allocation2] sm:$0xff] %vm19, -1e+30
    %21 = vst.msk [vmem:[#allocation2 + $0x8] sm:$0xff] %vm19, -1e+30
    %22 = vst.msk [vmem:[#allocation3] sm:$0xff] %vm19, 0.0
    %23 = vst.msk [vmem:[#allocation3 + $0x8] sm:$0xff] %vm19, 0.0
    %24 = vst [vmem:[#allocation4] sm:$0xff] 0.0
    %25 = vst [vmem:[#allocation4 + $0x8] sm:$0xff] 0.0
  $region17: #{llama_forward.23} parent=0 // pred_fallthru
    _
  %s26 = smul.u32 0, 8
  %s27 = smul.u32 0, 8
  %s28 = sadd.s32 %s27, 7
  %p29 = scmp.le.s32.totalorder %s26, %s28
  // Predicated region
  $region18: #{llama_forward.23} parent=0 // pred_check
    %p30 = pneg %p29
  $region19: #{llama_forward.23} parent=0 // pred_check_branch
    %32 = sbr.rel (%p30) target = $region21
  $region20: #{llama_forward.23} parent=0 // pred_region
    %v33 = vld [vmem:[%s0] sm:$0xf]
    %v34 = vld [vmem:[%s0 + $0x4] sm:$0xf]
    %v35 = vld [vmem:[%s1] sm:$0xf]
    %v36 = vld [vmem:[%s1 + $0x4] sm:$0xf]
    %37 = vmatprep.subr.bf16.mxu0 0
    %38 = vmatpush1.bf16.xpose.msra.mxu0 %v35
    %39 = vmatprep.subr.bf16.mxu0 0
    %40 = vmatpush1.bf16.xpose.msra.mxu0 0
    %41 = vmatprep.subr.bf16.mxu0 0
    %42 = vmatpush1.bf16.xpose.msra.mxu0 0
    %43 = vmatprep.subr.bf16.mxu0 0
    %44 = vmatpush1.bf16.xpose.msra.mxu0 0
    %45 = vmatprep.subr.bf16.mxu0 0
    %46 = vmatpush1.bf16.xpose.msra.mxu0 0
    %47 = vmatprep.subr.bf16.mxu0 0
    %48 = vmatpush1.bf16.xpose.msra.mxu0 0
    %49 = vmatprep.subr.bf16.mxu0 0
    %50 = vmatpush1.bf16.xpose.msra.mxu0 0
    %51 = vmatprep.subr.bf16.mxu0 0
    %52 = vmatpush1.bf16.xpose.msra.mxu0 0
    %53 = vmatprep.subr.bf16.mxu0 0
    %54 = vmatpush1.bf16.xpose.msra.mxu0 0
    %55 = vmatprep.subr.bf16.mxu0 0
    %56 = vmatpush1.bf16.xpose.msra.mxu0 0
    %57 = vmatprep.subr.bf16.mxu0 0
    %58 = vmatpush1.bf16.xpose.msra.mxu0 0
    %59 = vmatprep.subr.bf16.mxu0 0
    %60 = vmatpush1.bf16.xpose.msra.mxu0 0
    %61 = vmatprep.subr.bf16.mxu0 0
    %62 = vmatpush1.bf16.xpose.msra.mxu0 0
    %63 = vmatprep.subr.bf16.mxu0 0
    %64 = vmatpush1.bf16.xpose.msra.mxu0 0
    %65 = vmatprep.subr.bf16.mxu0 0
    %66 = vmatpush1.bf16.xpose.msra.mxu0 0
    %67 = vmatprep.subr.bf16.mxu0 0
    %68 = vmatpush1.bf16.xpose.msra.mxu0 0
    %69 = vmatprep.mubr.bf16.mxu0 0
    %70 = vmatmul.mubr.bf16.gmra.mrb[0].mxu0 %v33
    %v71 = vpop.f32.mrb[0].mxu0
    %v72 = vadd.f32 0.0, %v71
    %v73 = vpop.f32.mrb[0].mxu0
    %v74 = vpop.f32.mrb[0].mxu0
    %v75 = vpop.f32.mrb[0].mxu0
    %76 = vdwg.mxu0
    %77 = vmatprep.subr.bf16.mxu0 0
    %78 = vmatpush1.bf16.xpose.msra.mxu0 %v36
    %79 = vmatprep.subr.bf16.mxu0 0
    %80 = vmatpush1.bf16.xpose.msra.mxu0 0
    %81 = vmatprep.subr.bf16.mxu0 0
    %82 = vmatpush1.bf16.xpose.msra.mxu0 0
    %83 = vmatprep.subr.bf16.mxu0 0
    %84 = vmatpush1.bf16.xpose.msra.mxu0 0
    %85 = vmatprep.subr.bf16.mxu0 0
    %86 = vmatpush1.bf16.xpose.msra.mxu0 0
    %87 = vmatprep.subr.bf16.mxu0 0
    %88 = vmatpush1.bf16.xpose.msra.mxu0 0
    %89 = vmatprep.subr.bf16.mxu0 0
    %90 = vmatpush1.bf16.xpose.msra.mxu0 0
    %91 = vmatprep.subr.bf16.mxu0 0
    %92 = vmatpush1.bf16.xpose.msra.mxu0 0
    %93 = vmatprep.subr.bf16.mxu0 0
    %94 = vmatpush1.bf16.xpose.msra.mxu0 0
    %95 = vmatprep.subr.bf16.mxu0 0
    %96 = vmatpush1.bf16.xpose.msra.mxu0 0
    %97 = vmatprep.subr.bf16.mxu0 0
    %98 = vmatpush1.bf16.xpose.msra.mxu0 0
    %99 = vmatprep.subr.bf16.mxu0 0
    %100 = vmatpush1.bf16.xpose.msra.mxu0 0
    %101 = vmatprep.subr.bf16.mxu0 0
    %102 = vmatpush1.bf16.xpose.msra.mxu0 0
    %103 = vmatprep.subr.bf16.mxu0 0
    %104 = vmatpush1.bf16.xpose.msra.mxu0 0
    %105 = vmatprep.subr.bf16.mxu0 0
    %106 = vmatpush1.bf16.xpose.msra.mxu0 0
    %107 = vmatprep.subr.bf16.mxu0 0
    %108 = vmatpush1.bf16.xpose.msra.mxu0 0
    %109 = vmatprep.mubr.bf16.mxu0 0
    %110 = vmatmul.mubr.bf16.gmra.mrb[0].mxu0 %v34
    %v111 = vpop.f32.mrb[0].mxu0
    %v112 = vadd.f32 0.0, %v111
    %v113 = vpop.f32.mrb[0].mxu0
    %v114 = vpop.f32.mrb[0].mxu0
    %v115 = vpop.f32.mrb[0].mxu0
    %116 = vdwg.mxu0
    %v117 = vlaneseq
    %v118 = vshrl.u32 %v117, 7
    %v119 = vlaneseq
    %v120 = vand.u32 %v119, 127
    %v121 = vstv %s26
    %v122 = vadd.s32 %v121, %v120
    %v123 = vstv %s27
    %v124 = vadd.s32 %v123, %v118
    %vm125 = vcmp.le.s32.totalorder %v122, %v124
    %v126 = vsel %vm125, %v72, -1e+30
    %v127 = vsel %vm125, %v112, -1e+30
    %v128 = vld [vmem:[#allocation2] sm:$0xff]
    %v129 = vld [vmem:[#allocation2 + $0x8] sm:$0xff]
    %vm130 = vcmask 64512
    %v131 = vsel %vm130, %v126, -inf
    %132 = vmax.xlane.f32.xlu0 %v131
    %v133 = vpop.xlane.xlu0 %132
    %v134 = vsel %vm130, %v127, -inf
    %135 = vmax.xlane.f32.xlu0 %v134
    %v136 = vpop.xlane.xlu0 %135
    %v137 = vmax.f32 %v128, %v133
    %v138 = vmax.f32 %v129, %v136
    %v139 = vsub.f32 %v128, %v137
    %v140 = vsub.f32 %v129, %v138
    %v141 = vmul.f32 %v139, 1.442695
    %v142 = vpow.pop %v141
    %v143 = vmul.f32 %v140, 1.442695
    %v144 = vpow.pop %v143
    %146 = vset.pattern.permute.xlu0 0
    %147 = vperm.xlu0 %146, %v137
    %v148 = vpop.permute.xlu0 %147
    %151 = vset.pattern.permute.xlu0 0
    %152 = vperm.xlu0 %151, %v138
    %v153 = vpop.permute.xlu0 %152
    %v155 = vsub.f32 %v126, %v148
    %v156 = vsub.f32 %v127, %v153
    %v157 = vmul.f32 %v155, 1.442695
    %v158 = vpow.pop %v157
    %v159 = vmul.f32 %v156, 1.442695
    %v160 = vpow.pop %v159
    %v161 = vld [vmem:[#allocation3] sm:$0xff]
    %v162 = vld [vmem:[#allocation3 + $0x8] sm:$0xff]
    %v163 = vmul.f32 %v142, %v161
    %v164 = vmul.f32 %v144, %v162
    %v165 = vsel %vm130, %v158, 0.0
    %166 = vadd.xlane.f32.xlu0 %v165
    %v167 = vpop.xlane.xlu0 %166
    %v168 = vsel %vm130, %v160, 0.0
    %169 = vadd.xlane.f32.xlu0 %v168
    %v170 = vpop.xlane.xlu0 %169
    %v171 = vadd.f32 %v163, %v167
    %v172 = vadd.f32 %v164, %v170
    %vm173 = vcmask 7168
    %174 = vst.msk [vmem:[#allocation3] sm:$0xff] %vm173, %v171
    %175 = vst.msk [vmem:[#allocation3 + $0x8] sm:$0xff] %vm173, %v172
    %v176 = vld [vmem:[#allocation4] sm:$0xff]
    %v177 = vld [vmem:[#allocation4 + $0x8] sm:$0xff]
    %179 = vset.pattern.permute.xlu0 0
    %180 = vperm.xlu0 %179, %v142
    %v181 = vpop.permute.xlu0 %180
    %184 = vset.pattern.permute.xlu0 0
    %185 = vperm.xlu0 %184, %v144
    %v186 = vpop.permute.xlu0 %185
    %v188 = vmul.f32 %v181, %v176
    %v189 = vmul.f32 %v186, %v177
    %v190 = vpack.c.bf16 %v158, %v158
    %v191 = vpack.c.bf16 %v160, %v160
    %v192 = vld [vmem:[%s2] sm:$0xf]
    %v193 = vld [vmem:[%s2 + $0x4] sm:$0xf]
    %v195 = vsel %vm130, %v190, 0
    %vm197 = vcmask 1043456
    %v199 = vsel %vm197, %v192, 0
    %201 = vmatprep.subr.bf16.mxu0 0
    %202 = vmatpush1.bf16.msra.mxu0 %v199
    %203 = vmatprep.subr.bf16.mxu0 0
    %204 = vmatpush1.bf16.msra.mxu0 0
    %205 = vmatprep.subr.bf16.mxu0 0
    %206 = vmatpush1.bf16.msra.mxu0 0
    %207 = vmatprep.subr.bf16.mxu0 0
    %208 = vmatpush1.bf16.msra.mxu0 0
    %209 = vmatprep.subr.bf16.mxu0 0
    %210 = vmatpush1.bf16.msra.mxu0 0
    %211 = vmatprep.subr.bf16.mxu0 0
    %212 = vmatpush1.bf16.msra.mxu0 0
    %213 = vmatprep.subr.bf16.mxu0 0
    %214 = vmatpush1.bf16.msra.mxu0 0
    %215 = vmatprep.subr.bf16.mxu0 0
    %216 = vmatpush1.bf16.msra.mxu0 0
    %217 = vmatprep.subr.bf16.mxu0 0
    %218 = vmatpush1.bf16.msra.mxu0 0
    %219 = vmatprep.subr.bf16.mxu0 0
    %220 = vmatpush1.bf16.msra.mxu0 0
    %221 = vmatprep.subr.bf16.mxu0 0
    %222 = vmatpush1.bf16.msra.mxu0 0
    %223 = vmatprep.subr.bf16.mxu0 0
    %224 = vmatpush1.bf16.msra.mxu0 0
    %225 = vmatprep.subr.bf16.mxu0 0
    %226 = vmatpush1.bf16.msra.mxu0 0
    %227 = vmatprep.subr.bf16.mxu0 0
    %228 = vmatpush1.bf16.msra.mxu0 0
    %229 = vmatprep.subr.bf16.mxu0 0
    %230 = vmatpush1.bf16.msra.mxu0 0
    %231 = vmatprep.subr.bf16.mxu0 0
    %232 = vmatpush1.bf16.msra.mxu0 0
    %233 = vmatprep.mubr.bf16.mxu0 0
    %234 = vmatmul.mubr.bf16.gmra.mrb[0].mxu0 %v195
    %v235 = vpop.f32.mrb[0].mxu0
    %v236 = vadd.f32 0.0, %v235
    %v237 = vpop.f32.mrb[0].mxu0
    %v238 = vpop.f32.mrb[0].mxu0
    %v239 = vpop.f32.mrb[0].mxu0
    %240 = vdwg.mxu0
    %v242 = vsel %vm130, %v191, 0
    %v245 = vsel %vm197, %v193, 0
    %247 = vmatprep.subr.bf16.mxu0 0
    %248 = vmatpush1.bf16.msra.mxu0 %v245
    %249 = vmatprep.subr.bf16.mxu0 0
    %250 = vmatpush1.bf16.msra.mxu0 0
    %251 = vmatprep.subr.bf16.mxu0 0
    %252 = vmatpush1.bf16.msra.mxu0 0
    %253 = vmatprep.subr.bf16.mxu0 0
    %254 = vmatpush1.bf16.msra.mxu0 0
    %255 = vmatprep.subr.bf16.mxu0 0
    %256 = vmatpush1.bf16.msra.mxu0 0
    %257 = vmatprep.subr.bf16.mxu0 0
    %258 = vmatpush1.bf16.msra.mxu0 0
    %259 = vmatprep.subr.bf16.mxu0 0
    %260 = vmatpush1.bf16.msra.mxu0 0
    %261 = vmatprep.subr.bf16.mxu0 0
    %262 = vmatpush1.bf16.msra.mxu0 0
    %263 = vmatprep.subr.bf16.mxu0 0
    %264 = vmatpush1.bf16.msra.mxu0 0
    %265 = vmatprep.subr.bf16.mxu0 0
    %266 = vmatpush1.bf16.msra.mxu0 0
    %267 = vmatprep.subr.bf16.mxu0 0
    %268 = vmatpush1.bf16.msra.mxu0 0
    %269 = vmatprep.subr.bf16.mxu0 0
    %270 = vmatpush1.bf16.msra.mxu0 0
    %271 = vmatprep.subr.bf16.mxu0 0
    %272 = vmatpush1.bf16.msra.mxu0 0
    %273 = vmatprep.subr.bf16.mxu0 0
    %274 = vmatpush1.bf16.msra.mxu0 0
    %275 = vmatprep.subr.bf16.mxu0 0
    %276 = vmatpush1.bf16.msra.mxu0 0
    %277 = vmatprep.subr.bf16.mxu0 0
    %278 = vmatpush1.bf16.msra.mxu0 0
    %279 = vmatprep.mubr.bf16.mxu0 0
    %280 = vmatmul.mubr.bf16.gmra.mrb[0].mxu0 %v242
    %v281 = vpop.f32.mrb[0].mxu0
    %v282 = vadd.f32 0.0, %v281
    %v283 = vpop.f32.mrb[0].mxu0
    %v284 = vpop.f32.mrb[0].mxu0
    %v285 = vpop.f32.mrb[0].mxu0
    %286 = vdwg.mxu0
    %v287 = vadd.f32 %v188, %v236
    %v288 = vadd.f32 %v189, %v282
    %289 = vst [vmem:[#allocation4] sm:$0xff] %v287
    %290 = vst [vmem:[#allocation4 + $0x8] sm:$0xff] %v288
    %291 = vst.msk [vmem:[#allocation2] sm:$0xff] %vm173, %v137
    %292 = vst.msk [vmem:[#allocation2 + $0x8] sm:$0xff] %vm173, %v138
  $region21: #{llama_forward.23} parent=0 // pred_fallthru
    _
  // Predicated region
  $region22: #{llama_forward.23} parent=0 // pred_check
    %p293 = pneg %p15
  $region23: #{llama_forward.23} parent=0 // pred_check_branch
    %295 = sbr.rel (%p293) target = $region25
  $region24: #{llama_forward.23} parent=0 // pred_region
    %v296 = vld [vmem:[#allocation4] sm:$0xff]
    %v297 = vld [vmem:[#allocation4 + $0x8] sm:$0xff]
    %v298 = vld [vmem:[#allocation3] sm:$0xff]
    %v299 = vld [vmem:[#allocation3 + $0x8] sm:$0xff]
    %301 = vset.pattern.permute.xlu0 0
    %302 = vperm.xlu0 %301, %v298
    %v303 = vpop.permute.xlu0 %302
    %306 = vset.pattern.permute.xlu0 0
    %307 = vperm.xlu0 %306, %v299
    %v308 = vpop.permute.xlu0 %307
    %v310 = vrcp.pop %v303
    %v311 = vmul.f32 %v296, %v310
    %v312 = vrcp.pop %v308
    %v313 = vmul.f32 %v297, %v312
    %v314 = vpack.c.bf16 %v311, %v311
    %v315 = vpack.c.bf16 %v313, %v313
    %316 = vst [vmem:[%s3] sm:$0xf] %v314
    %317 = vst [vmem:[%s3 + $0x4] sm:$0xf] %v315
  $region25: #{llama_forward.23} parent=0 // pred_fallthru
    _
  // Predicated region
  $region26: #{llama_forward.23} parent=0 // pred_check
    _
  $region27: #{llama_forward.23} parent=0 // pred_check_branch
    %319 = sbr.rel (0) target = $region29
  $region28: #{llama_forward.23} parent=0 // pred_region
    _
  $region29: #{llama_forward.23} parent=0 // pred_fallthru
    _
  // Predicated region
  $region30: #{llama_forward.23} parent=0 // pred_check
    _
  $region31: #{llama_forward.23} parent=0 // pred_check_branch
    %321 = sbr.rel (0) target = $region33
  $region32: #{llama_forward.23} parent=0 // pred_region
    _
  $region33: #{llama_forward.23} parent=0 // pred_fallthru
    _

// kernel: llama_forward.26
$region0: #{llama_forward.26}
  #allocation0 [shape = 'u32[]', space=smem, size = 0x4, offset = 0x4, fixed_abs, tag = 'smem constant byte address 0x4 - core index']
  #allocation1 [shape = 'u32[144,128]{1,0:T(1,128)}', space=vmem, size = 0x12000, scoped, tag = 'internal scratch']
  #allocation2 [shape = 'f32[8,256]{1,0:T(8,128)}', space=vmem, size = 0x2000, scoped, tag = 'scratch operand']
  #allocation3 [shape = 'f32[8,256]{1,0:T(8,128)}', space=vmem, size = 0x2000, scoped, tag = 'scratch operand']
  %s0 = inlined_call_operand.vmem [shape: bf16[8,256], index: 0, kind: input, shape index: {}]
  %s1 = inlined_call_operand.vmem [shape: bf16[256,1024], index: 1, kind: input, shape index: {}]
  %s2 = inlined_call_operand.hbm [shape: bf16[256,1024], index: 2, kind: input, shape index: {}]
  %s3 = inlined_call_operand.vmem [shape: bf16[8,1024], index: 3, kind: output, shape index: {}]
  %s4 = sld [smem:[#allocation0]]
  $region95: #{llama_forward.26} parent=0
    _
  %s6 = ssub.s32 1, %s4
  %s7 = scalar_select 0, %s6, %s4
  $region1: #{llama_forward.26} parent=0
    #allocation4 [shape = 'u8[262144]{0}', space=vmem, size = 0x40000, scoped, tag = 'input window, operand 1']
    #allocation5 [shape = 'u8[262144]{0}', space=vmem, size = 0x40000, scoped, tag = 'input window, operand 2']
    #allocation6 [shape = 's32[2]{0}', space=sflag, size = 0x8, scoped, tag = 'scoped memory for llama_forward.26']
    %8 = vsyncpa [#allocation6], 0
    %s9 = scalar_lea.sflag [#allocation6], 1
    %10 = vsyncpa %s9, 0
    loop: start=0, step=1, limit=6
    $region2: #{llama_forward.26} parent=1 // loop_pre_header
      _
    $region3: #{llama_forward.26} parent=1 // loop_header
      %s12 = sphi 0, %s16
      %p13 = scmp.ge.s32.totalorder %s12, 6
      %s19 = sphi 0, %s38
      %s20 = sphi 0, %s34
      %s21 = sphi 0, %s30
      %s22 = sphi 0, %s19
      %s23 = sphi 0, %s20
      %s24 = sphi 0, %s21
      %s25 = sphi 0, %s22
      %s26 = sphi 0, %s23
      %s27 = sphi 0, %s24
      %s43 = sphi 0, %s45
      %s46 = sphi 0, %s43
      %s47 = sphi 0, %s46
      %s63 = sphi 0, %s47
      %s71 = sphi 0, %s73
      %s74 = sphi 0, %s71
      %s75 = sphi 0, %s74
      %s91 = sphi 0, %s75
      %s99 = sphi 0, %s101
      %s102 = sphi 0, %s99
      %s103 = sphi 0, %s102
      %s119 = sphi 0, %s103
      %s127 = sphi 0, %s129
      %s130 = sphi 0, %s127
      %s131 = sphi 0, %s130
      %s147 = sphi 0, %s131
    $region4: #{llama_forward.26} parent=1 // loop_header_branch
      %15 = sbr.rel (%p13) target = $region8
    $region5: #{llama_forward.26} parent=1 // loop_body
      %s17 = ssub.s32 %s12, 1
      %s18 = ssub.s32 %s12, 2
      %s28 = sadd.s32 1, %s21
      %p29 = scmp.ge.s32.totalorder %s28, 1
      %s30 = scalar_select %p29, 0, %s28
      %s31 = sadd.s32 1, %s20
      %s32 = scalar_select %p29, %s31, %s20
      %p33 = scmp.ge.s32.totalorder %s32, 4
      %s34 = scalar_select %p33, 0, %s32
      %s35 = sadd.s32 1, %s19
      %s36 = scalar_select %p33, %s35, %s19
      %p37 = scmp.ge.s32.totalorder %s36, 1
      %s38 = scalar_select %p37, 0, %s36
      %s39 = ssub.s32 %s19, %s38
      %s40 = ssub.s32 %s21, %s30
      %s41 = sor.u32 %s39, %s40
      %p42 = scmp.eq.s32.totalorder %s41, 0
      %s44 = sadd.s32 %s43, 1
      %s45 = scalar_select %p42, %s43, %s44
      %p48 = pneg %p42
      %p49 = scmp.eq.s32.totalorder %s12, 3
      %p50 = por %p48, %p49
      %p51 = scmp.ne.s32.totalorder %s43, %s46
      %p52 = scmp.eq.s32.totalorder %s12, 0
      %p53 = por %p51, %p52
      %p54 = scmp.ne.s32.totalorder %s43, %s46
      %p55 = scmp.eq.s32.totalorder %s17, 3
      %p56 = por %p54, %p55
      %p57 = scmp.ne.s32.totalorder %s46, %s47
      %p58 = scmp.eq.s32.totalorder %s17, 0
      %p59 = por %p57, %p58
      %p60 = scmp.ne.s32.totalorder %s46, %s47
      %p61 = scmp.eq.s32.totalorder %s18, 3
      %p62 = por %p60, %p61
      %p64 = scmp.ne.s32.totalorder %s47, %s63
      %p65 = scmp.eq.s32.totalorder %s18, 0
      %p66 = por %p64, %p65
      %s67 = ssub.s32 %s21, %s30
      %s68 = ssub.s32 %s20, %s34
      %s69 = sor.u32 %s67, %s68
      %p70 = scmp.eq.s32.totalorder %s69, 0
      %s72 = sadd.s32 %s71, 1
      %s73 = scalar_select %p70, %s71, %s72
      %p76 = pneg %p70
      %p77 = scmp.eq.s32.totalorder %s12, 3
      %p78 = por %p76, %p77
      %p79 = scmp.ne.s32.totalorder %s71, %s74
      %p80 = scmp.eq.s32.totalorder %s12, 0
      %p81 = por %p79, %p80
      %p82 = scmp.ne.s32.totalorder %s71, %s74
      %p83 = scmp.eq.s32.totalorder %s17, 3
      %p84 = por %p82, %p83
      %p85 = scmp.ne.s32.totalorder %s74, %s75
      %p86 = scmp.eq.s32.totalorder %s17, 0
      %p87 = por %p85, %p86
      %p88 = scmp.ne.s32.totalorder %s74, %s75
      %p89 = scmp.eq.s32.totalorder %s18, 3
      %p90 = por %p88, %p89
      %p92 = scmp.ne.s32.totalorder %s75, %s91
      %p93 = scmp.eq.s32.totalorder %s18, 0
      %p94 = por %p92, %p93
      %s95 = ssub.s32 %s21, %s30
      %s96 = ssub.s32 %s20, %s34
      %s97 = sor.u32 %s95, %s96
      %p98 = scmp.eq.s32.totalorder %s97, 0
      %s100 = sadd.s32 %s99, 1
      %s101 = scalar_select %p98, %s99, %s100
      %p104 = pneg %p98
      %p105 = scmp.eq.s32.totalorder %s12, 3
      %p106 = por %p104, %p105
      %p107 = scmp.ne.s32.totalorder %s99, %s102
      %p108 = scmp.eq.s32.totalorder %s12, 0
      %p109 = por %p107, %p108
      %p110 = scmp.ne.s32.totalorder %s99, %s102
      %p111 = scmp.eq.s32.totalorder %s17, 3
      %p112 = por %p110, %p111
      %p113 = scmp.ne.s32.totalorder %s102, %s103
      %p114 = scmp.eq.s32.totalorder %s17, 0
      %p115 = por %p113, %p114
      %p116 = scmp.ne.s32.totalorder %s102, %s103
      %p117 = scmp.eq.s32.totalorder %s18, 3
      %p118 = por %p116, %p117
      %p120 = scmp.ne.s32.totalorder %s103, %s119
      %p121 = scmp.eq.s32.totalorder %s18, 0
      %p122 = por %p120, %p121
      %s123 = ssub.s32 %s19, %s38
      %s124 = ssub.s32 %s20, %s34
      %s125 = sor.u32 %s123, %s124
      %p126 = scmp.eq.s32.totalorder %s125, 0
      %s128 = sadd.s32 %s127, 1
      %s129 = scalar_select %p126, %s127, %s128
      %p132 = pneg %p126
      %p133 = scmp.eq.s32.totalorder %s12, 3
      %p134 = por %p132, %p133
      %p135 = scmp.ne.s32.totalorder %s127, %s130
      %p136 = scmp.eq.s32.totalorder %s12, 0
      %p137 = por %p135, %p136
      %p138 = scmp.ne.s32.totalorder %s127, %s130
      %p139 = scmp.eq.s32.totalorder %s17, 3
      %p140 = por %p138, %p139
      %p141 = scmp.ne.s32.totalorder %s130, %s131
      %p142 = scmp.eq.s32.totalorder %s17, 0
      %p143 = por %p141, %p142
      %p144 = scmp.ne.s32.totalorder %s130, %s131
      %p145 = scmp.eq.s32.totalorder %s18, 3
      %p146 = por %p144, %p145
      %p148 = scmp.ne.s32.totalorder %s131, %s147
      %p149 = scmp.eq.s32.totalorder %s18, 0
      %p150 = por %p148, %p149
      %p151 = scmp.le.s32.totalorder 1, %s12
      %p152 = scmp.lt.s32.totalorder %s12, 5
      %p153 = pnand %p151, %p152
      %p154 = pneg %p153
      // Predicated region
      $region9: #{llama_forward.26} parent=5 // pred_check
        _
      $region10: #{llama_forward.26} parent=5 // pred_check_branch
        %156 = sbr.rel (%p153) target = $region12
      $region11: #{llama_forward.26} parent=5 // pred_region
        %s157 = ssub.s32 %s12, 1
        // Predicated region
        $region13: #{llama_forward.26} parent=11 // pred_check
          %p158 = pneg %p59
        $region14: #{llama_forward.26} parent=11 // pred_check_branch
          %160 = sbr.rel (%p158) target = $region16
        $region15: #{llama_forward.26} parent=11 // pred_region
          %s161 = smul.u32 2, %s24
          %p162 = scmp.lt.s32.totalorder %s22, 0
          %s163 = scalar_select %p162, %s22, 0
          %p164 = scmp.lt.s32.totalorder %s161, 1
          %s165 = scalar_select %p164, %s161, 1
          %s166 = smul.addr %s163, 2
          %s167 = sadd.s32 %s165, %s166
          %s168 = smul.addr %s167, 4
          %s169 = scalar_lea.vmem %s0, %s168
          %s170 = smul.u32 2, %s24
        $region16: #{llama_forward.26} parent=11 // pred_fallthru
          _
      $region12: #{llama_forward.26} parent=5 // pred_fallthru
        _
      %p171 = scmp.lt.s32.totalorder %s12, 4
      // Predicated region
      $region17: #{llama_forward.26} parent=5 // pred_check
        %p172 = pneg %p171
      $region18: #{llama_forward.26} parent=5 // pred_check_branch
        %174 = sbr.rel (%p172) target = $region20
      $region19: #{llama_forward.26} parent=5 // pred_region
        // Predicated region
        $region21: #{llama_forward.26} parent=19 // pred_check
          %p175 = pneg %p81
        $region22: #{llama_forward.26} parent=19 // pred_check_branch
          %177 = sbr.rel (%p175) target = $region24
        $region23: #{llama_forward.26} parent=19 // pred_region
          %s178 = sand.u32 %s71, 1
          %s179 = sand.u32 %s71, 1
          %s180 = smul.addr %s179, 256
          %s181 = scalar_lea.vmem [#allocation4], %s180
          %s182 = smul.u32 32, %s21
          %s183 = smul.u32 2, %s20
          %s184 = smul.addr %s182, 8
          %s185 = sadd.s32 %s183, %s184
          %s186 = smul.addr %s185, 4
          %s187 = scalar_lea.vmem %s1, %s186
          // Predicated region
          $region25: #{llama_forward.26} parent=23 // pred_check
            _
          $region26: #{llama_forward.26} parent=23 // pred_check_branch
            %189 = sbr.rel (0) target = $region28
          $region27: #{llama_forward.26} parent=23 // pred_region
            // Predicated region
            $region29: #{llama_forward.26} parent=27 // pred_check
              _
            $region30: #{llama_forward.26} parent=27 // pred_check_branch
              %191 = sbr.rel (0) target = $region32
            $region31: #{llama_forward.26} parent=27 // pred_region
              // Predicated region
              $region44: #{llama_forward.26} parent=31 // pred_check
                _
              $region45: #{llama_forward.26} parent=31 // pred_check_branch
                %268 = sbr.rel (0) target = $region47
              $region46: #{llama_forward.26} parent=31 // pred_region
                loop: start=0, step=1, limit=1
                $region48: #{llama_forward.26} parent=46 // loop_pre_header
                  _
                $region49: #{llama_forward.26} parent=46 // loop_header
                  %s270 = sphi 0, %s274
                  %p271 = scmp.ge.s32.totalorder %s270, 1
                  %s275 = sphi %s187, %s187
                  %s276 = sphi %s181, %s181
                $region50: #{llama_forward.26} parent=46 // loop_header_branch
                  %273 = sbr.rel (%p271) target = $region54
                $region51: #{llama_forward.26} parent=46 // loop_body
                  %v277 = vld [vmem:[%s275] sm:$0xff]
                  %278 = vst [vmem:[%s276] sm:$0xff] %v277
                  %v279 = vld [vmem:[%s275 + $0x20] sm:$0xff]
                  %280 = vst [vmem:[%s276 + $0x8] sm:$0xff] %v279
                  %v281 = vld [vmem:[%s275 + $0x40] sm:$0xff]
                  %282 = vst [vmem:[%s276 + $0x10] sm:$0xff] %v281
                  %v283 = vld [vmem:[%s275 + $0x60] sm:$0xff]
                  %284 = vst [vmem:[%s276 + $0x18] sm:$0xff] %v283
                  %v285 = vld [vmem:[%s275 + $0x80] sm:$0xff]
                  %286 = vst [vmem:[%s276 + $0x20] sm:$0xff] %v285
                  %v287 = vld [vmem:[%s275 + $0xa0] sm:$0xff]
                  %288 = vst [vmem:[%s276 + $0x28] sm:$0xff] %v287
                  %v289 = vld [vmem:[%s275 + $0xc0] sm:$0xff]
                  %290 = vst [vmem:[%s276 + $0x30] sm:$0xff] %v289
                  %v291 = vld [vmem:[%s275 + $0xe0] sm:$0xff]
                  %292 = vst [vmem:[%s276 + $0x38] sm:$0xff] %v291
                  %v293 = vld [vmem:[%s275 + $0x100] sm:$0xff]
                  %294 = vst [vmem:[%s276 + $0x40] sm:$0xff] %v293
                  %v295 = vld [vmem:[%s275 + $0x120] sm:$0xff]
                  %296 = vst [vmem:[%s276 + $0x48] sm:$0xff] %v295
                  %v297 = vld [vmem:[%s275 + $0x140] sm:$0xff]
                  %298 = vst [vmem:[%s276 + $0x50] sm:$0xff] %v297
                  %v299 = vld [vmem:[%s275 + $0x160] sm:$0xff]
                  %300 = vst [vmem:[%s276 + $0x58] sm:$0xff] %v299
                  %v301 = vld [vmem:[%s275 + $0x180] sm:$0xff]
                  %302 = vst [vmem:[%s276 + $0x60] sm:$0xff] %v301
                  %v303 = vld [vmem:[%s275 + $0x1a0] sm:$0xff]
                  %304 = vst [vmem:[%s276 + $0x68] sm:$0xff] %v303
                  %v305 = vld [vmem:[%s275 + $0x1c0] sm:$0xff]
                  %306 = vst [vmem:[%s276 + $0x70] sm:$0xff] %v305
                  %v307 = vld [vmem:[%s275 + $0x1e0] sm:$0xff]
                  %308 = vst [vmem:[%s276 + $0x78] sm:$0xff] %v307
                  %v309 = vld [vmem:[%s275 + $0x200] sm:$0xff]
                  %310 = vst [vmem:[%s276 + $0x80] sm:$0xff] %v309
                  %v311 = vld [vmem:[%s275 + $0x220] sm:$0xff]
                  %312 = vst [vmem:[%s276 + $0x88] sm:$0xff] %v311
                  %v313 = vld [vmem:[%s275 + $0x240] sm:$0xff]
                  %314 = vst [vmem:[%s276 + $0x90] sm:$0xff] %v313
                  %v315 = vld [vmem:[%s275 + $0x260] sm:$0xff]
                  %316 = vst [vmem:[%s276 + $0x98] sm:$0xff] %v315
                  %v317 = vld [vmem:[%s275 + $0x280] sm:$0xff]
                  %318 = vst [vmem:[%s276 + $0xa0] sm:$0xff] %v317
                  %v319 = vld [vmem:[%s275 + $0x2a0] sm:$0xff]
                  %320 = vst [vmem:[%s276 + $0xa8] sm:$0xff] %v319
                  %v321 = vld [vmem:[%s275 + $0x2c0] sm:$0xff]
                  %322 = vst [vmem:[%s276 + $0xb0] sm:$0xff] %v321
                  %v323 = vld [vmem:[%s275 + $0x2e0] sm:$0xff]
                  %324 = vst [vmem:[%s276 + $0xb8] sm:$0xff] %v323
                  %v325 = vld [vmem:[%s275 + $0x300] sm:$0xff]
                  %326 = vst [vmem:[%s276 + $0xc0] sm:$0xff] %v325
                  %v327 = vld [vmem:[%s275 + $0x320] sm:$0xff]
                  %328 = vst [vmem:[%s276 + $0xc8] sm:$0xff] %v327
                  %v329 = vld [vmem:[%s275 + $0x340] sm:$0xff]
                  %330 = vst [vmem:[%s276 + $0xd0] sm:$0xff] %v329
                  %v331 = vld [vmem:[%s275 + $0x360] sm:$0xff]
                  %332 = vst [vmem:[%s276 + $0xd8] sm:$0xff] %v331
                  %v333 = vld [vmem:[%s275 + $0x380] sm:$0xff]
                  %334 = vst [vmem:[%s276 + $0xe0] sm:$0xff] %v333
                  %v335 = vld [vmem:[%s275 + $0x3a0] sm:$0xff]
                  %336 = vst [vmem:[%s276 + $0xe8] sm:$0xff] %v335
                  %v337 = vld [vmem:[%s275 + $0x3c0] sm:$0xff]
                  %338 = vst [vmem:[%s276 + $0xf0] sm:$0xff] %v337
                  %v339 = vld [vmem:[%s275 + $0x3e0] sm:$0xff]
                  %340 = vst [vmem:[%s276 + $0xf8] sm:$0xff] %v339
                $region52: #{llama_forward.26} parent=46 // loop_footer
                  %s274 = sadd.s32 1, %s270
                $region53: #{llama_forward.26} parent=46 // loop_footer_branch
                  %269 = sbr.rel target = $region49
                $region54: #{llama_forward.26} parent=46 // loop_exit
                  _
              $region47: #{llama_forward.26} parent=31 // pred_fallthru
                _
              // Predicated region
              $region55: #{llama_forward.26} parent=31 // pred_check
                _
              $region56: #{llama_forward.26} parent=31 // pred_check_branch
                %342 = sbr.rel target = $region58
              $region57: #{llama_forward.26} parent=31 // pred_region
                _
              $region58: #{llama_forward.26} parent=31 // pred_fallthru
                _
            $region32: #{llama_forward.26} parent=27 // pred_fallthru
              _
            // Predicated region
            $region33: #{llama_forward.26} parent=27 // pred_check
              _
            $region34: #{llama_forward.26} parent=27 // pred_check_branch
              %193 = sbr.rel target = $region36
            $region35: #{llama_forward.26} parent=27 // pred_region
              loop: start=0, step=1, limit=1
              $region37: #{llama_forward.26} parent=35 // loop_pre_header
                _
              $region38: #{llama_forward.26} parent=35 // loop_header
                %s196 = sphi 0, %s200
                %p197 = scmp.ge.s32.totalorder %s196, 1
                %s201 = sphi %s187, %s187
                %s202 = sphi %s181, %s181
              $region39: #{llama_forward.26} parent=35 // loop_header_branch
                %199 = sbr.rel (%p197) target = $region43
              $region40: #{llama_forward.26} parent=35 // loop_body
                %v203 = vld [vmem:[%s201] sm:$0xff]
                %204 = vst [vmem:[%s202] sm:$0xff] %v203
                %v205 = vld [vmem:[%s201 + $0x20] sm:$0xff]
                %206 = vst [vmem:[%s202 + $0x8] sm:$0xff] %v205
                %v207 = vld [vmem:[%s201 + $0x40] sm:$0xff]
                %208 = vst [vmem:[%s202 + $0x10] sm:$0xff] %v207
                %v209 = vld [vmem:[%s201 + $0x60] sm:$0xff]
                %210 = vst [vmem:[%s202 + $0x18] sm:$0xff] %v209
                %v211 = vld [vmem:[%s201 + $0x80] sm:$0xff]
                %212 = vst [vmem:[%s202 + $0x20] sm:$0xff] %v211
                %v213 = vld [vmem:[%s201 + $0xa0] sm:$0xff]
                %214 = vst [vmem:[%s202 + $0x28] sm:$0xff] %v213
                %v215 = vld [vmem:[%s201 + $0xc0] sm:$0xff]
                %216 = vst [vmem:[%s202 + $0x30] sm:$0xff] %v215
                %v217 = vld [vmem:[%s201 + $0xe0] sm:$0xff]
                %218 = vst [vmem:[%s202 + $0x38] sm:$0xff] %v217
                %v219 = vld [vmem:[%s201 + $0x100] sm:$0xff]
                %220 = vst [vmem:[%s202 + $0x40] sm:$0xff] %v219
                %v221 = vld [vmem:[%s201 + $0x120] sm:$0xff]
                %222 = vst [vmem:[%s202 + $0x48] sm:$0xff] %v221
                %v223 = vld [vmem:[%s201 + $0x140] sm:$0xff]
                %224 = vst [vmem:[%s202 + $0x50] sm:$0xff] %v223
                %v225 = vld [vmem:[%s201 + $0x160] sm:$0xff]
                %226 = vst [vmem:[%s202 + $0x58] sm:$0xff] %v225
                %v227 = vld [vmem:[%s201 + $0x180] sm:$0xff]
                %228 = vst [vmem:[%s202 + $0x60] sm:$0xff] %v227
                %v229 = vld [vmem:[%s201 + $0x1a0] sm:$0xff]
                %230 = vst [vmem:[%s202 + $0x68] sm:$0xff] %v229
                %v231 = vld [vmem:[%s201 + $0x1c0] sm:$0xff]
                %232 = vst [vmem:[%s202 + $0x70] sm:$0xff] %v231
                %v233 = vld [vmem:[%s201 + $0x1e0] sm:$0xff]
                %234 = vst [vmem:[%s202 + $0x78] sm:$0xff] %v233
                %v235 = vld [vmem:[%s201 + $0x200] sm:$0xff]
                %236 = vst [vmem:[%s202 + $0x80] sm:$0xff] %v235
                %v237 = vld [vmem:[%s201 + $0x220] sm:$0xff]
                %238 = vst [vmem:[%s202 + $0x88] sm:$0xff] %v237
                %v239 = vld [vmem:[%s201 + $0x240] sm:$0xff]
                %240 = vst [vmem:[%s202 + $0x90] sm:$0xff] %v239
                %v241 = vld [vmem:[%s201 + $0x260] sm:$0xff]
                %242 = vst [vmem:[%s202 + $0x98] sm:$0xff] %v241
                %v243 = vld [vmem:[%s201 + $0x280] sm:$0xff]
                %244 = vst [vmem:[%s202 + $0xa0] sm:$0xff] %v243
                %v245 = vld [vmem:[%s201 + $0x2a0] sm:$0xff]
                %246 = vst [vmem:[%s202 + $0xa8] sm:$0xff] %v245
                %v247 = vld [vmem:[%s201 + $0x2c0] sm:$0xff]
                %248 = vst [vmem:[%s202 + $0xb0] sm:$0xff] %v247
                %v249 = vld [vmem:[%s201 + $0x2e0] sm:$0xff]
                %250 = vst [vmem:[%s202 + $0xb8] sm:$0xff] %v249
                %v251 = vld [vmem:[%s201 + $0x300] sm:$0xff]
                %252 = vst [vmem:[%s202 + $0xc0] sm:$0xff] %v251
                %v253 = vld [vmem:[%s201 + $0x320] sm:$0xff]
                %254 = vst [vmem:[%s202 + $0xc8] sm:$0xff] %v253
                %v255 = vld [vmem:[%s201 + $0x340] sm:$0xff]
                %256 = vst [vmem:[%s202 + $0xd0] sm:$0xff] %v255
                %v257 = vld [vmem:[%s201 + $0x360] sm:$0xff]
                %258 = vst [vmem:[%s202 + $0xd8] sm:$0xff] %v257
                %v259 = vld [vmem:[%s201 + $0x380] sm:$0xff]
                %260 = vst [vmem:[%s202 + $0xe0] sm:$0xff] %v259
                %v261 = vld [vmem:[%s201 + $0x3a0] sm:$0xff]
                %262 = vst [vmem:[%s202 + $0xe8] sm:$0xff] %v261
                %v263 = vld [vmem:[%s201 + $0x3c0] sm:$0xff]
                %264 = vst [vmem:[%s202 + $0xf0] sm:$0xff] %v263
                %v265 = vld [vmem:[%s201 + $0x3e0] sm:$0xff]
                %266 = vst [vmem:[%s202 + $0xf8] sm:$0xff] %v265
              $region41: #{llama_forward.26} parent=35 // loop_footer
                %s200 = sadd.s32 1, %s196
              $region42: #{llama_forward.26} parent=35 // loop_footer_branch
                %195 = sbr.rel target = $region38
              $region43: #{llama_forward.26} parent=35 // loop_exit
                _
            $region36: #{llama_forward.26} parent=27 // pred_fallthru
              _
          $region28: #{llama_forward.26} parent=23 // pred_fallthru
            _
          %343 = vnop
        $region24: #{llama_forward.26} parent=19 // pred_fallthru
          _
        // Predicated region
        $region59: #{llama_forward.26} parent=19 // pred_check
          %p344 = pneg %p109
        $region60: #{llama_forward.26} parent=19 // pred_check_branch
          %346 = sbr.rel (%p344) target = $region62
        $region61: #{llama_forward.26} parent=19 // pred_region
          %s347 = sand.u32 %s99, 1
          %s348 = scalar_lea.sflag [#allocation6], %s347
          %s349 = sand.u32 %s99, 1
          %s350 = smul.addr %s349, 256
          %s351 = scalar_lea.vmem [#allocation5], %s350
          %s352 = smul.u32 32, %s21
          %s353 = smul.u32 2, %s20
          %s355 = ssub.s32 4096, 4096
          %356 = vsyncadd %s348, %s355
          %s357 = smul.addr %s352, 8
          %s358 = sadd.s32 %s353, %s357
          %s359 = smul.addr %s358, 64
          %s360 = scalar_lea.hbm %s2, %s359
          %s361 = sshll.u32 %s351, 4
          %s362 = int_to_ptr.vmem [resolvable:$true] %s361
          %367 = dma.hbm_to_vmem [thread:$0]  %s360, 4096, %s362, %s348, 512, 128, 8
        $region62: #{llama_forward.26} parent=19 // pred_fallthru
          _
      $region20: #{llama_forward.26} parent=5 // pred_fallthru
        _
      %p368 = scmp.le.s32.totalorder 1, %s12
      %p369 = scmp.lt.s32.totalorder %s12, 5
      %p370 = pnand %p368, %p369
      %p371 = pneg %p370
      // Predicated region
      $region63: #{llama_forward.26} parent=5 // pred_check
        _
      $region64: #{llama_forward.26} parent=5 // pred_check_branch
        %373 = sbr.rel (%p370) target = $region66
      $region65: #{llama_forward.26} parent=5 // pred_region
        %s374 = ssub.s32 %s12, 1
        %s375 = sand.u32 %s74, 1
        %s376 = sand.u32 %s74, 1
        %s377 = smul.addr %s376, 256
        %s378 = scalar_lea.vmem [#allocation4], %s377
        // Predicated region
        $region67: #{llama_forward.26} parent=65 // pred_check
          %p379 = pneg %p87
        $region68: #{llama_forward.26} parent=65 // pred_check_branch
          %381 = sbr.rel (%p379) target = $region70
        $region69: #{llama_forward.26} parent=65 // pred_region
          _
        $region70: #{llama_forward.26} parent=65 // pred_fallthru
          _
        %s382 = sand.u32 %s102, 1
        %s383 = scalar_lea.sflag [#allocation6], %s382
        %s384 = sand.u32 %s102, 1
        %s385 = smul.addr %s384, 256
        %s386 = scalar_lea.vmem [#allocation5], %s385
        // Predicated region
        $region71: #{llama_forward.26} parent=65 // pred_check
          %p387 = pneg %p115
        $region72: #{llama_forward.26} parent=65 // pred_check_branch
          %389 = sbr.rel (%p387) target = $region74
        $region73: #{llama_forward.26} parent=65 // pred_region
          %390 = dma.done %s383, 4096
        $region74: #{llama_forward.26} parent=65 // pred_fallthru
          _
        %s391 = smul.u32 2, %s24
        %p392 = scmp.lt.s32.totalorder %s22, 0
        %s393 = scalar_select %p392, %s22, 0
        %p394 = scmp.lt.s32.totalorder %s391, 1
        %s395 = scalar_select %p394, %s391, 1
        %s396 = smul.addr %s393, 2
        %s397 = sadd.s32 %s395, %s396
        %s398 = smul.addr %s397, 4
        %s399 = scalar_lea.vmem %s0, %s398
        %p400 = pneg %p59
        %p401 = pneg %p56
        %s402 = sand.u32 %s74, 1
        %s403 = sand.u32 %s74, 1
        %s404 = smul.addr %s403, 256
        %s405 = scalar_lea.vmem [#allocation4], %s404
        %p406 = pneg %p87
        %p407 = pneg %p84
        %s408 = sand.u32 %s102, 1
        %s409 = scalar_lea.sflag [#allocation6], %s408
        %s410 = sand.u32 %s102, 1
        %s411 = smul.addr %s410, 256
        %s412 = scalar_lea.vmem [#allocation5], %s411
        %p413 = pneg %p115
        %p414 = pneg %p112
        %p415 = pneg %p143
        %p416 = pneg %p140
        %s417 = smul.u32 2, %s23
        %p418 = scmp.lt.s32.totalorder %s22, 0
        %s419 = scalar_select %p418, %s22, 0
        %p420 = scmp.lt.s32.totalorder %s417, 7
        %s421 = scalar_select %p420, %s417, 7
        %s422 = smul.addr %s419, 8
        %s423 = sadd.s32 %s421, %s422
        %s424 = smul.addr %s423, 4
        %s425 = scalar_lea.vmem %s3, %s424
        %s426 = smul.u32 2, %s24
        %p427 = scmp.lt.s32.totalorder %s22, 0
        %s428 = scalar_select %p427, %s22, 0
        %p429 = scmp.lt.s32.totalorder %s426, 1
        %s430 = scalar_select %p429, %s426, 1
        %s431 = smul.addr %s428, 2
        %s432 = sadd.s32 %s430, %s431
        %s433 = smul.addr %s432, 4
        %s434 = scalar_lea.vmem %s0, %s433
        %s435 = smul.u32 2, %s24
        %s436 = smul.u32 32, %s24
        %s437 = smul.u32 2, %s23
        %s438 = smul.u32 32, %s24
        %s439 = smul.u32 2, %s23
        %s440 = smul.u32 2, %s23
        %p441 = scmp.lt.s32.totalorder %s22, 0
        %s442 = scalar_select %p441, %s22, 0
        %p443 = scmp.lt.s32.totalorder %s440, 7
        %s444 = scalar_select %p443, %s440, 7
        %s445 = smul.addr %s442, 8
        %s446 = sadd.s32 %s444, %s445
        %s447 = smul.addr %s446, 4
        %s448 = scalar_lea.vmem %s3, %s447
        %s449 = smul.u32 2, %s23
        %p450 = scmp.eq.s32.totalorder %s24, 0
        // Predicated region
        $region75: #{llama_forward.26} parent=65 // pred_check
          %p451 = pneg %p450
        $region76: #{llama_forward.26} parent=65 // pred_check_branch
          %453 = sbr.rel (%p451) target = $region78
        $region77: #{llama_forward.26} parent=65 // pred_region
          %454 = vst [vmem:[#allocation2] sm:$0xff] 0.0
          %455 = vst [vmem:[#allocation2 + $0x8] sm:$0xff] 0.0
          %456 = vst [vmem:[#allocation3] sm:$0xff] 0.0
          %457 = vst [vmem:[#allocation3 + $0x8] sm:$0xff] 0.0
        $region78: #{llama_forward.26} parent=65 // pred_fallthru
          _
        %v458 = vld [vmem:[%s434] sm:$0xff]
        %v459 = vld [vmem:[#allocation2] sm:$0xff]
        %v460 = vld [vmem:[#allocation2 + $0x8] sm:$0xff]
        %v461 = vld [vmem:[%s378] sm:$0xff]
        %v462 = vld [vmem:[%s378 + $0x8] sm:$0xff]
        %v463 = vld [vmem:[%s378 + $0x10] sm:$0xff]
        %v464 = vld [vmem:[%s378 + $0x18] sm:$0xff]
        %v465 = vld [vmem:[%s378 + $0x20] sm:$0xff]
        %v466 = vld [vmem:[%s378 + $0x28] sm:$0xff]
        %v467 = vld [vmem:[%s378 + $0x30] sm:$0xff]
        %v468 = vld [vmem:[%s378 + $0x38] sm:$0xff]
        %v469 = vld [vmem:[%s378 + $0x40] sm:$0xff]
        %v470 = vld [vmem:[%s378 + $0x48] sm:$0xff]
        %v471 = vld [vmem:[%s378 + $0x50] sm:$0xff]
        %v472 = vld [vmem:[%s378 + $0x58] sm:$0xff]
        %v473 = vld [vmem:[%s378 + $0x60] sm:$0xff]
        %v474 = vld [vmem:[%s378 + $0x68] sm:$0xff]
        %v475 = vld [vmem:[%s378 + $0x70] sm:$0xff]
        %v476 = vld [vmem:[%s378 + $0x78] sm:$0xff]
        %v477 = vld [vmem:[%s378 + $0x80] sm:$0xff]
        %v478 = vld [vmem:[%s378 + $0x88] sm:$0xff]
        %v479 = vld [vmem:[%s378 + $0x90] sm:$0xff]
        %v480 = vld [vmem:[%s378 + $0x98] sm:$0xff]
        %v481 = vld [vmem:[%s378 + $0xa0] sm:$0xff]
        %v482 = vld [vmem:[%s378 + $0xa8] sm:$0xff]
        %v483 = vld [vmem:[%s378 + $0xb0] sm:$0xff]
        %v484 = vld [vmem:[%s378 + $0xb8] sm:$0xff]
        %v485 = vld [vmem:[%s378 + $0xc0] sm:$0xff]
        %v486 = vld [vmem:[%s378 + $0xc8] sm:$0xff]
        %v487 = vld [vmem:[%s378 + $0xd0] sm:$0xff]
        %v488 = vld [vmem:[%s378 + $0xd8] sm:$0xff]
        %v489 = vld [vmem:[%s378 + $0xe0] sm:$0xff]
        %v490 = vld [vmem:[%s378 + $0xe8] sm:$0xff]
        %v491 = vld [vmem:[%s378 + $0xf0] sm:$0xff]
        %v492 = vld [vmem:[%s378 + $0xf8] sm:$0xff]
        %v494 = vunpack.c.l.b16 %v458
        %v495 = vunpack.c.h.b16 %v458
        %v496 = vpack.c.b16 %v494, %v494
        %v497 = vpack.c.b16 %v495, %v495
        %v532 = vunpack.c.l.b16 %v461
        %v533 = vunpack.c.h.b16 %v461
        %v534 = vunpack.c.l.b16 %v462
        %v535 = vunpack.c.h.b16 %v462
        %v536 = vunpack.c.l.b16 %v463
        %v537 = vunpack.c.h.b16 %v463
        %v538 = vunpack.c.l.b16 %v464
        %v539 = vunpack.c.h.b16 %v464
        %v540 = vunpack.c.l.b16 %v465
        %v541 = vunpack.c.h.b16 %v465
        %v542 = vunpack.c.l.b16 %v466
        %v543 = vunpack.c.h.b16 %v466
        %v544 = vunpack.c.l.b16 %v467
        %v545 = vunpack.c.h.b16 %v467
        %v546 = vunpack.c.l.b16 %v468
        %v547 = vunpack.c.h.b16 %v468
        %v548 = vunpack.c.l.b16 %v469
        %v549 = vunpack.c.h.b16 %v469
        %v550 = vunpack.c.l.b16 %v470
        %v551 = vunpack.c.h.b16 %v470
        %v552 = vunpack.c.l.b16 %v471
        %v553 = vunpack.c.h.b16 %v471
        %v554 = vunpack.c.l.b16 %v472
        %v555 = vunpack.c.h.b16 %v472
        %v556 = vunpack.c.l.b16 %v473
        %v557 = vunpack.c.h.b16 %v473
        %v558 = vunpack.c.l.b16 %v474
        %v559 = vunpack.c.h.b16 %v474
        %v560 = vunpack.c.l.b16 %v475
        %v561 = vunpack.c.h.b16 %v475
        %v562 = vunpack.c.l.b16 %v476
        %v563 = vunpack.c.h.b16 %v476
        %v564 = vunpack.c.l.b16 %v477
        %v565 = vunpack.c.h.b16 %v477
        %v566 = vunpack.c.l.b16 %v478
        %v567 = vunpack.c.h.b16 %v478
        %v568 = vunpack.c.l.b16 %v479
        %v569 = vunpack.c.h.b16 %v479
        %v570 = vunpack.c.l.b16 %v480
        %v571 = vunpack.c.h.b16 %v480
        %v572 = vunpack.c.l.b16 %v481
        %v573 = vunpack.c.h.b16 %v481
        %v574 = vunpack.c.l.b16 %v482
        %v575 = vunpack.c.h.b16 %v482
        %v576 = vunpack.c.l.b16 %v483
        %v577 = vunpack.c.h.b16 %v483
        %v578 = vunpack.c.l.b16 %v484
        %v579 = vunpack.c.h.b16 %v484
        %v580 = vunpack.c.l.b16 %v485
        %v581 = vunpack.c.h.b16 %v485
        %v582 = vunpack.c.l.b16 %v486
        %v583 = vunpack.c.h.b16 %v486
        %v584 = vunpack.c.l.b16 %v487
        %v585 = vunpack.c.h.b16 %v487
        %v586 = vunpack.c.l.b16 %v488
        %v587 = vunpack.c.h.b16 %v488
        %v588 = vunpack.c.l.b16 %v489
        %v589 = vunpack.c.h.b16 %v489
        %v590 = vunpack.c.l.b16 %v490
        %v591 = vunpack.c.h.b16 %v490
        %v592 = vunpack.c.l.b16 %v491
        %v593 = vunpack.c.h.b16 %v491
        %v594 = vunpack.c.l.b16 %v492
        %v595 = vunpack.c.h.b16 %v492
        %v596 = vpack.c.b16 %v534, %v532
        %v597 = vpack.c.b16 %v535, %v533
        %v598 = vpack.c.b16 %v538, %v536
        %v599 = vpack.c.b16 %v539, %v537
        %v600 = vpack.c.b16 %v542, %v540
        %v601 = vpack.c.b16 %v543, %v541
        %v602 = vpack.c.b16 %v546, %v544
        %v603 = vpack.c.b16 %v547, %v545
        %v604 = vpack.c.b16 %v550, %v548
        %v605 = vpack.c.b16 %v551, %v549
        %v606 = vpack.c.b16 %v554, %v552
        %v607 = vpack.c.b16 %v555, %v553
        %v608 = vpack.c.b16 %v558, %v556
        %v609 = vpack.c.b16 %v559, %v557
        %v610 = vpack.c.b16 %v562, %v560
        %v611 = vpack.c.b16 %v563, %v561
        %v612 = vpack.c.b16 %v566, %v564
        %v613 = vpack.c.b16 %v567, %v565
        %v614 = vpack.c.b16 %v570, %v568
        %v615 = vpack.c.b16 %v571, %v569
        %v616 = vpack.c.b16 %v574, %v572
        %v617 = vpack.c.b16 %v575, %v573
        %v618 = vpack.c.b16 %v578, %v576
        %v619 = vpack.c.b16 %v579, %v577
        %v620 = vpack.c.b16 %v582, %v580
        %v621 = vpack.c.b16 %v583, %v581
        %v622 = vpack.c.b16 %v586, %v584
        %v623 = vpack.c.b16 %v587, %v585
        %v624 = vpack.c.b16 %v590, %v588
        %v625 = vpack.c.b16 %v591, %v589
        %v626 = vpack.c.b16 %v594, %v592
        %v627 = vpack.c.b16 %v595, %v593
        %660 = vmatprep.subr.bf16.mxu0 %v597
        %661 = vmatpush1.bf16.msra.mxu0 %v596
        %662 = vmatprep.subr.bf16.mxu0 %v599
        %663 = vmatpush1.bf16.msra.mxu0 %v598
        %664 = vmatprep.subr.bf16.mxu0 %v601
        %665 = vmatpush1.bf16.msra.mxu0 %v600
        %666 = vmatprep.subr.bf16.mxu0 %v603
        %667 = vmatpush1.bf16.msra.mxu0 %v602
        %668 = vmatprep.subr.bf16.mxu0 %v605
        %669 = vmatpush1.bf16.msra.mxu0 %v604
        %670 = vmatprep.subr.bf16.mxu0 %v607
        %671 = vmatpush1.bf16.msra.mxu0 %v606
        %672 = vmatprep.subr.bf16.mxu0 %v609
        %673 = vmatpush1.bf16.msra.mxu0 %v608
        %674 = vmatprep.subr.bf16.mxu0 %v611
        %675 = vmatpush1.bf16.msra.mxu0 %v610
        %676 = vmatprep.subr.bf16.mxu0 %v613
        %677 = vmatpush1.bf16.msra.mxu0 %v612
        %678 = vmatprep.subr.bf16.mxu0 %v615
        %679 = vmatpush1.bf16.msra.mxu0 %v614
        %680 = vmatprep.subr.bf16.mxu0 %v617
        %681 = vmatpush1.bf16.msra.mxu0 %v616
        %682 = vmatprep.subr.bf16.mxu0 %v619
        %683 = vmatpush1.bf16.msra.mxu0 %v618
        %684 = vmatprep.subr.bf16.mxu0 %v621
        %685 = vmatpush1.bf16.msra.mxu0 %v620
        %686 = vmatprep.subr.bf16.mxu0 %v623
        %687 = vmatpush1.bf16.msra.mxu0 %v622
        %688 = vmatprep.subr.bf16.mxu0 %v625
        %689 = vmatpush1.bf16.msra.mxu0 %v624
        %690 = vmatprep.subr.bf16.mxu0 %v627
        %691 = vmatpush1.bf16.msra.mxu0 %v626
        %692 = vmatprep.mubr.bf16.mxu0 %v497
        %693 = vmatmul.mubr.bf16.gmra.mrb[0].mxu0 %v496
        %v694 = vpop.f32.mrb[0].mxu0
        %v695 = vadd.f32 0.0, %v694
        %v696 = vpop.f32.mrb[0].mxu0
        %v697 = vadd.f32 0.0, %v696
        %v698 = vpop.f32.mrb[0].mxu0
        %v699 = vpop.f32.mrb[0].mxu0
        %700 = vdwg.mxu0
        %v701 = vadd.f32 %v459, %v695
        %v702 = vadd.f32 %v460, %v697
        %703 = vst [vmem:[#allocation2] sm:$0xff] %v701
        %704 = vst [vmem:[#allocation2 + $0x8] sm:$0xff] %v702
        %v705 = vld [vmem:[#allocation3] sm:$0xff]
        %v706 = vld [vmem:[#allocation3 + $0x8] sm:$0xff]
        %v707 = vld [vmem:[%s386] sm:$0xff]
        %v708 = vld [vmem:[%s386 + $0x8] sm:$0xff]
        %v709 = vld [vmem:[%s386 + $0x10] sm:$0xff]
        %v710 = vld [vmem:[%s386 + $0x18] sm:$0xff]
        %v711 = vld [vmem:[%s386 + $0x20] sm:$0xff]
        %v712 = vld [vmem:[%s386 + $0x28] sm:$0xff]
        %v713 = vld [vmem:[%s386 + $0x30] sm:$0xff]
        %v714 = vld [vmem:[%s386 + $0x38] sm:$0xff]
        %v715 = vld [vmem:[%s386 + $0x40] sm:$0xff]
        %v716 = vld [vmem:[%s386 + $0x48] sm:$0xff]
        %v717 = vld [vmem:[%s386 + $0x50] sm:$0xff]
        %v718 = vld [vmem:[%s386 + $0x58] sm:$0xff]
        %v719 = vld [vmem:[%s386 + $0x60] sm:$0xff]
        %v720 = vld [vmem:[%s386 + $0x68] sm:$0xff]
        %v721 = vld [vmem:[%s386 + $0x70] sm:$0xff]
        %v722 = vld [vmem:[%s386 + $0x78] sm:$0xff]
        %v723 = vld [vmem:[%s386 + $0x80] sm:$0xff]
        %v724 = vld [vmem:[%s386 + $0x88] sm:$0xff]
        %v725 = vld [vmem:[%s386 + $0x90] sm:$0xff]
        %v726 = vld [vmem:[%s386 + $0x98] sm:$0xff]
        %v727 = vld [vmem:[%s386 + $0xa0] sm:$0xff]
        %v728 = vld [vmem:[%s386 + $0xa8] sm:$0xff]
        %v729 = vld [vmem:[%s386 + $0xb0] sm:$0xff]
        %v730 = vld [vmem:[%s386 + $0xb8] sm:$0xff]
        %v731 = vld [vmem:[%s386 + $0xc0] sm:$0xff]
        %v732 = vld [vmem:[%s386 + $0xc8] sm:$0xff]
        %v733 = vld [vmem:[%s386 + $0xd0] sm:$0xff]
        %v734 = vld [vmem:[%s386 + $0xd8] sm:$0xff]
        %v735 = vld [vmem:[%s386 + $0xe0] sm:$0xff]
        %v736 = vld [vmem:[%s386 + $0xe8] sm:$0xff]
        %v737 = vld [vmem:[%s386 + $0xf0] sm:$0xff]
        %v738 = vld [vmem:[%s386 + $0xf8] sm:$0xff]
        %v771 = vunpack.c.l.b16 %v707
        %v772 = vunpack.c.h.b16 %v707
        %v773 = vunpack.c.l.b16 %v708
        %v774 = vunpack.c.h.b16 %v708
        %v775 = vunpack.c.l.b16 %v709
        %v776 = vunpack.c.h.b16 %v709
        %v777 = vunpack.c.l.b16 %v710
        %v778 = vunpack.c.h.b16 %v710
        %v779 = vunpack.c.l.b16 %v711
        %v780 = vunpack.c.h.b16 %v711
        %v781 = vunpack.c.l.b16 %v712
        %v782 = vunpack.c.h.b16 %v712
        %v783 = vunpack.c.l.b16 %v713
        %v784 = vunpack.c.h.b16 %v713
        %v785 = vunpack.c.l.b16 %v714
        %v786 = vunpack.c.h.b16 %v714
        %v787 = vunpack.c.l.b16 %v715
        %v788 = vunpack.c.h.b16 %v715
        %v789 = vunpack.c.l.b16 %v716
        %v790 = vunpack.c.h.b16 %v716
        %v791 = vunpack.c.l.b16 %v717
        %v792 = vunpack.c.h.b16 %v717
        %v793 = vunpack.c.l.b16 %v718
        %v794 = vunpack.c.h.b16 %v718
        %v795 = vunpack.c.l.b16 %v719
        %v796 = vunpack.c.h.b16 %v719
        %v797 = vunpack.c.l.b16 %v720
        %v798 = vunpack.c.h.b16 %v720
        %v799 = vunpack.c.l.b16 %v721
        %v800 = vunpack.c.h.b16 %v721
        %v801 = vunpack.c.l.b16 %v722
        %v802 = vunpack.c.h.b16 %v722
        %v803 = vunpack.c.l.b16 %v723
        %v804 = vunpack.c.h.b16 %v723
        %v805 = vunpack.c.l.b16 %v724
        %v806 = vunpack.c.h.b16 %v724
        %v807 = vunpack.c.l.b16 %v725
        %v808 = vunpack.c.h.b16 %v725
        %v809 = vunpack.c.l.b16 %v726
        %v810 = vunpack.c.h.b16 %v726
        %v811 = vunpack.c.l.b16 %v727
        %v812 = vunpack.c.h.b16 %v727
        %v813 = vunpack.c.l.b16 %v728
        %v814 = vunpack.c.h.b16 %v728
        %v815 = vunpack.c.l.b16 %v729
        %v816 = vunpack.c.h.b16 %v729
        %v817 = vunpack.c.l.b16 %v730
        %v818 = vunpack.c.h.b16 %v730
        %v819 = vunpack.c.l.b16 %v731
        %v820 = vunpack.c.h.b16 %v731
        %v821 = vunpack.c.l.b16 %v732
        %v822 = vunpack.c.h.b16 %v732
        %v823 = vunpack.c.l.b16 %v733
        %v824 = vunpack.c.h.b16 %v733
        %v825 = vunpack.c.l.b16 %v734
        %v826 = vunpack.c.h.b16 %v734
        %v827 = vunpack.c.l.b16 %v735
        %v828 = vunpack.c.h.b16 %v735
        %v829 = vunpack.c.l.b16 %v736
        %v830 = vunpack.c.h.b16 %v736
        %v831 = vunpack.c.l.b16 %v737
        %v832 = vunpack.c.h.b16 %v737
        %v833 = vunpack.c.l.b16 %v738
        %v834 = vunpack.c.h.b16 %v738
        %v835 = vpack.c.b16 %v773, %v771
        %v836 = vpack.c.b16 %v774, %v772
        %v837 = vpack.c.b16 %v777, %v775
        %v838 = vpack.c.b16 %v778, %v776
        %v839 = vpack.c.b16 %v781, %v779
        %v840 = vpack.c.b16 %v782, %v780
        %v841 = vpack.c.b16 %v785, %v783
        %v842 = vpack.c.b16 %v786, %v784
        %v843 = vpack.c.b16 %v789, %v787
        %v844 = vpack.c.b16 %v790, %v788
        %v845 = vpack.c.b16 %v793, %v791
        %v846 = vpack.c.b16 %v794, %v792
        %v847 = vpack.c.b16 %v797, %v795
        %v848 = vpack.c.b16 %v798, %v796
        %v849 = vpack.c.b16 %v801, %v799
        %v850 = vpack.c.b16 %v802, %v800
        %v851 = vpack.c.b16 %v805, %v803
        %v852 = vpack.c.b16 %v806, %v804
        %v853 = vpack.c.b16 %v809, %v807
        %v854 = vpack.c.b16 %v810, %v808
        %v855 = vpack.c.b16 %v813, %v811
        %v856 = vpack.c.b16 %v814, %v812
        %v857 = vpack.c.b16 %v817, %v815
        %v858 = vpack.c.b16 %v818, %v816
        %v859 = vpack.c.b16 %v821, %v819
        %v860 = vpack.c.b16 %v822, %v820
        %v861 = vpack.c.b16 %v825, %v823
        %v862 = vpack.c.b16 %v826, %v824
        %v863 = vpack.c.b16 %v829, %v827
        %v864 = vpack.c.b16 %v830, %v828
        %v865 = vpack.c.b16 %v833, %v831
        %v866 = vpack.c.b16 %v834, %v832
        %899 = vmatprep.subr.bf16.mxu0 %v836
        %900 = vmatpush1.bf16.msra.mxu0 %v835
        %901 = vmatprep.subr.bf16.mxu0 %v838
        %902 = vmatpush1.bf16.msra.mxu0 %v837
        %903 = vmatprep.subr.bf16.mxu0 %v840
        %904 = vmatpush1.bf16.msra.mxu0 %v839
        %905 = vmatprep.subr.bf16.mxu0 %v842
        %906 = vmatpush1.bf16.msra.mxu0 %v841
        %907 = vmatprep.subr.bf16.mxu0 %v844
        %908 = vmatpush1.bf16.msra.mxu0 %v843
        %909 = vmatprep.subr.bf16.mxu0 %v846
        %910 = vmatpush1.bf16.msra.mxu0 %v845
        %911 = vmatprep.subr.bf16.mxu0 %v848
        %912 = vmatpush1.bf16.msra.mxu0 %v847
        %913 = vmatprep.subr.bf16.mxu0 %v850
        %914 = vmatpush1.bf16.msra.mxu0 %v849
        %915 = vmatprep.subr.bf16.mxu0 %v852
        %916 = vmatpush1.bf16.msra.mxu0 %v851
        %917 = vmatprep.subr.bf16.mxu0 %v854
        %918 = vmatpush1.bf16.msra.mxu0 %v853
        %919 = vmatprep.subr.bf16.mxu0 %v856
        %920 = vmatpush1.bf16.msra.mxu0 %v855
        %921 = vmatprep.subr.bf16.mxu0 %v858
        %922 = vmatpush1.bf16.msra.mxu0 %v857
        %923 = vmatprep.subr.bf16.mxu0 %v860
        %924 = vmatpush1.bf16.msra.mxu0 %v859
        %925 = vmatprep.subr.bf16.mxu0 %v862
        %926 = vmatpush1.bf16.msra.mxu0 %v861
        %927 = vmatprep.subr.bf16.mxu0 %v864
        %928 = vmatpush1.bf16.msra.mxu0 %v863
        %929 = vmatprep.subr.bf16.mxu0 %v866
        %930 = vmatpush1.bf16.msra.mxu0 %v865
        %931 = vmatprep.mubr.bf16.mxu0 %v497
        %932 = vmatmul.mubr.bf16.gmra.mrb[0].mxu0 %v496
        %v933 = vpop.f32.mrb[0].mxu0
        %v934 = vadd.f32 0.0, %v933
        %v935 = vpop.f32.mrb[0].mxu0
        %v936 = vadd.f32 0.0, %v935
        %v937 = vpop.f32.mrb[0].mxu0
        %v938 = vpop.f32.mrb[0].mxu0
        %939 = vdwg.mxu0
        %v940 = vadd.f32 %v705, %v934
        %v941 = vadd.f32 %v706, %v936
        %942 = vst [vmem:[#allocation3] sm:$0xff] %v940
        %943 = vst [vmem:[#allocation3 + $0x8] sm:$0xff] %v941
        // Predicated region
        $region79: #{llama_forward.26} parent=65 // pred_check
          %p944 = pneg %p450
        $region80: #{llama_forward.26} parent=65 // pred_check_branch
          %946 = sbr.rel (%p944) target = $region82
        $region81: #{llama_forward.26} parent=65 // pred_region
          %v947 = vld [vmem:[#allocation2] sm:$0xff]
          %v948 = vld [vmem:[#allocation2 + $0x8] sm:$0xff]
          %v949 = vsub.f32 0.0, %v947
          %v950 = vsub.f32 0.0, %v948
          %v951 = vmul.f32 %v949, 1.442695
          %v952 = vpow.pop %v951
          %v953 = vmul.f32 %v950, 1.442695
          %v954 = vpow.pop %v953
          %v955 = vadd.f32 %v952, 1.0
          %v956 = vadd.f32 %v954, 1.0
          %v957 = vrcp.pop %v955
          %v958 = vmul.f32 %v947, %v957
          %v959 = vrcp.pop %v956
          %v960 = vmul.f32 %v948, %v959
          %v961 = vld [vmem:[#allocation3] sm:$0xff]
          %v962 = vld [vmem:[#allocation3 + $0x8] sm:$0xff]
          %v963 = vmul.f32 %v958, %v961
          %v964 = vmul.f32 %v960, %v962
          %v965 = vpack.c.bf16 %v963, %v963
          %v966 = vpack.c.bf16 %v964, %v964
          %v969 = vunpack.c.l.b16 %v965
          %v970 = vunpack.c.l.b16 %v966
          %v971 = vpack.c.b16 %v970, %v969
          %973 = vst [vmem:[%s448] sm:$0xff] %v971
        $region82: #{llama_forward.26} parent=65 // pred_fallthru
          _
        %s974 = smul.u32 2, %s23
        %p975 = scmp.lt.s32.totalorder %s22, 0
        %s976 = scalar_select %p975, %s22, 0
        %p977 = scmp.lt.s32.totalorder %s974, 7
        %s978 = scalar_select %p977, %s974, 7
        %s979 = smul.addr %s976, 8
        %s980 = sadd.s32 %s978, %s979
        %s981 = smul.addr %s980, 4
        %s982 = scalar_lea.vmem %s3, %s981
        // Predicated region
        $region83: #{llama_forward.26} parent=65 // pred_check
          %p983 = pneg %p140
        $region84: #{llama_forward.26} parent=65 // pred_check_branch
          %985 = sbr.rel (%p983) target = $region86
        $region85: #{llama_forward.26} parent=65 // pred_region
          %s986 = smul.u32 2, %s23
        $region86: #{llama_forward.26} parent=65 // pred_fallthru
          _
      $region66: #{llama_forward.26} parent=5 // pred_fallthru
        _
      %p987 = scmp.le.s32.totalorder 2, %s12
      // Predicated region
      $region87: #{llama_forward.26} parent=5 // pred_check
        %p988 = pneg %p987
      $region88: #{llama_forward.26} parent=5 // pred_check_branch
        %990 = sbr.rel (%p988) target = $region90
      $region89: #{llama_forward.26} parent=5 // pred_region
        %s991 = ssub.s32 %s12, 2
        // Predicated region
        $region91: #{llama_forward.26} parent=89 // pred_check
          %p992 = pneg %p146
        $region92: #{llama_forward.26} parent=89 // pred_check_branch
          %994 = sbr.rel (%p992) target = $region94
        $region93: #{llama_forward.26} parent=89 // pred_region
          %s995 = smul.u32 2, %s26
          %p996 = scmp.lt.s32.totalorder %s25, 0
          %s997 = scalar_select %p996, %s25, 0
          %p998 = scmp.lt.s32.totalorder %s995, 7
          %s999 = scalar_select %p998, %s995, 7
          %s1000 = smul.addr %s997, 8
          %s1001 = sadd.s32 %s999, %s1000
          %s1002 = smul.addr %s1001, 4
          %s1003 = scalar_lea.vmem %s3, %s1002
        $region94: #{llama_forward.26} parent=89 // pred_fallthru
          _
      $region90: #{llama_forward.26} parent=5 // pred_fallthru
        _
    $region6: #{llama_forward.26} parent=1 // loop_footer
      %s16 = sadd.s32 1, %s12
    $region7: #{llama_forward.26} parent=1 // loop_footer_branch
      %11 = sbr.rel target = $region3
    $region8: #{llama_forward.26} parent=1 // loop_exit
      _
    %1004 = vsyncpa [#allocation6], 1
    %s1005 = scalar_lea.sflag [#allocation6], 1
    %1006 = vsyncpa %s1005, 1

// kernel: llama_forward.29
$region0: #{llama_forward.29}
  #allocation0 [shape = 'u32[]', space=smem, size = 0x4, offset = 0x4, fixed_abs, tag = 'smem constant byte address 0x4 - core index']
  #allocation1 [shape = 'u32[144,128]{1,0:T(1,128)}', space=vmem, size = 0x12000, scoped, tag = 'internal scratch']
  #allocation2 [shape = 'f32[8,256]{1,0:T(8,128)}', space=vmem, size = 0x2000, scoped, tag = 'scratch operand']
  %s0 = inlined_call_operand.vmem [shape: bf16[8,256], index: 0, kind: input, shape index: {}]
  %s1 = inlined_call_operand.vmem [shape: bf16[256,512], index: 1, kind: input, shape index: {}]
  %s2 = inlined_call_operand.vmem [shape: bf16[8,512], index: 2, kind: output, shape index: {}]
  %s3 = sld [smem:[#allocation0]]
  $region87: #{llama_forward.29} parent=0
    _
  %s5 = ssub.s32 1, %s3
  %s6 = scalar_select 0, %s5, %s3
  $region1: #{llama_forward.29} parent=0
    #allocation3 [shape = 'u8[262144]{0}', space=vmem, size = 0x40000, scoped, tag = 'input window, operand 1']
    loop: start=0, step=1, limit=4
    $region2: #{llama_forward.29} parent=1 // loop_pre_header
      _
    $region3: #{llama_forward.29} parent=1 // loop_header
      %s8 = sphi 0, %s12
      %p9 = scmp.ge.s32.totalorder %s8, 4
      %s15 = sphi 0, %s34
      %s16 = sphi 0, %s30
      %s17 = sphi 0, %s26
      %s18 = sphi 0, %s15
      %s19 = sphi 0, %s16
      %s20 = sphi 0, %s17
      %s21 = sphi 0, %s18
      %s22 = sphi 0, %s19
      %s23 = sphi 0, %s20
      %s39 = sphi 0, %s41
      %s42 = sphi 0, %s39
      %s43 = sphi 0, %s42
      %s59 = sphi 0, %s43
      %s67 = sphi 0, %s69
      %s70 = sphi 0, %s67
      %s71 = sphi 0, %s70
      %s87 = sphi 0, %s71
      %s95 = sphi 0, %s97
      %s98 = sphi 0, %s95
      %s99 = sphi 0, %s98
      %s115 = sphi 0, %s99
    $region4: #{llama_forward.29} parent=1 // loop_header_branch
      %11 = sbr.rel (%p9) target = $region8
    $region5: #{llama_forward.29} parent=1 // loop_body
      %s13 = ssub.s32 %s8, 1
      %s14 = ssub.s32 %s8, 2
      %s24 = sadd.s32 1, %s17
      %p25 = scmp.ge.s32.totalorder %s24, 1
      %s26 = scalar_select %p25, 0, %s24
      %s27 = sadd.s32 1, %s16
      %s28 = scalar_select %p25, %s27, %s16
      %p29 = scmp.ge.s32.totalorder %s28, 2
      %s30 = scalar_select %p29, 0, %s28
      %s31 = sadd.s32 1, %s15
      %s32 = scalar_select %p29, %s31, %s15
      %p33 = scmp.ge.s32.totalorder %s32, 1
      %s34 = scalar_select %p33, 0, %s32
      %s35 = ssub.s32 %s15, %s34
      %s36 = ssub.s32 %s17, %s26
      %s37 = sor.u32 %s35, %s36
      %p38 = scmp.eq.s32.totalorder %s37, 0
      %s40 = sadd.s32 %s39, 1
      %s41 = scalar_select %p38, %s39, %s40
      %p44 = pneg %p38
      %p45 = scmp.eq.s32.totalorder %s8, 1
      %p46 = por %p44, %p45
      %p47 = scmp.ne.s32.totalorder %s39, %s42
      %p48 = scmp.eq.s32.totalorder %s8, 0
      %p49 = por %p47, %p48
      %p50 = scmp.ne.s32.totalorder %s39, %s42
      %p51 = scmp.eq.s32.totalorder %s13, 1
      %p52 = por %p50, %p51
      %p53 = scmp.ne.s32.totalorder %s42, %s43
      %p54 = scmp.eq.s32.totalorder %s13, 0
      %p55 = por %p53, %p54
      %p56 = scmp.ne.s32.totalorder %s42, %s43
      %p57 = scmp.eq.s32.totalorder %s14, 1
      %p58 = por %p56, %p57
      %p60 = scmp.ne.s32.totalorder %s43, %s59
      %p61 = scmp.eq.s32.totalorder %s14, 0
      %p62 = por %p60, %p61
      %s63 = ssub.s32 %s17, %s26
      %s64 = ssub.s32 %s16, %s30
      %s65 = sor.u32 %s63, %s64
      %p66 = scmp.eq.s32.totalorder %s65, 0
      %s68 = sadd.s32 %s67, 1
      %s69 = scalar_select %p66, %s67, %s68
      %p72 = pneg %p66
      %p73 = scmp.eq.s32.totalorder %s8, 1
      %p74 = por %p72, %p73
      %p75 = scmp.ne.s32.totalorder %s67, %s70
      %p76 = scmp.eq.s32.totalorder %s8, 0
      %p77 = por %p75, %p76
      %p78 = scmp.ne.s32.totalorder %s67, %s70
      %p79 = scmp.eq.s32.totalorder %s13, 1
      %p80 = por %p78, %p79
      %p81 = scmp.ne.s32.totalorder %s70, %s71
      %p82 = scmp.eq.s32.totalorder %s13, 0
      %p83 = por %p81, %p82
      %p84 = scmp.ne.s32.totalorder %s70, %s71
      %p85 = scmp.eq.s32.totalorder %s14, 1
      %p86 = por %p84, %p85
      %p88 = scmp.ne.s32.totalorder %s71, %s87
      %p89 = scmp.eq.s32.totalorder %s14, 0
      %p90 = por %p88, %p89
      %s91 = ssub.s32 %s15, %s34
      %s92 = ssub.s32 %s16, %s30
      %s93 = sor.u32 %s91, %s92
      %p94 = scmp.eq.s32.totalorder %s93, 0
      %s96 = sadd.s32 %s95, 1
      %s97 = scalar_select %p94, %s95, %s96
      %p100 = pneg %p94
      %p101 = scmp.eq.s32.totalorder %s8, 1
      %p102 = por %p100, %p101
      %p103 = scmp.ne.s32.totalorder %s95, %s98
      %p104 = scmp.eq.s32.totalorder %s8, 0
      %p105 = por %p103, %p104
      %p106 = scmp.ne.s32.totalorder %s95, %s98
      %p107 = scmp.eq.s32.totalorder %s13, 1
      %p108 = por %p106, %p107
      %p109 = scmp.ne.s32.totalorder %s98, %s99
      %p110 = scmp.eq.s32.totalorder %s13, 0
      %p111 = por %p109, %p110
      %p112 = scmp.ne.s32.totalorder %s98, %s99
      %p113 = scmp.eq.s32.totalorder %s14, 1
      %p114 = por %p112, %p113
      %p116 = scmp.ne.s32.totalorder %s99, %s115
      %p117 = scmp.eq.s32.totalorder %s14, 0
      %p118 = por %p116, %p117
      %p119 = scmp.le.s32.totalorder 1, %s8
      %p120 = scmp.lt.s32.totalorder %s8, 3
      %p121 = pnand %p119, %p120
      %p122 = pneg %p121
      // Predicated region
      $region9: #{llama_forward.29} parent=5 // pred_check
        _
      $region10: #{llama_forward.29} parent=5 // pred_check_branch
        %124 = sbr.rel (%p121) target = $region12
      $region11: #{llama_forward.29} parent=5 // pred_region
        %s125 = ssub.s32 %s8, 1
        // Predicated region
        $region13: #{llama_forward.29} parent=11 // pred_check
          %p126 = pneg %p55
        $region14: #{llama_forward.29} parent=11 // pred_check_branch
          %128 = sbr.rel (%p126) target = $region16
        $region15: #{llama_forward.29} parent=11 // pred_region
          %s129 = smul.u32 2, %s20
          %p130 = scmp.lt.s32.totalorder %s18, 0
          %s131 = scalar_select %p130, %s18, 0
          %p132 = scmp.lt.s32.totalorder %s129, 1
          %s133 = scalar_select %p132, %s129, 1
          %s134 = smul.addr %s131, 2
          %s135 = sadd.s32 %s133, %s134
          %s136 = smul.addr %s135, 4
          %s137 = scalar_lea.vmem %s0, %s136
          %s138 = smul.u32 2, %s20
        $region16: #{llama_forward.29} parent=11 // pred_fallthru
          _
      $region12: #{llama_forward.29} parent=5 // pred_fallthru
        _
      %p139 = scmp.lt.s32.totalorder %s8, 2
      // Predicated region
      $region17: #{llama_forward.29} parent=5 // pred_check
        %p140 = pneg %p139
      $region18: #{llama_forward.29} parent=5 // pred_check_branch
        %142 = sbr.rel (%p140) target = $region20
      $region19: #{llama_forward.29} parent=5 // pred_region
        // Predicated region
        $region21: #{llama_forward.29} parent=19 // pred_check
          %p143 = pneg %p77
        $region22: #{llama_forward.29} parent=19 // pred_check_branch
          %145 = sbr.rel (%p143) target = $region24
        $region23: #{llama_forward.29} parent=19 // pred_region
          %s146 = sand.u32 %s67, 1
          %s147 = sand.u32 %s67, 1
          %s148 = smul.addr %s147, 256
          %s149 = scalar_lea.vmem [#allocation3], %s148
          %s150 = smul.u32 32, %s17
          %s151 = smul.u32 2, %s16
          %s152 = smul.addr %s150, 4
          %s153 = sadd.s32 %s151, %s152
          %s154 = smul.addr %s153, 4
          %s155 = scalar_lea.vmem %s1, %s154
          // Predicated region
          $region25: #{llama_forward.29} parent=23 // pred_check
            _
          $region26: #{llama_forward.29} parent=23 // pred_check_branch
            %157 = sbr.rel (0) target = $region28
          $region27: #{llama_forward.29} parent=23 // pred_region
            // Predicated region
            $region29: #{llama_forward.29} parent=27 // pred_check
              _
            $region30: #{llama_forward.29} parent=27 // pred_check_branch
              %159 = sbr.rel (0) target = $region32
            $region31: #{llama_forward.29} parent=27 // pred_region
              // Predicated region
              $region44: #{llama_forward.29} parent=31 // pred_check
                _
              $region45: #{llama_forward.29} parent=31 // pred_check_branch
                %236 = sbr.rel (0) target = $region47
              $region46: #{llama_forward.29} parent=31 // pred_region
                loop: start=0, step=1, limit=1
                $region48: #{llama_forward.29} parent=46 // loop_pre_header
                  _
                $region49: #{llama_forward.29} parent=46 // loop_header
                  %s238 = sphi 0, %s242
                  %p239 = scmp.ge.s32.totalorder %s238, 1
                  %s243 = sphi %s155, %s155
                  %s244 = sphi %s149, %s149
                $region50: #{llama_forward.29} parent=46 // loop_header_branch
                  %241 = sbr.rel (%p239) target = $region54
                $region51: #{llama_forward.29} parent=46 // loop_body
                  %v245 = vld [vmem:[%s243] sm:$0xff]
                  %246 = vst [vmem:[%s244] sm:$0xff] %v245
                  %v247 = vld [vmem:[%s243 + $0x10] sm:$0xff]
                  %248 = vst [vmem:[%s244 + $0x8] sm:$0xff] %v247
                  %v249 = vld [vmem:[%s243 + $0x20] sm:$0xff]
                  %250 = vst [vmem:[%s244 + $0x10] sm:$0xff] %v249
                  %v251 = vld [vmem:[%s243 + $0x30] sm:$0xff]
                  %252 = vst [vmem:[%s244 + $0x18] sm:$0xff] %v251
                  %v253 = vld [vmem:[%s243 + $0x40] sm:$0xff]
                  %254 = vst [vmem:[%s244 + $0x20] sm:$0xff] %v253
                  %v255 = vld [vmem:[%s243 + $0x50] sm:$0xff]
                  %256 = vst [vmem:[%s244 + $0x28] sm:$0xff] %v255
                  %v257 = vld [vmem:[%s243 + $0x60] sm:$0xff]
                  %258 = vst [vmem:[%s244 + $0x30] sm:$0xff] %v257
                  %v259 = vld [vmem:[%s243 + $0x70] sm:$0xff]
                  %260 = vst [vmem:[%s244 + $0x38] sm:$0xff] %v259
                  %v261 = vld [vmem:[%s243 + $0x80] sm:$0xff]
                  %262 = vst [vmem:[%s244 + $0x40] sm:$0xff] %v261
                  %v263 = vld [vmem:[%s243 + $0x90] sm:$0xff]
                  %264 = vst [vmem:[%s244 + $0x48] sm:$0xff] %v263
                  %v265 = vld [vmem:[%s243 + $0xa0] sm:$0xff]
                  %266 = vst [vmem:[%s244 + $0x50] sm:$0xff] %v265
                  %v267 = vld [vmem:[%s243 + $0xb0] sm:$0xff]
                  %268 = vst [vmem:[%s244 + $0x58] sm:$0xff] %v267
                  %v269 = vld [vmem:[%s243 + $0xc0] sm:$0xff]
                  %270 = vst [vmem:[%s244 + $0x60] sm:$0xff] %v269
                  %v271 = vld [vmem:[%s243 + $0xd0] sm:$0xff]
                  %272 = vst [vmem:[%s244 + $0x68] sm:$0xff] %v271
                  %v273 = vld [vmem:[%s243 + $0xe0] sm:$0xff]
                  %274 = vst [vmem:[%s244 + $0x70] sm:$0xff] %v273
                  %v275 = vld [vmem:[%s243 + $0xf0] sm:$0xff]
                  %276 = vst [vmem:[%s244 + $0x78] sm:$0xff] %v275
                  %v277 = vld [vmem:[%s243 + $0x100] sm:$0xff]
                  %278 = vst [vmem:[%s244 + $0x80] sm:$0xff] %v277
                  %v279 = vld [vmem:[%s243 + $0x110] sm:$0xff]
                  %280 = vst [vmem:[%s244 + $0x88] sm:$0xff] %v279
                  %v281 = vld [vmem:[%s243 + $0x120] sm:$0xff]
                  %282 = vst [vmem:[%s244 + $0x90] sm:$0xff] %v281
                  %v283 = vld [vmem:[%s243 + $0x130] sm:$0xff]
                  %284 = vst [vmem:[%s244 + $0x98] sm:$0xff] %v283
                  %v285 = vld [vmem:[%s243 + $0x140] sm:$0xff]
                  %286 = vst [vmem:[%s244 + $0xa0] sm:$0xff] %v285
                  %v287 = vld [vmem:[%s243 + $0x150] sm:$0xff]
                  %288 = vst [vmem:[%s244 + $0xa8] sm:$0xff] %v287
                  %v289 = vld [vmem:[%s243 + $0x160] sm:$0xff]
                  %290 = vst [vmem:[%s244 + $0xb0] sm:$0xff] %v289
                  %v291 = vld [vmem:[%s243 + $0x170] sm:$0xff]
                  %292 = vst [vmem:[%s244 + $0xb8] sm:$0xff] %v291
                  %v293 = vld [vmem:[%s243 + $0x180] sm:$0xff]
                  %294 = vst [vmem:[%s244 + $0xc0] sm:$0xff] %v293
                  %v295 = vld [vmem:[%s243 + $0x190] sm:$0xff]
                  %296 = vst [vmem:[%s244 + $0xc8] sm:$0xff] %v295
                  %v297 = vld [vmem:[%s243 + $0x1a0] sm:$0xff]
                  %298 = vst [vmem:[%s244 + $0xd0] sm:$0xff] %v297
                  %v299 = vld [vmem:[%s243 + $0x1b0] sm:$0xff]
                  %300 = vst [vmem:[%s244 + $0xd8] sm:$0xff] %v299
                  %v301 = vld [vmem:[%s243 + $0x1c0] sm:$0xff]
                  %302 = vst [vmem:[%s244 + $0xe0] sm:$0xff] %v301
                  %v303 = vld [vmem:[%s243 + $0x1d0] sm:$0xff]
                  %304 = vst [vmem:[%s244 + $0xe8] sm:$0xff] %v303
                  %v305 = vld [vmem:[%s243 + $0x1e0] sm:$0xff]
                  %306 = vst [vmem:[%s244 + $0xf0] sm:$0xff] %v305
                  %v307 = vld [vmem:[%s243 + $0x1f0] sm:$0xff]
                  %308 = vst [vmem:[%s244 + $0xf8] sm:$0xff] %v307
                $region52: #{llama_forward.29} parent=46 // loop_footer
                  %s242 = sadd.s32 1, %s238
                $region53: #{llama_forward.29} parent=46 // loop_footer_branch
                  %237 = sbr.rel target = $region49
                $region54: #{llama_forward.29} parent=46 // loop_exit
                  _
              $region47: #{llama_forward.29} parent=31 // pred_fallthru
                _
              // Predicated region
              $region55: #{llama_forward.29} parent=31 // pred_check
                _
              $region56: #{llama_forward.29} parent=31 // pred_check_branch
                %310 = sbr.rel target = $region58
              $region57: #{llama_forward.29} parent=31 // pred_region
                _
              $region58: #{llama_forward.29} parent=31 // pred_fallthru
                _
            $region32: #{llama_forward.29} parent=27 // pred_fallthru
              _
            // Predicated region
            $region33: #{llama_forward.29} parent=27 // pred_check
              _
            $region34: #{llama_forward.29} parent=27 // pred_check_branch
              %161 = sbr.rel target = $region36
            $region35: #{llama_forward.29} parent=27 // pred_region
              loop: start=0, step=1, limit=1
              $region37: #{llama_forward.29} parent=35 // loop_pre_header
                _
              $region38: #{llama_forward.29} parent=35 // loop_header
                %s164 = sphi 0, %s168
                %p165 = scmp.ge.s32.totalorder %s164, 1
                %s169 = sphi %s155, %s155
                %s170 = sphi %s149, %s149
              $region39: #{llama_forward.29} parent=35 // loop_header_branch
                %167 = sbr.rel (%p165) target = $region43
              $region40: #{llama_forward.29} parent=35 // loop_body
                %v171 = vld [vmem:[%s169] sm:$0xff]
                %172 = vst [vmem:[%s170] sm:$0xff] %v171
                %v173 = vld [vmem:[%s169 + $0x10] sm:$0xff]
                %174 = vst [vmem:[%s170 + $0x8] sm:$0xff] %v173
                %v175 = vld [vmem:[%s169 + $0x20] sm:$0xff]
                %176 = vst [vmem:[%s170 + $0x10] sm:$0xff] %v175
                %v177 = vld [vmem:[%s169 + $0x30] sm:$0xff]
                %178 = vst [vmem:[%s170 + $0x18] sm:$0xff] %v177
                %v179 = vld [vmem:[%s169 + $0x40] sm:$0xff]
                %180 = vst [vmem:[%s170 + $0x20] sm:$0xff] %v179
                %v181 = vld [vmem:[%s169 + $0x50] sm:$0xff]
                %182 = vst [vmem:[%s170 + $0x28] sm:$0xff] %v181
                %v183 = vld [vmem:[%s169 + $0x60] sm:$0xff]
                %184 = vst [vmem:[%s170 + $0x30] sm:$0xff] %v183
                %v185 = vld [vmem:[%s169 + $0x70] sm:$0xff]
                %186 = vst [vmem:[%s170 + $0x38] sm:$0xff] %v185
                %v187 = vld [vmem:[%s169 + $0x80] sm:$0xff]
                %188 = vst [vmem:[%s170 + $0x40] sm:$0xff] %v187
                %v189 = vld [vmem:[%s169 + $0x90] sm:$0xff]
                %190 = vst [vmem:[%s170 + $0x48] sm:$0xff] %v189
                %v191 = vld [vmem:[%s169 + $0xa0] sm:$0xff]
                %192 = vst [vmem:[%s170 + $0x50] sm:$0xff] %v191
                %v193 = vld [vmem:[%s169 + $0xb0] sm:$0xff]
                %194 = vst [vmem:[%s170 + $0x58] sm:$0xff] %v193
                %v195 = vld [vmem:[%s169 + $0xc0] sm:$0xff]
                %196 = vst [vmem:[%s170 + $0x60] sm:$0xff] %v195
                %v197 = vld [vmem:[%s169 + $0xd0] sm:$0xff]
                %198 = vst [vmem:[%s170 + $0x68] sm:$0xff] %v197
                %v199 = vld [vmem:[%s169 + $0xe0] sm:$0xff]
                %200 = vst [vmem:[%s170 + $0x70] sm:$0xff] %v199
                %v201 = vld [vmem:[%s169 + $0xf0] sm:$0xff]
                %202 = vst [vmem:[%s170 + $0x78] sm:$0xff] %v201
                %v203 = vld [vmem:[%s169 + $0x100] sm:$0xff]
                %204 = vst [vmem:[%s170 + $0x80] sm:$0xff] %v203
                %v205 = vld [vmem:[%s169 + $0x110] sm:$0xff]
                %206 = vst [vmem:[%s170 + $0x88] sm:$0xff] %v205
                %v207 = vld [vmem:[%s169 + $0x120] sm:$0xff]
                %208 = vst [vmem:[%s170 + $0x90] sm:$0xff] %v207
                %v209 = vld [vmem:[%s169 + $0x130] sm:$0xff]
                %210 = vst [vmem:[%s170 + $0x98] sm:$0xff] %v209
                %v211 = vld [vmem:[%s169 + $0x140] sm:$0xff]
                %212 = vst [vmem:[%s170 + $0xa0] sm:$0xff] %v211
                %v213 = vld [vmem:[%s169 + $0x150] sm:$0xff]
                %214 = vst [vmem:[%s170 + $0xa8] sm:$0xff] %v213
                %v215 = vld [vmem:[%s169 + $0x160] sm:$0xff]
                %216 = vst [vmem:[%s170 + $0xb0] sm:$0xff] %v215
                %v217 = vld [vmem:[%s169 + $0x170] sm:$0xff]
                %218 = vst [vmem:[%s170 + $0xb8] sm:$0xff] %v217
                %v219 = vld [vmem:[%s169 + $0x180] sm:$0xff]
                %220 = vst [vmem:[%s170 + $0xc0] sm:$0xff] %v219
                %v221 = vld [vmem:[%s169 + $0x190] sm:$0xff]
                %222 = vst [vmem:[%s170 + $0xc8] sm:$0xff] %v221
                %v223 = vld [vmem:[%s169 + $0x1a0] sm:$0xff]
                %224 = vst [vmem:[%s170 + $0xd0] sm:$0xff] %v223
                %v225 = vld [vmem:[%s169 + $0x1b0] sm:$0xff]
                %226 = vst [vmem:[%s170 + $0xd8] sm:$0xff] %v225
                %v227 = vld [vmem:[%s169 + $0x1c0] sm:$0xff]
                %228 = vst [vmem:[%s170 + $0xe0] sm:$0xff] %v227
                %v229 = vld [vmem:[%s169 + $0x1d0] sm:$0xff]
                %230 = vst [vmem:[%s170 + $0xe8] sm:$0xff] %v229
                %v231 = vld [vmem:[%s169 + $0x1e0] sm:$0xff]
                %232 = vst [vmem:[%s170 + $0xf0] sm:$0xff] %v231
                %v233 = vld [vmem:[%s169 + $0x1f0] sm:$0xff]
                %234 = vst [vmem:[%s170 + $0xf8] sm:$0xff] %v233
              $region41: #{llama_forward.29} parent=35 // loop_footer
                %s168 = sadd.s32 1, %s164
              $region42: #{llama_forward.29} parent=35 // loop_footer_branch
                %163 = sbr.rel target = $region38
              $region43: #{llama_forward.29} parent=35 // loop_exit
                _
            $region36: #{llama_forward.29} parent=27 // pred_fallthru
              _
          $region28: #{llama_forward.29} parent=23 // pred_fallthru
            _
          %311 = vnop
        $region24: #{llama_forward.29} parent=19 // pred_fallthru
          _
      $region20: #{llama_forward.29} parent=5 // pred_fallthru
        _
      %p312 = scmp.le.s32.totalorder 1, %s8
      %p313 = scmp.lt.s32.totalorder %s8, 3
      %p314 = pnand %p312, %p313
      %p315 = pneg %p314
      // Predicated region
      $region59: #{llama_forward.29} parent=5 // pred_check
        _
      $region60: #{llama_forward.29} parent=5 // pred_check_branch
        %317 = sbr.rel (%p314) target = $region62
      $region61: #{llama_forward.29} parent=5 // pred_region
        %s318 = ssub.s32 %s8, 1
        %s319 = sand.u32 %s70, 1
        %s320 = sand.u32 %s70, 1
        %s321 = smul.addr %s320, 256
        %s322 = scalar_lea.vmem [#allocation3], %s321
        // Predicated region
        $region63: #{llama_forward.29} parent=61 // pred_check
          %p323 = pneg %p83
        $region64: #{llama_forward.29} parent=61 // pred_check_branch
          %325 = sbr.rel (%p323) target = $region66
        $region65: #{llama_forward.29} parent=61 // pred_region
          _
        $region66: #{llama_forward.29} parent=61 // pred_fallthru
          _
        %s326 = smul.u32 2, %s20
        %p327 = scmp.lt.s32.totalorder %s18, 0
        %s328 = scalar_select %p327, %s18, 0
        %p329 = scmp.lt.s32.totalorder %s326, 1
        %s330 = scalar_select %p329, %s326, 1
        %s331 = smul.addr %s328, 2
        %s332 = sadd.s32 %s330, %s331
        %s333 = smul.addr %s332, 4
        %s334 = scalar_lea.vmem %s0, %s333
        %p335 = pneg %p55
        %p336 = pneg %p52
        %s337 = sand.u32 %s70, 1
        %s338 = sand.u32 %s70, 1
        %s339 = smul.addr %s338, 256
        %s340 = scalar_lea.vmem [#allocation3], %s339
        %p341 = pneg %p83
        %p342 = pneg %p80
        %p343 = pneg %p111
        %p344 = pneg %p108
        %s345 = smul.u32 2, %s19
        %p346 = scmp.lt.s32.totalorder %s18, 0
        %s347 = scalar_select %p346, %s18, 0
        %p348 = scmp.lt.s32.totalorder %s345, 3
        %s349 = scalar_select %p348, %s345, 3
        %s350 = smul.addr %s347, 4
        %s351 = sadd.s32 %s349, %s350
        %s352 = smul.addr %s351, 4
        %s353 = scalar_lea.vmem %s2, %s352
        %s354 = smul.u32 2, %s20
        %p355 = scmp.lt.s32.totalorder %s18, 0
        %s356 = scalar_select %p355, %s18, 0
        %p357 = scmp.lt.s32.totalorder %s354, 1
        %s358 = scalar_select %p357, %s354, 1
        %s359 = smul.addr %s356, 2
        %s360 = sadd.s32 %s358, %s359
        %s361 = smul.addr %s360, 4
        %s362 = scalar_lea.vmem %s0, %s361
        %s363 = smul.u32 2, %s20
        %s364 = smul.u32 32, %s20
        %s365 = smul.u32 2, %s19
        %s366 = smul.u32 2, %s19
        %p367 = scmp.lt.s32.totalorder %s18, 0
        %s368 = scalar_select %p367, %s18, 0
        %p369 = scmp.lt.s32.totalorder %s366, 3
        %s370 = scalar_select %p369, %s366, 3
        %s371 = smul.addr %s368, 4
        %s372 = sadd.s32 %s370, %s371
        %s373 = smul.addr %s372, 4
        %s374 = scalar_lea.vmem %s2, %s373
        %s375 = smul.u32 2, %s19
        %p376 = scmp.eq.s32.totalorder %s20, 0
        // Predicated region
        $region67: #{llama_forward.29} parent=61 // pred_check
          %p377 = pneg %p376
        $region68: #{llama_forward.29} parent=61 // pred_check_branch
          %379 = sbr.rel (%p377) target = $region70
        $region69: #{llama_forward.29} parent=61 // pred_region
          %380 = vst [vmem:[#allocation2] sm:$0xff] 0.0
          %381 = vst [vmem:[#allocation2 + $0x8] sm:$0xff] 0.0
        $region70: #{llama_forward.29} parent=61 // pred_fallthru
          _
        %v382 = vld [vmem:[#allocation2] sm:$0xff]
        %v383 = vld [vmem:[#allocation2 + $0x8] sm:$0xff]
        %v384 = vld [vmem:[%s362] sm:$0xff]
        %v385 = vld [vmem:[%s322] sm:$0xff]
        %v386 = vld [vmem:[%s322 + $0x8] sm:$0xff]
        %v387 = vld [vmem:[%s322 + $0x10] sm:$0xff]
        %v388 = vld [vmem:[%s322 + $0x18] sm:$0xff]
        %v389 = vld [vmem:[%s322 + $0x20] sm:$0xff]
        %v390 = vld [vmem:[%s322 + $0x28] sm:$0xff]
        %v391 = vld [vmem:[%s322 + $0x30] sm:$0xff]
        %v392 = vld [vmem:[%s322 + $0x38] sm:$0xff]
        %v393 = vld [vmem:[%s322 + $0x40] sm:$0xff]
        %v394 = vld [vmem:[%s322 + $0x48] sm:$0xff]
        %v395 = vld [vmem:[%s322 + $0x50] sm:$0xff]
        %v396 = vld [vmem:[%s322 + $0x58] sm:$0xff]
        %v397 = vld [vmem:[%s322 + $0x60] sm:$0xff]
        %v398 = vld [vmem:[%s322 + $0x68] sm:$0xff]
        %v399 = vld [vmem:[%s322 + $0x70] sm:$0xff]
        %v400 = vld [vmem:[%s322 + $0x78] sm:$0xff]
        %v401 = vld [vmem:[%s322 + $0x80] sm:$0xff]
        %v402 = vld [vmem:[%s322 + $0x88] sm:$0xff]
        %v403 = vld [vmem:[%s322 + $0x90] sm:$0xff]
        %v404 = vld [vmem:[%s322 + $0x98] sm:$0xff]
        %v405 = vld [vmem:[%s322 + $0xa0] sm:$0xff]
        %v406 = vld [vmem:[%s322 + $0xa8] sm:$0xff]
        %v407 = vld [vmem:[%s322 + $0xb0] sm:$0xff]
        %v408 = vld [vmem:[%s322 + $0xb8] sm:$0xff]
        %v409 = vld [vmem:[%s322 + $0xc0] sm:$0xff]
        %v410 = vld [vmem:[%s322 + $0xc8] sm:$0xff]
        %v411 = vld [vmem:[%s322 + $0xd0] sm:$0xff]
        %v412 = vld [vmem:[%s322 + $0xd8] sm:$0xff]
        %v413 = vld [vmem:[%s322 + $0xe0] sm:$0xff]
        %v414 = vld [vmem:[%s322 + $0xe8] sm:$0xff]
        %v415 = vld [vmem:[%s322 + $0xf0] sm:$0xff]
        %v416 = vld [vmem:[%s322 + $0xf8] sm:$0xff]
        %v418 = vunpack.c.l.b16 %v384
        %v419 = vunpack.c.h.b16 %v384
        %v420 = vpack.c.b16 %v418, %v418
        %v421 = vpack.c.b16 %v419, %v419
        %v456 = vunpack.c.l.b16 %v385
        %v457 = vunpack.c.h.b16 %v385
        %v458 = vunpack.c.l.b16 %v386
        %v459 = vunpack.c.h.b16 %v386
        %v460 = vunpack.c.l.b16 %v387
        %v461 = vunpack.c.h.b16 %v387
        %v462 = vunpack.c.l.b16 %v388
        %v463 = vunpack.c.h.b16 %v388
        %v464 = vunpack.c.l.b16 %v389
        %v465 = vunpack.c.h.b16 %v389
        %v466 = vunpack.c.l.b16 %v390
        %v467 = vunpack.c.h.b16 %v390
        %v468 = vunpack.c.l.b16 %v391
        %v469 = vunpack.c.h.b16 %v391
        %v470 = vunpack.c.l.b16 %v392
        %v471 = vunpack.c.h.b16 %v392
        %v472 = vunpack.c.l.b16 %v393
        %v473 = vunpack.c.h.b16 %v393
        %v474 = vunpack.c.l.b16 %v394
        %v475 = vunpack.c.h.b16 %v394
        %v476 = vunpack.c.l.b16 %v395
        %v477 = vunpack.c.h.b16 %v395
        %v478 = vunpack.c.l.b16 %v396
        %v479 = vunpack.c.h.b16 %v396
        %v480 = vunpack.c.l.b16 %v397
        %v481 = vunpack.c.h.b16 %v397
        %v482 = vunpack.c.l.b16 %v398
        %v483 = vunpack.c.h.b16 %v398
        %v484 = vunpack.c.l.b16 %v399
        %v485 = vunpack.c.h.b16 %v399
        %v486 = vunpack.c.l.b16 %v400
        %v487 = vunpack.c.h.b16 %v400
        %v488 = vunpack.c.l.b16 %v401
        %v489 = vunpack.c.h.b16 %v401
        %v490 = vunpack.c.l.b16 %v402
        %v491 = vunpack.c.h.b16 %v402
        %v492 = vunpack.c.l.b16 %v403
        %v493 = vunpack.c.h.b16 %v403
        %v494 = vunpack.c.l.b16 %v404
        %v495 = vunpack.c.h.b16 %v404
        %v496 = vunpack.c.l.b16 %v405
        %v497 = vunpack.c.h.b16 %v405
        %v498 = vunpack.c.l.b16 %v406
        %v499 = vunpack.c.h.b16 %v406
        %v500 = vunpack.c.l.b16 %v407
        %v501 = vunpack.c.h.b16 %v407
        %v502 = vunpack.c.l.b16 %v408
        %v503 = vunpack.c.h.b16 %v408
        %v504 = vunpack.c.l.b16 %v409
        %v505 = vunpack.c.h.b16 %v409
        %v506 = vunpack.c.l.b16 %v410
        %v507 = vunpack.c.h.b16 %v410
        %v508 = vunpack.c.l.b16 %v411
        %v509 = vunpack.c.h.b16 %v411
        %v510 = vunpack.c.l.b16 %v412
        %v511 = vunpack.c.h.b16 %v412
        %v512 = vunpack.c.l.b16 %v413
        %v513 = vunpack.c.h.b16 %v413
        %v514 = vunpack.c.l.b16 %v414
        %v515 = vunpack.c.h.b16 %v414
        %v516 = vunpack.c.l.b16 %v415
        %v517 = vunpack.c.h.b16 %v415
        %v518 = vunpack.c.l.b16 %v416
        %v519 = vunpack.c.h.b16 %v416
        %v520 = vpack.c.b16 %v458, %v456
        %v521 = vpack.c.b16 %v459, %v457
        %v522 = vpack.c.b16 %v462, %v460
        %v523 = vpack.c.b16 %v463, %v461
        %v524 = vpack.c.b16 %v466, %v464
        %v525 = vpack.c.b16 %v467, %v465
        %v526 = vpack.c.b16 %v470, %v468
        %v527 = vpack.c.b16 %v471, %v469
        %v528 = vpack.c.b16 %v474, %v472
        %v529 = vpack.c.b16 %v475, %v473
        %v530 = vpack.c.b16 %v478, %v476
        %v531 = vpack.c.b16 %v479, %v477
        %v532 = vpack.c.b16 %v482, %v480
        %v533 = vpack.c.b16 %v483, %v481
        %v534 = vpack.c.b16 %v486, %v484
        %v535 = vpack.c.b16 %v487, %v485
        %v536 = vpack.c.b16 %v490, %v488
        %v537 = vpack.c.b16 %v491, %v489
        %v538 = vpack.c.b16 %v494, %v492
        %v539 = vpack.c.b16 %v495, %v493
        %v540 = vpack.c.b16 %v498, %v496
        %v541 = vpack.c.b16 %v499, %v497
        %v542 = vpack.c.b16 %v502, %v500
        %v543 = vpack.c.b16 %v503, %v501
        %v544 = vpack.c.b16 %v506, %v504
        %v545 = vpack.c.b16 %v507, %v505
        %v546 = vpack.c.b16 %v510, %v508
        %v547 = vpack.c.b16 %v511, %v509
        %v548 = vpack.c.b16 %v514, %v512
        %v549 = vpack.c.b16 %v515, %v513
        %v550 = vpack.c.b16 %v518, %v516
        %v551 = vpack.c.b16 %v519, %v517
        %584 = vmatprep.subr.bf16.mxu0 %v521
        %585 = vmatpush1.bf16.msra.mxu0 %v520
        %586 = vmatprep.subr.bf16.mxu0 %v523
        %587 = vmatpush1.bf16.msra.mxu0 %v522
        %588 = vmatprep.subr.bf16.mxu0 %v525
        %589 = vmatpush1.bf16.msra.mxu0 %v524
        %590 = vmatprep.subr.bf16.mxu0 %v527
        %591 = vmatpush1.bf16.msra.mxu0 %v526
        %592 = vmatprep.subr.bf16.mxu0 %v529
        %593 = vmatpush1.bf16.msra.mxu0 %v528
        %594 = vmatprep.subr.bf16.mxu0 %v531
        %595 = vmatpush1.bf16.msra.mxu0 %v530
        %596 = vmatprep.subr.bf16.mxu0 %v533
        %597 = vmatpush1.bf16.msra.mxu0 %v532
        %598 = vmatprep.subr.bf16.mxu0 %v535
        %599 = vmatpush1.bf16.msra.mxu0 %v534
        %600 = vmatprep.subr.bf16.mxu0 %v537
        %601 = vmatpush1.bf16.msra.mxu0 %v536
        %602 = vmatprep.subr.bf16.mxu0 %v539
        %603 = vmatpush1.bf16.msra.mxu0 %v538
        %604 = vmatprep.subr.bf16.mxu0 %v541
        %605 = vmatpush1.bf16.msra.mxu0 %v540
        %606 = vmatprep.subr.bf16.mxu0 %v543
        %607 = vmatpush1.bf16.msra.mxu0 %v542
        %608 = vmatprep.subr.bf16.mxu0 %v545
        %609 = vmatpush1.bf16.msra.mxu0 %v544
        %610 = vmatprep.subr.bf16.mxu0 %v547
        %611 = vmatpush1.bf16.msra.mxu0 %v546
        %612 = vmatprep.subr.bf16.mxu0 %v549
        %613 = vmatpush1.bf16.msra.mxu0 %v548
        %614 = vmatprep.subr.bf16.mxu0 %v551
        %615 = vmatpush1.bf16.msra.mxu0 %v550
        %616 = vmatprep.mubr.bf16.mxu0 %v421
        %617 = vmatmul.mubr.bf16.gmra.mrb[0].mxu0 %v420
        %v618 = vpop.f32.mrb[0].mxu0
        %v619 = vadd.f32 0.0, %v618
        %v620 = vpop.f32.mrb[0].mxu0
        %v621 = vadd.f32 0.0, %v620
        %v622 = vpop.f32.mrb[0].mxu0
        %v623 = vpop.f32.mrb[0].mxu0
        %624 = vdwg.mxu0
        %v625 = vadd.f32 %v382, %v619
        %v626 = vadd.f32 %v383, %v621
        %627 = vst [vmem:[#allocation2] sm:$0xff] %v625
        %628 = vst [vmem:[#allocation2 + $0x8] sm:$0xff] %v626
        // Predicated region
        $region71: #{llama_forward.29} parent=61 // pred_check
          %p629 = pneg %p376
        $region72: #{llama_forward.29} parent=61 // pred_check_branch
          %631 = sbr.rel (%p629) target = $region74
        $region73: #{llama_forward.29} parent=61 // pred_region
          %v632 = vld [vmem:[#allocation2] sm:$0xff]
          %v633 = vld [vmem:[#allocation2 + $0x8] sm:$0xff]
          %v634 = vpack.c.bf16 %v632, %v632
          %v635 = vpack.c.bf16 %v633, %v633
          %v638 = vunpack.c.l.b16 %v634
          %v639 = vunpack.c.l.b16 %v635
          %v640 = vpack.c.b16 %v639, %v638
          %642 = vst [vmem:[%s374] sm:$0xff] %v640
        $region74: #{llama_forward.29} parent=61 // pred_fallthru
          _
        %s643 = smul.u32 2, %s19
        %p644 = scmp.lt.s32.totalorder %s18, 0
        %s645 = scalar_select %p644, %s18, 0
        %p646 = scmp.lt.s32.totalorder %s643, 3
        %s647 = scalar_select %p646, %s643, 3
        %s648 = smul.addr %s645, 4
        %s649 = sadd.s32 %s647, %s648
        %s650 = smul.addr %s649, 4
        %s651 = scalar_lea.vmem %s2, %s650
        // Predicated region
        $region75: #{llama_forward.29} parent=61 // pred_check
          %p652 = pneg %p108
        $region76: #{llama_forward.29} parent=61 // pred_check_branch
          %654 = sbr.rel (%p652) target = $region78
        $region77: #{llama_forward.29} parent=61 // pred_region
          %s655 = smul.u32 2, %s19
        $region78: #{llama_forward.29} parent=61 // pred_fallthru
          _
      $region62: #{llama_forward.29} parent=5 // pred_fallthru
        _
      %p656 = scmp.le.s32.totalorder 2, %s8
      // Predicated region
      $region79: #{llama_forward.29} parent=5 // pred_check
        %p657 = pneg %p656
      $region80: #{llama_forward.29} parent=5 // pred_check_branch
        %659 = sbr.rel (%p657) target = $region82
      $region81: #{llama_forward.29} parent=5 // pred_region
        %s660 = ssub.s32 %s8, 2
        // Predicated region
        $region83: #{llama_forward.29} parent=81 // pred_check
          %p661 = pneg %p114
        $region84: #{llama_forward.29} parent=81 // pred_check_branch
          %663 = sbr.rel (%p661) target = $region86
        $region85: #{llama_forward.29} parent=81 // pred_region
          %s664 = smul.u32 2, %s22
          %p665 = scmp.lt.s32.totalorder %s21, 0
          %s666 = scalar_select %p665, %s21, 0
          %p667 = scmp.lt.s32.totalorder %s664, 3
          %s668 = scalar_select %p667, %s664, 3
          %s669 = smul.addr %s666, 4
          %s670 = sadd.s32 %s668, %s669
          %s671 = smul.addr %s670, 4
          %s672 = scalar_lea.vmem %s2, %s671
        $region86: #{llama_forward.29} parent=81 // pred_fallthru
          _
      $region82: #{llama_forward.29} parent=5 // pred_fallthru
        _
    $region6: #{llama_forward.29} parent=1 // loop_footer
      %s12 = sadd.s32 1, %s8
    $region7: #{llama_forward.29} parent=1 // loop_footer_branch
      %7 = sbr.rel target = $region3
    $region8: #{llama_forward.29} parent=1 // loop_exit
      _

// kernel: llama_forward.33
$region0: #{llama_forward.33}
  #allocation0 [shape = 'u32[]', space=smem, size = 0x4, offset = 0x4, fixed_abs, tag = 'smem constant byte address 0x4 - core index']
  #allocation1 [shape = 'u32[144,128]{1,0:T(1,128)}', space=vmem, size = 0x12000, scoped, tag = 'internal scratch']
  #allocation2 [shape = 'f32[8,256]{1,0:T(8,128)}', space=vmem, size = 0x2000, scoped, tag = 'scratch operand']
  %s0 = inlined_call_operand.vmem [shape: bf16[8,256], index: 0, kind: input, shape index: {}]
  %s1 = inlined_call_operand.vmem [shape: bf16[256,256], index: 1, kind: input, shape index: {}]
  %s2 = inlined_call_operand.vmem [shape: bf16[8,256], index: 2, kind: output, shape index: {}]
  %s3 = sld [smem:[#allocation0]]
  $region26: #{llama_forward.33} parent=0
    _
  %s5 = ssub.s32 1, %s3
  %s6 = scalar_select 0, %s5, %s3
  // Predicated region
  $region2: #{llama_forward.33} parent=0 // pred_check
    _
  $region3: #{llama_forward.33} parent=0 // pred_check_branch
    %8 = sbr.rel (0) target = $region5
  $region4: #{llama_forward.33} parent=0 // pred_region
    _
  $region5: #{llama_forward.33} parent=0 // pred_fallthru
    _
  // Predicated region
  $region6: #{llama_forward.33} parent=0 // pred_check
    _
  $region7: #{llama_forward.33} parent=0 // pred_check_branch
    %10 = sbr.rel (0) target = $region9
  $region8: #{llama_forward.33} parent=0 // pred_region
    _
  $region9: #{llama_forward.33} parent=0 // pred_fallthru
    _
  %p11 = scmp.eq.s32.totalorder 0, 0
  // Predicated region
  $region10: #{llama_forward.33} parent=0 // pred_check
    %p12 = pneg %p11
  $region11: #{llama_forward.33} parent=0 // pred_check_branch
    %14 = sbr.rel (%p12) target = $region13
  $region12: #{llama_forward.33} parent=0 // pred_region
    %15 = vst [vmem:[#allocation2] sm:$0xff] 0.0
    %16 = vst [vmem:[#allocation2 + $0x8] sm:$0xff] 0.0
  $region13: #{llama_forward.33} parent=0 // pred_fallthru
    _
  %v17 = vld [vmem:[#allocation2] sm:$0xff]
  %v18 = vld [vmem:[#allocation2 + $0x8] sm:$0xff]
  %v19 = vld [vmem:[%s0] sm:$0xff]
  %v20 = vld [vmem:[%s1] sm:$0xff]
  %v21 = vld [vmem:[%s1 + $0x8] sm:$0xff]
  %v22 = vld [vmem:[%s1 + $0x10] sm:$0xff]
  %v23 = vld [vmem:[%s1 + $0x18] sm:$0xff]
  %v24 = vld [vmem:[%s1 + $0x20] sm:$0xff]
  %v25 = vld [vmem:[%s1 + $0x28] sm:$0xff]
  %v26 = vld [vmem:[%s1 + $0x30] sm:$0xff]
  %v27 = vld [vmem:[%s1 + $0x38] sm:$0xff]
  %v28 = vld [vmem:[%s1 + $0x40] sm:$0xff]
  %v29 = vld [vmem:[%s1 + $0x48] sm:$0xff]
  %v30 = vld [vmem:[%s1 + $0x50] sm:$0xff]
  %v31 = vld [vmem:[%s1 + $0x58] sm:$0xff]
  %v32 = vld [vmem:[%s1 + $0x60] sm:$0xff]
  %v33 = vld [vmem:[%s1 + $0x68] sm:$0xff]
  %v34 = vld [vmem:[%s1 + $0x70] sm:$0xff]
  %v35 = vld [vmem:[%s1 + $0x78] sm:$0xff]
  %v36 = vld [vmem:[%s1 + $0x80] sm:$0xff]
  %v37 = vld [vmem:[%s1 + $0x88] sm:$0xff]
  %v38 = vld [vmem:[%s1 + $0x90] sm:$0xff]
  %v39 = vld [vmem:[%s1 + $0x98] sm:$0xff]
  %v40 = vld [vmem:[%s1 + $0xa0] sm:$0xff]
  %v41 = vld [vmem:[%s1 + $0xa8] sm:$0xff]
  %v42 = vld [vmem:[%s1 + $0xb0] sm:$0xff]
  %v43 = vld [vmem:[%s1 + $0xb8] sm:$0xff]
  %v44 = vld [vmem:[%s1 + $0xc0] sm:$0xff]
  %v45 = vld [vmem:[%s1 + $0xc8] sm:$0xff]
  %v46 = vld [vmem:[%s1 + $0xd0] sm:$0xff]
  %v47 = vld [vmem:[%s1 + $0xd8] sm:$0xff]
  %v48 = vld [vmem:[%s1 + $0xe0] sm:$0xff]
  %v49 = vld [vmem:[%s1 + $0xe8] sm:$0xff]
  %v50 = vld [vmem:[%s1 + $0xf0] sm:$0xff]
  %v51 = vld [vmem:[%s1 + $0xf8] sm:$0xff]
  %v53 = vunpack.c.l.b16 %v19
  %v54 = vunpack.c.h.b16 %v19
  %v55 = vpack.c.b16 %v53, %v53
  %v56 = vpack.c.b16 %v54, %v54
  %v91 = vunpack.c.l.b16 %v20
  %v92 = vunpack.c.h.b16 %v20
  %v93 = vunpack.c.l.b16 %v21
  %v94 = vunpack.c.h.b16 %v21
  %v95 = vunpack.c.l.b16 %v22
  %v96 = vunpack.c.h.b16 %v22
  %v97 = vunpack.c.l.b16 %v23
  %v98 = vunpack.c.h.b16 %v23
  %v99 = vunpack.c.l.b16 %v24
  %v100 = vunpack.c.h.b16 %v24
  %v101 = vunpack.c.l.b16 %v25
  %v102 = vunpack.c.h.b16 %v25
  %v103 = vunpack.c.l.b16 %v26
  %v104 = vunpack.c.h.b16 %v26
  %v105 = vunpack.c.l.b16 %v27
  %v106 = vunpack.c.h.b16 %v27
  %v107 = vunpack.c.l.b16 %v28
  %v108 = vunpack.c.h.b16 %v28
  %v109 = vunpack.c.l.b16 %v29
  %v110 = vunpack.c.h.b16 %v29
  %v111 = vunpack.c.l.b16 %v30
  %v112 = vunpack.c.h.b16 %v30
  %v113 = vunpack.c.l.b16 %v31
  %v114 = vunpack.c.h.b16 %v31
  %v115 = vunpack.c.l.b16 %v32
  %v116 = vunpack.c.h.b16 %v32
  %v117 = vunpack.c.l.b16 %v33
  %v118 = vunpack.c.h.b16 %v33
  %v119 = vunpack.c.l.b16 %v34
  %v120 = vunpack.c.h.b16 %v34
  %v121 = vunpack.c.l.b16 %v35
  %v122 = vunpack.c.h.b16 %v35
  %v123 = vunpack.c.l.b16 %v36
  %v124 = vunpack.c.h.b16 %v36
  %v125 = vunpack.c.l.b16 %v37
  %v126 = vunpack.c.h.b16 %v37
  %v127 = vunpack.c.l.b16 %v38
  %v128 = vunpack.c.h.b16 %v38
  %v129 = vunpack.c.l.b16 %v39
  %v130 = vunpack.c.h.b16 %v39
  %v131 = vunpack.c.l.b16 %v40
  %v132 = vunpack.c.h.b16 %v40
  %v133 = vunpack.c.l.b16 %v41
  %v134 = vunpack.c.h.b16 %v41
  %v135 = vunpack.c.l.b16 %v42
  %v136 = vunpack.c.h.b16 %v42
  %v137 = vunpack.c.l.b16 %v43
  %v138 = vunpack.c.h.b16 %v43
  %v139 = vunpack.c.l.b16 %v44
  %v140 = vunpack.c.h.b16 %v44
  %v141 = vunpack.c.l.b16 %v45
  %v142 = vunpack.c.h.b16 %v45
  %v143 = vunpack.c.l.b16 %v46
  %v144 = vunpack.c.h.b16 %v46
  %v145 = vunpack.c.l.b16 %v47
  %v146 = vunpack.c.h.b16 %v47
  %v147 = vunpack.c.l.b16 %v48
  %v148 = vunpack.c.h.b16 %v48
  %v149 = vunpack.c.l.b16 %v49
  %v150 = vunpack.c.h.b16 %v49
  %v151 = vunpack.c.l.b16 %v50
  %v152 = vunpack.c.h.b16 %v50
  %v153 = vunpack.c.l.b16 %v51
  %v154 = vunpack.c.h.b16 %v51
  %v155 = vpack.c.b16 %v93, %v91
  %v156 = vpack.c.b16 %v94, %v92
  %v157 = vpack.c.b16 %v97, %v95
  %v158 = vpack.c.b16 %v98, %v96
  %v159 = vpack.c.b16 %v101, %v99
  %v160 = vpack.c.b16 %v102, %v100
  %v161 = vpack.c.b16 %v105, %v103
  %v162 = vpack.c.b16 %v106, %v104
  %v163 = vpack.c.b16 %v109, %v107
  %v164 = vpack.c.b16 %v110, %v108
  %v165 = vpack.c.b16 %v113, %v111
  %v166 = vpack.c.b16 %v114, %v112
  %v167 = vpack.c.b16 %v117, %v115
  %v168 = vpack.c.b16 %v118, %v116
  %v169 = vpack.c.b16 %v121, %v119
  %v170 = vpack.c.b16 %v122, %v120
  %v171 = vpack.c.b16 %v125, %v123
  %v172 = vpack.c.b16 %v126, %v124
  %v173 = vpack.c.b16 %v129, %v127
  %v174 = vpack.c.b16 %v130, %v128
  %v175 = vpack.c.b16 %v133, %v131
  %v176 = vpack.c.b16 %v134, %v132
  %v177 = vpack.c.b16 %v137, %v135
  %v178 = vpack.c.b16 %v138, %v136
  %v179 = vpack.c.b16 %v141, %v139
  %v180 = vpack.c.b16 %v142, %v140
  %v181 = vpack.c.b16 %v145, %v143
  %v182 = vpack.c.b16 %v146, %v144
  %v183 = vpack.c.b16 %v149, %v147
  %v184 = vpack.c.b16 %v150, %v148
  %v185 = vpack.c.b16 %v153, %v151
  %v186 = vpack.c.b16 %v154, %v152
  %219 = vmatprep.subr.bf16.mxu0 %v156
  %220 = vmatpush1.bf16.msra.mxu0 %v155
  %221 = vmatprep.subr.bf16.mxu0 %v158
  %222 = vmatpush1.bf16.msra.mxu0 %v157
  %223 = vmatprep.subr.bf16.mxu0 %v160
  %224 = vmatpush1.bf16.msra.mxu0 %v159
  %225 = vmatprep.subr.bf16.mxu0 %v162
  %226 = vmatpush1.bf16.msra.mxu0 %v161
  %227 = vmatprep.subr.bf16.mxu0 %v164
  %228 = vmatpush1.bf16.msra.mxu0 %v163
  %229 = vmatprep.subr.bf16.mxu0 %v166
  %230 = vmatpush1.bf16.msra.mxu0 %v165
  %231 = vmatprep.subr.bf16.mxu0 %v168
  %232 = vmatpush1.bf16.msra.mxu0 %v167
  %233 = vmatprep.subr.bf16.mxu0 %v170
  %234 = vmatpush1.bf16.msra.mxu0 %v169
  %235 = vmatprep.subr.bf16.mxu0 %v172
  %236 = vmatpush1.bf16.msra.mxu0 %v171
  %237 = vmatprep.subr.bf16.mxu0 %v174
  %238 = vmatpush1.bf16.msra.mxu0 %v173
  %239 = vmatprep.subr.bf16.mxu0 %v176
  %240 = vmatpush1.bf16.msra.mxu0 %v175
  %241 = vmatprep.subr.bf16.mxu0 %v178
  %242 = vmatpush1.bf16.msra.mxu0 %v177
  %243 = vmatprep.subr.bf16.mxu0 %v180
  %244 = vmatpush1.bf16.msra.mxu0 %v179
  %245 = vmatprep.subr.bf16.mxu0 %v182
  %246 = vmatpush1.bf16.msra.mxu0 %v181
  %247 = vmatprep.subr.bf16.mxu0 %v184
  %248 = vmatpush1.bf16.msra.mxu0 %v183
  %249 = vmatprep.subr.bf16.mxu0 %v186
  %250 = vmatpush1.bf16.msra.mxu0 %v185
  %251 = vmatprep.mubr.bf16.mxu0 %v56
  %252 = vmatmul.mubr.bf16.gmra.mrb[0].mxu0 %v55
  %v253 = vpop.f32.mrb[0].mxu0
  %v254 = vadd.f32 0.0, %v253
  %v255 = vpop.f32.mrb[0].mxu0
  %v256 = vadd.f32 0.0, %v255
  %v257 = vpop.f32.mrb[0].mxu0
  %v258 = vpop.f32.mrb[0].mxu0
  %259 = vdwg.mxu0
  %v260 = vadd.f32 %v17, %v254
  %v261 = vadd.f32 %v18, %v256
  %262 = vst [vmem:[#allocation2] sm:$0xff] %v260
  %263 = vst [vmem:[#allocation2 + $0x8] sm:$0xff] %v261
  // Predicated region
  $region14: #{llama_forward.33} parent=0 // pred_check
    %p264 = pneg %p11
  $region15: #{llama_forward.33} parent=0 // pred_check_branch
    %266 = sbr.rel (%p264) target = $region17
  $region16: #{llama_forward.33} parent=0 // pred_region
    %v267 = vld [vmem:[#allocation2] sm:$0xff]
    %v268 = vld [vmem:[#allocation2 + $0x8] sm:$0xff]
    %v269 = vpack.c.bf16 %v267, %v267
    %v270 = vpack.c.bf16 %v268, %v268
    %v273 = vunpack.c.l.b16 %v269
    %v274 = vunpack.c.l.b16 %v270
    %v275 = vpack.c.b16 %v274, %v273
    %277 = vst [vmem:[%s2] sm:$0xff] %v275
  $region17: #{llama_forward.33} parent=0 // pred_fallthru
    _
  // Predicated region
  $region18: #{llama_forward.33} parent=0 // pred_check
    _
  $region19: #{llama_forward.33} parent=0 // pred_check_branch
    %279 = sbr.rel (0) target = $region21
  $region20: #{llama_forward.33} parent=0 // pred_region
    _
  $region21: #{llama_forward.33} parent=0 // pred_fallthru
    _
  // Predicated region
  $region22: #{llama_forward.33} parent=0 // pred_check
    _
  $region23: #{llama_forward.33} parent=0 // pred_check_branch
    %281 = sbr.rel (0) target = $region25
  $region24: #{llama_forward.33} parent=0 // pred_region
    _
  $region25: #{llama_forward.33} parent=0 // pred_fallthru
    _

// kernel: llama_forward.27
$region0: #{llama_forward.27}
  #allocation0 [shape = 'u32[]', space=smem, size = 0x4, offset = 0x4, fixed_abs, tag = 'smem constant byte address 0x4 - core index']
  #allocation1 [shape = 'u32[144,128]{1,0:T(1,128)}', space=vmem, size = 0x12000, scoped, tag = 'internal scratch']
  #allocation2 [shape = 'f32[8,256]{1,0:T(8,128)}', space=vmem, size = 0x2000, scoped, tag = 'scratch operand']
  %s0 = inlined_call_operand.vmem [shape: bf16[8,1024], index: 0, kind: input, shape index: {}]
  %s1 = inlined_call_operand.vmem [shape: bf16[1024,256], index: 1, kind: input, shape index: {}]
  %s2 = inlined_call_operand.vmem [shape: bf16[8,256], index: 2, kind: output, shape index: {}]
  %s3 = sld [smem:[#allocation0]]
  $region49: #{llama_forward.27} parent=0
    _
  %s5 = ssub.s32 1, %s3
  %s6 = scalar_select 0, %s5, %s3
  loop: start=0, step=1, limit=4
  $region2: #{llama_forward.27} parent=0 // loop_pre_header
    _
  $region3: #{llama_forward.27} parent=0 // loop_header
    %s8 = sphi 0, %s12
    %p9 = scmp.ge.s32.totalorder %s8, 4
    %s15 = sphi 0, %s34
    %s16 = sphi 0, %s30
    %s17 = sphi 0, %s26
    %s18 = sphi 0, %s15
    %s19 = sphi 0, %s16
    %s20 = sphi 0, %s17
    %s21 = sphi 0, %s18
    %s22 = sphi 0, %s19
    %s23 = sphi 0, %s20
    %s39 = sphi 0, %s41
    %s42 = sphi 0, %s39
    %s43 = sphi 0, %s42
    %s59 = sphi 0, %s43
    %s67 = sphi 0, %s69
    %s70 = sphi 0, %s67
    %s71 = sphi 0, %s70
    %s87 = sphi 0, %s71
    %s95 = sphi 0, %s97
    %s98 = sphi 0, %s95
    %s99 = sphi 0, %s98
    %s115 = sphi 0, %s99
  $region4: #{llama_forward.27} parent=0 // loop_header_branch
    %11 = sbr.rel (%p9) target = $region8
  $region5: #{llama_forward.27} parent=0 // loop_body
    %s13 = ssub.s32 %s8, 1
    %s14 = ssub.s32 %s8, 2
    %s24 = sadd.s32 1, %s17
    %p25 = scmp.ge.s32.totalorder %s24, 2
    %s26 = scalar_select %p25, 0, %s24
    %s27 = sadd.s32 1, %s16
    %s28 = scalar_select %p25, %s27, %s16
    %p29 = scmp.ge.s32.totalorder %s28, 1
    %s30 = scalar_select %p29, 0, %s28
    %s31 = sadd.s32 1, %s15
    %s32 = scalar_select %p29, %s31, %s15
    %p33 = scmp.ge.s32.totalorder %s32, 1
    %s34 = scalar_select %p33, 0, %s32
    %s35 = ssub.s32 %s15, %s34
    %s36 = ssub.s32 %s17, %s26
    %s37 = sor.u32 %s35, %s36
    %p38 = scmp.eq.s32.totalorder %s37, 0
    %s40 = sadd.s32 %s39, 1
    %s41 = scalar_select %p38, %s39, %s40
    %p44 = pneg %p38
    %p45 = scmp.eq.s32.totalorder %s8, 1
    %p46 = por %p44, %p45
    %p47 = scmp.ne.s32.totalorder %s39, %s42
    %p48 = scmp.eq.s32.totalorder %s8, 0
    %p49 = por %p47, %p48
    %p50 = scmp.ne.s32.totalorder %s39, %s42
    %p51 = scmp.eq.s32.totalorder %s13, 1
    %p52 = por %p50, %p51
    %p53 = scmp.ne.s32.totalorder %s42, %s43
    %p54 = scmp.eq.s32.totalorder %s13, 0
    %p55 = por %p53, %p54
    %p56 = scmp.ne.s32.totalorder %s42, %s43
    %p57 = scmp.eq.s32.totalorder %s14, 1
    %p58 = por %p56, %p57
    %p60 = scmp.ne.s32.totalorder %s43, %s59
    %p61 = scmp.eq.s32.totalorder %s14, 0
    %p62 = por %p60, %p61
    %s63 = ssub.s32 %s17, %s26
    %s64 = ssub.s32 %s16, %s30
    %s65 = sor.u32 %s63, %s64
    %p66 = scmp.eq.s32.totalorder %s65, 0
    %s68 = sadd.s32 %s67, 1
    %s69 = scalar_select %p66, %s67, %s68
    %p72 = pneg %p66
    %p73 = scmp.eq.s32.totalorder %s8, 1
    %p74 = por %p72, %p73
    %p75 = scmp.ne.s32.totalorder %s67, %s70
    %p76 = scmp.eq.s32.totalorder %s8, 0
    %p77 = por %p75, %p76
    %p78 = scmp.ne.s32.totalorder %s67, %s70
    %p79 = scmp.eq.s32.totalorder %s13, 1
    %p80 = por %p78, %p79
    %p81 = scmp.ne.s32.totalorder %s70, %s71
    %p82 = scmp.eq.s32.totalorder %s13, 0
    %p83 = por %p81, %p82
    %p84 = scmp.ne.s32.totalorder %s70, %s71
    %p85 = scmp.eq.s32.totalorder %s14, 1
    %p86 = por %p84, %p85
    %p88 = scmp.ne.s32.totalorder %s71, %s87
    %p89 = scmp.eq.s32.totalorder %s14, 0
    %p90 = por %p88, %p89
    %s91 = ssub.s32 %s15, %s34
    %s92 = ssub.s32 %s16, %s30
    %s93 = sor.u32 %s91, %s92
    %p94 = scmp.eq.s32.totalorder %s93, 0
    %s96 = sadd.s32 %s95, 1
    %s97 = scalar_select %p94, %s95, %s96
    %p100 = pneg %p94
    %p101 = scmp.eq.s32.totalorder %s8, 1
    %p102 = por %p100, %p101
    %p103 = scmp.ne.s32.totalorder %s95, %s98
    %p104 = scmp.eq.s32.totalorder %s8, 0
    %p105 = por %p103, %p104
    %p106 = scmp.ne.s32.totalorder %s95, %s98
    %p107 = scmp.eq.s32.totalorder %s13, 1
    %p108 = por %p106, %p107
    %p109 = scmp.ne.s32.totalorder %s98, %s99
    %p110 = scmp.eq.s32.totalorder %s13, 0
    %p111 = por %p109, %p110
    %p112 = scmp.ne.s32.totalorder %s98, %s99
    %p113 = scmp.eq.s32.totalorder %s14, 1
    %p114 = por %p112, %p113
    %p116 = scmp.ne.s32.totalorder %s99, %s115
    %p117 = scmp.eq.s32.totalorder %s14, 0
    %p118 = por %p116, %p117
    %p119 = scmp.le.s32.totalorder 1, %s8
    %p120 = scmp.lt.s32.totalorder %s8, 3
    %p121 = pnand %p119, %p120
    %p122 = pneg %p121
    // Predicated region
    $region9: #{llama_forward.27} parent=5 // pred_check
      _
    $region10: #{llama_forward.27} parent=5 // pred_check_branch
      %124 = sbr.rel (%p121) target = $region12
    $region11: #{llama_forward.27} parent=5 // pred_region
      %s125 = ssub.s32 %s8, 1
    $region12: #{llama_forward.27} parent=5 // pred_fallthru
      _
    %p126 = scmp.lt.s32.totalorder %s8, 2
    // Predicated region
    $region13: #{llama_forward.27} parent=5 // pred_check
      %p127 = pneg %p126
    $region14: #{llama_forward.27} parent=5 // pred_check_branch
      %129 = sbr.rel (%p127) target = $region16
    $region15: #{llama_forward.27} parent=5 // pred_region
      // Predicated region
      $region17: #{llama_forward.27} parent=15 // pred_check
        %p130 = pneg %p49
      $region18: #{llama_forward.27} parent=15 // pred_check_branch
        %132 = sbr.rel (%p130) target = $region20
      $region19: #{llama_forward.27} parent=15 // pred_region
        %s133 = smul.u32 4, %s17
        %p134 = scmp.lt.s32.totalorder %s15, 0
        %s135 = scalar_select %p134, %s15, 0
        %p136 = scmp.lt.s32.totalorder %s133, 7
        %s137 = scalar_select %p136, %s133, 7
        %s138 = smul.addr %s135, 8
        %s139 = sadd.s32 %s137, %s138
        %s140 = smul.addr %s139, 4
        %s141 = scalar_lea.vmem %s0, %s140
        %s142 = smul.u32 4, %s17
      $region20: #{llama_forward.27} parent=15 // pred_fallthru
        _
      // Predicated region
      $region21: #{llama_forward.27} parent=15 // pred_check
        %p143 = pneg %p77
      $region22: #{llama_forward.27} parent=15 // pred_check_branch
        %145 = sbr.rel (%p143) target = $region24
      $region23: #{llama_forward.27} parent=15 // pred_region
        %s146 = smul.u32 64, %s17
        %s147 = smul.u32 2, %s16
        %p148 = scmp.lt.s32.totalorder %s146, 127
        %s149 = scalar_select %p148, %s146, 127
        %p150 = scmp.lt.s32.totalorder %s147, 1
        %s151 = scalar_select %p150, %s147, 1
        %s152 = smul.addr %s149, 2
        %s153 = sadd.s32 %s151, %s152
        %s154 = smul.addr %s153, 4
        %s155 = scalar_lea.vmem %s1, %s154
        %s156 = smul.u32 64, %s17
        %s157 = smul.u32 2, %s16
      $region24: #{llama_forward.27} parent=15 // pred_fallthru
        _
    $region16: #{llama_forward.27} parent=5 // pred_fallthru
      _
    %p158 = scmp.le.s32.totalorder 1, %s8
    %p159 = scmp.lt.s32.totalorder %s8, 3
    %p160 = pnand %p158, %p159
    %p161 = pneg %p160
    // Predicated region
    $region25: #{llama_forward.27} parent=5 // pred_check
      _
    $region26: #{llama_forward.27} parent=5 // pred_check_branch
      %163 = sbr.rel (%p160) target = $region28
    $region27: #{llama_forward.27} parent=5 // pred_region
      %s164 = ssub.s32 %s8, 1
      %s165 = smul.u32 4, %s20
      %p166 = scmp.lt.s32.totalorder %s18, 0
      %s167 = scalar_select %p166, %s18, 0
      %p168 = scmp.lt.s32.totalorder %s165, 7
      %s169 = scalar_select %p168, %s165, 7
      %s170 = smul.addr %s167, 8
      %s171 = sadd.s32 %s169, %s170
      %s172 = smul.addr %s171, 4
      %s173 = scalar_lea.vmem %s0, %s172
      %p174 = pneg %p55
      %p175 = pneg %p52
      %s176 = smul.u32 64, %s20
      %s177 = smul.u32 2, %s19
      %p178 = scmp.lt.s32.totalorder %s176, 127
      %s179 = scalar_select %p178, %s176, 127
      %p180 = scmp.lt.s32.totalorder %s177, 1
      %s181 = scalar_select %p180, %s177, 1
      %s182 = smul.addr %s179, 2
      %s183 = sadd.s32 %s181, %s182
      %s184 = smul.addr %s183, 4
      %s185 = scalar_lea.vmem %s1, %s184
      %p186 = pneg %p83
      %p187 = pneg %p80
      %p188 = pneg %p111
      %p189 = pneg %p108
      %s190 = smul.u32 2, %s19
      %p191 = scmp.lt.s32.totalorder %s18, 0
      %s192 = scalar_select %p191, %s18, 0
      %p193 = scmp.lt.s32.totalorder %s190, 1
      %s194 = scalar_select %p193, %s190, 1
      %s195 = smul.addr %s192, 2
      %s196 = sadd.s32 %s194, %s195
      %s197 = smul.addr %s196, 4
      %s198 = scalar_lea.vmem %s2, %s197
      %s199 = smul.u32 4, %s20
      %p200 = scmp.lt.s32.totalorder %s18, 0
      %s201 = scalar_select %p200, %s18, 0
      %p202 = scmp.lt.s32.totalorder %s199, 7
      %s203 = scalar_select %p202, %s199, 7
      %s204 = smul.addr %s201, 8
      %s205 = sadd.s32 %s203, %s204
      %s206 = smul.addr %s205, 4
      %s207 = scalar_lea.vmem %s0, %s206
      %s208 = smul.u32 4, %s20
      %s209 = smul.u32 64, %s20
      %s210 = smul.u32 2, %s19
      %p211 = scmp.lt.s32.totalorder %s209, 127
      %s212 = scalar_select %p211, %s209, 127
      %p213 = scmp.lt.s32.totalorder %s210, 1
      %s214 = scalar_select %p213, %s210, 1
      %s215 = smul.addr %s212, 2
      %s216 = sadd.s32 %s214, %s215
      %s217 = smul.addr %s216, 4
      %s218 = scalar_lea.vmem %s1, %s217
      %s219 = smul.u32 64, %s20
      %s220 = smul.u32 2, %s19
      %s221 = smul.u32 2, %s19
      %p222 = scmp.lt.s32.totalorder %s18, 0
      %s223 = scalar_select %p222, %s18, 0
      %p224 = scmp.lt.s32.totalorder %s221, 1
      %s225 = scalar_select %p224, %s221, 1
      %s226 = smul.addr %s223, 2
      %s227 = sadd.s32 %s225, %s226
      %s228 = smul.addr %s227, 4
      %s229 = scalar_lea.vmem %s2, %s228
      %s230 = smul.u32 2, %s19
      %p231 = scmp.eq.s32.totalorder %s20, 0
      // Predicated region
      $region29: #{llama_forward.27} parent=27 // pred_check
        %p232 = pneg %p231
      $region30: #{llama_forward.27} parent=27 // pred_check_branch
        %234 = sbr.rel (%p232) target = $region32
      $region31: #{llama_forward.27} parent=27 // pred_region
        %235 = vst [vmem:[#allocation2] sm:$0xff] 0.0
        %236 = vst [vmem:[#allocation2 + $0x8] sm:$0xff] 0.0
      $region32: #{llama_forward.27} parent=27 // pred_fallthru
        _
      %v237 = vld [vmem:[#allocation2] sm:$0xff]
      %v238 = vld [vmem:[#allocation2 + $0x8] sm:$0xff]
      %v239 = vld [vmem:[%s207] sm:$0xff]
      %v240 = vld [vmem:[%s207 + $0x8] sm:$0xff]
      %v241 = vld [vmem:[%s218] sm:$0xff]
      %v242 = vld [vmem:[%s218 + $0x8] sm:$0xff]
      %v243 = vld [vmem:[%s218 + $0x10] sm:$0xff]
      %v244 = vld [vmem:[%s218 + $0x18] sm:$0xff]
      %v245 = vld [vmem:[%s218 + $0x20] sm:$0xff]
      %v246 = vld [vmem:[%s218 + $0x28] sm:$0xff]
      %v247 = vld [vmem:[%s218 + $0x30] sm:$0xff]
      %v248 = vld [vmem:[%s218 + $0x38] sm:$0xff]
      %v249 = vld [vmem:[%s218 + $0x40] sm:$0xff]
      %v250 = vld [vmem:[%s218 + $0x48] sm:$0xff]
      %v251 = vld [vmem:[%s218 + $0x50] sm:$0xff]
      %v252 = vld [vmem:[%s218 + $0x58] sm:$0xff]
      %v253 = vld [vmem:[%s218 + $0x60] sm:$0xff]
      %v254 = vld [vmem:[%s218 + $0x68] sm:$0xff]
      %v255 = vld [vmem:[%s218 + $0x70] sm:$0xff]
      %v256 = vld [vmem:[%s218 + $0x78] sm:$0xff]
      %v257 = vld [vmem:[%s218 + $0x80] sm:$0xff]
      %v258 = vld [vmem:[%s218 + $0x88] sm:$0xff]
      %v259 = vld [vmem:[%s218 + $0x90] sm:$0xff]
      %v260 = vld [vmem:[%s218 + $0x98] sm:$0xff]
      %v261 = vld [vmem:[%s218 + $0xa0] sm:$0xff]
      %v262 = vld [vmem:[%s218 + $0xa8] sm:$0xff]
      %v263 = vld [vmem:[%s218 + $0xb0] sm:$0xff]
      %v264 = vld [vmem:[%s218 + $0xb8] sm:$0xff]
      %v265 = vld [vmem:[%s218 + $0xc0] sm:$0xff]
      %v266 = vld [vmem:[%s218 + $0xc8] sm:$0xff]
      %v267 = vld [vmem:[%s218 + $0xd0] sm:$0xff]
      %v268 = vld [vmem:[%s218 + $0xd8] sm:$0xff]
      %v269 = vld [vmem:[%s218 + $0xe0] sm:$0xff]
      %v270 = vld [vmem:[%s218 + $0xe8] sm:$0xff]
      %v271 = vld [vmem:[%s218 + $0xf0] sm:$0xff]
      %v272 = vld [vmem:[%s218 + $0xf8] sm:$0xff]
      %v273 = vld [vmem:[%s218 + $0x100] sm:$0xff]
      %v274 = vld [vmem:[%s218 + $0x108] sm:$0xff]
      %v275 = vld [vmem:[%s218 + $0x110] sm:$0xff]
      %v276 = vld [vmem:[%s218 + $0x118] sm:$0xff]
      %v277 = vld [vmem:[%s218 + $0x120] sm:$0xff]
      %v278 = vld [vmem:[%s218 + $0x128] sm:$0xff]
      %v279 = vld [vmem:[%s218 + $0x130] sm:$0xff]
      %v280 = vld [vmem:[%s218 + $0x138] sm:$0xff]
      %v281 = vld [vmem:[%s218 + $0x140] sm:$0xff]
      %v282 = vld [vmem:[%s218 + $0x148] sm:$0xff]
      %v283 = vld [vmem:[%s218 + $0x150] sm:$0xff]
      %v284 = vld [vmem:[%s218 + $0x158] sm:$0xff]
      %v285 = vld [vmem:[%s218 + $0x160] sm:$0xff]
      %v286 = vld [vmem:[%s218 + $0x168] sm:$0xff]
      %v287 = vld [vmem:[%s218 + $0x170] sm:$0xff]
      %v288 = vld [vmem:[%s218 + $0x178] sm:$0xff]
      %v289 = vld [vmem:[%s218 + $0x180] sm:$0xff]
      %v290 = vld [vmem:[%s218 + $0x188] sm:$0xff]
      %v291 = vld [vmem:[%s218 + $0x190] sm:$0xff]
      %v292 = vld [vmem:[%s218 + $0x198] sm:$0xff]
      %v293 = vld [vmem:[%s218 + $0x1a0] sm:$0xff]
      %v294 = vld [vmem:[%s218 + $0x1a8] sm:$0xff]
      %v295 = vld [vmem:[%s218 + $0x1b0] sm:$0xff]
      %v296 = vld [vmem:[%s218 + $0x1b8] sm:$0xff]
      %v297 = vld [vmem:[%s218 + $0x1c0] sm:$0xff]
      %v298 = vld [vmem:[%s218 + $0x1c8] sm:$0xff]
      %v299 = vld [vmem:[%s218 + $0x1d0] sm:$0xff]
      %v300 = vld [vmem:[%s218 + $0x1d8] sm:$0xff]
      %v301 = vld [vmem:[%s218 + $0x1e0] sm:$0xff]
      %v302 = vld [vmem:[%s218 + $0x1e8] sm:$0xff]
      %v303 = vld [vmem:[%s218 + $0x1f0] sm:$0xff]
      %v304 = vld [vmem:[%s218 + $0x1f8] sm:$0xff]
      %v307 = vunpack.c.l.b16 %v239
      %v308 = vunpack.c.h.b16 %v239
      %v309 = vunpack.c.l.b16 %v240
      %v310 = vunpack.c.h.b16 %v240
      %v311 = vpack.c.b16 %v307, %v307
      %v312 = vpack.c.b16 %v308, %v308
      %v313 = vpack.c.b16 %v309, %v309
      %v314 = vpack.c.b16 %v310, %v310
      %v383 = vunpack.c.l.b16 %v241
      %v384 = vunpack.c.h.b16 %v241
      %v385 = vunpack.c.l.b16 %v242
      %v386 = vunpack.c.h.b16 %v242
      %v387 = vunpack.c.l.b16 %v243
      %v388 = vunpack.c.h.b16 %v243
      %v389 = vunpack.c.l.b16 %v244
      %v390 = vunpack.c.h.b16 %v244
      %v391 = vunpack.c.l.b16 %v245
      %v392 = vunpack.c.h.b16 %v245
      %v393 = vunpack.c.l.b16 %v246
      %v394 = vunpack.c.h.b16 %v246
      %v395 = vunpack.c.l.b16 %v247
      %v396 = vunpack.c.h.b16 %v247
      %v397 = vunpack.c.l.b16 %v248
      %v398 = vunpack.c.h.b16 %v248
      %v399 = vunpack.c.l.b16 %v249
      %v400 = vunpack.c.h.b16 %v249
      %v401 = vunpack.c.l.b16 %v250
      %v402 = vunpack.c.h.b16 %v250
      %v403 = vunpack.c.l.b16 %v251
      %v404 = vunpack.c.h.b16 %v251
      %v405 = vunpack.c.l.b16 %v252
      %v406 = vunpack.c.h.b16 %v252
      %v407 = vunpack.c.l.b16 %v253
      %v408 = vunpack.c.h.b16 %v253
      %v409 = vunpack.c.l.b16 %v254
      %v410 = vunpack.c.h.b16 %v254
      %v411 = vunpack.c.l.b16 %v255
      %v412 = vunpack.c.h.b16 %v255
      %v413 = vunpack.c.l.b16 %v256
      %v414 = vunpack.c.h.b16 %v256
      %v415 = vunpack.c.l.b16 %v257
      %v416 = vunpack.c.h.b16 %v257
      %v417 = vunpack.c.l.b16 %v258
      %v418 = vunpack.c.h.b16 %v258
      %v419 = vunpack.c.l.b16 %v259
      %v420 = vunpack.c.h.b16 %v259
      %v421 = vunpack.c.l.b16 %v260
      %v422 = vunpack.c.h.b16 %v260
      %v423 = vunpack.c.l.b16 %v261
      %v424 = vunpack.c.h.b16 %v261
      %v425 = vunpack.c.l.b16 %v262
      %v426 = vunpack.c.h.b16 %v262
      %v427 = vunpack.c.l.b16 %v263
      %v428 = vunpack.c.h.b16 %v263
      %v429 = vunpack.c.l.b16 %v264
      %v430 = vunpack.c.h.b16 %v264
      %v431 = vunpack.c.l.b16 %v265
      %v432 = vunpack.c.h.b16 %v265
      %v433 = vunpack.c.l.b16 %v266
      %v434 = vunpack.c.h.b16 %v266
      %v435 = vunpack.c.l.b16 %v267
      %v436 = vunpack.c.h.b16 %v267
      %v437 = vunpack.c.l.b16 %v268
      %v438 = vunpack.c.h.b16 %v268
      %v439 = vunpack.c.l.b16 %v269
      %v440 = vunpack.c.h.b16 %v269
      %v441 = vunpack.c.l.b16 %v270
      %v442 = vunpack.c.h.b16 %v270
      %v443 = vunpack.c.l.b16 %v271
      %v444 = vunpack.c.h.b16 %v271
      %v445 = vunpack.c.l.b16 %v272
      %v446 = vunpack.c.h.b16 %v272
      %v447 = vunpack.c.l.b16 %v273
      %v448 = vunpack.c.h.b16 %v273
      %v449 = vunpack.c.l.b16 %v274
      %v450 = vunpack.c.h.b16 %v274
      %v451 = vunpack.c.l.b16 %v275
      %v452 = vunpack.c.h.b16 %v275
      %v453 = vunpack.c.l.b16 %v276
      %v454 = vunpack.c.h.b16 %v276
      %v455 = vunpack.c.l.b16 %v277
      %v456 = vunpack.c.h.b16 %v277
      %v457 = vunpack.c.l.b16 %v278
      %v458 = vunpack.c.h.b16 %v278
      %v459 = vunpack.c.l.b16 %v279
      %v460 = vunpack.c.h.b16 %v279
      %v461 = vunpack.c.l.b16 %v280
      %v462 = vunpack.c.h.b16 %v280
      %v463 = vunpack.c.l.b16 %v281
      %v464 = vunpack.c.h.b16 %v281
      %v465 = vunpack.c.l.b16 %v282
      %v466 = vunpack.c.h.b16 %v282
      %v467 = vunpack.c.l.b16 %v283
      %v468 = vunpack.c.h.b16 %v283
      %v469 = vunpack.c.l.b16 %v284
      %v470 = vunpack.c.h.b16 %v284
      %v471 = vunpack.c.l.b16 %v285
      %v472 = vunpack.c.h.b16 %v285
      %v473 = vunpack.c.l.b16 %v286
      %v474 = vunpack.c.h.b16 %v286
      %v475 = vunpack.c.l.b16 %v287
      %v476 = vunpack.c.h.b16 %v287
      %v477 = vunpack.c.l.b16 %v288
      %v478 = vunpack.c.h.b16 %v288
      %v479 = vunpack.c.l.b16 %v289
      %v480 = vunpack.c.h.b16 %v289
      %v481 = vunpack.c.l.b16 %v290
      %v482 = vunpack.c.h.b16 %v290
      %v483 = vunpack.c.l.b16 %v291
      %v484 = vunpack.c.h.b16 %v291
      %v485 = vunpack.c.l.b16 %v292
      %v486 = vunpack.c.h.b16 %v292
      %v487 = vunpack.c.l.b16 %v293
      %v488 = vunpack.c.h.b16 %v293
      %v489 = vunpack.c.l.b16 %v294
      %v490 = vunpack.c.h.b16 %v294
      %v491 = vunpack.c.l.b16 %v295
      %v492 = vunpack.c.h.b16 %v295
      %v493 = vunpack.c.l.b16 %v296
      %v494 = vunpack.c.h.b16 %v296
      %v495 = vunpack.c.l.b16 %v297
      %v496 = vunpack.c.h.b16 %v297
      %v497 = vunpack.c.l.b16 %v298
      %v498 = vunpack.c.h.b16 %v298
      %v499 = vunpack.c.l.b16 %v299
      %v500 = vunpack.c.h.b16 %v299
      %v501 = vunpack.c.l.b16 %v300
      %v502 = vunpack.c.h.b16 %v300
      %v503 = vunpack.c.l.b16 %v301
      %v504 = vunpack.c.h.b16 %v301
      %v505 = vunpack.c.l.b16 %v302
      %v506 = vunpack.c.h.b16 %v302
      %v507 = vunpack.c.l.b16 %v303
      %v508 = vunpack.c.h.b16 %v303
      %v509 = vunpack.c.l.b16 %v304
      %v510 = vunpack.c.h.b16 %v304
      %v511 = vpack.c.b16 %v385, %v383
      %v512 = vpack.c.b16 %v386, %v384
      %v513 = vpack.c.b16 %v389, %v387
      %v514 = vpack.c.b16 %v390, %v388
      %v515 = vpack.c.b16 %v393, %v391
      %v516 = vpack.c.b16 %v394, %v392
      %v517 = vpack.c.b16 %v397, %v395
      %v518 = vpack.c.b16 %v398, %v396
      %v519 = vpack.c.b16 %v401, %v399
      %v520 = vpack.c.b16 %v402, %v400
      %v521 = vpack.c.b16 %v405, %v403
      %v522 = vpack.c.b16 %v406, %v404
      %v523 = vpack.c.b16 %v409, %v407
      %v524 = vpack.c.b16 %v410, %v408
      %v525 = vpack.c.b16 %v413, %v411
      %v526 = vpack.c.b16 %v414, %v412
      %v527 = vpack.c.b16 %v417, %v415
      %v528 = vpack.c.b16 %v418, %v416
      %v529 = vpack.c.b16 %v421, %v419
      %v530 = vpack.c.b16 %v422, %v420
      %v531 = vpack.c.b16 %v425, %v423
      %v532 = vpack.c.b16 %v426, %v424
      %v533 = vpack.c.b16 %v429, %v427
      %v534 = vpack.c.b16 %v430, %v428
      %v535 = vpack.c.b16 %v433, %v431
      %v536 = vpack.c.b16 %v434, %v432
      %v537 = vpack.c.b16 %v437, %v435
      %v538 = vpack.c.b16 %v438, %v436
      %v539 = vpack.c.b16 %v441, %v439
      %v540 = vpack.c.b16 %v442, %v440
      %v541 = vpack.c.b16 %v445, %v443
      %v542 = vpack.c.b16 %v446, %v444
      %v543 = vpack.c.b16 %v449, %v447
      %v544 = vpack.c.b16 %v450, %v448
      %v545 = vpack.c.b16 %v453, %v451
      %v546 = vpack.c.b16 %v454, %v452
      %v547 = vpack.c.b16 %v457, %v455
      %v548 = vpack.c.b16 %v458, %v456
      %v549 = vpack.c.b16 %v461, %v459
      %v550 = vpack.c.b16 %v462, %v460
      %v551 = vpack.c.b16 %v465, %v463
      %v552 = vpack.c.b16 %v466, %v464
      %v553 = vpack.c.b16 %v469, %v467
      %v554 = vpack.c.b16 %v470, %v468
      %v555 = vpack.c.b16 %v473, %v471
      %v556 = vpack.c.b16 %v474, %v472
      %v557 = vpack.c.b16 %v477, %v475
      %v558 = vpack.c.b16 %v478, %v476
      %v559 = vpack.c.b16 %v481, %v479
      %v560 = vpack.c.b16 %v482, %v480
      %v561 = vpack.c.b16 %v485, %v483
      %v562 = vpack.c.b16 %v486, %v484
      %v563 = vpack.c.b16 %v489, %v487
      %v564 = vpack.c.b16 %v490, %v488
      %v565 = vpack.c.b16 %v493, %v491
      %v566 = vpack.c.b16 %v494, %v492
      %v567 = vpack.c.b16 %v497, %v495
      %v568 = vpack.c.b16 %v498, %v496
      %v569 = vpack.c.b16 %v501, %v499
      %v570 = vpack.c.b16 %v502, %v500
      %v571 = vpack.c.b16 %v505, %v503
      %v572 = vpack.c.b16 %v506, %v504
      %v573 = vpack.c.b16 %v509, %v507
      %v574 = vpack.c.b16 %v510, %v508
      %639 = vmatprep.subr.bf16.mxu0 %v512
      %640 = vmatpush1.bf16.msra.mxu0 %v511
      %641 = vmatprep.subr.bf16.mxu0 %v514
      %642 = vmatpush1.bf16.msra.mxu0 %v513
      %643 = vmatprep.subr.bf16.mxu0 %v516
      %644 = vmatpush1.bf16.msra.mxu0 %v515
      %645 = vmatprep.subr.bf16.mxu0 %v518
      %646 = vmatpush1.bf16.msra.mxu0 %v517
      %647 = vmatprep.subr.bf16.mxu0 %v520
      %648 = vmatpush1.bf16.msra.mxu0 %v519
      %649 = vmatprep.subr.bf16.mxu0 %v522
      %650 = vmatpush1.bf16.msra.mxu0 %v521
      %651 = vmatprep.subr.bf16.mxu0 %v524
      %652 = vmatpush1.bf16.msra.mxu0 %v523
      %653 = vmatprep.subr.bf16.mxu0 %v526
      %654 = vmatpush1.bf16.msra.mxu0 %v525
      %655 = vmatprep.subr.bf16.mxu0 %v528
      %656 = vmatpush1.bf16.msra.mxu0 %v527
      %657 = vmatprep.subr.bf16.mxu0 %v530
      %658 = vmatpush1.bf16.msra.mxu0 %v529
      %659 = vmatprep.subr.bf16.mxu0 %v532
      %660 = vmatpush1.bf16.msra.mxu0 %v531
      %661 = vmatprep.subr.bf16.mxu0 %v534
      %662 = vmatpush1.bf16.msra.mxu0 %v533
      %663 = vmatprep.subr.bf16.mxu0 %v536
      %664 = vmatpush1.bf16.msra.mxu0 %v535
      %665 = vmatprep.subr.bf16.mxu0 %v538
      %666 = vmatpush1.bf16.msra.mxu0 %v537
      %667 = vmatprep.subr.bf16.mxu0 %v540
      %668 = vmatpush1.bf16.msra.mxu0 %v539
      %669 = vmatprep.subr.bf16.mxu0 %v542
      %670 = vmatpush1.bf16.msra.mxu0 %v541
      %671 = vmatprep.mubr.bf16.mxu0 %v312
      %672 = vmatmul.mubr.bf16.gmra.mrb[0].mxu0 %v311
      %v673 = vpop.f32.mrb[0].mxu0
      %v674 = vadd.f32 0.0, %v673
      %v675 = vpop.f32.mrb[0].mxu0
      %v676 = vadd.f32 0.0, %v675
      %v677 = vpop.f32.mrb[0].mxu0
      %v678 = vpop.f32.mrb[0].mxu0
      %679 = vdwg.mxu0
      %680 = vmatprep.subr.bf16.mxu0 %v544
      %681 = vmatpush1.bf16.msra.mxu0 %v543
      %682 = vmatprep.subr.bf16.mxu0 %v546
      %683 = vmatpush1.bf16.msra.mxu0 %v545
      %684 = vmatprep.subr.bf16.mxu0 %v548
      %685 = vmatpush1.bf16.msra.mxu0 %v547
      %686 = vmatprep.subr.bf16.mxu0 %v550
      %687 = vmatpush1.bf16.msra.mxu0 %v549
      %688 = vmatprep.subr.bf16.mxu0 %v552
      %689 = vmatpush1.bf16.msra.mxu0 %v551
      %690 = vmatprep.subr.bf16.mxu0 %v554
      %691 = vmatpush1.bf16.msra.mxu0 %v553
      %692 = vmatprep.subr.bf16.mxu0 %v556
      %693 = vmatpush1.bf16.msra.mxu0 %v555
      %694 = vmatprep.subr.bf16.mxu0 %v558
      %695 = vmatpush1.bf16.msra.mxu0 %v557
      %696 = vmatprep.subr.bf16.mxu0 %v560
      %697 = vmatpush1.bf16.msra.mxu0 %v559
      %698 = vmatprep.subr.bf16.mxu0 %v562
      %699 = vmatpush1.bf16.msra.mxu0 %v561
      %700 = vmatprep.subr.bf16.mxu0 %v564
      %701 = vmatpush1.bf16.msra.mxu0 %v563
      %702 = vmatprep.subr.bf16.mxu0 %v566
      %703 = vmatpush1.bf16.msra.mxu0 %v565
      %704 = vmatprep.subr.bf16.mxu0 %v568
      %705 = vmatpush1.bf16.msra.mxu0 %v567
      %706 = vmatprep.subr.bf16.mxu0 %v570
      %707 = vmatpush1.bf16.msra.mxu0 %v569
      %708 = vmatprep.subr.bf16.mxu0 %v572
      %709 = vmatpush1.bf16.msra.mxu0 %v571
      %710 = vmatprep.subr.bf16.mxu0 %v574
      %711 = vmatpush1.bf16.msra.mxu0 %v573
      %712 = vmatprep.mubr.bf16.mxu0 %v314
      %713 = vmatmul.mubr.bf16.gmra.mrb[0].mxu0 %v313
      %v714 = vpop.f32.mrb[0].mxu0
      %v715 = vadd.f32 %v674, %v714
      %v716 = vpop.f32.mrb[0].mxu0
      %v717 = vadd.f32 %v676, %v716
      %v718 = vpop.f32.mrb[0].mxu0
      %v719 = vpop.f32.mrb[0].mxu0
      %720 = vdwg.mxu0
      %v721 = vadd.f32 %v237, %v715
      %v722 = vadd.f32 %v238, %v717
      %723 = vst [vmem:[#allocation2] sm:$0xff] %v721
      %724 = vst [vmem:[#allocation2 + $0x8] sm:$0xff] %v722
      %p725 = scmp.eq.s32.totalorder %s20, 1
      // Predicated region
      $region33: #{llama_forward.27} parent=27 // pred_check
        %p726 = pneg %p725
      $region34: #{llama_forward.27} parent=27 // pred_check_branch
        %728 = sbr.rel (%p726) target = $region36
      $region35: #{llama_forward.27} parent=27 // pred_region
        %v729 = vld [vmem:[#allocation2] sm:$0xff]
        %v730 = vld [vmem:[#allocation2 + $0x8] sm:$0xff]
        %v731 = vpack.c.bf16 %v729, %v729
        %v732 = vpack.c.bf16 %v730, %v730
        %v735 = vunpack.c.l.b16 %v731
        %v736 = vunpack.c.l.b16 %v732
        %v737 = vpack.c.b16 %v736, %v735
        %739 = vst [vmem:[%s229] sm:$0xff] %v737
      $region36: #{llama_forward.27} parent=27 // pred_fallthru
        _
      %s740 = smul.u32 2, %s19
      %p741 = scmp.lt.s32.totalorder %s18, 0
      %s742 = scalar_select %p741, %s18, 0
      %p743 = scmp.lt.s32.totalorder %s740, 1
      %s744 = scalar_select %p743, %s740, 1
      %s745 = smul.addr %s742, 2
      %s746 = sadd.s32 %s744, %s745
      %s747 = smul.addr %s746, 4
      %s748 = scalar_lea.vmem %s2, %s747
      // Predicated region
      $region37: #{llama_forward.27} parent=27 // pred_check
        %p749 = pneg %p108
      $region38: #{llama_forward.27} parent=27 // pred_check_branch
        %751 = sbr.rel (%p749) target = $region40
      $region39: #{llama_forward.27} parent=27 // pred_region
        %s752 = smul.u32 2, %s19
      $region40: #{llama_forward.27} parent=27 // pred_fallthru
        _
      // Predicated region
      $region41: #{llama_forward.27} parent=27 // pred_check
        %p753 = pneg %p108
      $region42: #{llama_forward.27} parent=27 // pred_check_branch
        %755 = sbr.rel (%p753) target = $region44
      $region43: #{llama_forward.27} parent=27 // pred_region
        %s756 = smul.u32 2, %s19
        %p757 = scmp.lt.s32.totalorder %s18, 0
        %s758 = scalar_select %p757, %s18, 0
        %p759 = scmp.lt.s32.totalorder %s756, 1
        %s760 = scalar_select %p759, %s756, 1
        %s761 = smul.addr %s758, 2
        %s762 = sadd.s32 %s760, %s761
        %s763 = smul.addr %s762, 4
        %s764 = scalar_lea.vmem %s2, %s763
      $region44: #{llama_forward.27} parent=27 // pred_fallthru
        _
    $region28: #{llama_forward.27} parent=5 // pred_fallthru
      _
    %p765 = scmp.le.s32.totalorder 2, %s8
    // Predicated region
    $region45: #{llama_forward.27} parent=5 // pred_check
      %p766 = pneg %p765
    $region46: #{llama_forward.27} parent=5 // pred_check_branch
      %768 = sbr.rel (%p766) target = $region48
    $region47: #{llama_forward.27} parent=5 // pred_region
      %s769 = ssub.s32 %s8, 2
    $region48: #{llama_forward.27} parent=5 // pred_fallthru
      _
  $region6: #{llama_forward.27} parent=0 // loop_footer
    %s12 = sadd.s32 1, %s8
  $region7: #{llama_forward.27} parent=0 // loop_footer_branch
    %7 = sbr.rel target = $region3
  $region8: #{llama_forward.27} parent=0 // loop_exit
    _

// kernel: llama_forward.37
$region0: #{llama_forward.37}
  #allocation0 [shape = 'u32[]', space=smem, size = 0x4, offset = 0x4, fixed_abs, tag = 'smem constant byte address 0x4 - core index']
  #allocation1 [shape = 'u32[144,128]{1,0:T(1,128)}', space=vmem, size = 0x12000, scoped, tag = 'internal scratch']
  %s0 = inlined_call_operand.vmem [shape: bf16[8,256], index: 0, kind: input, shape index: {}]
  %s1 = inlined_call_operand.vmem [shape: bf16[8,256], index: 1, kind: input, shape index: {}]
  %s2 = inlined_call_operand.vmem [shape: f32[1,256], index: 2, kind: input, shape index: {}]
  %s3 = inlined_call_operand.hbm [shape: bf16[8,256], index: 3, kind: output, shape index: {0}]
  %s4 = inlined_call_operand.hbm [shape: bf16[8,256], index: 4, kind: output, shape index: {1}]
  %5 = xla_tuple %s3, %s4
  %s6 = sld [smem:[#allocation0]]
  $region30: #{llama_forward.37} parent=0
    _
  %s8 = ssub.s32 1, %s6
  %s9 = scalar_select 0, %s8, %s6
  $region1: #{llama_forward.37} parent=0
    #allocation2 [shape = 'u8[4096]{0}', space=vmem, size = 0x1000, scoped, tag = 'output window, operand 0, single buffered']
    #allocation3 [shape = 's32[1]{0}', space=sflag, size = 0x4, scoped, tag = 'scoped memory for llama_forward.37']
    #allocation4 [shape = 'u8[4096]{0}', space=vmem, size = 0x1000, scoped, tag = 'output window, operand 1, single buffered']
    #allocation5 [shape = 's32[1]{0}', space=sflag, size = 0x4, scoped, tag = 'scoped memory for llama_forward.37']
    %10 = vsyncpa [#allocation3], 0
    %11 = vsyncpa [#allocation5], 0
    // Predicated region
    $region2: #{llama_forward.37} parent=1 // pred_check
      _
    $region3: #{llama_forward.37} parent=1 // pred_check_branch
      %13 = sbr.rel (0) target = $region5
    $region4: #{llama_forward.37} parent=1 // pred_region
      _
    $region5: #{llama_forward.37} parent=1 // pred_fallthru
      _
    // Predicated region
    $region6: #{llama_forward.37} parent=1 // pred_check
      _
    $region7: #{llama_forward.37} parent=1 // pred_check_branch
      %15 = sbr.rel (0) target = $region9
    $region8: #{llama_forward.37} parent=1 // pred_region
      _
    $region9: #{llama_forward.37} parent=1 // pred_fallthru
      _
    // Predicated region
    $region10: #{llama_forward.37} parent=1 // pred_check
      _
    $region11: #{llama_forward.37} parent=1 // pred_check_branch
      %17 = sbr.rel (0) target = $region13
    $region12: #{llama_forward.37} parent=1 // pred_region
      _
    $region13: #{llama_forward.37} parent=1 // pred_fallthru
      _
    %v18 = vld [vmem:[%s0] sm:$0xff]
    %v19 = vunpack.c.l.bf16 %v18
    %v20 = vunpack.c.h.bf16 %v18
    %v21 = vld [vmem:[%s1] sm:$0xff]
    %v22 = vunpack.c.l.bf16 %v21
    %v23 = vunpack.c.h.bf16 %v21
    %v24 = vadd.f32 %v19, %v22
    %v25 = vadd.f32 %v20, %v23
    %v26 = vmul.f32 %v24, %v24
    %v27 = vmul.f32 %v25, %v25
    %v28 = vadd.f32 %v26, %v27
    %29 = vadd.xlane.f32.xlu0 %v28
    %v30 = vpop.xlane.xlu0 %29
    %v31 = vrcp.pop 256.0
    %v32 = vmul.f32 %v30, %v31
    %v33 = vadd.f32 %v32, 1e-06
    %v34 = vrsqrt.pop %v33
    %v35 = vmul.f32 %v24, %v34
    %v36 = vmul.f32 %v25, %v34
    %v37 = vld [vmem:[%s2] sm:$0x3]
    %v39 = vlaneseq
    %v40 = vshrl.u32 %v39, 7
    %v41 = vsub.s32 0, %v40
    %v42 = vrot.slane %v37, %v41
    %v43 = vlaneseq
    %v44 = vshrl.u32 %v43, 7
    %v45 = vsub.s32 1, %v44
    %v46 = vrot.slane %v37, %v45
    %v49 = vmul.f32 %v35, %v42
    %v50 = vmul.f32 %v36, %v46
    %v51 = vpack.c.bf16 %v49, %v49
    %v52 = vpack.c.bf16 %v50, %v50
    %v55 = vunpack.c.l.b16 %v51
    %v56 = vunpack.c.l.b16 %v52
    %v57 = vpack.c.b16 %v56, %v55
    %59 = vst [vmem:[#allocation2] sm:$0xff] %v57
    %v60 = vpack.c.bf16 %v24, %v24
    %v61 = vpack.c.bf16 %v25, %v25
    %v64 = vunpack.c.l.b16 %v60
    %v65 = vunpack.c.l.b16 %v61
    %v66 = vpack.c.b16 %v65, %v64
    %68 = vst [vmem:[#allocation4] sm:$0xff] %v66
    // Predicated region
    $region14: #{llama_forward.37} parent=1 // pred_check
      _
    $region15: #{llama_forward.37} parent=1 // pred_check_branch
      %70 = sbr.rel (0) target = $region17
    $region16: #{llama_forward.37} parent=1 // pred_region
      %s72 = ssub.s32 128, 128
      %73 = vsyncadd [#allocation3], %s72
      %s75 = sshll.u32 [#allocation2], 4
      %s76 = int_to_ptr.vmem [resolvable:$true] %s75
      %78 = dma.vmem_to_hbm [thread:$0]  %s76, 128, %s3, [#allocation3]
    $region17: #{llama_forward.37} parent=1 // pred_fallthru
      _
    // Predicated region
    $region18: #{llama_forward.37} parent=1 // pred_check
      _
    $region19: #{llama_forward.37} parent=1 // pred_check_branch
      %80 = sbr.rel (0) target = $region21
    $region20: #{llama_forward.37} parent=1 // pred_region
      %s82 = ssub.s32 128, 128
      %83 = vsyncadd [#allocation5], %s82
      %s85 = sshll.u32 [#allocation4], 4
      %s86 = int_to_ptr.vmem [resolvable:$true] %s85
      %88 = dma.vmem_to_hbm [thread:$0]  %s86, 128, %s4, [#allocation5]
    $region21: #{llama_forward.37} parent=1 // pred_fallthru
      _
    // Predicated region
    $region22: #{llama_forward.37} parent=1 // pred_check
      _
    $region23: #{llama_forward.37} parent=1 // pred_check_branch
      %90 = sbr.rel (0) target = $region25
    $region24: #{llama_forward.37} parent=1 // pred_region
      %91 = dma.done [#allocation3], 128
    $region25: #{llama_forward.37} parent=1 // pred_fallthru
      _
    // Predicated region
    $region26: #{llama_forward.37} parent=1 // pred_check
      _
    $region27: #{llama_forward.37} parent=1 // pred_check_branch
      %93 = sbr.rel (0) target = $region29
    $region28: #{llama_forward.37} parent=1 // pred_region
      %94 = dma.done [#allocation5], 128
    $region29: #{llama_forward.37} parent=1 // pred_fallthru
      _
    %95 = vsyncpa [#allocation3], 1
    %96 = vsyncpa [#allocation5], 1

// kernel: llama_forward.35
$region0: #{llama_forward.35}
  #allocation0 [shape = 'u32[]', space=smem, size = 0x4, offset = 0x4, fixed_abs, tag = 'smem constant byte address 0x4 - core index']
  #allocation1 [shape = 'u32[144,128]{1,0:T(1,128)}', space=vmem, size = 0x12000, scoped, tag = 'internal scratch']
  #allocation2 [shape = 'f32[8,256]{1,0:T(8,128)}', space=vmem, size = 0x2000, scoped, tag = 'scratch operand']
  #allocation3 [shape = 'f32[8,256]{1,0:T(8,128)}', space=vmem, size = 0x2000, scoped, tag = 'scratch operand']
  %s0 = inlined_call_operand.vmem [shape: bf16[8,256], index: 0, kind: input, shape index: {}]
  %s1 = inlined_call_operand.vmem [shape: bf16[256,1024], index: 1, kind: input, shape index: {}]
  %s2 = inlined_call_operand.vmem [shape: bf16[256,1024], index: 2, kind: input, shape index: {}]
  %s3 = inlined_call_operand.vmem [shape: bf16[8,1024], index: 3, kind: output, shape index: {}]
  %s4 = sld [smem:[#allocation0]]
  $region129: #{llama_forward.35} parent=0
    _
  %s6 = ssub.s32 1, %s4
  %s7 = scalar_select 0, %s6, %s4
  $region1: #{llama_forward.35} parent=0
    #allocation4 [shape = 'u8[262144]{0}', space=vmem, size = 0x40000, scoped, tag = 'input window, operand 1']
    #allocation5 [shape = 'u8[262144]{0}', space=vmem, size = 0x40000, scoped, tag = 'input window, operand 2']
    loop: start=0, step=1, limit=6
    $region2: #{llama_forward.35} parent=1 // loop_pre_header
      _
    $region3: #{llama_forward.35} parent=1 // loop_header
      %s9 = sphi 0, %s13
      %p10 = scmp.ge.s32.totalorder %s9, 6
      %s16 = sphi 0, %s35
      %s17 = sphi 0, %s31
      %s18 = sphi 0, %s27
      %s19 = sphi 0, %s16
      %s20 = sphi 0, %s17
      %s21 = sphi 0, %s18
      %s22 = sphi 0, %s19
      %s23 = sphi 0, %s20
      %s24 = sphi 0, %s21
      %s40 = sphi 0, %s42
      %s43 = sphi 0, %s40
      %s44 = sphi 0, %s43
      %s60 = sphi 0, %s44
      %s68 = sphi 0, %s70
      %s71 = sphi 0, %s68
      %s72 = sphi 0, %s71
      %s88 = sphi 0, %s72
      %s96 = sphi 0, %s98
      %s99 = sphi 0, %s96
      %s100 = sphi 0, %s99
      %s116 = sphi 0, %s100
      %s124 = sphi 0, %s126
      %s127 = sphi 0, %s124
      %s128 = sphi 0, %s127
      %s144 = sphi 0, %s128
    $region4: #{llama_forward.35} parent=1 // loop_header_branch
      %12 = sbr.rel (%p10) target = $region8
    $region5: #{llama_forward.35} parent=1 // loop_body
      %s14 = ssub.s32 %s9, 1
      %s15 = ssub.s32 %s9, 2
      %s25 = sadd.s32 1, %s18
      %p26 = scmp.ge.s32.totalorder %s25, 1
      %s27 = scalar_select %p26, 0, %s25
      %s28 = sadd.s32 1, %s17
      %s29 = scalar_select %p26, %s28, %s17
      %p30 = scmp.ge.s32.totalorder %s29, 4
      %s31 = scalar_select %p30, 0, %s29
      %s32 = sadd.s32 1, %s16
      %s33 = scalar_select %p30, %s32, %s16
      %p34 = scmp.ge.s32.totalorder %s33, 1
      %s35 = scalar_select %p34, 0, %s33
      %s36 = ssub.s32 %s16, %s35
      %s37 = ssub.s32 %s18, %s27
      %s38 = sor.u32 %s36, %s37
      %p39 = scmp.eq.s32.totalorder %s38, 0
      %s41 = sadd.s32 %s40, 1
      %s42 = scalar_select %p39, %s40, %s41
      %p45 = pneg %p39
      %p46 = scmp.eq.s32.totalorder %s9, 3
      %p47 = por %p45, %p46
      %p48 = scmp.ne.s32.totalorder %s40, %s43
      %p49 = scmp.eq.s32.totalorder %s9, 0
      %p50 = por %p48, %p49
      %p51 = scmp.ne.s32.totalorder %s40, %s43
      %p52 = scmp.eq.s32.totalorder %s14, 3
      %p53 = por %p51, %p52
      %p54 = scmp.ne.s32.totalorder %s43, %s44
      %p55 = scmp.eq.s32.totalorder %s14, 0
      %p56 = por %p54, %p55
      %p57 = scmp.ne.s32.totalorder %s43, %s44
      %p58 = scmp.eq.s32.totalorder %s15, 3
      %p59 = por %p57, %p58
      %p61 = scmp.ne.s32.totalorder %s44, %s60
      %p62 = scmp.eq.s32.totalorder %s15, 0
      %p63 = por %p61, %p62
      %s64 = ssub.s32 %s18, %s27
      %s65 = ssub.s32 %s17, %s31
      %s66 = sor.u32 %s64, %s65
      %p67 = scmp.eq.s32.totalorder %s66, 0
      %s69 = sadd.s32 %s68, 1
      %s70 = scalar_select %p67, %s68, %s69
      %p73 = pneg %p67
      %p74 = scmp.eq.s32.totalorder %s9, 3
      %p75 = por %p73, %p74
      %p76 = scmp.ne.s32.totalorder %s68, %s71
      %p77 = scmp.eq.s32.totalorder %s9, 0
      %p78 = por %p76, %p77
      %p79 = scmp.ne.s32.totalorder %s68, %s71
      %p80 = scmp.eq.s32.totalorder %s14, 3
      %p81 = por %p79, %p80
      %p82 = scmp.ne.s32.totalorder %s71, %s72
      %p83 = scmp.eq.s32.totalorder %s14, 0
      %p84 = por %p82, %p83
      %p85 = scmp.ne.s32.totalorder %s71, %s72
      %p86 = scmp.eq.s32.totalorder %s15, 3
      %p87 = por %p85, %p86
      %p89 = scmp.ne.s32.totalorder %s72, %s88
      %p90 = scmp.eq.s32.totalorder %s15, 0
      %p91 = por %p89, %p90
      %s92 = ssub.s32 %s18, %s27
      %s93 = ssub.s32 %s17, %s31
      %s94 = sor.u32 %s92, %s93
      %p95 = scmp.eq.s32.totalorder %s94, 0
      %s97 = sadd.s32 %s96, 1
      %s98 = scalar_select %p95, %s96, %s97
      %p101 = pneg %p95
      %p102 = scmp.eq.s32.totalorder %s9, 3
      %p103 = por %p101, %p102
      %p104 = scmp.ne.s32.totalorder %s96, %s99
      %p105 = scmp.eq.s32.totalorder %s9, 0
      %p106 = por %p104, %p105
      %p107 = scmp.ne.s32.totalorder %s96, %s99
      %p108 = scmp.eq.s32.totalorder %s14, 3
      %p109 = por %p107, %p108
      %p110 = scmp.ne.s32.totalorder %s99, %s100
      %p111 = scmp.eq.s32.totalorder %s14, 0
      %p112 = por %p110, %p111
      %p113 = scmp.ne.s32.totalorder %s99, %s100
      %p114 = scmp.eq.s32.totalorder %s15, 3
      %p115 = por %p113, %p114
      %p117 = scmp.ne.s32.totalorder %s100, %s116
      %p118 = scmp.eq.s32.totalorder %s15, 0
      %p119 = por %p117, %p118
      %s120 = ssub.s32 %s16, %s35
      %s121 = ssub.s32 %s17, %s31
      %s122 = sor.u32 %s120, %s121
      %p123 = scmp.eq.s32.totalorder %s122, 0
      %s125 = sadd.s32 %s124, 1
      %s126 = scalar_select %p123, %s124, %s125
      %p129 = pneg %p123
      %p130 = scmp.eq.s32.totalorder %s9, 3
      %p131 = por %p129, %p130
      %p132 = scmp.ne.s32.totalorder %s124, %s127
      %p133 = scmp.eq.s32.totalorder %s9, 0
      %p134 = por %p132, %p133
      %p135 = scmp.ne.s32.totalorder %s124, %s127
      %p136 = scmp.eq.s32.totalorder %s14, 3
      %p137 = por %p135, %p136
      %p138 = scmp.ne.s32.totalorder %s127, %s128
      %p139 = scmp.eq.s32.totalorder %s14, 0
      %p140 = por %p138, %p139
      %p141 = scmp.ne.s32.totalorder %s127, %s128
      %p142 = scmp.eq.s32.totalorder %s15, 3
      %p143 = por %p141, %p142
      %p145 = scmp.ne.s32.totalorder %s128, %s144
      %p146 = scmp.eq.s32.totalorder %s15, 0
      %p147 = por %p145, %p146
      %p148 = scmp.le.s32.totalorder 1, %s9
      %p149 = scmp.lt.s32.totalorder %s9, 5
      %p150 = pnand %p148, %p149
      %p151 = pneg %p150
      // Predicated region
      $region9: #{llama_forward.35} parent=5 // pred_check
        _
      $region10: #{llama_forward.35} parent=5 // pred_check_branch
        %153 = sbr.rel (%p150) target = $region12
      $region11: #{llama_forward.35} parent=5 // pred_region
        %s154 = ssub.s32 %s9, 1
        // Predicated region
        $region13: #{llama_forward.35} parent=11 // pred_check
          %p155 = pneg %p56
        $region14: #{llama_forward.35} parent=11 // pred_check_branch
          %157 = sbr.rel (%p155) target = $region16
        $region15: #{llama_forward.35} parent=11 // pred_region
          %s158 = smul.u32 2, %s21
          %p159 = scmp.lt.s32.totalorder %s19, 0
          %s160 = scalar_select %p159, %s19, 0
          %p161 = scmp.lt.s32.totalorder %s158, 1
          %s162 = scalar_select %p161, %s158, 1
          %s163 = smul.addr %s160, 2
          %s164 = sadd.s32 %s162, %s163
          %s165 = smul.addr %s164, 4
          %s166 = scalar_lea.vmem %s0, %s165
          %s167 = smul.u32 2, %s21
        $region16: #{llama_forward.35} parent=11 // pred_fallthru
          _
      $region12: #{llama_forward.35} parent=5 // pred_fallthru
        _
      %p168 = scmp.lt.s32.totalorder %s9, 4
      // Predicated region
      $region17: #{llama_forward.35} parent=5 // pred_check
        %p169 = pneg %p168
      $region18: #{llama_forward.35} parent=5 // pred_check_branch
        %171 = sbr.rel (%p169) target = $region20
      $region19: #{llama_forward.35} parent=5 // pred_region
        // Predicated region
        $region21: #{llama_forward.35} parent=19 // pred_check
          %p172 = pneg %p78
        $region22: #{llama_forward.35} parent=19 // pred_check_branch
          %174 = sbr.rel (%p172) target = $region24
        $region23: #{llama_forward.35} parent=19 // pred_region
          %s175 = sand.u32 %s68, 1
          %s176 = sand.u32 %s68, 1
          %s177 = smul.addr %s176, 256
          %s178 = scalar_lea.vmem [#allocation4], %s177
          %s179 = smul.u32 32, %s18
          %s180 = smul.u32 2, %s17
          %s181 = smul.addr %s179, 8
          %s182 = sadd.s32 %s180, %s181
          %s183 = smul.addr %s182, 4
          %s184 = scalar_lea.vmem %s1, %s183
          // Predicated region
          $region25: #{llama_forward.35} parent=23 // pred_check
            _
          $region26: #{llama_forward.35} parent=23 // pred_check_branch
            %186 = sbr.rel (0) target = $region28
          $region27: #{llama_forward.35} parent=23 // pred_region
            // Predicated region
            $region29: #{llama_forward.35} parent=27 // pred_check
              _
            $region30: #{llama_forward.35} parent=27 // pred_check_branch
              %188 = sbr.rel (0) target = $region32
            $region31: #{llama_forward.35} parent=27 // pred_region
              // Predicated region
              $region44: #{llama_forward.35} parent=31 // pred_check
                _
              $region45: #{llama_forward.35} parent=31 // pred_check_branch
                %265 = sbr.rel (0) target = $region47
              $region46: #{llama_forward.35} parent=31 // pred_region
                loop: start=0, step=1, limit=1
                $region48: #{llama_forward.35} parent=46 // loop_pre_header
                  _
                $region49: #{llama_forward.35} parent=46 // loop_header
                  %s267 = sphi 0, %s271
                  %p268 = scmp.ge.s32.totalorder %s267, 1
                  %s272 = sphi %s184, %s184
                  %s273 = sphi %s178, %s178
                $region50: #{llama_forward.35} parent=46 // loop_header_branch
                  %270 = sbr.rel (%p268) target = $region54
                $region51: #{llama_forward.35} parent=46 // loop_body
                  %v274 = vld [vmem:[%s272] sm:$0xff]
                  %275 = vst [vmem:[%s273] sm:$0xff] %v274
                  %v276 = vld [vmem:[%s272 + $0x20] sm:$0xff]
                  %277 = vst [vmem:[%s273 + $0x8] sm:$0xff] %v276
                  %v278 = vld [vmem:[%s272 + $0x40] sm:$0xff]
                  %279 = vst [vmem:[%s273 + $0x10] sm:$0xff] %v278
                  %v280 = vld [vmem:[%s272 + $0x60] sm:$0xff]
                  %281 = vst [vmem:[%s273 + $0x18] sm:$0xff] %v280
                  %v282 = vld [vmem:[%s272 + $0x80] sm:$0xff]
                  %283 = vst [vmem:[%s273 + $0x20] sm:$0xff] %v282
                  %v284 = vld [vmem:[%s272 + $0xa0] sm:$0xff]
                  %285 = vst [vmem:[%s273 + $0x28] sm:$0xff] %v284
                  %v286 = vld [vmem:[%s272 + $0xc0] sm:$0xff]
                  %287 = vst [vmem:[%s273 + $0x30] sm:$0xff] %v286
                  %v288 = vld [vmem:[%s272 + $0xe0] sm:$0xff]
                  %289 = vst [vmem:[%s273 + $0x38] sm:$0xff] %v288
                  %v290 = vld [vmem:[%s272 + $0x100] sm:$0xff]
                  %291 = vst [vmem:[%s273 + $0x40] sm:$0xff] %v290
                  %v292 = vld [vmem:[%s272 + $0x120] sm:$0xff]
                  %293 = vst [vmem:[%s273 + $0x48] sm:$0xff] %v292
                  %v294 = vld [vmem:[%s272 + $0x140] sm:$0xff]
                  %295 = vst [vmem:[%s273 + $0x50] sm:$0xff] %v294
                  %v296 = vld [vmem:[%s272 + $0x160] sm:$0xff]
                  %297 = vst [vmem:[%s273 + $0x58] sm:$0xff] %v296
                  %v298 = vld [vmem:[%s272 + $0x180] sm:$0xff]
                  %299 = vst [vmem:[%s273 + $0x60] sm:$0xff] %v298
                  %v300 = vld [vmem:[%s272 + $0x1a0] sm:$0xff]
                  %301 = vst [vmem:[%s273 + $0x68] sm:$0xff] %v300
                  %v302 = vld [vmem:[%s272 + $0x1c0] sm:$0xff]
                  %303 = vst [vmem:[%s273 + $0x70] sm:$0xff] %v302
                  %v304 = vld [vmem:[%s272 + $0x1e0] sm:$0xff]
                  %305 = vst [vmem:[%s273 + $0x78] sm:$0xff] %v304
                  %v306 = vld [vmem:[%s272 + $0x200] sm:$0xff]
                  %307 = vst [vmem:[%s273 + $0x80] sm:$0xff] %v306
                  %v308 = vld [vmem:[%s272 + $0x220] sm:$0xff]
                  %309 = vst [vmem:[%s273 + $0x88] sm:$0xff] %v308
                  %v310 = vld [vmem:[%s272 + $0x240] sm:$0xff]
                  %311 = vst [vmem:[%s273 + $0x90] sm:$0xff] %v310
                  %v312 = vld [vmem:[%s272 + $0x260] sm:$0xff]
                  %313 = vst [vmem:[%s273 + $0x98] sm:$0xff] %v312
                  %v314 = vld [vmem:[%s272 + $0x280] sm:$0xff]
                  %315 = vst [vmem:[%s273 + $0xa0] sm:$0xff] %v314
                  %v316 = vld [vmem:[%s272 + $0x2a0] sm:$0xff]
                  %317 = vst [vmem:[%s273 + $0xa8] sm:$0xff] %v316
                  %v318 = vld [vmem:[%s272 + $0x2c0] sm:$0xff]
                  %319 = vst [vmem:[%s273 + $0xb0] sm:$0xff] %v318
                  %v320 = vld [vmem:[%s272 + $0x2e0] sm:$0xff]
                  %321 = vst [vmem:[%s273 + $0xb8] sm:$0xff] %v320
                  %v322 = vld [vmem:[%s272 + $0x300] sm:$0xff]
                  %323 = vst [vmem:[%s273 + $0xc0] sm:$0xff] %v322
                  %v324 = vld [vmem:[%s272 + $0x320] sm:$0xff]
                  %325 = vst [vmem:[%s273 + $0xc8] sm:$0xff] %v324
                  %v326 = vld [vmem:[%s272 + $0x340] sm:$0xff]
                  %327 = vst [vmem:[%s273 + $0xd0] sm:$0xff] %v326
                  %v328 = vld [vmem:[%s272 + $0x360] sm:$0xff]
                  %329 = vst [vmem:[%s273 + $0xd8] sm:$0xff] %v328
                  %v330 = vld [vmem:[%s272 + $0x380] sm:$0xff]
                  %331 = vst [vmem:[%s273 + $0xe0] sm:$0xff] %v330
                  %v332 = vld [vmem:[%s272 + $0x3a0] sm:$0xff]
                  %333 = vst [vmem:[%s273 + $0xe8] sm:$0xff] %v332
                  %v334 = vld [vmem:[%s272 + $0x3c0] sm:$0xff]
                  %335 = vst [vmem:[%s273 + $0xf0] sm:$0xff] %v334
                  %v336 = vld [vmem:[%s272 + $0x3e0] sm:$0xff]
                  %337 = vst [vmem:[%s273 + $0xf8] sm:$0xff] %v336
                $region52: #{llama_forward.35} parent=46 // loop_footer
                  %s271 = sadd.s32 1, %s267
                $region53: #{llama_forward.35} parent=46 // loop_footer_branch
                  %266 = sbr.rel target = $region49
                $region54: #{llama_forward.35} parent=46 // loop_exit
                  _
              $region47: #{llama_forward.35} parent=31 // pred_fallthru
                _
              // Predicated region
              $region55: #{llama_forward.35} parent=31 // pred_check
                _
              $region56: #{llama_forward.35} parent=31 // pred_check_branch
                %339 = sbr.rel target = $region58
              $region57: #{llama_forward.35} parent=31 // pred_region
                _
              $region58: #{llama_forward.35} parent=31 // pred_fallthru
                _
            $region32: #{llama_forward.35} parent=27 // pred_fallthru
              _
            // Predicated region
            $region33: #{llama_forward.35} parent=27 // pred_check
              _
            $region34: #{llama_forward.35} parent=27 // pred_check_branch
              %190 = sbr.rel target = $region36
            $region35: #{llama_forward.35} parent=27 // pred_region
              loop: start=0, step=1, limit=1
              $region37: #{llama_forward.35} parent=35 // loop_pre_header
                _
              $region38: #{llama_forward.35} parent=35 // loop_header
                %s193 = sphi 0, %s197
                %p194 = scmp.ge.s32.totalorder %s193, 1
                %s198 = sphi %s184, %s184
                %s199 = sphi %s178, %s178
              $region39: #{llama_forward.35} parent=35 // loop_header_branch
                %196 = sbr.rel (%p194) target = $region43
              $region40: #{llama_forward.35} parent=35 // loop_body
                %v200 = vld [vmem:[%s198] sm:$0xff]
                %201 = vst [vmem:[%s199] sm:$0xff] %v200
                %v202 = vld [vmem:[%s198 + $0x20] sm:$0xff]
                %203 = vst [vmem:[%s199 + $0x8] sm:$0xff] %v202
                %v204 = vld [vmem:[%s198 + $0x40] sm:$0xff]
                %205 = vst [vmem:[%s199 + $0x10] sm:$0xff] %v204
                %v206 = vld [vmem:[%s198 + $0x60] sm:$0xff]
                %207 = vst [vmem:[%s199 + $0x18] sm:$0xff] %v206
                %v208 = vld [vmem:[%s198 + $0x80] sm:$0xff]
                %209 = vst [vmem:[%s199 + $0x20] sm:$0xff] %v208
                %v210 = vld [vmem:[%s198 + $0xa0] sm:$0xff]
                %211 = vst [vmem:[%s199 + $0x28] sm:$0xff] %v210
                %v212 = vld [vmem:[%s198 + $0xc0] sm:$0xff]
                %213 = vst [vmem:[%s199 + $0x30] sm:$0xff] %v212
                %v214 = vld [vmem:[%s198 + $0xe0] sm:$0xff]
                %215 = vst [vmem:[%s199 + $0x38] sm:$0xff] %v214
                %v216 = vld [vmem:[%s198 + $0x100] sm:$0xff]
                %217 = vst [vmem:[%s199 + $0x40] sm:$0xff] %v216
                %v218 = vld [vmem:[%s198 + $0x120] sm:$0xff]
                %219 = vst [vmem:[%s199 + $0x48] sm:$0xff] %v218
                %v220 = vld [vmem:[%s198 + $0x140] sm:$0xff]
                %221 = vst [vmem:[%s199 + $0x50] sm:$0xff] %v220
                %v222 = vld [vmem:[%s198 + $0x160] sm:$0xff]
                %223 = vst [vmem:[%s199 + $0x58] sm:$0xff] %v222
                %v224 = vld [vmem:[%s198 + $0x180] sm:$0xff]
                %225 = vst [vmem:[%s199 + $0x60] sm:$0xff] %v224
                %v226 = vld [vmem:[%s198 + $0x1a0] sm:$0xff]
                %227 = vst [vmem:[%s199 + $0x68] sm:$0xff] %v226
                %v228 = vld [vmem:[%s198 + $0x1c0] sm:$0xff]
                %229 = vst [vmem:[%s199 + $0x70] sm:$0xff] %v228
                %v230 = vld [vmem:[%s198 + $0x1e0] sm:$0xff]
                %231 = vst [vmem:[%s199 + $0x78] sm:$0xff] %v230
                %v232 = vld [vmem:[%s198 + $0x200] sm:$0xff]
                %233 = vst [vmem:[%s199 + $0x80] sm:$0xff] %v232
                %v234 = vld [vmem:[%s198 + $0x220] sm:$0xff]
                %235 = vst [vmem:[%s199 + $0x88] sm:$0xff] %v234
                %v236 = vld [vmem:[%s198 + $0x240] sm:$0xff]
                %237 = vst [vmem:[%s199 + $0x90] sm:$0xff] %v236
                %v238 = vld [vmem:[%s198 + $0x260] sm:$0xff]
                %239 = vst [vmem:[%s199 + $0x98] sm:$0xff] %v238
                %v240 = vld [vmem:[%s198 + $0x280] sm:$0xff]
                %241 = vst [vmem:[%s199 + $0xa0] sm:$0xff] %v240
                %v242 = vld [vmem:[%s198 + $0x2a0] sm:$0xff]
                %243 = vst [vmem:[%s199 + $0xa8] sm:$0xff] %v242
                %v244 = vld [vmem:[%s198 + $0x2c0] sm:$0xff]
                %245 = vst [vmem:[%s199 + $0xb0] sm:$0xff] %v244
                %v246 = vld [vmem:[%s198 + $0x2e0] sm:$0xff]
                %247 = vst [vmem:[%s199 + $0xb8] sm:$0xff] %v246
                %v248 = vld [vmem:[%s198 + $0x300] sm:$0xff]
                %249 = vst [vmem:[%s199 + $0xc0] sm:$0xff] %v248
                %v250 = vld [vmem:[%s198 + $0x320] sm:$0xff]
                %251 = vst [vmem:[%s199 + $0xc8] sm:$0xff] %v250
                %v252 = vld [vmem:[%s198 + $0x340] sm:$0xff]
                %253 = vst [vmem:[%s199 + $0xd0] sm:$0xff] %v252
                %v254 = vld [vmem:[%s198 + $0x360] sm:$0xff]
                %255 = vst [vmem:[%s199 + $0xd8] sm:$0xff] %v254
                %v256 = vld [vmem:[%s198 + $0x380] sm:$0xff]
                %257 = vst [vmem:[%s199 + $0xe0] sm:$0xff] %v256
                %v258 = vld [vmem:[%s198 + $0x3a0] sm:$0xff]
                %259 = vst [vmem:[%s199 + $0xe8] sm:$0xff] %v258
                %v260 = vld [vmem:[%s198 + $0x3c0] sm:$0xff]
                %261 = vst [vmem:[%s199 + $0xf0] sm:$0xff] %v260
                %v262 = vld [vmem:[%s198 + $0x3e0] sm:$0xff]
                %263 = vst [vmem:[%s199 + $0xf8] sm:$0xff] %v262
              $region41: #{llama_forward.35} parent=35 // loop_footer
                %s197 = sadd.s32 1, %s193
              $region42: #{llama_forward.35} parent=35 // loop_footer_branch
                %192 = sbr.rel target = $region38
              $region43: #{llama_forward.35} parent=35 // loop_exit
                _
            $region36: #{llama_forward.35} parent=27 // pred_fallthru
              _
          $region28: #{llama_forward.35} parent=23 // pred_fallthru
            _
          %340 = vnop
        $region24: #{llama_forward.35} parent=19 // pred_fallthru
          _
        // Predicated region
        $region59: #{llama_forward.35} parent=19 // pred_check
          %p341 = pneg %p106
        $region60: #{llama_forward.35} parent=19 // pred_check_branch
          %343 = sbr.rel (%p341) target = $region62
        $region61: #{llama_forward.35} parent=19 // pred_region
          %s344 = sand.u32 %s96, 1
          %s345 = sand.u32 %s96, 1
          %s346 = smul.addr %s345, 256
          %s347 = scalar_lea.vmem [#allocation5], %s346
          %s348 = smul.u32 32, %s18
          %s349 = smul.u32 2, %s17
          %s350 = smul.addr %s348, 8
          %s351 = sadd.s32 %s349, %s350
          %s352 = smul.addr %s351, 4
          %s353 = scalar_lea.vmem %s2, %s352
          // Predicated region
          $region63: #{llama_forward.35} parent=61 // pred_check
            _
          $region64: #{llama_forward.35} parent=61 // pred_check_branch
            %355 = sbr.rel (0) target = $region66
          $region65: #{llama_forward.35} parent=61 // pred_region
            // Predicated region
            $region67: #{llama_forward.35} parent=65 // pred_check
              _
            $region68: #{llama_forward.35} parent=65 // pred_check_branch
              %357 = sbr.rel (0) target = $region70
            $region69: #{llama_forward.35} parent=65 // pred_region
              // Predicated region
              $region82: #{llama_forward.35} parent=69 // pred_check
                _
              $region83: #{llama_forward.35} parent=69 // pred_check_branch
                %434 = sbr.rel (0) target = $region85
              $region84: #{llama_forward.35} parent=69 // pred_region
                loop: start=0, step=1, limit=1
                $region86: #{llama_forward.35} parent=84 // loop_pre_header
                  _
                $region87: #{llama_forward.35} parent=84 // loop_header
                  %s436 = sphi 0, %s440
                  %p437 = scmp.ge.s32.totalorder %s436, 1
                  %s441 = sphi %s353, %s353
                  %s442 = sphi %s347, %s347
                $region88: #{llama_forward.35} parent=84 // loop_header_branch
                  %439 = sbr.rel (%p437) target = $region92
                $region89: #{llama_forward.35} parent=84 // loop_body
                  %v443 = vld [vmem:[%s441] sm:$0xff]
                  %444 = vst [vmem:[%s442] sm:$0xff] %v443
                  %v445 = vld [vmem:[%s441 + $0x20] sm:$0xff]
                  %446 = vst [vmem:[%s442 + $0x8] sm:$0xff] %v445
                  %v447 = vld [vmem:[%s441 + $0x40] sm:$0xff]
                  %448 = vst [vmem:[%s442 + $0x10] sm:$0xff] %v447
                  %v449 = vld [vmem:[%s441 + $0x60] sm:$0xff]
                  %450 = vst [vmem:[%s442 + $0x18] sm:$0xff] %v449
                  %v451 = vld [vmem:[%s441 + $0x80] sm:$0xff]
                  %452 = vst [vmem:[%s442 + $0x20] sm:$0xff] %v451
                  %v453 = vld [vmem:[%s441 + $0xa0] sm:$0xff]
                  %454 = vst [vmem:[%s442 + $0x28] sm:$0xff] %v453
                  %v455 = vld [vmem:[%s441 + $0xc0] sm:$0xff]
                  %456 = vst [vmem:[%s442 + $0x30] sm:$0xff] %v455
                  %v457 = vld [vmem:[%s441 + $0xe0] sm:$0xff]
                  %458 = vst [vmem:[%s442 + $0x38] sm:$0xff] %v457
                  %v459 = vld [vmem:[%s441 + $0x100] sm:$0xff]
                  %460 = vst [vmem:[%s442 + $0x40] sm:$0xff] %v459
                  %v461 = vld [vmem:[%s441 + $0x120] sm:$0xff]
                  %462 = vst [vmem:[%s442 + $0x48] sm:$0xff] %v461
                  %v463 = vld [vmem:[%s441 + $0x140] sm:$0xff]
                  %464 = vst [vmem:[%s442 + $0x50] sm:$0xff] %v463
                  %v465 = vld [vmem:[%s441 + $0x160] sm:$0xff]
                  %466 = vst [vmem:[%s442 + $0x58] sm:$0xff] %v465
                  %v467 = vld [vmem:[%s441 + $0x180] sm:$0xff]
                  %468 = vst [vmem:[%s442 + $0x60] sm:$0xff] %v467
                  %v469 = vld [vmem:[%s441 + $0x1a0] sm:$0xff]
                  %470 = vst [vmem:[%s442 + $0x68] sm:$0xff] %v469
                  %v471 = vld [vmem:[%s441 + $0x1c0] sm:$0xff]
                  %472 = vst [vmem:[%s442 + $0x70] sm:$0xff] %v471
                  %v473 = vld [vmem:[%s441 + $0x1e0] sm:$0xff]
                  %474 = vst [vmem:[%s442 + $0x78] sm:$0xff] %v473
                  %v475 = vld [vmem:[%s441 + $0x200] sm:$0xff]
                  %476 = vst [vmem:[%s442 + $0x80] sm:$0xff] %v475
                  %v477 = vld [vmem:[%s441 + $0x220] sm:$0xff]
                  %478 = vst [vmem:[%s442 + $0x88] sm:$0xff] %v477
                  %v479 = vld [vmem:[%s441 + $0x240] sm:$0xff]
                  %480 = vst [vmem:[%s442 + $0x90] sm:$0xff] %v479
                  %v481 = vld [vmem:[%s441 + $0x260] sm:$0xff]
                  %482 = vst [vmem:[%s442 + $0x98] sm:$0xff] %v481
                  %v483 = vld [vmem:[%s441 + $0x280] sm:$0xff]
                  %484 = vst [vmem:[%s442 + $0xa0] sm:$0xff] %v483
                  %v485 = vld [vmem:[%s441 + $0x2a0] sm:$0xff]
                  %486 = vst [vmem:[%s442 + $0xa8] sm:$0xff] %v485
                  %v487 = vld [vmem:[%s441 + $0x2c0] sm:$0xff]
                  %488 = vst [vmem:[%s442 + $0xb0] sm:$0xff] %v487
                  %v489 = vld [vmem:[%s441 + $0x2e0] sm:$0xff]
                  %490 = vst [vmem:[%s442 + $0xb8] sm:$0xff] %v489
                  %v491 = vld [vmem:[%s441 + $0x300] sm:$0xff]
                  %492 = vst [vmem:[%s442 + $0xc0] sm:$0xff] %v491
                  %v493 = vld [vmem:[%s441 + $0x320] sm:$0xff]
                  %494 = vst [vmem:[%s442 + $0xc8] sm:$0xff] %v493
                  %v495 = vld [vmem:[%s441 + $0x340] sm:$0xff]
                  %496 = vst [vmem:[%s442 + $0xd0] sm:$0xff] %v495
                  %v497 = vld [vmem:[%s441 + $0x360] sm:$0xff]
                  %498 = vst [vmem:[%s442 + $0xd8] sm:$0xff] %v497
                  %v499 = vld [vmem:[%s441 + $0x380] sm:$0xff]
                  %500 = vst [vmem:[%s442 + $0xe0] sm:$0xff] %v499
                  %v501 = vld [vmem:[%s441 + $0x3a0] sm:$0xff]
                  %502 = vst [vmem:[%s442 + $0xe8] sm:$0xff] %v501
                  %v503 = vld [vmem:[%s441 + $0x3c0] sm:$0xff]
                  %504 = vst [vmem:[%s442 + $0xf0] sm:$0xff] %v503
                  %v505 = vld [vmem:[%s441 + $0x3e0] sm:$0xff]
                  %506 = vst [vmem:[%s442 + $0xf8] sm:$0xff] %v505
                $region90: #{llama_forward.35} parent=84 // loop_footer
                  %s440 = sadd.s32 1, %s436
                $region91: #{llama_forward.35} parent=84 // loop_footer_branch
                  %435 = sbr.rel target = $region87
                $region92: #{llama_forward.35} parent=84 // loop_exit
                  _
              $region85: #{llama_forward.35} parent=69 // pred_fallthru
                _
              // Predicated region
              $region93: #{llama_forward.35} parent=69 // pred_check
                _
              $region94: #{llama_forward.35} parent=69 // pred_check_branch
                %508 = sbr.rel target = $region96
              $region95: #{llama_forward.35} parent=69 // pred_region
                _
              $region96: #{llama_forward.35} parent=69 // pred_fallthru
                _
            $region70: #{llama_forward.35} parent=65 // pred_fallthru
              _
            // Predicated region
            $region71: #{llama_forward.35} parent=65 // pred_check
              _
            $region72: #{llama_forward.35} parent=65 // pred_check_branch
              %359 = sbr.rel target = $region74
            $region73: #{llama_forward.35} parent=65 // pred_region
              loop: start=0, step=1, limit=1
              $region75: #{llama_forward.35} parent=73 // loop_pre_header
                _
              $region76: #{llama_forward.35} parent=73 // loop_header
                %s362 = sphi 0, %s366
                %p363 = scmp.ge.s32.totalorder %s362, 1
                %s367 = sphi %s353, %s353
                %s368 = sphi %s347, %s347
              $region77: #{llama_forward.35} parent=73 // loop_header_branch
                %365 = sbr.rel (%p363) target = $region81
              $region78: #{llama_forward.35} parent=73 // loop_body
                %v369 = vld [vmem:[%s367] sm:$0xff]
                %370 = vst [vmem:[%s368] sm:$0xff] %v369
                %v371 = vld [vmem:[%s367 + $0x20] sm:$0xff]
                %372 = vst [vmem:[%s368 + $0x8] sm:$0xff] %v371
                %v373 = vld [vmem:[%s367 + $0x40] sm:$0xff]
                %374 = vst [vmem:[%s368 + $0x10] sm:$0xff] %v373
                %v375 = vld [vmem:[%s367 + $0x60] sm:$0xff]
                %376 = vst [vmem:[%s368 + $0x18] sm:$0xff] %v375
                %v377 = vld [vmem:[%s367 + $0x80] sm:$0xff]
                %378 = vst [vmem:[%s368 + $0x20] sm:$0xff] %v377
                %v379 = vld [vmem:[%s367 + $0xa0] sm:$0xff]
                %380 = vst [vmem:[%s368 + $0x28] sm:$0xff] %v379
                %v381 = vld [vmem:[%s367 + $0xc0] sm:$0xff]
                %382 = vst [vmem:[%s368 + $0x30] sm:$0xff] %v381
                %v383 = vld [vmem:[%s367 + $0xe0] sm:$0xff]
                %384 = vst [vmem:[%s368 + $0x38] sm:$0xff] %v383
                %v385 = vld [vmem:[%s367 + $0x100] sm:$0xff]
                %386 = vst [vmem:[%s368 + $0x40] sm:$0xff] %v385
                %v387 = vld [vmem:[%s367 + $0x120] sm:$0xff]
                %388 = vst [vmem:[%s368 + $0x48] sm:$0xff] %v387
                %v389 = vld [vmem:[%s367 + $0x140] sm:$0xff]
                %390 = vst [vmem:[%s368 + $0x50] sm:$0xff] %v389
                %v391 = vld [vmem:[%s367 + $0x160] sm:$0xff]
                %392 = vst [vmem:[%s368 + $0x58] sm:$0xff] %v391
                %v393 = vld [vmem:[%s367 + $0x180] sm:$0xff]
                %394 = vst [vmem:[%s368 + $0x60] sm:$0xff] %v393
                %v395 = vld [vmem:[%s367 + $0x1a0] sm:$0xff]
                %396 = vst [vmem:[%s368 + $0x68] sm:$0xff] %v395
                %v397 = vld [vmem:[%s367 + $0x1c0] sm:$0xff]
                %398 = vst [vmem:[%s368 + $0x70] sm:$0xff] %v397
                %v399 = vld [vmem:[%s367 + $0x1e0] sm:$0xff]
                %400 = vst [vmem:[%s368 + $0x78] sm:$0xff] %v399
                %v401 = vld [vmem:[%s367 + $0x200] sm:$0xff]
                %402 = vst [vmem:[%s368 + $0x80] sm:$0xff] %v401
                %v403 = vld [vmem:[%s367 + $0x220] sm:$0xff]
                %404 = vst [vmem:[%s368 + $0x88] sm:$0xff] %v403
                %v405 = vld [vmem:[%s367 + $0x240] sm:$0xff]
                %406 = vst [vmem:[%s368 + $0x90] sm:$0xff] %v405
                %v407 = vld [vmem:[%s367 + $0x260] sm:$0xff]
                %408 = vst [vmem:[%s368 + $0x98] sm:$0xff] %v407
                %v409 = vld [vmem:[%s367 + $0x280] sm:$0xff]
                %410 = vst [vmem:[%s368 + $0xa0] sm:$0xff] %v409
                %v411 = vld [vmem:[%s367 + $0x2a0] sm:$0xff]
                %412 = vst [vmem:[%s368 + $0xa8] sm:$0xff] %v411
                %v413 = vld [vmem:[%s367 + $0x2c0] sm:$0xff]
                %414 = vst [vmem:[%s368 + $0xb0] sm:$0xff] %v413
                %v415 = vld [vmem:[%s367 + $0x2e0] sm:$0xff]
                %416 = vst [vmem:[%s368 + $0xb8] sm:$0xff] %v415
                %v417 = vld [vmem:[%s367 + $0x300] sm:$0xff]
                %418 = vst [vmem:[%s368 + $0xc0] sm:$0xff] %v417
                %v419 = vld [vmem:[%s367 + $0x320] sm:$0xff]
                %420 = vst [vmem:[%s368 + $0xc8] sm:$0xff] %v419
                %v421 = vld [vmem:[%s367 + $0x340] sm:$0xff]
                %422 = vst [vmem:[%s368 + $0xd0] sm:$0xff] %v421
                %v423 = vld [vmem:[%s367 + $0x360] sm:$0xff]
                %424 = vst [vmem:[%s368 + $0xd8] sm:$0xff] %v423
                %v425 = vld [vmem:[%s367 + $0x380] sm:$0xff]
                %426 = vst [vmem:[%s368 + $0xe0] sm:$0xff] %v425
                %v427 = vld [vmem:[%s367 + $0x3a0] sm:$0xff]
                %428 = vst [vmem:[%s368 + $0xe8] sm:$0xff] %v427
                %v429 = vld [vmem:[%s367 + $0x3c0] sm:$0xff]
                %430 = vst [vmem:[%s368 + $0xf0] sm:$0xff] %v429
                %v431 = vld [vmem:[%s367 + $0x3e0] sm:$0xff]
                %432 = vst [vmem:[%s368 + $0xf8] sm:$0xff] %v431
              $region79: #{llama_forward.35} parent=73 // loop_footer
                %s366 = sadd.s32 1, %s362
              $region80: #{llama_forward.35} parent=73 // loop_footer_branch
                %361 = sbr.rel target = $region76
              $region81: #{llama_forward.35} parent=73 // loop_exit
                _
            $region74: #{llama_forward.35} parent=65 // pred_fallthru
              _
          $region66: #{llama_forward.35} parent=61 // pred_fallthru
            _
          %509 = vnop
        $region62: #{llama_forward.35} parent=19 // pred_fallthru
          _
      $region20: #{llama_forward.35} parent=5 // pred_fallthru
        _
      %p510 = scmp.le.s32.totalorder 1, %s9
      %p511 = scmp.lt.s32.totalorder %s9, 5
      %p512 = pnand %p510, %p511
      %p513 = pneg %p512
      // Predicated region
      $region97: #{llama_forward.35} parent=5 // pred_check
        _
      $region98: #{llama_forward.35} parent=5 // pred_check_branch
        %515 = sbr.rel (%p512) target = $region100
      $region99: #{llama_forward.35} parent=5 // pred_region
        %s516 = ssub.s32 %s9, 1
        %s517 = sand.u32 %s71, 1
        %s518 = sand.u32 %s71, 1
        %s519 = smul.addr %s518, 256
        %s520 = scalar_lea.vmem [#allocation4], %s519
        // Predicated region
        $region101: #{llama_forward.35} parent=99 // pred_check
          %p521 = pneg %p84
        $region102: #{llama_forward.35} parent=99 // pred_check_branch
          %523 = sbr.rel (%p521) target = $region104
        $region103: #{llama_forward.35} parent=99 // pred_region
          _
        $region104: #{llama_forward.35} parent=99 // pred_fallthru
          _
        %s524 = sand.u32 %s99, 1
        %s525 = sand.u32 %s99, 1
        %s526 = smul.addr %s525, 256
        %s527 = scalar_lea.vmem [#allocation5], %s526
        // Predicated region
        $region105: #{llama_forward.35} parent=99 // pred_check
          %p528 = pneg %p112
        $region106: #{llama_forward.35} parent=99 // pred_check_branch
          %530 = sbr.rel (%p528) target = $region108
        $region107: #{llama_forward.35} parent=99 // pred_region
          _
        $region108: #{llama_forward.35} parent=99 // pred_fallthru
          _
        %s531 = smul.u32 2, %s21
        %p532 = scmp.lt.s32.totalorder %s19, 0
        %s533 = scalar_select %p532, %s19, 0
        %p534 = scmp.lt.s32.totalorder %s531, 1
        %s535 = scalar_select %p534, %s531, 1
        %s536 = smul.addr %s533, 2
        %s537 = sadd.s32 %s535, %s536
        %s538 = smul.addr %s537, 4
        %s539 = scalar_lea.vmem %s0, %s538
        %p540 = pneg %p56
        %p541 = pneg %p53
        %s542 = sand.u32 %s71, 1
        %s543 = sand.u32 %s71, 1
        %s544 = smul.addr %s543, 256
        %s545 = scalar_lea.vmem [#allocation4], %s544
        %p546 = pneg %p84
        %p547 = pneg %p81
        %s548 = sand.u32 %s99, 1
        %s549 = sand.u32 %s99, 1
        %s550 = smul.addr %s549, 256
        %s551 = scalar_lea.vmem [#allocation5], %s550
        %p552 = pneg %p112
        %p553 = pneg %p109
        %p554 = pneg %p140
        %p555 = pneg %p137
        %s556 = smul.u32 2, %s20
        %p557 = scmp.lt.s32.totalorder %s19, 0
        %s558 = scalar_select %p557, %s19, 0
        %p559 = scmp.lt.s32.totalorder %s556, 7
        %s560 = scalar_select %p559, %s556, 7
        %s561 = smul.addr %s558, 8
        %s562 = sadd.s32 %s560, %s561
        %s563 = smul.addr %s562, 4
        %s564 = scalar_lea.vmem %s3, %s563
        %s565 = smul.u32 2, %s21
        %p566 = scmp.lt.s32.totalorder %s19, 0
        %s567 = scalar_select %p566, %s19, 0
        %p568 = scmp.lt.s32.totalorder %s565, 1
        %s569 = scalar_select %p568, %s565, 1
        %s570 = smul.addr %s567, 2
        %s571 = sadd.s32 %s569, %s570
        %s572 = smul.addr %s571, 4
        %s573 = scalar_lea.vmem %s0, %s572
        %s574 = smul.u32 2, %s21
        %s575 = smul.u32 32, %s21
        %s576 = smul.u32 2, %s20
        %s577 = smul.u32 32, %s21
        %s578 = smul.u32 2, %s20
        %s579 = smul.u32 2, %s20
        %p580 = scmp.lt.s32.totalorder %s19, 0
        %s581 = scalar_select %p580, %s19, 0
        %p582 = scmp.lt.s32.totalorder %s579, 7
        %s583 = scalar_select %p582, %s579, 7
        %s584 = smul.addr %s581, 8
        %s585 = sadd.s32 %s583, %s584
        %s586 = smul.addr %s585, 4
        %s587 = scalar_lea.vmem %s3, %s586
        %s588 = smul.u32 2, %s20
        %p589 = scmp.eq.s32.totalorder %s21, 0
        // Predicated region
        $region109: #{llama_forward.35} parent=99 // pred_check
          %p590 = pneg %p589
        $region110: #{llama_forward.35} parent=99 // pred_check_branch
          %592 = sbr.rel (%p590) target = $region112
        $region111: #{llama_forward.35} parent=99 // pred_region
          %593 = vst [vmem:[#allocation2] sm:$0xff] 0.0
          %594 = vst [vmem:[#allocation2 + $0x8] sm:$0xff] 0.0
          %595 = vst [vmem:[#allocation3] sm:$0xff] 0.0
          %596 = vst [vmem:[#allocation3 + $0x8] sm:$0xff] 0.0
        $region112: #{llama_forward.35} parent=99 // pred_fallthru
          _
        %v597 = vld [vmem:[%s573] sm:$0xff]
        %v598 = vld [vmem:[#allocation2] sm:$0xff]
        %v599 = vld [vmem:[#allocation2 + $0x8] sm:$0xff]
        %v600 = vld [vmem:[%s520] sm:$0xff]
        %v601 = vld [vmem:[%s520 + $0x8] sm:$0xff]
        %v602 = vld [vmem:[%s520 + $0x10] sm:$0xff]
        %v603 = vld [vmem:[%s520 + $0x18] sm:$0xff]
        %v604 = vld [vmem:[%s520 + $0x20] sm:$0xff]
        %v605 = vld [vmem:[%s520 + $0x28] sm:$0xff]
        %v606 = vld [vmem:[%s520 + $0x30] sm:$0xff]
        %v607 = vld [vmem:[%s520 + $0x38] sm:$0xff]
        %v608 = vld [vmem:[%s520 + $0x40] sm:$0xff]
        %v609 = vld [vmem:[%s520 + $0x48] sm:$0xff]
        %v610 = vld [vmem:[%s520 + $0x50] sm:$0xff]
        %v611 = vld [vmem:[%s520 + $0x58] sm:$0xff]
        %v612 = vld [vmem:[%s520 + $0x60] sm:$0xff]
        %v613 = vld [vmem:[%s520 + $0x68] sm:$0xff]
        %v614 = vld [vmem:[%s520 + $0x70] sm:$0xff]
        %v615 = vld [vmem:[%s520 + $0x78] sm:$0xff]
        %v616 = vld [vmem:[%s520 + $0x80] sm:$0xff]
        %v617 = vld [vmem:[%s520 + $0x88] sm:$0xff]
        %v618 = vld [vmem:[%s520 + $0x90] sm:$0xff]
        %v619 = vld [vmem:[%s520 + $0x98] sm:$0xff]
        %v620 = vld [vmem:[%s520 + $0xa0] sm:$0xff]
        %v621 = vld [vmem:[%s520 + $0xa8] sm:$0xff]
        %v622 = vld [vmem:[%s520 + $0xb0] sm:$0xff]
        %v623 = vld [vmem:[%s520 + $0xb8] sm:$0xff]
        %v624 = vld [vmem:[%s520 + $0xc0] sm:$0xff]
        %v625 = vld [vmem:[%s520 + $0xc8] sm:$0xff]
        %v626 = vld [vmem:[%s520 + $0xd0] sm:$0xff]
        %v627 = vld [vmem:[%s520 + $0xd8] sm:$0xff]
        %v628 = vld [vmem:[%s520 + $0xe0] sm:$0xff]
        %v629 = vld [vmem:[%s520 + $0xe8] sm:$0xff]
        %v630 = vld [vmem:[%s520 + $0xf0] sm:$0xff]
        %v631 = vld [vmem:[%s520 + $0xf8] sm:$0xff]
        %v633 = vunpack.c.l.b16 %v597
        %v634 = vunpack.c.h.b16 %v597
        %v635 = vpack.c.b16 %v633, %v633
        %v636 = vpack.c.b16 %v634, %v634
        %v671 = vunpack.c.l.b16 %v600
        %v672 = vunpack.c.h.b16 %v600
        %v673 = vunpack.c.l.b16 %v601
        %v674 = vunpack.c.h.b16 %v601
        %v675 = vunpack.c.l.b16 %v602
        %v676 = vunpack.c.h.b16 %v602
        %v677 = vunpack.c.l.b16 %v603
        %v678 = vunpack.c.h.b16 %v603
        %v679 = vunpack.c.l.b16 %v604
        %v680 = vunpack.c.h.b16 %v604
        %v681 = vunpack.c.l.b16 %v605
        %v682 = vunpack.c.h.b16 %v605
        %v683 = vunpack.c.l.b16 %v606
        %v684 = vunpack.c.h.b16 %v606
        %v685 = vunpack.c.l.b16 %v607
        %v686 = vunpack.c.h.b16 %v607
        %v687 = vunpack.c.l.b16 %v608
        %v688 = vunpack.c.h.b16 %v608
        %v689 = vunpack.c.l.b16 %v609
        %v690 = vunpack.c.h.b16 %v609
        %v691 = vunpack.c.l.b16 %v610
        %v692 = vunpack.c.h.b16 %v610
        %v693 = vunpack.c.l.b16 %v611
        %v694 = vunpack.c.h.b16 %v611
        %v695 = vunpack.c.l.b16 %v612
        %v696 = vunpack.c.h.b16 %v612
        %v697 = vunpack.c.l.b16 %v613
        %v698 = vunpack.c.h.b16 %v613
        %v699 = vunpack.c.l.b16 %v614
        %v700 = vunpack.c.h.b16 %v614
        %v701 = vunpack.c.l.b16 %v615
        %v702 = vunpack.c.h.b16 %v615
        %v703 = vunpack.c.l.b16 %v616
        %v704 = vunpack.c.h.b16 %v616
        %v705 = vunpack.c.l.b16 %v617
        %v706 = vunpack.c.h.b16 %v617
        %v707 = vunpack.c.l.b16 %v618
        %v708 = vunpack.c.h.b16 %v618
        %v709 = vunpack.c.l.b16 %v619
        %v710 = vunpack.c.h.b16 %v619
        %v711 = vunpack.c.l.b16 %v620
        %v712 = vunpack.c.h.b16 %v620
        %v713 = vunpack.c.l.b16 %v621
        %v714 = vunpack.c.h.b16 %v621
        %v715 = vunpack.c.l.b16 %v622
        %v716 = vunpack.c.h.b16 %v622
        %v717 = vunpack.c.l.b16 %v623
        %v718 = vunpack.c.h.b16 %v623
        %v719 = vunpack.c.l.b16 %v624
        %v720 = vunpack.c.h.b16 %v624
        %v721 = vunpack.c.l.b16 %v625
        %v722 = vunpack.c.h.b16 %v625
        %v723 = vunpack.c.l.b16 %v626
        %v724 = vunpack.c.h.b16 %v626
        %v725 = vunpack.c.l.b16 %v627
        %v726 = vunpack.c.h.b16 %v627
        %v727 = vunpack.c.l.b16 %v628
        %v728 = vunpack.c.h.b16 %v628
        %v729 = vunpack.c.l.b16 %v629
        %v730 = vunpack.c.h.b16 %v629
        %v731 = vunpack.c.l.b16 %v630
        %v732 = vunpack.c.h.b16 %v630
        %v733 = vunpack.c.l.b16 %v631
        %v734 = vunpack.c.h.b16 %v631
        %v735 = vpack.c.b16 %v673, %v671
        %v736 = vpack.c.b16 %v674, %v672
        %v737 = vpack.c.b16 %v677, %v675
        %v738 = vpack.c.b16 %v678, %v676
        %v739 = vpack.c.b16 %v681, %v679
        %v740 = vpack.c.b16 %v682, %v680
        %v741 = vpack.c.b16 %v685, %v683
        %v742 = vpack.c.b16 %v686, %v684
        %v743 = vpack.c.b16 %v689, %v687
        %v744 = vpack.c.b16 %v690, %v688
        %v745 = vpack.c.b16 %v693, %v691
        %v746 = vpack.c.b16 %v694, %v692
        %v747 = vpack.c.b16 %v697, %v695
        %v748 = vpack.c.b16 %v698, %v696
        %v749 = vpack.c.b16 %v701, %v699
        %v750 = vpack.c.b16 %v702, %v700
        %v751 = vpack.c.b16 %v705, %v703
        %v752 = vpack.c.b16 %v706, %v704
        %v753 = vpack.c.b16 %v709, %v707
        %v754 = vpack.c.b16 %v710, %v708
        %v755 = vpack.c.b16 %v713, %v711
        %v756 = vpack.c.b16 %v714, %v712
        %v757 = vpack.c.b16 %v717, %v715
        %v758 = vpack.c.b16 %v718, %v716
        %v759 = vpack.c.b16 %v721, %v719
        %v760 = vpack.c.b16 %v722, %v720
        %v761 = vpack.c.b16 %v725, %v723
        %v762 = vpack.c.b16 %v726, %v724
        %v763 = vpack.c.b16 %v729, %v727
        %v764 = vpack.c.b16 %v730, %v728
        %v765 = vpack.c.b16 %v733, %v731
        %v766 = vpack.c.b16 %v734, %v732
        %799 = vmatprep.subr.bf16.mxu0 %v736
        %800 = vmatpush1.bf16.msra.mxu0 %v735
        %801 = vmatprep.subr.bf16.mxu0 %v738
        %802 = vmatpush1.bf16.msra.mxu0 %v737
        %803 = vmatprep.subr.bf16.mxu0 %v740
        %804 = vmatpush1.bf16.msra.mxu0 %v739
        %805 = vmatprep.subr.bf16.mxu0 %v742
        %806 = vmatpush1.bf16.msra.mxu0 %v741
        %807 = vmatprep.subr.bf16.mxu0 %v744
        %808 = vmatpush1.bf16.msra.mxu0 %v743
        %809 = vmatprep.subr.bf16.mxu0 %v746
        %810 = vmatpush1.bf16.msra.mxu0 %v745
        %811 = vmatprep.subr.bf16.mxu0 %v748
        %812 = vmatpush1.bf16.msra.mxu0 %v747
        %813 = vmatprep.subr.bf16.mxu0 %v750
        %814 = vmatpush1.bf16.msra.mxu0 %v749
        %815 = vmatprep.subr.bf16.mxu0 %v752
        %816 = vmatpush1.bf16.msra.mxu0 %v751
        %817 = vmatprep.subr.bf16.mxu0 %v754
        %818 = vmatpush1.bf16.msra.mxu0 %v753
        %819 = vmatprep.subr.bf16.mxu0 %v756
        %820 = vmatpush1.bf16.msra.mxu0 %v755
        %821 = vmatprep.subr.bf16.mxu0 %v758
        %822 = vmatpush1.bf16.msra.mxu0 %v757
        %823 = vmatprep.subr.bf16.mxu0 %v760
        %824 = vmatpush1.bf16.msra.mxu0 %v759
        %825 = vmatprep.subr.bf16.mxu0 %v762
        %826 = vmatpush1.bf16.msra.mxu0 %v761
        %827 = vmatprep.subr.bf16.mxu0 %v764
        %828 = vmatpush1.bf16.msra.mxu0 %v763
        %829 = vmatprep.subr.bf16.mxu0 %v766
        %830 = vmatpush1.bf16.msra.mxu0 %v765
        %831 = vmatprep.mubr.bf16.mxu0 %v636
        %832 = vmatmul.mubr.bf16.gmra.mrb[0].mxu0 %v635
        %v833 = vpop.f32.mrb[0].mxu0
        %v834 = vadd.f32 0.0, %v833
        %v835 = vpop.f32.mrb[0].mxu0
        %v836 = vadd.f32 0.0, %v835
        %v837 = vpop.f32.mrb[0].mxu0
        %v838 = vpop.f32.mrb[0].mxu0
        %839 = vdwg.mxu0
        %v840 = vadd.f32 %v598, %v834
        %v841 = vadd.f32 %v599, %v836
        %842 = vst [vmem:[#allocation2] sm:$0xff] %v840
        %843 = vst [vmem:[#allocation2 + $0x8] sm:$0xff] %v841
        %v844 = vld [vmem:[#allocation3] sm:$0xff]
        %v845 = vld [vmem:[#allocation3 + $0x8] sm:$0xff]
        %v846 = vld [vmem:[%s527] sm:$0xff]
        %v847 = vld [vmem:[%s527 + $0x8] sm:$0xff]
        %v848 = vld [vmem:[%s527 + $0x10] sm:$0xff]
        %v849 = vld [vmem:[%s527 + $0x18] sm:$0xff]
        %v850 = vld [vmem:[%s527 + $0x20] sm:$0xff]
        %v851 = vld [vmem:[%s527 + $0x28] sm:$0xff]
        %v852 = vld [vmem:[%s527 + $0x30] sm:$0xff]
        %v853 = vld [vmem:[%s527 + $0x38] sm:$0xff]
        %v854 = vld [vmem:[%s527 + $0x40] sm:$0xff]
        %v855 = vld [vmem:[%s527 + $0x48] sm:$0xff]
        %v856 = vld [vmem:[%s527 + $0x50] sm:$0xff]
        %v857 = vld [vmem:[%s527 + $0x58] sm:$0xff]
        %v858 = vld [vmem:[%s527 + $0x60] sm:$0xff]
        %v859 = vld [vmem:[%s527 + $0x68] sm:$0xff]
        %v860 = vld [vmem:[%s527 + $0x70] sm:$0xff]
        %v861 = vld [vmem:[%s527 + $0x78] sm:$0xff]
        %v862 = vld [vmem:[%s527 + $0x80] sm:$0xff]
        %v863 = vld [vmem:[%s527 + $0x88] sm:$0xff]
        %v864 = vld [vmem:[%s527 + $0x90] sm:$0xff]
        %v865 = vld [vmem:[%s527 + $0x98] sm:$0xff]
        %v866 = vld [vmem:[%s527 + $0xa0] sm:$0xff]
        %v867 = vld [vmem:[%s527 + $0xa8] sm:$0xff]
        %v868 = vld [vmem:[%s527 + $0xb0] sm:$0xff]
        %v869 = vld [vmem:[%s527 + $0xb8] sm:$0xff]
        %v870 = vld [vmem:[%s527 + $0xc0] sm:$0xff]
        %v871 = vld [vmem:[%s527 + $0xc8] sm:$0xff]
        %v872 = vld [vmem:[%s527 + $0xd0] sm:$0xff]
        %v873 = vld [vmem:[%s527 + $0xd8] sm:$0xff]
        %v874 = vld [vmem:[%s527 + $0xe0] sm:$0xff]
        %v875 = vld [vmem:[%s527 + $0xe8] sm:$0xff]
        %v876 = vld [vmem:[%s527 + $0xf0] sm:$0xff]
        %v877 = vld [vmem:[%s527 + $0xf8] sm:$0xff]
        %v910 = vunpack.c.l.b16 %v846
        %v911 = vunpack.c.h.b16 %v846
        %v912 = vunpack.c.l.b16 %v847
        %v913 = vunpack.c.h.b16 %v847
        %v914 = vunpack.c.l.b16 %v848
        %v915 = vunpack.c.h.b16 %v848
        %v916 = vunpack.c.l.b16 %v849
        %v917 = vunpack.c.h.b16 %v849
        %v918 = vunpack.c.l.b16 %v850
        %v919 = vunpack.c.h.b16 %v850
        %v920 = vunpack.c.l.b16 %v851
        %v921 = vunpack.c.h.b16 %v851
        %v922 = vunpack.c.l.b16 %v852
        %v923 = vunpack.c.h.b16 %v852
        %v924 = vunpack.c.l.b16 %v853
        %v925 = vunpack.c.h.b16 %v853
        %v926 = vunpack.c.l.b16 %v854
        %v927 = vunpack.c.h.b16 %v854
        %v928 = vunpack.c.l.b16 %v855
        %v929 = vunpack.c.h.b16 %v855
        %v930 = vunpack.c.l.b16 %v856
        %v931 = vunpack.c.h.b16 %v856
        %v932 = vunpack.c.l.b16 %v857
        %v933 = vunpack.c.h.b16 %v857
        %v934 = vunpack.c.l.b16 %v858
        %v935 = vunpack.c.h.b16 %v858
        %v936 = vunpack.c.l.b16 %v859
        %v937 = vunpack.c.h.b16 %v859
        %v938 = vunpack.c.l.b16 %v860
        %v939 = vunpack.c.h.b16 %v860
        %v940 = vunpack.c.l.b16 %v861
        %v941 = vunpack.c.h.b16 %v861
        %v942 = vunpack.c.l.b16 %v862
        %v943 = vunpack.c.h.b16 %v862
        %v944 = vunpack.c.l.b16 %v863
        %v945 = vunpack.c.h.b16 %v863
        %v946 = vunpack.c.l.b16 %v864
        %v947 = vunpack.c.h.b16 %v864
        %v948 = vunpack.c.l.b16 %v865
        %v949 = vunpack.c.h.b16 %v865
        %v950 = vunpack.c.l.b16 %v866
        %v951 = vunpack.c.h.b16 %v866
        %v952 = vunpack.c.l.b16 %v867
        %v953 = vunpack.c.h.b16 %v867
        %v954 = vunpack.c.l.b16 %v868
        %v955 = vunpack.c.h.b16 %v868
        %v956 = vunpack.c.l.b16 %v869
        %v957 = vunpack.c.h.b16 %v869
        %v958 = vunpack.c.l.b16 %v870
        %v959 = vunpack.c.h.b16 %v870
        %v960 = vunpack.c.l.b16 %v871
        %v961 = vunpack.c.h.b16 %v871
        %v962 = vunpack.c.l.b16 %v872
        %v963 = vunpack.c.h.b16 %v872
        %v964 = vunpack.c.l.b16 %v873
        %v965 = vunpack.c.h.b16 %v873
        %v966 = vunpack.c.l.b16 %v874
        %v967 = vunpack.c.h.b16 %v874
        %v968 = vunpack.c.l.b16 %v875
        %v969 = vunpack.c.h.b16 %v875
        %v970 = vunpack.c.l.b16 %v876
        %v971 = vunpack.c.h.b16 %v876
        %v972 = vunpack.c.l.b16 %v877
        %v973 = vunpack.c.h.b16 %v877
        %v974 = vpack.c.b16 %v912, %v910
        %v975 = vpack.c.b16 %v913, %v911
        %v976 = vpack.c.b16 %v916, %v914
        %v977 = vpack.c.b16 %v917, %v915
        %v978 = vpack.c.b16 %v920, %v918
        %v979 = vpack.c.b16 %v921, %v919
        %v980 = vpack.c.b16 %v924, %v922
        %v981 = vpack.c.b16 %v925, %v923
        %v982 = vpack.c.b16 %v928, %v926
        %v983 = vpack.c.b16 %v929, %v927
        %v984 = vpack.c.b16 %v932, %v930
        %v985 = vpack.c.b16 %v933, %v931
        %v986 = vpack.c.b16 %v936, %v934
        %v987 = vpack.c.b16 %v937, %v935
        %v988 = vpack.c.b16 %v940, %v938
        %v989 = vpack.c.b16 %v941, %v939
        %v990 = vpack.c.b16 %v944, %v942
        %v991 = vpack.c.b16 %v945, %v943
        %v992 = vpack.c.b16 %v948, %v946
        %v993 = vpack.c.b16 %v949, %v947
        %v994 = vpack.c.b16 %v952, %v950
        %v995 = vpack.c.b16 %v953, %v951
        %v996 = vpack.c.b16 %v956, %v954
        %v997 = vpack.c.b16 %v957, %v955
        %v998 = vpack.c.b16 %v960, %v958
        %v999 = vpack.c.b16 %v961, %v959
        %v1000 = vpack.c.b16 %v964, %v962
        %v1001 = vpack.c.b16 %v965, %v963
        %v1002 = vpack.c.b16 %v968, %v966
        %v1003 = vpack.c.b16 %v969, %v967
        %v1004 = vpack.c.b16 %v972, %v970
        %v1005 = vpack.c.b16 %v973, %v971
        %1038 = vmatprep.subr.bf16.mxu0 %v975
        %1039 = vmatpush1.bf16.msra.mxu0 %v974
        %1040 = vmatprep.subr.bf16.mxu0 %v977
        %1041 = vmatpush1.bf16.msra.mxu0 %v976
        %1042 = vmatprep.subr.bf16.mxu0 %v979
        %1043 = vmatpush1.bf16.msra.mxu0 %v978
        %1044 = vmatprep.subr.bf16.mxu0 %v981
        %1045 = vmatpush1.bf16.msra.mxu0 %v980
        %1046 = vmatprep.subr.bf16.mxu0 %v983
        %1047 = vmatpush1.bf16.msra.mxu0 %v982
        %1048 = vmatprep.subr.bf16.mxu0 %v985
        %1049 = vmatpush1.bf16.msra.mxu0 %v984
        %1050 = vmatprep.subr.bf16.mxu0 %v987
        %1051 = vmatpush1.bf16.msra.mxu0 %v986
        %1052 = vmatprep.subr.bf16.mxu0 %v989
        %1053 = vmatpush1.bf16.msra.mxu0 %v988
        %1054 = vmatprep.subr.bf16.mxu0 %v991
        %1055 = vmatpush1.bf16.msra.mxu0 %v990
        %1056 = vmatprep.subr.bf16.mxu0 %v993
        %1057 = vmatpush1.bf16.msra.mxu0 %v992
        %1058 = vmatprep.subr.bf16.mxu0 %v995
        %1059 = vmatpush1.bf16.msra.mxu0 %v994
        %1060 = vmatprep.subr.bf16.mxu0 %v997
        %1061 = vmatpush1.bf16.msra.mxu0 %v996
        %1062 = vmatprep.subr.bf16.mxu0 %v999
        %1063 = vmatpush1.bf16.msra.mxu0 %v998
        %1064 = vmatprep.subr.bf16.mxu0 %v1001
        %1065 = vmatpush1.bf16.msra.mxu0 %v1000
        %1066 = vmatprep.subr.bf16.mxu0 %v1003
        %1067 = vmatpush1.bf16.msra.mxu0 %v1002
        %1068 = vmatprep.subr.bf16.mxu0 %v1005
        %1069 = vmatpush1.bf16.msra.mxu0 %v1004
        %1070 = vmatprep.mubr.bf16.mxu0 %v636
        %1071 = vmatmul.mubr.bf16.gmra.mrb[0].mxu0 %v635
        %v1072 = vpop.f32.mrb[0].mxu0
        %v1073 = vadd.f32 0.0, %v1072
        %v1074 = vpop.f32.mrb[0].mxu0
        %v1075 = vadd.f32 0.0, %v1074
        %v1076 = vpop.f32.mrb[0].mxu0
        %v1077 = vpop.f32.mrb[0].mxu0
        %1078 = vdwg.mxu0
        %v1079 = vadd.f32 %v844, %v1073
        %v1080 = vadd.f32 %v845, %v1075
        %1081 = vst [vmem:[#allocation3] sm:$0xff] %v1079
        %1082 = vst [vmem:[#allocation3 + $0x8] sm:$0xff] %v1080
        // Predicated region
        $region113: #{llama_forward.35} parent=99 // pred_check
          %p1083 = pneg %p589
        $region114: #{llama_forward.35} parent=99 // pred_check_branch
          %1085 = sbr.rel (%p1083) target = $region116
        $region115: #{llama_forward.35} parent=99 // pred_region
          %v1086 = vld [vmem:[#allocation2] sm:$0xff]
          %v1087 = vld [vmem:[#allocation2 + $0x8] sm:$0xff]
          %v1088 = vsub.f32 0.0, %v1086
          %v1089 = vsub.f32 0.0, %v1087
          %v1090 = vmul.f32 %v1088, 1.442695
          %v1091 = vpow.pop %v1090
          %v1092 = vmul.f32 %v1089, 1.442695
          %v1093 = vpow.pop %v1092
          %v1094 = vadd.f32 %v1091, 1.0
          %v1095 = vadd.f32 %v1093, 1.0
          %v1096 = vrcp.pop %v1094
          %v1097 = vmul.f32 %v1086, %v1096
          %v1098 = vrcp.pop %v1095
          %v1099 = vmul.f32 %v1087, %v1098
          %v1100 = vld [vmem:[#allocation3] sm:$0xff]
          %v1101 = vld [vmem:[#allocation3 + $0x8] sm:$0xff]
          %v1102 = vmul.f32 %v1097, %v1100
          %v1103 = vmul.f32 %v1099, %v1101
          %v1104 = vpack.c.bf16 %v1102, %v1102
          %v1105 = vpack.c.bf16 %v1103, %v1103
          %v1108 = vunpack.c.l.b16 %v1104
          %v1109 = vunpack.c.l.b16 %v1105
          %v1110 = vpack.c.b16 %v1109, %v1108
          %1112 = vst [vmem:[%s587] sm:$0xff] %v1110
        $region116: #{llama_forward.35} parent=99 // pred_fallthru
          _
        %s1113 = smul.u32 2, %s20
        %p1114 = scmp.lt.s32.totalorder %s19, 0
        %s1115 = scalar_select %p1114, %s19, 0
        %p1116 = scmp.lt.s32.totalorder %s1113, 7
        %s1117 = scalar_select %p1116, %s1113, 7
        %s1118 = smul.addr %s1115, 8
        %s1119 = sadd.s32 %s1117, %s1118
        %s1120 = smul.addr %s1119, 4
        %s1121 = scalar_lea.vmem %s3, %s1120
        // Predicated region
        $region117: #{llama_forward.35} parent=99 // pred_check
          %p1122 = pneg %p137
        $region118: #{llama_forward.35} parent=99 // pred_check_branch
          %1124 = sbr.rel (%p1122) target = $region120
        $region119: #{llama_forward.35} parent=99 // pred_region
          %s1125 = smul.u32 2, %s20
        $region120: #{llama_forward.35} parent=99 // pred_fallthru
          _
      $region100: #{llama_forward.35} parent=5 // pred_fallthru
        _
      %p1126 = scmp.le.s32.totalorder 2, %s9
      // Predicated region
      $region121: #{llama_forward.35} parent=5 // pred_check
        %p1127 = pneg %p1126
      $region122: #{llama_forward.35} parent=5 // pred_check_branch
        %1129 = sbr.rel (%p1127) target = $region124
      $region123: #{llama_forward.35} parent=5 // pred_region
        %s1130 = ssub.s32 %s9, 2
        // Predicated region
        $region125: #{llama_forward.35} parent=123 // pred_check
          %p1131 = pneg %p143
        $region126: #{llama_forward.35} parent=123 // pred_check_branch
          %1133 = sbr.rel (%p1131) target = $region128
        $region127: #{llama_forward.35} parent=123 // pred_region
          %s1134 = smul.u32 2, %s23
          %p1135 = scmp.lt.s32.totalorder %s22, 0
          %s1136 = scalar_select %p1135, %s22, 0
          %p1137 = scmp.lt.s32.totalorder %s1134, 7
          %s1138 = scalar_select %p1137, %s1134, 7
          %s1139 = smul.addr %s1136, 8
          %s1140 = sadd.s32 %s1138, %s1139
          %s1141 = smul.addr %s1140, 4
          %s1142 = scalar_lea.vmem %s3, %s1141
        $region128: #{llama_forward.35} parent=123 // pred_fallthru
          _
      $region124: #{llama_forward.35} parent=5 // pred_fallthru
        _
    $region6: #{llama_forward.35} parent=1 // loop_footer
      %s13 = sadd.s32 1, %s9
    $region7: #{llama_forward.35} parent=1 // loop_footer_branch
      %8 = sbr.rel target = $region3
    $region8: #{llama_forward.35} parent=1 // loop_exit
      _

</llo_original>
